<compile_context>
chip_gen: v7x
topology: tpu7x:2x2x1
jax: 0.10.0
libtpu: 0.0.40
codegen_flags: <defaults>
</compile_context>

<pallas_src>
import functools

import jax
import jax.numpy as jnp
import numpy as np
from jax import lax
from jax.experimental import pallas as pl
from jax.experimental.pallas import tpu as pltpu

EPS = 1e-5
LANE = 128


# ----------------------------------------------------------------------------
# small helpers
# ----------------------------------------------------------------------------
def _round_up(x, m):
    return (x + m - 1) // m * m


def _tpu_budget():
    """Per-generation (vmem_limit_bytes, max row-tile)."""
    vmem_phys = 64 * 1024 * 1024                      # conservative default (v7x)
    try:
        info = pltpu.get_tpu_info()
        vmem_phys = int(getattr(info, "vmem_capacity_bytes", vmem_phys))
    except Exception:
        pass
    if vmem_phys >= 100 * 1024 * 1024:                # v5e / v6e: 128 MiB physical
        return 96 * 1024 * 1024, 1024
    return 44 * 1024 * 1024, 512                      # v7x: 64 MiB physical


def _pick_tile(m, cap):
    """Largest 8-aligned divisor of m that is <= cap while leaving >= 2 grid
    steps (so the DMA/compute pipeline has something to overlap)."""
    best = None
    t = 8
    upper = min(cap, m)
    while t <= upper:
        if m % t == 0 and m // t >= 2:
            best = t
        t += 8
    if best is None:
        # TODO(synk): pad M to a tile multiple and mask padded rows out of the
        # stats accumulation for row counts with no 8-aligned divisor.
        return m
    return best


def _pad_last(a, target):
    pad = target - a.shape[-1]
    if pad == 0:
        return a
    return jnp.pad(a, [(0, 0)] * (a.ndim - 1) + [(0, pad)])


def _pad_2d(a, rows, cols):
    return jnp.pad(a, ((0, rows - a.shape[0]), (0, cols - a.shape[1])))


def _pad_vec(v, n, fill):
    return jnp.pad(v, (0, n - v.shape[0]), constant_values=fill).astype(jnp.float32)


# ----------------------------------------------------------------------------
# k1 / k3: 1x1 conv as M-tiled matmul (+ optional fused BN+ReLU prologue)
#          emitting per-tile partial per-channel stats
# ----------------------------------------------------------------------------
def matmul_bn_stats(x, w, tm, vmem_limit, scale=None, shift=None):
    """y = [relu(x*scale+shift)] @ w   with per-tile partial channel stats.

    x: (M, K) bf16, w: (K, Cout) bf16.  If scale/shift ((1, K) f32) are given,
    the previous stage's BatchNorm + ReLU is applied to the input block in
    VMEM right before the MXU matmul.  Returns y (M, Cout) bf16 and per-tile
    partial sum / sum-of-squares of the f32 accumulator, (M//tm, 1, Cout) f32.
    """
    m, k = x.shape
    cout = w.shape[1]
    g = m // tm
    fused = scale is not None

    def kernel(*refs):
        if fused:
            x_ref, sc_ref, sh_ref, w_ref, y_ref, s_ref, q_ref = refs
            a = x_ref[...].astype(jnp.float32) * sc_ref[...] + sh_ref[...]
            a = jnp.maximum(a, 0.0).astype(jnp.bfloat16)
        else:
            x_ref, w_ref, y_ref, s_ref, q_ref = refs
            a = x_ref[...]
        acc = jnp.dot(a, w_ref[...], preferred_element_type=jnp.float32)
        y_ref[...] = acc.astype(y_ref.dtype)
        # Stats come from the f32 accumulator, never the bf16 stored copy.
        s_ref[...] = jnp.sum(acc, axis=0, keepdims=True).reshape(1, 1, cout)
        q_ref[...] = jnp.sum(acc * acc, axis=0, keepdims=True).reshape(1, 1, cout)

    row_spec = pl.BlockSpec((tm, k), lambda i: (i, 0))
    vec_spec = pl.BlockSpec((1, k), lambda i: (0, 0))
    w_spec = pl.BlockSpec((k, cout), lambda i: (0, 0))
    in_specs = [row_spec] + ([vec_spec, vec_spec] if fused else []) + [w_spec]
    args = [x] + ([scale, shift] if fused else []) + [w]

    return pl.pallas_call(
        kernel,
        out_shape=(jax.ShapeDtypeStruct((m, cout), jnp.bfloat16),
                   jax.ShapeDtypeStruct((g, 1, cout), jnp.float32),
                   jax.ShapeDtypeStruct((g, 1, cout), jnp.float32)),
        grid=(g,),
        in_specs=in_specs,
        out_specs=(pl.BlockSpec((tm, cout), lambda i: (i, 0)),
                   pl.BlockSpec((1, 1, cout), lambda i: (i, 0, 0)),
                   pl.BlockSpec((1, 1, cout), lambda i: (i, 0, 0))),
        compiler_params=pltpu.CompilerParams(
            dimension_semantics=("parallel",),
            vmem_limit_bytes=vmem_limit),
    )(*args)


# ----------------------------------------------------------------------------
# k2: 3x3 conv (pad=1, stride=1) with fused BN1+ReLU prologue, in-VMEM halo
#     padding and im2col packed along K = 9*C
# ----------------------------------------------------------------------------
def conv3x3_bn_stats(y1_nhwc, scale1, shift1, w_col, vmem_limit):
    """y1_nhwc: (N, H, W, C) bf16 raw conv1 output.  w_col: (9*C, Cout) bf16
    with rows ordered tap-major / channel-minor.  Returns y2 (N*H*W, Cout)
    bf16 plus per-image partial stats (N, 1, Cout) f32."""
    n, h, w, c = y1_nhwc.shape
    cout = w_col.shape[1]
    hw = h * w
    assert w_col.shape[0] == 9 * c
    assert hw % 8 == 0, "H*W must be a multiple of 8"
    # TODO(synk): for very large images / N == 1 inference, tile over H-row
    # blocks with a 1-row halo to bound VMEM and restore pipelining.

    def kernel(y_ref, sc_ref, sh_ref, w_ref, o_ref, s_ref, q_ref,
               pad_scr, col_scr):
        # --- fused BN1 + ReLU prologue (f32 math, bf16 result) ---
        a = y_ref[0].astype(jnp.float32)
        a = a * sc_ref[...].reshape(1, 1, c) + sh_ref[...].reshape(1, 1, c)
        a = jnp.maximum(a, 0.0).astype(jnp.bfloat16)
        # --- spatial halo built in VMEM (no wrapper-side jnp.pad round trip) ---
        pad_scr[...] = jnp.zeros((h + 2, w + 2, c), jnp.bfloat16)
        pad_scr[1:h + 1, 1:w + 1, :] = a
        # --- im2col packed along K = 9*C so one matmul fills the MXU ---
        for t in range(9):
            dh, dw = t // 3, t % 3
            col_scr[:, t * c:(t + 1) * c] = (
                pad_scr[dh:dh + h, dw:dw + w, :].reshape(hw, c))
        acc = jnp.dot(col_scr[...], w_ref[...], preferred_element_type=jnp.float32)
        o_ref[...] = acc.astype(o_ref.dtype)
        s_ref[...] = jnp.sum(acc, axis=0, keepdims=True).reshape(1, 1, cout)
        q_ref[...] = jnp.sum(acc * acc, axis=0, keepdims=True).reshape(1, 1, cout)

    return pl.pallas_call(
        kernel,
        out_shape=(jax.ShapeDtypeStruct((n * hw, cout), jnp.bfloat16),
                   jax.ShapeDtypeStruct((n, 1, cout), jnp.float32),
                   jax.ShapeDtypeStruct((n, 1, cout), jnp.float32)),
        grid=(n,),
        in_specs=[pl.BlockSpec((1, h, w, c), lambda i: (i, 0, 0, 0)),
                  pl.BlockSpec((1, c), lambda i: (0, 0)),
                  pl.BlockSpec((1, c), lambda i: (0, 0)),
                  pl.BlockSpec((9 * c, cout), lambda i: (0, 0))],
        out_specs=(pl.BlockSpec((hw, cout), lambda i: (i, 0)),
                   pl.BlockSpec((1, 1, cout), lambda i: (i, 0, 0)),
                   pl.BlockSpec((1, 1, cout), lambda i: (i, 0, 0))),
        scratch_shapes=[pltpu.VMEM((h + 2, w + 2, c), jnp.bfloat16),
                        pltpu.VMEM((hw, 9 * c), jnp.bfloat16)],
        compiler_params=pltpu.CompilerParams(
            dimension_semantics=("parallel",),
            vmem_limit_bytes=vmem_limit),
    )(y1_nhwc, scale1, shift1, w_col)


# ----------------------------------------------------------------------------
# k4: BN3 apply + residual + ReLU epilogue
# ----------------------------------------------------------------------------
def bn_residual_relu(y, scale, shift, residual, tm, vmem_limit):
    """out = relu(y*scale + shift + residual); y/residual bf16, out f32."""
    m, c = y.shape

    def kernel(y_ref, r_ref, sc_ref, sh_ref, o_ref):
        o = y_ref[...].astype(jnp.float32) * sc_ref[...] + sh_ref[...]
        o = o + r_ref[...].astype(jnp.float32)
        o_ref[...] = jnp.maximum(o, 0.0)

    row_spec = pl.BlockSpec((tm, c), lambda i: (i, 0))
    vec_spec = pl.BlockSpec((1, c), lambda i: (0, 0))
    return pl.pallas_call(
        kernel,
        out_shape=jax.ShapeDtypeStruct((m, c), jnp.float32),
        grid=(m // tm,),
        in_specs=[row_spec, row_spec, vec_spec, vec_spec],
        out_specs=row_spec,
        compiler_params=pltpu.CompilerParams(
            dimension_semantics=("parallel",),
            vmem_limit_bytes=vmem_limit),
    )(y, residual, scale, shift)


# ----------------------------------------------------------------------------
# stats reduction -> per-channel BN scale / shift (tiny jnp ops between kernels)
# ----------------------------------------------------------------------------
def _bn_scale_shift(s_partial, q_partial, gamma, beta, count):
    s = jnp.sum(s_partial, axis=(0, 1))
    q = jnp.sum(q_partial, axis=(0, 1))
    mean = s * (1.0 / count)
    # TODO(synk): E[y^2]-E[y]^2 in f32 is cancellation-prone for huge M with
    # large means; use a mean-shifted accumulation if that ever matters.
    var = jnp.maximum(q * (1.0 / count) - mean * mean, 0.0)
    scale = gamma * lax.rsqrt(var + EPS)
    shift = beta - mean * scale
    return scale.reshape(1, -1), shift.reshape(1, -1)


# ----------------------------------------------------------------------------
# One-time parameter preparation (hoisted out of the forward pass)
# ----------------------------------------------------------------------------
def prepare_params(params, in_channels):
    w1, g1, b1, w2, g2, b2, w3, g3, b3 = params
    cmid, cexp = int(w1.shape[0]), int(w3.shape[0])
    cin_p = _round_up(in_channels, LANE)
    cmid_p = _round_up(cmid, LANE)
    cexp_p = _round_up(cexp, LANE)

    w1_2d = _pad_2d(jnp.transpose(w1[:, :, 0, 0]), cin_p, cmid_p).astype(jnp.bfloat16)
    # (O,I,3,3) -> (3,3,I,O), pad both channel dims, flatten taps along K.
    w2_col = jnp.transpose(w2, (2, 3, 1, 0))
    w2_col = jnp.pad(w2_col, ((0, 0), (0, 0),
                              (0, cmid_p - cmid), (0, cmid_p - cmid)))
    w2_col = w2_col.reshape(9 * cmid_p, cmid_p).astype(jnp.bfloat16)
    w3_2d = _pad_2d(jnp.transpose(w3[:, :, 0, 0]), cmid_p, cexp_p).astype(jnp.bfloat16)

    return dict(
        w1=w1_2d, w2=w2_col, w3=w3_2d,
        g1=_pad_vec(g1, cmid_p, 1.0), b1=_pad_vec(b1, cmid_p, 0.0),
        g2=_pad_vec(g2, cmid_p, 1.0), b2=_pad_vec(b2, cmid_p, 0.0),
        g3=_pad_vec(g3, cexp_p, 1.0), b3=_pad_vec(b3, cexp_p, 0.0),
    )


# ----------------------------------------------------------------------------
# Bottleneck forward
# ----------------------------------------------------------------------------
def bottleneck_forward(x_nchw, prep, *, c_exp):
    """Identity-residual Bottleneck: downsample=None, stride=1, requires
    in_channels == 4 * out_channels."""
    # TODO(synk): the optional `downsample` branch (arbitrary nn.Module) and
    # stride > 1 are not modeled.
    n, cin, h, w = x_nchw.shape
    cin_p, cmid_p = prep["w1"].shape
    cexp_p = prep["w3"].shape[1]
    assert cin == c_exp and cin_p == cexp_p, \
        "identity residual requires in_channels == 4*out_channels"
    m = n * h * w

    vmem_limit, tile_cap = _tpu_budget()
    tm = _pick_tile(m, tile_cap)

    # NCHW -> NHWC once, flatten to (M, C), pad channels to the lane width,
    # store bf16 (reused as the residual stream in the epilogue).
    x2d = jnp.transpose(x_nchw, (0, 2, 3, 1)).reshape(m, cin)
    x2d = _pad_last(x2d, cin_p).astype(jnp.bfloat16)

    # conv1 (1x1) -> raw y1 + stage-1 stats
    y1, s1, q1 = matmul_bn_stats(x2d, prep["w1"], tm, vmem_limit)
    sc1, sh1 = _bn_scale_shift(s1, q1, prep["g1"], prep["b1"], float(m))

    # conv2 (3x3, pad=1, stride=1), BN1+ReLU fused into the prologue
    y2, s2, q2 = conv3x3_bn_stats(y1.reshape(n, h, w, cmid_p), sc1, sh1,
                                  prep["w2"], vmem_limit)
    sc2, sh2 = _bn_scale_shift(s2, q2, prep["g2"], prep["b2"], float(m))

    # conv3 (1x1 -> 4*Cmid), BN2+ReLU fused into the prologue
    y3, s3, q3 = matmul_bn_stats(y2, prep["w3"], tm, vmem_limit,
                                 scale=sc2, shift=sh2)
    sc3, sh3 = _bn_scale_shift(s3, q3, prep["g3"], prep["b3"], float(m))

    # BN3 + residual + ReLU epilogue
    out2d = bn_residual_relu(y3, sc3, sh3, x2d, tm, vmem_limit)

    out = out2d[:, :c_exp].reshape(n, h, w, c_exp)
    return jnp.transpose(out, (0, 3, 1, 2))                  # NHWC -> NCHW


# ----------------------------------------------------------------------------
# Pure-JAX reference (f32 convolutions) for the numerical sanity check
# ----------------------------------------------------------------------------
def _bn_train_ref(y_nchw, gamma, beta):
    mean = jnp.mean(y_nchw, axis=(0, 2, 3), keepdims=True)
    var = jnp.mean(jnp.square(y_nchw - mean), axis=(0, 2, 3), keepdims=True)
    return (y_nchw - mean) * lax.rsqrt(var + EPS) * gamma.reshape(1, -1, 1, 1) \
        + beta.reshape(1, -1, 1, 1)


def bottleneck_reference(x, params, stride=1):
    w1, g1, b1, w2, g2, b2, w3, g3, b3 = params
    conv = functools.partial(lax.conv_general_dilated,
                             dimension_numbers=("NCHW", "OIHW", "NCHW"))
    out = jax.nn.relu(_bn_train_ref(conv(x, w1, (1, 1), "VALID"), g1, b1))
    out = jax.nn.relu(_bn_train_ref(
        conv(out, w2, (stride, stride), [(1, 1), (1, 1)]), g2, b2))
    out = _bn_train_ref(conv(out, w3, (1, 1), "VALID"), g3, b3)
    return jax.nn.relu(out + x)


# ----------------------------------------------------------------------------
# Deterministic parameter init (PyTorch shapes; gamma=1, beta=0 like defaults)
# ----------------------------------------------------------------------------
def init_params(key, in_channels, out_channels):
    k1, k2, k3 = jax.random.split(key, 3)
    w1 = 0.1 * jax.random.normal(k1, (out_channels, in_channels, 1, 1), jnp.float32)
    w2 = 0.1 * jax.random.normal(k2, (out_channels, out_channels, 3, 3), jnp.float32)
    w3 = 0.1 * jax.random.normal(k3, (out_channels * 4, out_channels, 1, 1), jnp.float32)
    g1 = jnp.ones((out_channels,), jnp.float32)
    b1 = jnp.zeros((out_channels,), jnp.float32)
    g2 = jnp.ones((out_channels,), jnp.float32)
    b2 = jnp.zeros((out_channels,), jnp.float32)
    g3 = jnp.ones((out_channels * 4,), jnp.float32)
    b3 = jnp.zeros((out_channels * 4,), jnp.float32)
    return (w1, g1, b1, w2, g2, b2, w3, g3, b3)


if __name__ == "__main__":
    key = jax.random.PRNGKey(0)
    k_x, k_p = jax.random.split(key)

    # Small but lane-friendly shapes: M = N*H*W = 1024 rows -> multi-step tiled
    # grids; channel dims pad to multiples of 128 for lane-dense blocks.
    N, OUT_C, H, W = 4, 32, 16, 16
    IN_C = OUT_C * 4                       # 128, required for identity residual
    x = jax.random.normal(k_x, (N, IN_C, H, W), jnp.float32)   # NCHW input

    params = init_params(k_p, IN_C, OUT_C)
    prep = prepare_params(params, IN_C)    # one-time weight prep (bf16, padded)

    fwd = jax.jit(functools.partial(bottleneck_forward, c_exp=IN_C))
    out = jax.block_until_ready(fwd(x, prep))
    ref = jax.block_until_ready(bottleneck_reference(x, params, stride=1))

    assert out.shape == (N, 4 * OUT_C, H, W), out.shape
    # Loose tolerance: the Pallas path stores inter-stage activations and the
    # residual in bf16 and feeds the MXU bf16 operands (f32 accumulation),
    # while the reference runs pure-f32 convolutions.
    np.testing.assert_allclose(np.asarray(out), np.asarray(ref),
                               rtol=1e-1, atol=1e-1)
    print("KERNEL_OK")
</pallas_src>

<mosaic_0001>
module attributes {stable_mosaic.version = 11 : i64} {
  func.func @kernel(%arg0: i32, %arg1: memref<512x128xbf16, #tpu.memory_space<vmem>>, %arg2: memref<128x128xbf16, #tpu.memory_space<vmem>>, %arg3: memref<512x128xbf16, #tpu.memory_space<vmem>>, %arg4: memref<1x1x128xf32, #tpu.memory_space<vmem>>, %arg5: memref<1x1x128xf32, #tpu.memory_space<vmem>>) attributes {dimension_semantics = [#tpu.dimension_semantics<parallel>], iteration_bounds = array<i64: 2>, scalar_prefetch = 0 : i64, scratch_operands = 0 : i64, tpu.core_type = #tpu.core_type<tc>, window_params = [{transform_indices = @transform_0, window_bounds = array<i64: 512, 128>}, {pipeline_mode = #tpu.pipeline_mode<synchronous>, transform_indices = @transform_1, window_bounds = array<i64: 128, 128>}, {transform_indices = @transform_2, window_bounds = array<i64: 512, 128>}, {transform_indices = @transform_3, window_bounds = array<i64: 1, 1, 128>}, {transform_indices = @transform_4, window_bounds = array<i64: 1, 1, 128>}]} {
    %c0 = arith.constant 0 : index
    %c0_0 = arith.constant 0 : index
    %0 = vector.load %arg1[%c0, %c0_0] : memref<512x128xbf16, #tpu.memory_space<vmem>>, vector<512x128xbf16>
    %c0_1 = arith.constant 0 : index
    %c0_2 = arith.constant 0 : index
    %1 = vector.load %arg2[%c0_1, %c0_2] : memref<128x128xbf16, #tpu.memory_space<vmem>>, vector<128x128xbf16>
    %cst = arith.constant dense<0.000000e+00> : vector<512x128xf32>
    %2 = tpu.matmul %0, %1, %cst {dimension_numbers = #tpu.dot_dimension_numbers<[1], [0], [0], [1], [0, 0, 1, 1], [], []>} : vector<512x128xbf16>, vector<128x128xbf16>, vector<512x128xf32> -> vector<512x128xf32>
    %3 = arith.truncf %2 : vector<512x128xf32> to vector<512x128xbf16>
    %c0_3 = arith.constant 0 : index
    %c0_4 = arith.constant 0 : index
    %4 = vector.load %arg3[%c0_3, %c0_4] : memref<512x128xbf16, #tpu.memory_space<vmem>>, vector<512x128xbf16>
    tpu.vector_store %arg3[%c0_3, %c0_4], %3 {strides = array<i32>} : memref<512x128xbf16, #tpu.memory_space<vmem>>, vector<512x128xbf16>,
    %cst_5 = arith.constant dense<0.000000e+00> : vector<128xf32>
    %5 = vector.multi_reduction <add>, %2, %cst_5 [0] : vector<512x128xf32> to vector<128xf32>
    %6 = vector.shape_cast %5 : vector<128xf32> to vector<1x128xf32>
    %7 = vector.shape_cast %6 : vector<1x128xf32> to vector<1x1x128xf32>
    %c0_6 = arith.constant 0 : index
    %c0_7 = arith.constant 0 : index
    %c0_8 = arith.constant 0 : index
    %8 = vector.load %arg4[%c0_6, %c0_7, %c0_8] : memref<1x1x128xf32, #tpu.memory_space<vmem>>, vector<1x1x128xf32>
    tpu.vector_store %arg4[%c0_6, %c0_7, %c0_8], %7 {strides = array<i32>} : memref<1x1x128xf32, #tpu.memory_space<vmem>>, vector<1x1x128xf32>,
    %9 = arith.mulf %2, %2 : vector<512x128xf32>
    %cst_9 = arith.constant dense<0.000000e+00> : vector<128xf32>
    %10 = vector.multi_reduction <add>, %9, %cst_9 [0] : vector<512x128xf32> to vector<128xf32>
    %11 = vector.shape_cast %10 : vector<128xf32> to vector<1x128xf32>
    %12 = vector.shape_cast %11 : vector<1x128xf32> to vector<1x1x128xf32>
    %c0_10 = arith.constant 0 : index
    %c0_11 = arith.constant 0 : index
    %c0_12 = arith.constant 0 : index
    %13 = vector.load %arg5[%c0_10, %c0_11, %c0_12] : memref<1x1x128xf32, #tpu.memory_space<vmem>>, vector<1x1x128xf32>
    tpu.vector_store %arg5[%c0_10, %c0_11, %c0_12], %12 {strides = array<i32>} : memref<1x1x128xf32, #tpu.memory_space<vmem>>, vector<1x1x128xf32>,
    return
  }
  func.func @transform_0(%arg0: i32) -> (i32, i32) {
    %c0_i32 = arith.constant 0 : i32
    %c0_i32_0 = arith.constant 0 : i32
    return %arg0, %c0_i32 : i32, i32
  }
  func.func @transform_1(%arg0: i32) -> (i32, i32) {
    %c0_i32 = arith.constant 0 : i32
    %c0_i32_0 = arith.constant 0 : i32
    %c0_i32_1 = arith.constant 0 : i32
    return %c0_i32, %c0_i32_0 : i32, i32
  }
  func.func @transform_2(%arg0: i32) -> (i32, i32) {
    %c0_i32 = arith.constant 0 : i32
    %c0_i32_0 = arith.constant 0 : i32
    return %arg0, %c0_i32 : i32, i32
  }
  func.func @transform_3(%arg0: i32) -> (i32, i32, i32) {
    %c0_i32 = arith.constant 0 : i32
    %c0_i32_0 = arith.constant 0 : i32
    %c0_i32_1 = arith.constant 0 : i32
    return %arg0, %c0_i32, %c0_i32_0 : i32, i32, i32
  }
  func.func @transform_4(%arg0: i32) -> (i32, i32, i32) {
    %c0_i32 = arith.constant 0 : i32
    %c0_i32_0 = arith.constant 0 : i32
    %c0_i32_1 = arith.constant 0 : i32
    return %arg0, %c0_i32, %c0_i32_0 : i32, i32, i32
  }
}

module attributes {stable_mosaic.version = 11 : i64} {
  func.func @kernel(%arg0: i32, %arg1: memref<1x16x16x128xbf16, #tpu.memory_space<vmem>>, %arg2: memref<1x128xf32, #tpu.memory_space<vmem>>, %arg3: memref<1x128xf32, #tpu.memory_space<vmem>>, %arg4: memref<1152x128xbf16, #tpu.memory_space<vmem>>, %arg5: memref<256x128xbf16, #tpu.memory_space<vmem>>, %arg6: memref<1x1x128xf32, #tpu.memory_space<vmem>>, %arg7: memref<1x1x128xf32, #tpu.memory_space<vmem>>, %arg8: memref<18x18x128xbf16, #tpu.memory_space<vmem>>, %arg9: memref<256x1152xbf16, #tpu.memory_space<vmem>>) attributes {dimension_semantics = [#tpu.dimension_semantics<parallel>], iteration_bounds = array<i64: 4>, scalar_prefetch = 0 : i64, scratch_operands = 2 : i64, tpu.core_type = #tpu.core_type<tc>, window_params = [{transform_indices = @transform_0, window_bounds = array<i64: 1, 16, 16, 128>}, {pipeline_mode = #tpu.pipeline_mode<synchronous>, transform_indices = @transform_1, window_bounds = array<i64: 1, 128>}, {pipeline_mode = #tpu.pipeline_mode<synchronous>, transform_indices = @transform_2, window_bounds = array<i64: 1, 128>}, {pipeline_mode = #tpu.pipeline_mode<synchronous>, transform_indices = @transform_3, window_bounds = array<i64: 1152, 128>}, {transform_indices = @transform_4, window_bounds = array<i64: 256, 128>}, {transform_indices = @transform_5, window_bounds = array<i64: 1, 1, 128>}, {transform_indices = @transform_6, window_bounds = array<i64: 1, 1, 128>}]} {
    %c0 = arith.constant 0 : index
    %c0_0 = arith.constant 0 : index
    %c0_1 = arith.constant 0 : index
    %c0_2 = arith.constant 0 : index
    %0 = vector.load %arg1[%c0, %c0_0, %c0_1, %c0_2] : memref<1x16x16x128xbf16, #tpu.memory_space<vmem>>, vector<1x16x16x128xbf16>
    %1 = vector.shape_cast %0 : vector<1x16x16x128xbf16> to vector<16x16x128xbf16>
    %2 = arith.extf %1 : vector<16x16x128xbf16> to vector<16x16x128xf32>
    %c0_3 = arith.constant 0 : index
    %c0_4 = arith.constant 0 : index
    %3 = vector.load %arg2[%c0_3, %c0_4] : memref<1x128xf32, #tpu.memory_space<vmem>>, vector<1x128xf32>
    %4 = vector.shape_cast %3 : vector<1x128xf32> to vector<1x1x128xf32>
    %5 = vector.broadcast %4 : vector<1x1x128xf32> to vector<16x16x128xf32>
    %6 = arith.mulf %2, %5 : vector<16x16x128xf32>
    %c0_5 = arith.constant 0 : index
    %c0_6 = arith.constant 0 : index
    %7 = vector.load %arg3[%c0_5, %c0_6] : memref<1x128xf32, #tpu.memory_space<vmem>>, vector<1x128xf32>
    %8 = vector.shape_cast %7 : vector<1x128xf32> to vector<1x1x128xf32>
    %9 = vector.broadcast %8 : vector<1x1x128xf32> to vector<16x16x128xf32>
    %10 = arith.addf %6, %9 : vector<16x16x128xf32>
    %cst = arith.constant 0.000000e+00 : f32
    %11 = vector.broadcast %cst : f32 to vector<16x16x128xf32>
    %12 = arith.maximumf %10, %11 : vector<16x16x128xf32>
    %13 = arith.truncf %12 : vector<16x16x128xf32> to vector<16x16x128xbf16>
    %cst_7 = arith.constant 0.000000e+00 : bf16
    %14 = vector.broadcast %cst_7 : bf16 to vector<18x18x128xbf16>
    %c0_8 = arith.constant 0 : index
    %c0_9 = arith.constant 0 : index
    %c0_10 = arith.constant 0 : index
    %15 = vector.load %arg8[%c0_8, %c0_9, %c0_10] : memref<18x18x128xbf16, #tpu.memory_space<vmem>>, vector<18x18x128xbf16>
    tpu.vector_store %arg8[%c0_8, %c0_9, %c0_10], %14 {strides = array<i32>} : memref<18x18x128xbf16, #tpu.memory_space<vmem>>, vector<18x18x128xbf16>,
    %c1 = arith.constant 1 : index
    %c1_11 = arith.constant 1 : index
    %c0_12 = arith.constant 0 : index
    %16 = vector.load %arg8[%c1, %c1_11, %c0_12] : memref<18x18x128xbf16, #tpu.memory_space<vmem>>, vector<16x16x128xbf16>
    tpu.vector_store %arg8[%c1, %c1_11, %c0_12], %13 {strides = array<i32>} : memref<18x18x128xbf16, #tpu.memory_space<vmem>>, vector<16x16x128xbf16>,
    %c0_13 = arith.constant 0 : index
    %c0_14 = arith.constant 0 : index
    %c0_15 = arith.constant 0 : index
    %17 = vector.load %arg8[%c0_13, %c0_14, %c0_15] : memref<18x18x128xbf16, #tpu.memory_space<vmem>>, vector<16x16x128xbf16>
    %18 = vector.shape_cast %17 : vector<16x16x128xbf16> to vector<256x128xbf16>
    %c0_16 = arith.constant 0 : index
    %c0_17 = arith.constant 0 : index
    %19 = vector.load %arg9[%c0_16, %c0_17] : memref<256x1152xbf16, #tpu.memory_space<vmem>>, vector<256x128xbf16>
    tpu.vector_store %arg9[%c0_16, %c0_17], %18 {strides = array<i32>} : memref<256x1152xbf16, #tpu.memory_space<vmem>>, vector<256x128xbf16>,
    %c0_18 = arith.constant 0 : index
    %c1_19 = arith.constant 1 : index
    %c0_20 = arith.constant 0 : index
    %20 = vector.load %arg8[%c0_18, %c1_19, %c0_20] : memref<18x18x128xbf16, #tpu.memory_space<vmem>>, vector<16x16x128xbf16>
    %21 = vector.shape_cast %20 : vector<16x16x128xbf16> to vector<256x128xbf16>
    %c0_21 = arith.constant 0 : index
    %c128 = arith.constant 128 : index
    %22 = vector.load %arg9[%c0_21, %c128] : memref<256x1152xbf16, #tpu.memory_space<vmem>>, vector<256x128xbf16>
    tpu.vector_store %arg9[%c0_21, %c128], %21 {strides = array<i32>} : memref<256x1152xbf16, #tpu.memory_space<vmem>>, vector<256x128xbf16>,
    %c0_22 = arith.constant 0 : index
    %c2 = arith.constant 2 : index
    %c0_23 = arith.constant 0 : index
    %23 = vector.load %arg8[%c0_22, %c2, %c0_23] : memref<18x18x128xbf16, #tpu.memory_space<vmem>>, vector<16x16x128xbf16>
    %24 = vector.shape_cast %23 : vector<16x16x128xbf16> to vector<256x128xbf16>
    %c0_24 = arith.constant 0 : index
    %c256 = arith.constant 256 : index
    %25 = vector.load %arg9[%c0_24, %c256] : memref<256x1152xbf16, #tpu.memory_space<vmem>>, vector<256x128xbf16>
    tpu.vector_store %arg9[%c0_24, %c256], %24 {strides = array<i32>} : memref<256x1152xbf16, #tpu.memory_space<vmem>>, vector<256x128xbf16>,
    %c1_25 = arith.constant 1 : index
    %c0_26 = arith.constant 0 : index
    %c0_27 = arith.constant 0 : index
    %26 = vector.load %arg8[%c1_25, %c0_26, %c0_27] : memref<18x18x128xbf16, #tpu.memory_space<vmem>>, vector<16x16x128xbf16>
    %27 = vector.shape_cast %26 : vector<16x16x128xbf16> to vector<256x128xbf16>
    %c0_28 = arith.constant 0 : index
    %c384 = arith.constant 384 : index
    %28 = vector.load %arg9[%c0_28, %c384] : memref<256x1152xbf16, #tpu.memory_space<vmem>>, vector<256x128xbf16>
    tpu.vector_store %arg9[%c0_28, %c384], %27 {strides = array<i32>} : memref<256x1152xbf16, #tpu.memory_space<vmem>>, vector<256x128xbf16>,
    %c1_29 = arith.constant 1 : index
    %c1_30 = arith.constant 1 : index
    %c0_31 = arith.constant 0 : index
    %29 = vector.load %arg8[%c1_29, %c1_30, %c0_31] : memref<18x18x128xbf16, #tpu.memory_space<vmem>>, vector<16x16x128xbf16>
    %30 = vector.shape_cast %29 : vector<16x16x128xbf16> to vector<256x128xbf16>
    %c0_32 = arith.constant 0 : index
    %c512 = arith.constant 512 : index
    %31 = vector.load %arg9[%c0_32, %c512] : memref<256x1152xbf16, #tpu.memory_space<vmem>>, vector<256x128xbf16>
    tpu.vector_store %arg9[%c0_32, %c512], %30 {strides = array<i32>} : memref<256x1152xbf16, #tpu.memory_space<vmem>>, vector<256x128xbf16>,
    %c1_33 = arith.constant 1 : index
    %c2_34 = arith.constant 2 : index
    %c0_35 = arith.constant 0 : index
    %32 = vector.load %arg8[%c1_33, %c2_34, %c0_35] : memref<18x18x128xbf16, #tpu.memory_space<vmem>>, vector<16x16x128xbf16>
    %33 = vector.shape_cast %32 : vector<16x16x128xbf16> to vector<256x128xbf16>
    %c0_36 = arith.constant 0 : index
    %c640 = arith.constant 640 : index
    %34 = vector.load %arg9[%c0_36, %c640] : memref<256x1152xbf16, #tpu.memory_space<vmem>>, vector<256x128xbf16>
    tpu.vector_store %arg9[%c0_36, %c640], %33 {strides = array<i32>} : memref<256x1152xbf16, #tpu.memory_space<vmem>>, vector<256x128xbf16>,
    %c2_37 = arith.constant 2 : index
    %c0_38 = arith.constant 0 : index
    %c0_39 = arith.constant 0 : index
    %35 = vector.load %arg8[%c2_37, %c0_38, %c0_39] : memref<18x18x128xbf16, #tpu.memory_space<vmem>>, vector<16x16x128xbf16>
    %36 = vector.shape_cast %35 : vector<16x16x128xbf16> to vector<256x128xbf16>
    %c0_40 = arith.constant 0 : index
    %c768 = arith.constant 768 : index
    %37 = vector.load %arg9[%c0_40, %c768] : memref<256x1152xbf16, #tpu.memory_space<vmem>>, vector<256x128xbf16>
    tpu.vector_store %arg9[%c0_40, %c768], %36 {strides = array<i32>} : memref<256x1152xbf16, #tpu.memory_space<vmem>>, vector<256x128xbf16>,
    %c2_41 = arith.constant 2 : index
    %c1_42 = arith.constant 1 : index
    %c0_43 = arith.constant 0 : index
    %38 = vector.load %arg8[%c2_41, %c1_42, %c0_43] : memref<18x18x128xbf16, #tpu.memory_space<vmem>>, vector<16x16x128xbf16>
    %39 = vector.shape_cast %38 : vector<16x16x128xbf16> to vector<256x128xbf16>
    %c0_44 = arith.constant 0 : index
    %c896 = arith.constant 896 : index
    %40 = vector.load %arg9[%c0_44, %c896] : memref<256x1152xbf16, #tpu.memory_space<vmem>>, vector<256x128xbf16>
    tpu.vector_store %arg9[%c0_44, %c896], %39 {strides = array<i32>} : memref<256x1152xbf16, #tpu.memory_space<vmem>>, vector<256x128xbf16>,
    %c2_45 = arith.constant 2 : index
    %c2_46 = arith.constant 2 : index
    %c0_47 = arith.constant 0 : index
    %41 = vector.load %arg8[%c2_45, %c2_46, %c0_47] : memref<18x18x128xbf16, #tpu.memory_space<vmem>>, vector<16x16x128xbf16>
    %42 = vector.shape_cast %41 : vector<16x16x128xbf16> to vector<256x128xbf16>
    %c0_48 = arith.constant 0 : index
    %c1024 = arith.constant 1024 : index
    %43 = vector.load %arg9[%c0_48, %c1024] : memref<256x1152xbf16, #tpu.memory_space<vmem>>, vector<256x128xbf16>
    tpu.vector_store %arg9[%c0_48, %c1024], %42 {strides = array<i32>} : memref<256x1152xbf16, #tpu.memory_space<vmem>>, vector<256x128xbf16>,
    %c0_49 = arith.constant 0 : index
    %c0_50 = arith.constant 0 : index
    %44 = vector.load %arg9[%c0_49, %c0_50] : memref<256x1152xbf16, #tpu.memory_space<vmem>>, vector<256x1152xbf16>
    %c0_51 = arith.constant 0 : index
    %c0_52 = arith.constant 0 : index
    %45 = vector.load %arg4[%c0_51, %c0_52] : memref<1152x128xbf16, #tpu.memory_space<vmem>>, vector<1152x128xbf16>
    %cst_53 = arith.constant dense<0.000000e+00> : vector<256x128xf32>
    %46 = tpu.matmul %44, %45, %cst_53 {dimension_numbers = #tpu.dot_dimension_numbers<[1], [0], [0], [1], [0, 0, 1, 1], [], []>} : vector<256x1152xbf16>, vector<1152x128xbf16>, vector<256x128xf32> -> vector<256x128xf32>
    %47 = arith.truncf %46 : vector<256x128xf32> to vector<256x128xbf16>
    %c0_54 = arith.constant 0 : index
    %c0_55 = arith.constant 0 : index
    %48 = vector.load %arg5[%c0_54, %c0_55] : memref<256x128xbf16, #tpu.memory_space<vmem>>, vector<256x128xbf16>
    tpu.vector_store %arg5[%c0_54, %c0_55], %47 {strides = array<i32>} : memref<256x128xbf16, #tpu.memory_space<vmem>>, vector<256x128xbf16>,
    %cst_56 = arith.constant dense<0.000000e+00> : vector<128xf32>
    %49 = vector.multi_reduction <add>, %46, %cst_56 [0] : vector<256x128xf32> to vector<128xf32>
    %50 = vector.shape_cast %49 : vector<128xf32> to vector<1x128xf32>
    %51 = vector.shape_cast %50 : vector<1x128xf32> to vector<1x1x128xf32>
    %c0_57 = arith.constant 0 : index
    %c0_58 = arith.constant 0 : index
    %c0_59 = arith.constant 0 : index
    %52 = vector.load %arg6[%c0_57, %c0_58, %c0_59] : memref<1x1x128xf32, #tpu.memory_space<vmem>>, vector<1x1x128xf32>
    tpu.vector_store %arg6[%c0_57, %c0_58, %c0_59], %51 {strides = array<i32>} : memref<1x1x128xf32, #tpu.memory_space<vmem>>, vector<1x1x128xf32>,
    %53 = arith.mulf %46, %46 : vector<256x128xf32>
    %cst_60 = arith.constant dense<0.000000e+00> : vector<128xf32>
    %54 = vector.multi_reduction <add>, %53, %cst_60 [0] : vector<256x128xf32> to vector<128xf32>
    %55 = vector.shape_cast %54 : vector<128xf32> to vector<1x128xf32>
    %56 = vector.shape_cast %55 : vector<1x128xf32> to vector<1x1x128xf32>
    %c0_61 = arith.constant 0 : index
    %c0_62 = arith.constant 0 : index
    %c0_63 = arith.constant 0 : index
    %57 = vector.load %arg7[%c0_61, %c0_62, %c0_63] : memref<1x1x128xf32, #tpu.memory_space<vmem>>, vector<1x1x128xf32>
    tpu.vector_store %arg7[%c0_61, %c0_62, %c0_63], %56 {strides = array<i32>} : memref<1x1x128xf32, #tpu.memory_space<vmem>>, vector<1x1x128xf32>,
    return
  }
  func.func @transform_0(%arg0: i32) -> (i32, i32, i32, i32) {
    %c0_i32 = arith.constant 0 : i32
    %c0_i32_0 = arith.constant 0 : i32
    %c0_i32_1 = arith.constant 0 : i32
    %c0_i32_2 = arith.constant 0 : i32
    return %arg0, %c0_i32, %c0_i32_0, %c0_i32_1 : i32, i32, i32, i32
  }
  func.func @transform_1(%arg0: i32) -> (i32, i32) {
    %c0_i32 = arith.constant 0 : i32
    %c0_i32_0 = arith.constant 0 : i32
    %c0_i32_1 = arith.constant 0 : i32
    return %c0_i32, %c0_i32_0 : i32, i32
  }
  func.func @transform_2(%arg0: i32) -> (i32, i32) {
    %c0_i32 = arith.constant 0 : i32
    %c0_i32_0 = arith.constant 0 : i32
    %c0_i32_1 = arith.constant 0 : i32
    return %c0_i32, %c0_i32_0 : i32, i32
  }
  func.func @transform_3(%arg0: i32) -> (i32, i32) {
    %c0_i32 = arith.constant 0 : i32
    %c0_i32_0 = arith.constant 0 : i32
    %c0_i32_1 = arith.constant 0 : i32
    return %c0_i32, %c0_i32_0 : i32, i32
  }
  func.func @transform_4(%arg0: i32) -> (i32, i32) {
    %c0_i32 = arith.constant 0 : i32
    %c0_i32_0 = arith.constant 0 : i32
    return %arg0, %c0_i32 : i32, i32
  }
  func.func @transform_5(%arg0: i32) -> (i32, i32, i32) {
    %c0_i32 = arith.constant 0 : i32
    %c0_i32_0 = arith.constant 0 : i32
    %c0_i32_1 = arith.constant 0 : i32
    return %arg0, %c0_i32, %c0_i32_0 : i32, i32, i32
  }
  func.func @transform_6(%arg0: i32) -> (i32, i32, i32) {
    %c0_i32 = arith.constant 0 : i32
    %c0_i32_0 = arith.constant 0 : i32
    %c0_i32_1 = arith.constant 0 : i32
    return %arg0, %c0_i32, %c0_i32_0 : i32, i32, i32
  }
}

module attributes {stable_mosaic.version = 11 : i64} {
  func.func @kernel(%arg0: i32, %arg1: memref<512x128xbf16, #tpu.memory_space<vmem>>, %arg2: memref<1x128xf32, #tpu.memory_space<vmem>>, %arg3: memref<1x128xf32, #tpu.memory_space<vmem>>, %arg4: memref<128x128xbf16, #tpu.memory_space<vmem>>, %arg5: memref<512x128xbf16, #tpu.memory_space<vmem>>, %arg6: memref<1x1x128xf32, #tpu.memory_space<vmem>>, %arg7: memref<1x1x128xf32, #tpu.memory_space<vmem>>) attributes {dimension_semantics = [#tpu.dimension_semantics<parallel>], iteration_bounds = array<i64: 2>, scalar_prefetch = 0 : i64, scratch_operands = 0 : i64, tpu.core_type = #tpu.core_type<tc>, window_params = [{transform_indices = @transform_0, window_bounds = array<i64: 512, 128>}, {pipeline_mode = #tpu.pipeline_mode<synchronous>, transform_indices = @transform_1, window_bounds = array<i64: 1, 128>}, {pipeline_mode = #tpu.pipeline_mode<synchronous>, transform_indices = @transform_2, window_bounds = array<i64: 1, 128>}, {pipeline_mode = #tpu.pipeline_mode<synchronous>, transform_indices = @transform_3, window_bounds = array<i64: 128, 128>}, {transform_indices = @transform_4, window_bounds = array<i64: 512, 128>}, {transform_indices = @transform_5, window_bounds = array<i64: 1, 1, 128>}, {transform_indices = @transform_6, window_bounds = array<i64: 1, 1, 128>}]} {
    %c0 = arith.constant 0 : index
    %c0_0 = arith.constant 0 : index
    %0 = vector.load %arg1[%c0, %c0_0] : memref<512x128xbf16, #tpu.memory_space<vmem>>, vector<512x128xbf16>
    %1 = arith.extf %0 : vector<512x128xbf16> to vector<512x128xf32>
    %c0_1 = arith.constant 0 : index
    %c0_2 = arith.constant 0 : index
    %2 = vector.load %arg2[%c0_1, %c0_2] : memref<1x128xf32, #tpu.memory_space<vmem>>, vector<1x128xf32>
    %3 = vector.broadcast %2 : vector<1x128xf32> to vector<512x128xf32>
    %4 = arith.mulf %1, %3 : vector<512x128xf32>
    %c0_3 = arith.constant 0 : index
    %c0_4 = arith.constant 0 : index
    %5 = vector.load %arg3[%c0_3, %c0_4] : memref<1x128xf32, #tpu.memory_space<vmem>>, vector<1x128xf32>
    %6 = vector.broadcast %5 : vector<1x128xf32> to vector<512x128xf32>
    %7 = arith.addf %4, %6 : vector<512x128xf32>
    %cst = arith.constant 0.000000e+00 : f32
    %8 = vector.broadcast %cst : f32 to vector<512x128xf32>
    %9 = arith.maximumf %7, %8 : vector<512x128xf32>
    %10 = arith.truncf %9 : vector<512x128xf32> to vector<512x128xbf16>
    %c0_5 = arith.constant 0 : index
    %c0_6 = arith.constant 0 : index
    %11 = vector.load %arg4[%c0_5, %c0_6] : memref<128x128xbf16, #tpu.memory_space<vmem>>, vector<128x128xbf16>
    %cst_7 = arith.constant dense<0.000000e+00> : vector<512x128xf32>
    %12 = tpu.matmul %10, %11, %cst_7 {dimension_numbers = #tpu.dot_dimension_numbers<[1], [0], [0], [1], [0, 0, 1, 1], [], []>} : vector<512x128xbf16>, vector<128x128xbf16>, vector<512x128xf32> -> vector<512x128xf32>
    %13 = arith.truncf %12 : vector<512x128xf32> to vector<512x128xbf16>
    %c0_8 = arith.constant 0 : index
    %c0_9 = arith.constant 0 : index
    %14 = vector.load %arg5[%c0_8, %c0_9] : memref<512x128xbf16, #tpu.memory_space<vmem>>, vector<512x128xbf16>
    tpu.vector_store %arg5[%c0_8, %c0_9], %13 {strides = array<i32>} : memref<512x128xbf16, #tpu.memory_space<vmem>>, vector<512x128xbf16>,
    %cst_10 = arith.constant dense<0.000000e+00> : vector<128xf32>
    %15 = vector.multi_reduction <add>, %12, %cst_10 [0] : vector<512x128xf32> to vector<128xf32>
    %16 = vector.shape_cast %15 : vector<128xf32> to vector<1x128xf32>
    %17 = vector.shape_cast %16 : vector<1x128xf32> to vector<1x1x128xf32>
    %c0_11 = arith.constant 0 : index
    %c0_12 = arith.constant 0 : index
    %c0_13 = arith.constant 0 : index
    %18 = vector.load %arg6[%c0_11, %c0_12, %c0_13] : memref<1x1x128xf32, #tpu.memory_space<vmem>>, vector<1x1x128xf32>
    tpu.vector_store %arg6[%c0_11, %c0_12, %c0_13], %17 {strides = array<i32>} : memref<1x1x128xf32, #tpu.memory_space<vmem>>, vector<1x1x128xf32>,
    %19 = arith.mulf %12, %12 : vector<512x128xf32>
    %cst_14 = arith.constant dense<0.000000e+00> : vector<128xf32>
    %20 = vector.multi_reduction <add>, %19, %cst_14 [0] : vector<512x128xf32> to vector<128xf32>
    %21 = vector.shape_cast %20 : vector<128xf32> to vector<1x128xf32>
    %22 = vector.shape_cast %21 : vector<1x128xf32> to vector<1x1x128xf32>
    %c0_15 = arith.constant 0 : index
    %c0_16 = arith.constant 0 : index
    %c0_17 = arith.constant 0 : index
    %23 = vector.load %arg7[%c0_15, %c0_16, %c0_17] : memref<1x1x128xf32, #tpu.memory_space<vmem>>, vector<1x1x128xf32>
    tpu.vector_store %arg7[%c0_15, %c0_16, %c0_17], %22 {strides = array<i32>} : memref<1x1x128xf32, #tpu.memory_space<vmem>>, vector<1x1x128xf32>,
    return
  }
  func.func @transform_0(%arg0: i32) -> (i32, i32) {
    %c0_i32 = arith.constant 0 : i32
    %c0_i32_0 = arith.constant 0 : i32
    return %arg0, %c0_i32 : i32, i32
  }
  func.func @transform_1(%arg0: i32) -> (i32, i32) {
    %c0_i32 = arith.constant 0 : i32
    %c0_i32_0 = arith.constant 0 : i32
    %c0_i32_1 = arith.constant 0 : i32
    return %c0_i32, %c0_i32_0 : i32, i32
  }
  func.func @transform_2(%arg0: i32) -> (i32, i32) {
    %c0_i32 = arith.constant 0 : i32
    %c0_i32_0 = arith.constant 0 : i32
    %c0_i32_1 = arith.constant 0 : i32
    return %c0_i32, %c0_i32_0 : i32, i32
  }
  func.func @transform_3(%arg0: i32) -> (i32, i32) {
    %c0_i32 = arith.constant 0 : i32
    %c0_i32_0 = arith.constant 0 : i32
    %c0_i32_1 = arith.constant 0 : i32
    return %c0_i32, %c0_i32_0 : i32, i32
  }
  func.func @transform_4(%arg0: i32) -> (i32, i32) {
    %c0_i32 = arith.constant 0 : i32
    %c0_i32_0 = arith.constant 0 : i32
    return %arg0, %c0_i32 : i32, i32
  }
  func.func @transform_5(%arg0: i32) -> (i32, i32, i32) {
    %c0_i32 = arith.constant 0 : i32
    %c0_i32_0 = arith.constant 0 : i32
    %c0_i32_1 = arith.constant 0 : i32
    return %arg0, %c0_i32, %c0_i32_0 : i32, i32, i32
  }
  func.func @transform_6(%arg0: i32) -> (i32, i32, i32) {
    %c0_i32 = arith.constant 0 : i32
    %c0_i32_0 = arith.constant 0 : i32
    %c0_i32_1 = arith.constant 0 : i32
    return %arg0, %c0_i32, %c0_i32_0 : i32, i32, i32
  }
}

module attributes {stable_mosaic.version = 11 : i64} {
  func.func @kernel(%arg0: i32, %arg1: memref<512x128xbf16, #tpu.memory_space<vmem>>, %arg2: memref<512x128xbf16, #tpu.memory_space<vmem>>, %arg3: memref<1x128xf32, #tpu.memory_space<vmem>>, %arg4: memref<1x128xf32, #tpu.memory_space<vmem>>, %arg5: memref<512x128xf32, #tpu.memory_space<vmem>>) attributes {dimension_semantics = [#tpu.dimension_semantics<parallel>], iteration_bounds = array<i64: 2>, scalar_prefetch = 0 : i64, scratch_operands = 0 : i64, tpu.core_type = #tpu.core_type<tc>, window_params = [{transform_indices = @transform_0, window_bounds = array<i64: 512, 128>}, {transform_indices = @transform_1, window_bounds = array<i64: 512, 128>}, {pipeline_mode = #tpu.pipeline_mode<synchronous>, transform_indices = @transform_2, window_bounds = array<i64: 1, 128>}, {pipeline_mode = #tpu.pipeline_mode<synchronous>, transform_indices = @transform_3, window_bounds = array<i64: 1, 128>}, {transform_indices = @transform_4, window_bounds = array<i64: 512, 128>}]} {
    %c0 = arith.constant 0 : index
    %c0_0 = arith.constant 0 : index
    %0 = vector.load %arg1[%c0, %c0_0] : memref<512x128xbf16, #tpu.memory_space<vmem>>, vector<512x128xbf16>
    %1 = arith.extf %0 : vector<512x128xbf16> to vector<512x128xf32>
    %c0_1 = arith.constant 0 : index
    %c0_2 = arith.constant 0 : index
    %2 = vector.load %arg3[%c0_1, %c0_2] : memref<1x128xf32, #tpu.memory_space<vmem>>, vector<1x128xf32>
    %3 = vector.broadcast %2 : vector<1x128xf32> to vector<512x128xf32>
    %4 = arith.mulf %1, %3 : vector<512x128xf32>
    %c0_3 = arith.constant 0 : index
    %c0_4 = arith.constant 0 : index
    %5 = vector.load %arg4[%c0_3, %c0_4] : memref<1x128xf32, #tpu.memory_space<vmem>>, vector<1x128xf32>
    %6 = vector.broadcast %5 : vector<1x128xf32> to vector<512x128xf32>
    %7 = arith.addf %4, %6 : vector<512x128xf32>
    %c0_5 = arith.constant 0 : index
    %c0_6 = arith.constant 0 : index
    %8 = vector.load %arg2[%c0_5, %c0_6] : memref<512x128xbf16, #tpu.memory_space<vmem>>, vector<512x128xbf16>
    %9 = arith.extf %8 : vector<512x128xbf16> to vector<512x128xf32>
    %10 = arith.addf %7, %9 : vector<512x128xf32>
    %cst = arith.constant 0.000000e+00 : f32
    %11 = vector.broadcast %cst : f32 to vector<512x128xf32>
    %12 = arith.maximumf %10, %11 : vector<512x128xf32>
    %c0_7 = arith.constant 0 : index
    %c0_8 = arith.constant 0 : index
    %13 = vector.load %arg5[%c0_7, %c0_8] : memref<512x128xf32, #tpu.memory_space<vmem>>, vector<512x128xf32>
    tpu.vector_store %arg5[%c0_7, %c0_8], %12 {strides = array<i32>} : memref<512x128xf32, #tpu.memory_space<vmem>>, vector<512x128xf32>,
    return
  }
  func.func @transform_0(%arg0: i32) -> (i32, i32) {
    %c0_i32 = arith.constant 0 : i32
    %c0_i32_0 = arith.constant 0 : i32
    return %arg0, %c0_i32 : i32, i32
  }
  func.func @transform_1(%arg0: i32) -> (i32, i32) {
    %c0_i32 = arith.constant 0 : i32
    %c0_i32_0 = arith.constant 0 : i32
    return %arg0, %c0_i32 : i32, i32
  }
  func.func @transform_2(%arg0: i32) -> (i32, i32) {
    %c0_i32 = arith.constant 0 : i32
    %c0_i32_0 = arith.constant 0 : i32
    %c0_i32_1 = arith.constant 0 : i32
    return %c0_i32, %c0_i32_0 : i32, i32
  }
  func.func @transform_3(%arg0: i32) -> (i32, i32) {
    %c0_i32 = arith.constant 0 : i32
    %c0_i32_0 = arith.constant 0 : i32
    %c0_i32_1 = arith.constant 0 : i32
    return %c0_i32, %c0_i32_0 : i32, i32
  }
  func.func @transform_4(%arg0: i32) -> (i32, i32) {
    %c0_i32 = arith.constant 0 : i32
    %c0_i32_0 = arith.constant 0 : i32
    return %arg0, %c0_i32 : i32, i32
  }
}

</mosaic_0001>

<llo_original>
// kernel: bottleneck_forward.4
$region0: #{bottleneck_forward.4}
  #allocation0 [shape = 'u32[]', space=smem, size = 0x4, offset = 0x4, fixed_abs, tag = 'smem constant byte address 0x4 - core index']
  #allocation1 [shape = 'u32[144,128]{1,0:T(1,128)}', space=vmem, size = 0x12000, scoped, tag = 'internal scratch']
  %s0 = inlined_call_operand.vmem [shape: bf16[1024,128], index: 0, kind: input, shape index: {}]
  %s1 = inlined_call_operand.vmem [shape: bf16[128,128], index: 1, kind: input, shape index: {}]
  %s2 = inlined_call_operand.vmem [shape: bf16[1024,128], index: 2, kind: output, shape index: {0}]
  %s3 = inlined_call_operand.vmem [shape: f32[2,1,128], index: 3, kind: output, shape index: {1}]
  %s4 = inlined_call_operand.vmem [shape: f32[2,1,128], index: 4, kind: output, shape index: {2}]
  %5 = xla_tuple %s2, %s3, %s4
  %s6 = sld [smem:[#allocation0]]
  $region57: #{bottleneck_forward.4} parent=0
    _
  %s8 = ssub.s32 1, %s6
  %s9 = scalar_select 0, %s8, %s6
  loop: start=0, step=1, limit=4
  $region2: #{bottleneck_forward.4} parent=0 // loop_pre_header
    _
  $region3: #{bottleneck_forward.4} parent=0 // loop_header
    %s11 = sphi 0, %s15
    %p12 = scmp.ge.s32.totalorder %s11, 4
    %s21 = sphi 0, %s23
    %s24 = sphi 0, %s21
    %s25 = sphi 0, %s24
    %s41 = sphi 0, %s25
    %s45 = sphi 0, %s45
    %s47 = sphi 0, %s45
    %s48 = sphi 0, %s47
    %s62 = sphi 0, %s48
    %s68 = sphi 0, %s70
    %s71 = sphi 0, %s68
    %s72 = sphi 0, %s71
    %s88 = sphi 0, %s72
    %s94 = sphi 0, %s96
    %s97 = sphi 0, %s94
    %s98 = sphi 0, %s97
    %s114 = sphi 0, %s98
    %s120 = sphi 0, %s122
    %s123 = sphi 0, %s120
    %s124 = sphi 0, %s123
    %s140 = sphi 0, %s124
  $region4: #{bottleneck_forward.4} parent=0 // loop_header_branch
    %14 = sbr.rel (%p12) target = $region8
  $region5: #{bottleneck_forward.4} parent=0 // loop_body
    %s16 = ssub.s32 %s11, 1
    %s17 = ssub.s32 %s11, 2
    %s18 = sadd.s32 %s11, 1
    %s19 = ssub.s32 %s11, %s18
    %p20 = scmp.eq.s32.totalorder %s19, 0
    %s22 = sadd.s32 %s21, 1
    %s23 = scalar_select %p20, %s21, %s22
    %p26 = pneg %p20
    %p27 = scmp.eq.s32.totalorder %s11, 1
    %p28 = por %p26, %p27
    %p29 = scmp.ne.s32.totalorder %s21, %s24
    %p30 = scmp.eq.s32.totalorder %s11, 0
    %p31 = por %p29, %p30
    %p32 = scmp.ne.s32.totalorder %s21, %s24
    %p33 = scmp.eq.s32.totalorder %s16, 1
    %p34 = por %p32, %p33
    %p35 = scmp.ne.s32.totalorder %s24, %s25
    %p36 = scmp.eq.s32.totalorder %s16, 0
    %p37 = por %p35, %p36
    %p38 = scmp.ne.s32.totalorder %s24, %s25
    %p39 = scmp.eq.s32.totalorder %s17, 1
    %p40 = por %p38, %p39
    %p42 = scmp.ne.s32.totalorder %s25, %s41
    %p43 = scmp.eq.s32.totalorder %s17, 0
    %p44 = por %p42, %p43
    %s46 = sadd.s32 %s45, 1
    %p49 = scmp.eq.s32.totalorder %s11, 1
    %p50 = scmp.ne.s32.totalorder %s45, %s47
    %p51 = scmp.eq.s32.totalorder %s11, 0
    %p52 = por %p50, %p51
    %p53 = scmp.ne.s32.totalorder %s45, %s47
    %p54 = scmp.eq.s32.totalorder %s16, 1
    %p55 = por %p53, %p54
    %p56 = scmp.ne.s32.totalorder %s47, %s48
    %p57 = scmp.eq.s32.totalorder %s16, 0
    %p58 = por %p56, %p57
    %p59 = scmp.ne.s32.totalorder %s47, %s48
    %p60 = scmp.eq.s32.totalorder %s17, 1
    %p61 = por %p59, %p60
    %p63 = scmp.ne.s32.totalorder %s48, %s62
    %p64 = scmp.eq.s32.totalorder %s17, 0
    %p65 = por %p63, %p64
    %s66 = ssub.s32 %s11, %s18
    %p67 = scmp.eq.s32.totalorder %s66, 0
    %s69 = sadd.s32 %s68, 1
    %s70 = scalar_select %p67, %s68, %s69
    %p73 = pneg %p67
    %p74 = scmp.eq.s32.totalorder %s11, 1
    %p75 = por %p73, %p74
    %p76 = scmp.ne.s32.totalorder %s68, %s71
    %p77 = scmp.eq.s32.totalorder %s11, 0
    %p78 = por %p76, %p77
    %p79 = scmp.ne.s32.totalorder %s68, %s71
    %p80 = scmp.eq.s32.totalorder %s16, 1
    %p81 = por %p79, %p80
    %p82 = scmp.ne.s32.totalorder %s71, %s72
    %p83 = scmp.eq.s32.totalorder %s16, 0
    %p84 = por %p82, %p83
    %p85 = scmp.ne.s32.totalorder %s71, %s72
    %p86 = scmp.eq.s32.totalorder %s17, 1
    %p87 = por %p85, %p86
    %p89 = scmp.ne.s32.totalorder %s72, %s88
    %p90 = scmp.eq.s32.totalorder %s17, 0
    %p91 = por %p89, %p90
    %s92 = ssub.s32 %s11, %s18
    %p93 = scmp.eq.s32.totalorder %s92, 0
    %s95 = sadd.s32 %s94, 1
    %s96 = scalar_select %p93, %s94, %s95
    %p99 = pneg %p93
    %p100 = scmp.eq.s32.totalorder %s11, 1
    %p101 = por %p99, %p100
    %p102 = scmp.ne.s32.totalorder %s94, %s97
    %p103 = scmp.eq.s32.totalorder %s11, 0
    %p104 = por %p102, %p103
    %p105 = scmp.ne.s32.totalorder %s94, %s97
    %p106 = scmp.eq.s32.totalorder %s16, 1
    %p107 = por %p105, %p106
    %p108 = scmp.ne.s32.totalorder %s97, %s98
    %p109 = scmp.eq.s32.totalorder %s16, 0
    %p110 = por %p108, %p109
    %p111 = scmp.ne.s32.totalorder %s97, %s98
    %p112 = scmp.eq.s32.totalorder %s17, 1
    %p113 = por %p111, %p112
    %p115 = scmp.ne.s32.totalorder %s98, %s114
    %p116 = scmp.eq.s32.totalorder %s17, 0
    %p117 = por %p115, %p116
    %s118 = ssub.s32 %s11, %s18
    %p119 = scmp.eq.s32.totalorder %s118, 0
    %s121 = sadd.s32 %s120, 1
    %s122 = scalar_select %p119, %s120, %s121
    %p125 = pneg %p119
    %p126 = scmp.eq.s32.totalorder %s11, 1
    %p127 = por %p125, %p126
    %p128 = scmp.ne.s32.totalorder %s120, %s123
    %p129 = scmp.eq.s32.totalorder %s11, 0
    %p130 = por %p128, %p129
    %p131 = scmp.ne.s32.totalorder %s120, %s123
    %p132 = scmp.eq.s32.totalorder %s16, 1
    %p133 = por %p131, %p132
    %p134 = scmp.ne.s32.totalorder %s123, %s124
    %p135 = scmp.eq.s32.totalorder %s16, 0
    %p136 = por %p134, %p135
    %p137 = scmp.ne.s32.totalorder %s123, %s124
    %p138 = scmp.eq.s32.totalorder %s17, 1
    %p139 = por %p137, %p138
    %p141 = scmp.ne.s32.totalorder %s124, %s140
    %p142 = scmp.eq.s32.totalorder %s17, 0
    %p143 = por %p141, %p142
    %p144 = scmp.le.s32.totalorder 1, %s11
    %p145 = scmp.lt.s32.totalorder %s11, 3
    %p146 = pnand %p144, %p145
    %p147 = pneg %p146
    // Predicated region
    $region9: #{bottleneck_forward.4} parent=5 // pred_check
      _
    $region10: #{bottleneck_forward.4} parent=5 // pred_check_branch
      %149 = sbr.rel (%p146) target = $region12
    $region11: #{bottleneck_forward.4} parent=5 // pred_region
      %s150 = ssub.s32 %s11, 1
      // Predicated region
      $region13: #{bottleneck_forward.4} parent=11 // pred_check
        %p151 = pneg %p58
      $region14: #{bottleneck_forward.4} parent=11 // pred_check_branch
        %153 = sbr.rel (%p151) target = $region16
      $region15: #{bottleneck_forward.4} parent=11 // pred_region
        _
      $region16: #{bottleneck_forward.4} parent=11 // pred_fallthru
        _
    $region12: #{bottleneck_forward.4} parent=5 // pred_fallthru
      _
    %p154 = scmp.lt.s32.totalorder %s11, 2
    // Predicated region
    $region17: #{bottleneck_forward.4} parent=5 // pred_check
      %p155 = pneg %p154
    $region18: #{bottleneck_forward.4} parent=5 // pred_check_branch
      %157 = sbr.rel (%p155) target = $region20
    $region19: #{bottleneck_forward.4} parent=5 // pred_region
      // Predicated region
      $region21: #{bottleneck_forward.4} parent=19 // pred_check
        %p158 = pneg %p31
      $region22: #{bottleneck_forward.4} parent=19 // pred_check_branch
        %160 = sbr.rel (%p158) target = $region24
      $region23: #{bottleneck_forward.4} parent=19 // pred_region
        %s161 = smul.u32 64, %s11
        %p162 = scmp.lt.s32.totalorder %s161, 127
        %s163 = scalar_select %p162, %s161, 127
        %s164 = smul.addr %s163, 4
        %s165 = scalar_lea.vmem %s0, %s164
        %s166 = smul.u32 64, %s11
      $region24: #{bottleneck_forward.4} parent=19 // pred_fallthru
        _
    $region20: #{bottleneck_forward.4} parent=5 // pred_fallthru
      _
    %p167 = scmp.le.s32.totalorder 1, %s11
    %p168 = scmp.lt.s32.totalorder %s11, 3
    %p169 = pnand %p167, %p168
    %p170 = pneg %p169
    // Predicated region
    $region25: #{bottleneck_forward.4} parent=5 // pred_check
      _
    $region26: #{bottleneck_forward.4} parent=5 // pred_check_branch
      %172 = sbr.rel (%p169) target = $region28
    $region27: #{bottleneck_forward.4} parent=5 // pred_region
      %s173 = ssub.s32 %s11, 1
      %s174 = smul.u32 64, %s16
      %p175 = scmp.lt.s32.totalorder %s174, 127
      %s176 = scalar_select %p175, %s174, 127
      %s177 = smul.addr %s176, 4
      %s178 = scalar_lea.vmem %s0, %s177
      %p179 = pneg %p37
      %p180 = pneg %p34
      %p181 = pneg %p58
      %p182 = pneg %p55
      %p183 = pneg %p84
      %p184 = pneg %p81
      %s185 = smul.u32 64, %s16
      %p186 = scmp.lt.s32.totalorder %s185, 127
      %s187 = scalar_select %p186, %s185, 127
      %s188 = smul.addr %s187, 4
      %s189 = scalar_lea.vmem %s2, %s188
      %p190 = pneg %p110
      %p191 = pneg %p107
      %p192 = scmp.lt.s32.totalorder %s16, 1
      %s193 = scalar_select %p192, %s16, 1
      %s194 = scalar_lea.vmem %s3, %s193
      %p195 = pneg %p136
      %p196 = pneg %p133
      %p197 = scmp.lt.s32.totalorder %s16, 1
      %s198 = scalar_select %p197, %s16, 1
      %s199 = scalar_lea.vmem %s4, %s198
      %s200 = smul.u32 64, %s16
      %p201 = scmp.lt.s32.totalorder %s200, 127
      %s202 = scalar_select %p201, %s200, 127
      %s203 = smul.addr %s202, 4
      %s204 = scalar_lea.vmem %s0, %s203
      %s205 = smul.u32 64, %s16
      %s206 = smul.u32 64, %s16
      %p207 = scmp.lt.s32.totalorder %s206, 127
      %s208 = scalar_select %p207, %s206, 127
      %s209 = smul.addr %s208, 4
      %s210 = scalar_lea.vmem %s2, %s209
      %s211 = smul.u32 64, %s16
      %p212 = scmp.lt.s32.totalorder %s16, 1
      %s213 = scalar_select %p212, %s16, 1
      %s214 = scalar_lea.vmem %s3, %s213
      %p215 = scmp.lt.s32.totalorder %s16, 1
      %s216 = scalar_select %p215, %s16, 1
      %s217 = scalar_lea.vmem %s4, %s216
      %v219 = vld [vmem:[%s204] sm:$0xf]
      %v220 = vld [vmem:[%s204 + $0x4] sm:$0xf]
      %v221 = vld [vmem:[%s204 + $0x8] sm:$0xf]
      %v222 = vld [vmem:[%s204 + $0xc] sm:$0xf]
      %v223 = vld [vmem:[%s204 + $0x10] sm:$0xf]
      %v224 = vld [vmem:[%s204 + $0x14] sm:$0xf]
      %v225 = vld [vmem:[%s204 + $0x18] sm:$0xf]
      %v226 = vld [vmem:[%s204 + $0x1c] sm:$0xf]
      %v227 = vld [vmem:[%s204 + $0x20] sm:$0xf]
      %v228 = vld [vmem:[%s204 + $0x24] sm:$0xf]
      %v229 = vld [vmem:[%s204 + $0x28] sm:$0xf]
      %v230 = vld [vmem:[%s204 + $0x2c] sm:$0xf]
      %v231 = vld [vmem:[%s204 + $0x30] sm:$0xf]
      %v232 = vld [vmem:[%s204 + $0x34] sm:$0xf]
      %v233 = vld [vmem:[%s204 + $0x38] sm:$0xf]
      %v234 = vld [vmem:[%s204 + $0x3c] sm:$0xf]
      %v235 = vld [vmem:[%s204 + $0x40] sm:$0xf]
      %v236 = vld [vmem:[%s204 + $0x44] sm:$0xf]
      %v237 = vld [vmem:[%s204 + $0x48] sm:$0xf]
      %v238 = vld [vmem:[%s204 + $0x4c] sm:$0xf]
      %v239 = vld [vmem:[%s204 + $0x50] sm:$0xf]
      %v240 = vld [vmem:[%s204 + $0x54] sm:$0xf]
      %v241 = vld [vmem:[%s204 + $0x58] sm:$0xf]
      %v242 = vld [vmem:[%s204 + $0x5c] sm:$0xf]
      %v243 = vld [vmem:[%s204 + $0x60] sm:$0xf]
      %v244 = vld [vmem:[%s204 + $0x64] sm:$0xf]
      %v245 = vld [vmem:[%s204 + $0x68] sm:$0xf]
      %v246 = vld [vmem:[%s204 + $0x6c] sm:$0xf]
      %v247 = vld [vmem:[%s204 + $0x70] sm:$0xf]
      %v248 = vld [vmem:[%s204 + $0x74] sm:$0xf]
      %v249 = vld [vmem:[%s204 + $0x78] sm:$0xf]
      %v250 = vld [vmem:[%s204 + $0x7c] sm:$0xf]
      %v251 = vld [vmem:[%s204 + $0x80] sm:$0xf]
      %v252 = vld [vmem:[%s204 + $0x84] sm:$0xf]
      %v253 = vld [vmem:[%s204 + $0x88] sm:$0xf]
      %v254 = vld [vmem:[%s204 + $0x8c] sm:$0xf]
      %v255 = vld [vmem:[%s204 + $0x90] sm:$0xf]
      %v256 = vld [vmem:[%s204 + $0x94] sm:$0xf]
      %v257 = vld [vmem:[%s204 + $0x98] sm:$0xf]
      %v258 = vld [vmem:[%s204 + $0x9c] sm:$0xf]
      %v259 = vld [vmem:[%s204 + $0xa0] sm:$0xf]
      %v260 = vld [vmem:[%s204 + $0xa4] sm:$0xf]
      %v261 = vld [vmem:[%s204 + $0xa8] sm:$0xf]
      %v262 = vld [vmem:[%s204 + $0xac] sm:$0xf]
      %v263 = vld [vmem:[%s204 + $0xb0] sm:$0xf]
      %v264 = vld [vmem:[%s204 + $0xb4] sm:$0xf]
      %v265 = vld [vmem:[%s204 + $0xb8] sm:$0xf]
      %v266 = vld [vmem:[%s204 + $0xbc] sm:$0xf]
      %v267 = vld [vmem:[%s204 + $0xc0] sm:$0xf]
      %v268 = vld [vmem:[%s204 + $0xc4] sm:$0xf]
      %v269 = vld [vmem:[%s204 + $0xc8] sm:$0xf]
      %v270 = vld [vmem:[%s204 + $0xcc] sm:$0xf]
      %v271 = vld [vmem:[%s204 + $0xd0] sm:$0xf]
      %v272 = vld [vmem:[%s204 + $0xd4] sm:$0xf]
      %v273 = vld [vmem:[%s204 + $0xd8] sm:$0xf]
      %v274 = vld [vmem:[%s204 + $0xdc] sm:$0xf]
      %v275 = vld [vmem:[%s204 + $0xe0] sm:$0xf]
      %v276 = vld [vmem:[%s204 + $0xe4] sm:$0xf]
      %v277 = vld [vmem:[%s204 + $0xe8] sm:$0xf]
      %v278 = vld [vmem:[%s204 + $0xec] sm:$0xf]
      %v279 = vld [vmem:[%s204 + $0xf0] sm:$0xf]
      %v280 = vld [vmem:[%s204 + $0xf4] sm:$0xf]
      %v281 = vld [vmem:[%s204 + $0xf8] sm:$0xf]
      %v282 = vld [vmem:[%s204 + $0xfc] sm:$0xf]
      %v283 = vld [vmem:[%s1] sm:$0xf]
      %v284 = vld [vmem:[%s1 + $0x4] sm:$0xf]
      %v285 = vld [vmem:[%s1 + $0x8] sm:$0xf]
      %v286 = vld [vmem:[%s1 + $0xc] sm:$0xf]
      %v287 = vld [vmem:[%s1 + $0x10] sm:$0xf]
      %v288 = vld [vmem:[%s1 + $0x14] sm:$0xf]
      %v289 = vld [vmem:[%s1 + $0x18] sm:$0xf]
      %v290 = vld [vmem:[%s1 + $0x1c] sm:$0xf]
      %v291 = vld [vmem:[%s1 + $0x20] sm:$0xf]
      %v292 = vld [vmem:[%s1 + $0x24] sm:$0xf]
      %v293 = vld [vmem:[%s1 + $0x28] sm:$0xf]
      %v294 = vld [vmem:[%s1 + $0x2c] sm:$0xf]
      %v295 = vld [vmem:[%s1 + $0x30] sm:$0xf]
      %v296 = vld [vmem:[%s1 + $0x34] sm:$0xf]
      %v297 = vld [vmem:[%s1 + $0x38] sm:$0xf]
      %v298 = vld [vmem:[%s1 + $0x3c] sm:$0xf]
      %v363 = vunpack.c.l.b16 %v219
      %v364 = vunpack.c.l.b16 %v220
      %v365 = vunpack.c.l.b16 %v221
      %v366 = vunpack.c.l.b16 %v222
      %v367 = vunpack.c.l.b16 %v223
      %v368 = vunpack.c.l.b16 %v224
      %v369 = vunpack.c.l.b16 %v225
      %v370 = vunpack.c.l.b16 %v226
      %v371 = vunpack.c.l.b16 %v227
      %v372 = vunpack.c.l.b16 %v228
      %v373 = vunpack.c.l.b16 %v229
      %v374 = vunpack.c.l.b16 %v230
      %v375 = vunpack.c.l.b16 %v231
      %v376 = vunpack.c.l.b16 %v232
      %v377 = vunpack.c.l.b16 %v233
      %v378 = vunpack.c.l.b16 %v234
      %v379 = vunpack.c.l.b16 %v235
      %v380 = vunpack.c.l.b16 %v236
      %v381 = vunpack.c.l.b16 %v237
      %v382 = vunpack.c.l.b16 %v238
      %v383 = vunpack.c.l.b16 %v239
      %v384 = vunpack.c.l.b16 %v240
      %v385 = vunpack.c.l.b16 %v241
      %v386 = vunpack.c.l.b16 %v242
      %v387 = vunpack.c.l.b16 %v243
      %v388 = vunpack.c.l.b16 %v244
      %v389 = vunpack.c.l.b16 %v245
      %v390 = vunpack.c.l.b16 %v246
      %v391 = vunpack.c.l.b16 %v247
      %v392 = vunpack.c.l.b16 %v248
      %v393 = vunpack.c.l.b16 %v249
      %v394 = vunpack.c.l.b16 %v250
      %v395 = vunpack.c.l.b16 %v251
      %v396 = vunpack.c.l.b16 %v252
      %v397 = vunpack.c.l.b16 %v253
      %v398 = vunpack.c.l.b16 %v254
      %v399 = vunpack.c.l.b16 %v255
      %v400 = vunpack.c.l.b16 %v256
      %v401 = vunpack.c.l.b16 %v257
      %v402 = vunpack.c.l.b16 %v258
      %v403 = vunpack.c.l.b16 %v259
      %v404 = vunpack.c.l.b16 %v260
      %v405 = vunpack.c.l.b16 %v261
      %v406 = vunpack.c.l.b16 %v262
      %v407 = vunpack.c.l.b16 %v263
      %v408 = vunpack.c.l.b16 %v264
      %v409 = vunpack.c.l.b16 %v265
      %v410 = vunpack.c.l.b16 %v266
      %v411 = vunpack.c.l.b16 %v267
      %v412 = vunpack.c.l.b16 %v268
      %v413 = vunpack.c.l.b16 %v269
      %v414 = vunpack.c.l.b16 %v270
      %v415 = vunpack.c.l.b16 %v271
      %v416 = vunpack.c.l.b16 %v272
      %v417 = vunpack.c.l.b16 %v273
      %v418 = vunpack.c.l.b16 %v274
      %v419 = vunpack.c.l.b16 %v275
      %v420 = vunpack.c.l.b16 %v276
      %v421 = vunpack.c.l.b16 %v277
      %v422 = vunpack.c.l.b16 %v278
      %v423 = vunpack.c.l.b16 %v279
      %v424 = vunpack.c.l.b16 %v280
      %v425 = vunpack.c.l.b16 %v281
      %v426 = vunpack.c.l.b16 %v282
      %v427 = vpack.c.b16 %v364, %v363
      %v428 = vpack.c.b16 %v366, %v365
      %v429 = vpack.c.b16 %v368, %v367
      %v430 = vpack.c.b16 %v370, %v369
      %v431 = vpack.c.b16 %v372, %v371
      %v432 = vpack.c.b16 %v374, %v373
      %v433 = vpack.c.b16 %v376, %v375
      %v434 = vpack.c.b16 %v378, %v377
      %v435 = vpack.c.b16 %v380, %v379
      %v436 = vpack.c.b16 %v382, %v381
      %v437 = vpack.c.b16 %v384, %v383
      %v438 = vpack.c.b16 %v386, %v385
      %v439 = vpack.c.b16 %v388, %v387
      %v440 = vpack.c.b16 %v390, %v389
      %v441 = vpack.c.b16 %v392, %v391
      %v442 = vpack.c.b16 %v394, %v393
      %v443 = vpack.c.b16 %v396, %v395
      %v444 = vpack.c.b16 %v398, %v397
      %v445 = vpack.c.b16 %v400, %v399
      %v446 = vpack.c.b16 %v402, %v401
      %v447 = vpack.c.b16 %v404, %v403
      %v448 = vpack.c.b16 %v406, %v405
      %v449 = vpack.c.b16 %v408, %v407
      %v450 = vpack.c.b16 %v410, %v409
      %v451 = vpack.c.b16 %v412, %v411
      %v452 = vpack.c.b16 %v414, %v413
      %v453 = vpack.c.b16 %v416, %v415
      %v454 = vpack.c.b16 %v418, %v417
      %v455 = vpack.c.b16 %v420, %v419
      %v456 = vpack.c.b16 %v422, %v421
      %v457 = vpack.c.b16 %v424, %v423
      %v458 = vpack.c.b16 %v426, %v425
      %v507 = vunpack.c.l.b16 %v283
      %v508 = vunpack.c.l.b16 %v284
      %v509 = vunpack.c.l.b16 %v285
      %v510 = vunpack.c.l.b16 %v286
      %v511 = vunpack.c.l.b16 %v287
      %v512 = vunpack.c.l.b16 %v288
      %v513 = vunpack.c.l.b16 %v289
      %v514 = vunpack.c.l.b16 %v290
      %v515 = vunpack.c.l.b16 %v291
      %v516 = vunpack.c.l.b16 %v292
      %v517 = vunpack.c.l.b16 %v293
      %v518 = vunpack.c.l.b16 %v294
      %v519 = vunpack.c.l.b16 %v295
      %v520 = vunpack.c.l.b16 %v296
      %v521 = vunpack.c.l.b16 %v297
      %v522 = vunpack.c.l.b16 %v298
      %v523 = vpack.c.b16 %v508, %v507
      %v524 = vpack.c.b16 %v510, %v509
      %v525 = vpack.c.b16 %v512, %v511
      %v526 = vpack.c.b16 %v514, %v513
      %v527 = vpack.c.b16 %v516, %v515
      %v528 = vpack.c.b16 %v518, %v517
      %v529 = vpack.c.b16 %v520, %v519
      %v530 = vpack.c.b16 %v522, %v521
      %539 = vmatprep.subr.bf16.mxu0 0
      %540 = vmatpush1.bf16.msra.mxu0 %v523
      %541 = vmatprep.subr.bf16.mxu0 0
      %542 = vmatpush1.bf16.msra.mxu0 %v524
      %543 = vmatprep.subr.bf16.mxu0 0
      %544 = vmatpush1.bf16.msra.mxu0 %v525
      %545 = vmatprep.subr.bf16.mxu0 0
      %546 = vmatpush1.bf16.msra.mxu0 %v526
      %547 = vmatprep.subr.bf16.mxu0 0
      %548 = vmatpush1.bf16.msra.mxu0 %v527
      %549 = vmatprep.subr.bf16.mxu0 0
      %550 = vmatpush1.bf16.msra.mxu0 %v528
      %551 = vmatprep.subr.bf16.mxu0 0
      %552 = vmatpush1.bf16.msra.mxu0 %v529
      %553 = vmatprep.subr.bf16.mxu0 0
      %554 = vmatpush1.bf16.msra.mxu0 %v530
      %555 = vmatprep.subr.bf16.mxu0 0
      %556 = vmatpush1.bf16.msra.mxu0 0
      %557 = vmatprep.subr.bf16.mxu0 0
      %558 = vmatpush1.bf16.msra.mxu0 0
      %559 = vmatprep.subr.bf16.mxu0 0
      %560 = vmatpush1.bf16.msra.mxu0 0
      %561 = vmatprep.subr.bf16.mxu0 0
      %562 = vmatpush1.bf16.msra.mxu0 0
      %563 = vmatprep.subr.bf16.mxu0 0
      %564 = vmatpush1.bf16.msra.mxu0 0
      %565 = vmatprep.subr.bf16.mxu0 0
      %566 = vmatpush1.bf16.msra.mxu0 0
      %567 = vmatprep.subr.bf16.mxu0 0
      %568 = vmatpush1.bf16.msra.mxu0 0
      %569 = vmatprep.subr.bf16.mxu0 0
      %570 = vmatpush1.bf16.msra.mxu0 0
      %571 = vmatprep.mubr.bf16.mxu0 0
      %572 = vmatmul.mubr.bf16.gmra.mrb[0].mxu0 %v427
      %v573 = vpop.f32.mrb[0].mxu0
      %v574 = vadd.f32 0.0, %v573
      %v575 = vpop.f32.mrb[0].mxu0
      %v576 = vpop.f32.mrb[0].mxu0
      %v577 = vadd.f32 0.0, %v576
      %v578 = vpop.f32.mrb[0].mxu0
      %579 = vmatprep.mubr.bf16.mxu0 0
      %580 = vmatmul.mubr.bf16.gmra.mrb[0].mxu0 %v428
      %v581 = vpop.f32.mrb[0].mxu0
      %v582 = vadd.f32 0.0, %v581
      %v583 = vpop.f32.mrb[0].mxu0
      %v584 = vpop.f32.mrb[0].mxu0
      %v585 = vadd.f32 0.0, %v584
      %v586 = vpop.f32.mrb[0].mxu0
      %587 = vmatprep.mubr.bf16.mxu0 0
      %588 = vmatmul.mubr.bf16.gmra.mrb[0].mxu0 %v429
      %v589 = vpop.f32.mrb[0].mxu0
      %v590 = vadd.f32 0.0, %v589
      %v591 = vpop.f32.mrb[0].mxu0
      %v592 = vpop.f32.mrb[0].mxu0
      %v593 = vadd.f32 0.0, %v592
      %v594 = vpop.f32.mrb[0].mxu0
      %595 = vmatprep.mubr.bf16.mxu0 0
      %596 = vmatmul.mubr.bf16.gmra.mrb[0].mxu0 %v430
      %v597 = vpop.f32.mrb[0].mxu0
      %v598 = vadd.f32 0.0, %v597
      %v599 = vpop.f32.mrb[0].mxu0
      %v600 = vpop.f32.mrb[0].mxu0
      %v601 = vadd.f32 0.0, %v600
      %v602 = vpop.f32.mrb[0].mxu0
      %603 = vmatprep.mubr.bf16.mxu0 0
      %604 = vmatmul.mubr.bf16.gmra.mrb[0].mxu0 %v431
      %v605 = vpop.f32.mrb[0].mxu0
      %v606 = vadd.f32 0.0, %v605
      %v607 = vpop.f32.mrb[0].mxu0
      %v608 = vpop.f32.mrb[0].mxu0
      %v609 = vadd.f32 0.0, %v608
      %v610 = vpop.f32.mrb[0].mxu0
      %611 = vmatprep.mubr.bf16.mxu0 0
      %612 = vmatmul.mubr.bf16.gmra.mrb[0].mxu0 %v432
      %v613 = vpop.f32.mrb[0].mxu0
      %v614 = vadd.f32 0.0, %v613
      %v615 = vpop.f32.mrb[0].mxu0
      %v616 = vpop.f32.mrb[0].mxu0
      %v617 = vadd.f32 0.0, %v616
      %v618 = vpop.f32.mrb[0].mxu0
      %619 = vmatprep.mubr.bf16.mxu0 0
      %620 = vmatmul.mubr.bf16.gmra.mrb[0].mxu0 %v433
      %v621 = vpop.f32.mrb[0].mxu0
      %v622 = vadd.f32 0.0, %v621
      %v623 = vpop.f32.mrb[0].mxu0
      %v624 = vpop.f32.mrb[0].mxu0
      %v625 = vadd.f32 0.0, %v624
      %v626 = vpop.f32.mrb[0].mxu0
      %627 = vmatprep.mubr.bf16.mxu0 0
      %628 = vmatmul.mubr.bf16.gmra.mrb[0].mxu0 %v434
      %v629 = vpop.f32.mrb[0].mxu0
      %v630 = vadd.f32 0.0, %v629
      %v631 = vpop.f32.mrb[0].mxu0
      %v632 = vpop.f32.mrb[0].mxu0
      %v633 = vadd.f32 0.0, %v632
      %v634 = vpop.f32.mrb[0].mxu0
      %635 = vmatprep.mubr.bf16.mxu0 0
      %636 = vmatmul.mubr.bf16.gmra.mrb[0].mxu0 %v435
      %v637 = vpop.f32.mrb[0].mxu0
      %v638 = vadd.f32 0.0, %v637
      %v639 = vpop.f32.mrb[0].mxu0
      %v640 = vpop.f32.mrb[0].mxu0
      %v641 = vadd.f32 0.0, %v640
      %v642 = vpop.f32.mrb[0].mxu0
      %643 = vmatprep.mubr.bf16.mxu0 0
      %644 = vmatmul.mubr.bf16.gmra.mrb[0].mxu0 %v436
      %v645 = vpop.f32.mrb[0].mxu0
      %v646 = vadd.f32 0.0, %v645
      %v647 = vpop.f32.mrb[0].mxu0
      %v648 = vpop.f32.mrb[0].mxu0
      %v649 = vadd.f32 0.0, %v648
      %v650 = vpop.f32.mrb[0].mxu0
      %651 = vmatprep.mubr.bf16.mxu0 0
      %652 = vmatmul.mubr.bf16.gmra.mrb[0].mxu0 %v437
      %v653 = vpop.f32.mrb[0].mxu0
      %v654 = vadd.f32 0.0, %v653
      %v655 = vpop.f32.mrb[0].mxu0
      %v656 = vpop.f32.mrb[0].mxu0
      %v657 = vadd.f32 0.0, %v656
      %v658 = vpop.f32.mrb[0].mxu0
      %659 = vmatprep.mubr.bf16.mxu0 0
      %660 = vmatmul.mubr.bf16.gmra.mrb[0].mxu0 %v438
      %v661 = vpop.f32.mrb[0].mxu0
      %v662 = vadd.f32 0.0, %v661
      %v663 = vpop.f32.mrb[0].mxu0
      %v664 = vpop.f32.mrb[0].mxu0
      %v665 = vadd.f32 0.0, %v664
      %v666 = vpop.f32.mrb[0].mxu0
      %667 = vmatprep.mubr.bf16.mxu0 0
      %668 = vmatmul.mubr.bf16.gmra.mrb[0].mxu0 %v439
      %v669 = vpop.f32.mrb[0].mxu0
      %v670 = vadd.f32 0.0, %v669
      %v671 = vpop.f32.mrb[0].mxu0
      %v672 = vpop.f32.mrb[0].mxu0
      %v673 = vadd.f32 0.0, %v672
      %v674 = vpop.f32.mrb[0].mxu0
      %675 = vmatprep.mubr.bf16.mxu0 0
      %676 = vmatmul.mubr.bf16.gmra.mrb[0].mxu0 %v440
      %v677 = vpop.f32.mrb[0].mxu0
      %v678 = vadd.f32 0.0, %v677
      %v679 = vpop.f32.mrb[0].mxu0
      %v680 = vpop.f32.mrb[0].mxu0
      %v681 = vadd.f32 0.0, %v680
      %v682 = vpop.f32.mrb[0].mxu0
      %683 = vmatprep.mubr.bf16.mxu0 0
      %684 = vmatmul.mubr.bf16.gmra.mrb[0].mxu0 %v441
      %v685 = vpop.f32.mrb[0].mxu0
      %v686 = vadd.f32 0.0, %v685
      %v687 = vpop.f32.mrb[0].mxu0
      %v688 = vpop.f32.mrb[0].mxu0
      %v689 = vadd.f32 0.0, %v688
      %v690 = vpop.f32.mrb[0].mxu0
      %691 = vmatprep.mubr.bf16.mxu0 0
      %692 = vmatmul.mubr.bf16.gmra.mrb[0].mxu0 %v442
      %v693 = vpop.f32.mrb[0].mxu0
      %v694 = vadd.f32 0.0, %v693
      %v695 = vpop.f32.mrb[0].mxu0
      %v696 = vpop.f32.mrb[0].mxu0
      %v697 = vadd.f32 0.0, %v696
      %v698 = vpop.f32.mrb[0].mxu0
      %699 = vmatprep.mubr.bf16.mxu0 0
      %700 = vmatmul.mubr.bf16.gmra.mrb[0].mxu0 %v443
      %v701 = vpop.f32.mrb[0].mxu0
      %v702 = vadd.f32 0.0, %v701
      %v703 = vpop.f32.mrb[0].mxu0
      %v704 = vpop.f32.mrb[0].mxu0
      %v705 = vadd.f32 0.0, %v704
      %v706 = vpop.f32.mrb[0].mxu0
      %707 = vmatprep.mubr.bf16.mxu0 0
      %708 = vmatmul.mubr.bf16.gmra.mrb[0].mxu0 %v444
      %v709 = vpop.f32.mrb[0].mxu0
      %v710 = vadd.f32 0.0, %v709
      %v711 = vpop.f32.mrb[0].mxu0
      %v712 = vpop.f32.mrb[0].mxu0
      %v713 = vadd.f32 0.0, %v712
      %v714 = vpop.f32.mrb[0].mxu0
      %715 = vmatprep.mubr.bf16.mxu0 0
      %716 = vmatmul.mubr.bf16.gmra.mrb[0].mxu0 %v445
      %v717 = vpop.f32.mrb[0].mxu0
      %v718 = vadd.f32 0.0, %v717
      %v719 = vpop.f32.mrb[0].mxu0
      %v720 = vpop.f32.mrb[0].mxu0
      %v721 = vadd.f32 0.0, %v720
      %v722 = vpop.f32.mrb[0].mxu0
      %723 = vmatprep.mubr.bf16.mxu0 0
      %724 = vmatmul.mubr.bf16.gmra.mrb[0].mxu0 %v446
      %v725 = vpop.f32.mrb[0].mxu0
      %v726 = vadd.f32 0.0, %v725
      %v727 = vpop.f32.mrb[0].mxu0
      %v728 = vpop.f32.mrb[0].mxu0
      %v729 = vadd.f32 0.0, %v728
      %v730 = vpop.f32.mrb[0].mxu0
      %731 = vmatprep.mubr.bf16.mxu0 0
      %732 = vmatmul.mubr.bf16.gmra.mrb[0].mxu0 %v447
      %v733 = vpop.f32.mrb[0].mxu0
      %v734 = vadd.f32 0.0, %v733
      %v735 = vpop.f32.mrb[0].mxu0
      %v736 = vpop.f32.mrb[0].mxu0
      %v737 = vadd.f32 0.0, %v736
      %v738 = vpop.f32.mrb[0].mxu0
      %739 = vmatprep.mubr.bf16.mxu0 0
      %740 = vmatmul.mubr.bf16.gmra.mrb[0].mxu0 %v448
      %v741 = vpop.f32.mrb[0].mxu0
      %v742 = vadd.f32 0.0, %v741
      %v743 = vpop.f32.mrb[0].mxu0
      %v744 = vpop.f32.mrb[0].mxu0
      %v745 = vadd.f32 0.0, %v744
      %v746 = vpop.f32.mrb[0].mxu0
      %747 = vmatprep.mubr.bf16.mxu0 0
      %748 = vmatmul.mubr.bf16.gmra.mrb[0].mxu0 %v449
      %v749 = vpop.f32.mrb[0].mxu0
      %v750 = vadd.f32 0.0, %v749
      %v751 = vpop.f32.mrb[0].mxu0
      %v752 = vpop.f32.mrb[0].mxu0
      %v753 = vadd.f32 0.0, %v752
      %v754 = vpop.f32.mrb[0].mxu0
      %755 = vmatprep.mubr.bf16.mxu0 0
      %756 = vmatmul.mubr.bf16.gmra.mrb[0].mxu0 %v450
      %v757 = vpop.f32.mrb[0].mxu0
      %v758 = vadd.f32 0.0, %v757
      %v759 = vpop.f32.mrb[0].mxu0
      %v760 = vpop.f32.mrb[0].mxu0
      %v761 = vadd.f32 0.0, %v760
      %v762 = vpop.f32.mrb[0].mxu0
      %763 = vmatprep.mubr.bf16.mxu0 0
      %764 = vmatmul.mubr.bf16.gmra.mrb[0].mxu0 %v451
      %v765 = vpop.f32.mrb[0].mxu0
      %v766 = vadd.f32 0.0, %v765
      %v767 = vpop.f32.mrb[0].mxu0
      %v768 = vpop.f32.mrb[0].mxu0
      %v769 = vadd.f32 0.0, %v768
      %v770 = vpop.f32.mrb[0].mxu0
      %771 = vmatprep.mubr.bf16.mxu0 0
      %772 = vmatmul.mubr.bf16.gmra.mrb[0].mxu0 %v452
      %v773 = vpop.f32.mrb[0].mxu0
      %v774 = vadd.f32 0.0, %v773
      %v775 = vpop.f32.mrb[0].mxu0
      %v776 = vpop.f32.mrb[0].mxu0
      %v777 = vadd.f32 0.0, %v776
      %v778 = vpop.f32.mrb[0].mxu0
      %779 = vmatprep.mubr.bf16.mxu0 0
      %780 = vmatmul.mubr.bf16.gmra.mrb[0].mxu0 %v453
      %v781 = vpop.f32.mrb[0].mxu0
      %v782 = vadd.f32 0.0, %v781
      %v783 = vpop.f32.mrb[0].mxu0
      %v784 = vpop.f32.mrb[0].mxu0
      %v785 = vadd.f32 0.0, %v784
      %v786 = vpop.f32.mrb[0].mxu0
      %787 = vmatprep.mubr.bf16.mxu0 0
      %788 = vmatmul.mubr.bf16.gmra.mrb[0].mxu0 %v454
      %v789 = vpop.f32.mrb[0].mxu0
      %v790 = vadd.f32 0.0, %v789
      %v791 = vpop.f32.mrb[0].mxu0
      %v792 = vpop.f32.mrb[0].mxu0
      %v793 = vadd.f32 0.0, %v792
      %v794 = vpop.f32.mrb[0].mxu0
      %795 = vmatprep.mubr.bf16.mxu0 0
      %796 = vmatmul.mubr.bf16.gmra.mrb[0].mxu0 %v455
      %v797 = vpop.f32.mrb[0].mxu0
      %v798 = vadd.f32 0.0, %v797
      %v799 = vpop.f32.mrb[0].mxu0
      %v800 = vpop.f32.mrb[0].mxu0
      %v801 = vadd.f32 0.0, %v800
      %v802 = vpop.f32.mrb[0].mxu0
      %803 = vmatprep.mubr.bf16.mxu0 0
      %804 = vmatmul.mubr.bf16.gmra.mrb[0].mxu0 %v456
      %v805 = vpop.f32.mrb[0].mxu0
      %v806 = vadd.f32 0.0, %v805
      %v807 = vpop.f32.mrb[0].mxu0
      %v808 = vpop.f32.mrb[0].mxu0
      %v809 = vadd.f32 0.0, %v808
      %v810 = vpop.f32.mrb[0].mxu0
      %811 = vmatprep.mubr.bf16.mxu0 0
      %812 = vmatmul.mubr.bf16.gmra.mrb[0].mxu0 %v457
      %v813 = vpop.f32.mrb[0].mxu0
      %v814 = vadd.f32 0.0, %v813
      %v815 = vpop.f32.mrb[0].mxu0
      %v816 = vpop.f32.mrb[0].mxu0
      %v817 = vadd.f32 0.0, %v816
      %v818 = vpop.f32.mrb[0].mxu0
      %819 = vmatprep.mubr.bf16.mxu0 0
      %820 = vmatmul.mubr.bf16.gmra.mrb[0].mxu0 %v458
      %v821 = vpop.f32.mrb[0].mxu0
      %v822 = vadd.f32 0.0, %v821
      %v823 = vpop.f32.mrb[0].mxu0
      %v824 = vpop.f32.mrb[0].mxu0
      %v825 = vadd.f32 0.0, %v824
      %v826 = vpop.f32.mrb[0].mxu0
      %827 = vdwg.mxu0
      %v828 = vpack.c.bf16 %v577, %v574
      %v829 = vpack.c.bf16 %v585, %v582
      %v830 = vpack.c.bf16 %v593, %v590
      %v831 = vpack.c.bf16 %v601, %v598
      %v832 = vpack.c.bf16 %v609, %v606
      %v833 = vpack.c.bf16 %v617, %v614
      %v834 = vpack.c.bf16 %v625, %v622
      %v835 = vpack.c.bf16 %v633, %v630
      %v836 = vpack.c.bf16 %v641, %v638
      %v837 = vpack.c.bf16 %v649, %v646
      %v838 = vpack.c.bf16 %v657, %v654
      %v839 = vpack.c.bf16 %v665, %v662
      %v840 = vpack.c.bf16 %v673, %v670
      %v841 = vpack.c.bf16 %v681, %v678
      %v842 = vpack.c.bf16 %v689, %v686
      %v843 = vpack.c.bf16 %v697, %v694
      %v844 = vpack.c.bf16 %v705, %v702
      %v845 = vpack.c.bf16 %v713, %v710
      %v846 = vpack.c.bf16 %v721, %v718
      %v847 = vpack.c.bf16 %v729, %v726
      %v848 = vpack.c.bf16 %v737, %v734
      %v849 = vpack.c.bf16 %v745, %v742
      %v850 = vpack.c.bf16 %v753, %v750
      %v851 = vpack.c.bf16 %v761, %v758
      %v852 = vpack.c.bf16 %v769, %v766
      %v853 = vpack.c.bf16 %v777, %v774
      %v854 = vpack.c.bf16 %v785, %v782
      %v855 = vpack.c.bf16 %v793, %v790
      %v856 = vpack.c.bf16 %v801, %v798
      %v857 = vpack.c.bf16 %v809, %v806
      %v858 = vpack.c.bf16 %v817, %v814
      %v859 = vpack.c.bf16 %v825, %v822
      %v892 = vunpack.c.l.b16 %v828
      %v893 = vunpack.c.h.b16 %v828
      %v894 = vunpack.c.l.b16 %v829
      %v895 = vunpack.c.h.b16 %v829
      %v896 = vunpack.c.l.b16 %v830
      %v897 = vunpack.c.h.b16 %v830
      %v898 = vunpack.c.l.b16 %v831
      %v899 = vunpack.c.h.b16 %v831
      %v900 = vunpack.c.l.b16 %v832
      %v901 = vunpack.c.h.b16 %v832
      %v902 = vunpack.c.l.b16 %v833
      %v903 = vunpack.c.h.b16 %v833
      %v904 = vunpack.c.l.b16 %v834
      %v905 = vunpack.c.h.b16 %v834
      %v906 = vunpack.c.l.b16 %v835
      %v907 = vunpack.c.h.b16 %v835
      %v908 = vunpack.c.l.b16 %v836
      %v909 = vunpack.c.h.b16 %v836
      %v910 = vunpack.c.l.b16 %v837
      %v911 = vunpack.c.h.b16 %v837
      %v912 = vunpack.c.l.b16 %v838
      %v913 = vunpack.c.h.b16 %v838
      %v914 = vunpack.c.l.b16 %v839
      %v915 = vunpack.c.h.b16 %v839
      %v916 = vunpack.c.l.b16 %v840
      %v917 = vunpack.c.h.b16 %v840
      %v918 = vunpack.c.l.b16 %v841
      %v919 = vunpack.c.h.b16 %v841
      %v920 = vunpack.c.l.b16 %v842
      %v921 = vunpack.c.h.b16 %v842
      %v922 = vunpack.c.l.b16 %v843
      %v923 = vunpack.c.h.b16 %v843
      %v924 = vunpack.c.l.b16 %v844
      %v925 = vunpack.c.h.b16 %v844
      %v926 = vunpack.c.l.b16 %v845
      %v927 = vunpack.c.h.b16 %v845
      %v928 = vunpack.c.l.b16 %v846
      %v929 = vunpack.c.h.b16 %v846
      %v930 = vunpack.c.l.b16 %v847
      %v931 = vunpack.c.h.b16 %v847
      %v932 = vunpack.c.l.b16 %v848
      %v933 = vunpack.c.h.b16 %v848
      %v934 = vunpack.c.l.b16 %v849
      %v935 = vunpack.c.h.b16 %v849
      %v936 = vunpack.c.l.b16 %v850
      %v937 = vunpack.c.h.b16 %v850
      %v938 = vunpack.c.l.b16 %v851
      %v939 = vunpack.c.h.b16 %v851
      %v940 = vunpack.c.l.b16 %v852
      %v941 = vunpack.c.h.b16 %v852
      %v942 = vunpack.c.l.b16 %v853
      %v943 = vunpack.c.h.b16 %v853
      %v944 = vunpack.c.l.b16 %v854
      %v945 = vunpack.c.h.b16 %v854
      %v946 = vunpack.c.l.b16 %v855
      %v947 = vunpack.c.h.b16 %v855
      %v948 = vunpack.c.l.b16 %v856
      %v949 = vunpack.c.h.b16 %v856
      %v950 = vunpack.c.l.b16 %v857
      %v951 = vunpack.c.h.b16 %v857
      %v952 = vunpack.c.l.b16 %v858
      %v953 = vunpack.c.h.b16 %v858
      %v954 = vunpack.c.l.b16 %v859
      %v955 = vunpack.c.h.b16 %v859
      %v956 = vpack.c.b16 %v892, %v892
      %v957 = vpack.c.b16 %v893, %v893
      %v958 = vpack.c.b16 %v894, %v894
      %v959 = vpack.c.b16 %v895, %v895
      %v960 = vpack.c.b16 %v896, %v896
      %v961 = vpack.c.b16 %v897, %v897
      %v962 = vpack.c.b16 %v898, %v898
      %v963 = vpack.c.b16 %v899, %v899
      %v964 = vpack.c.b16 %v900, %v900
      %v965 = vpack.c.b16 %v901, %v901
      %v966 = vpack.c.b16 %v902, %v902
      %v967 = vpack.c.b16 %v903, %v903
      %v968 = vpack.c.b16 %v904, %v904
      %v969 = vpack.c.b16 %v905, %v905
      %v970 = vpack.c.b16 %v906, %v906
      %v971 = vpack.c.b16 %v907, %v907
      %v972 = vpack.c.b16 %v908, %v908
      %v973 = vpack.c.b16 %v909, %v909
      %v974 = vpack.c.b16 %v910, %v910
      %v975 = vpack.c.b16 %v911, %v911
      %v976 = vpack.c.b16 %v912, %v912
      %v977 = vpack.c.b16 %v913, %v913
      %v978 = vpack.c.b16 %v914, %v914
      %v979 = vpack.c.b16 %v915, %v915
      %v980 = vpack.c.b16 %v916, %v916
      %v981 = vpack.c.b16 %v917, %v917
      %v982 = vpack.c.b16 %v918, %v918
      %v983 = vpack.c.b16 %v919, %v919
      %v984 = vpack.c.b16 %v920, %v920
      %v985 = vpack.c.b16 %v921, %v921
      %v986 = vpack.c.b16 %v922, %v922
      %v987 = vpack.c.b16 %v923, %v923
      %v988 = vpack.c.b16 %v924, %v924
      %v989 = vpack.c.b16 %v925, %v925
      %v990 = vpack.c.b16 %v926, %v926
      %v991 = vpack.c.b16 %v927, %v927
      %v992 = vpack.c.b16 %v928, %v928
      %v993 = vpack.c.b16 %v929, %v929
      %v994 = vpack.c.b16 %v930, %v930
      %v995 = vpack.c.b16 %v931, %v931
      %v996 = vpack.c.b16 %v932, %v932
      %v997 = vpack.c.b16 %v933, %v933
      %v998 = vpack.c.b16 %v934, %v934
      %v999 = vpack.c.b16 %v935, %v935
      %v1000 = vpack.c.b16 %v936, %v936
      %v1001 = vpack.c.b16 %v937, %v937
      %v1002 = vpack.c.b16 %v938, %v938
      %v1003 = vpack.c.b16 %v939, %v939
      %v1004 = vpack.c.b16 %v940, %v940
      %v1005 = vpack.c.b16 %v941, %v941
      %v1006 = vpack.c.b16 %v942, %v942
      %v1007 = vpack.c.b16 %v943, %v943
      %v1008 = vpack.c.b16 %v944, %v944
      %v1009 = vpack.c.b16 %v945, %v945
      %v1010 = vpack.c.b16 %v946, %v946
      %v1011 = vpack.c.b16 %v947, %v947
      %v1012 = vpack.c.b16 %v948, %v948
      %v1013 = vpack.c.b16 %v949, %v949
      %v1014 = vpack.c.b16 %v950, %v950
      %v1015 = vpack.c.b16 %v951, %v951
      %v1016 = vpack.c.b16 %v952, %v952
      %v1017 = vpack.c.b16 %v953, %v953
      %v1018 = vpack.c.b16 %v954, %v954
      %v1019 = vpack.c.b16 %v955, %v955
      %1084 = vst [vmem:[%s210] sm:$0xf] %v956
      %1085 = vst [vmem:[%s210 + $0x4] sm:$0xf] %v957
      %1086 = vst [vmem:[%s210 + $0x8] sm:$0xf] %v958
      %1087 = vst [vmem:[%s210 + $0xc] sm:$0xf] %v959
      %1088 = vst [vmem:[%s210 + $0x10] sm:$0xf] %v960
      %1089 = vst [vmem:[%s210 + $0x14] sm:$0xf] %v961
      %1090 = vst [vmem:[%s210 + $0x18] sm:$0xf] %v962
      %1091 = vst [vmem:[%s210 + $0x1c] sm:$0xf] %v963
      %1092 = vst [vmem:[%s210 + $0x20] sm:$0xf] %v964
      %1093 = vst [vmem:[%s210 + $0x24] sm:$0xf] %v965
      %1094 = vst [vmem:[%s210 + $0x28] sm:$0xf] %v966
      %1095 = vst [vmem:[%s210 + $0x2c] sm:$0xf] %v967
      %1096 = vst [vmem:[%s210 + $0x30] sm:$0xf] %v968
      %1097 = vst [vmem:[%s210 + $0x34] sm:$0xf] %v969
      %1098 = vst [vmem:[%s210 + $0x38] sm:$0xf] %v970
      %1099 = vst [vmem:[%s210 + $0x3c] sm:$0xf] %v971
      %1100 = vst [vmem:[%s210 + $0x40] sm:$0xf] %v972
      %1101 = vst [vmem:[%s210 + $0x44] sm:$0xf] %v973
      %1102 = vst [vmem:[%s210 + $0x48] sm:$0xf] %v974
      %1103 = vst [vmem:[%s210 + $0x4c] sm:$0xf] %v975
      %1104 = vst [vmem:[%s210 + $0x50] sm:$0xf] %v976
      %1105 = vst [vmem:[%s210 + $0x54] sm:$0xf] %v977
      %1106 = vst [vmem:[%s210 + $0x58] sm:$0xf] %v978
      %1107 = vst [vmem:[%s210 + $0x5c] sm:$0xf] %v979
      %1108 = vst [vmem:[%s210 + $0x60] sm:$0xf] %v980
      %1109 = vst [vmem:[%s210 + $0x64] sm:$0xf] %v981
      %1110 = vst [vmem:[%s210 + $0x68] sm:$0xf] %v982
      %1111 = vst [vmem:[%s210 + $0x6c] sm:$0xf] %v983
      %1112 = vst [vmem:[%s210 + $0x70] sm:$0xf] %v984
      %1113 = vst [vmem:[%s210 + $0x74] sm:$0xf] %v985
      %1114 = vst [vmem:[%s210 + $0x78] sm:$0xf] %v986
      %1115 = vst [vmem:[%s210 + $0x7c] sm:$0xf] %v987
      %1116 = vst [vmem:[%s210 + $0x80] sm:$0xf] %v988
      %1117 = vst [vmem:[%s210 + $0x84] sm:$0xf] %v989
      %1118 = vst [vmem:[%s210 + $0x88] sm:$0xf] %v990
      %1119 = vst [vmem:[%s210 + $0x8c] sm:$0xf] %v991
      %1120 = vst [vmem:[%s210 + $0x90] sm:$0xf] %v992
      %1121 = vst [vmem:[%s210 + $0x94] sm:$0xf] %v993
      %1122 = vst [vmem:[%s210 + $0x98] sm:$0xf] %v994
      %1123 = vst [vmem:[%s210 + $0x9c] sm:$0xf] %v995
      %1124 = vst [vmem:[%s210 + $0xa0] sm:$0xf] %v996
      %1125 = vst [vmem:[%s210 + $0xa4] sm:$0xf] %v997
      %1126 = vst [vmem:[%s210 + $0xa8] sm:$0xf] %v998
      %1127 = vst [vmem:[%s210 + $0xac] sm:$0xf] %v999
      %1128 = vst [vmem:[%s210 + $0xb0] sm:$0xf] %v1000
      %1129 = vst [vmem:[%s210 + $0xb4] sm:$0xf] %v1001
      %1130 = vst [vmem:[%s210 + $0xb8] sm:$0xf] %v1002
      %1131 = vst [vmem:[%s210 + $0xbc] sm:$0xf] %v1003
      %1132 = vst [vmem:[%s210 + $0xc0] sm:$0xf] %v1004
      %1133 = vst [vmem:[%s210 + $0xc4] sm:$0xf] %v1005
      %1134 = vst [vmem:[%s210 + $0xc8] sm:$0xf] %v1006
      %1135 = vst [vmem:[%s210 + $0xcc] sm:$0xf] %v1007
      %1136 = vst [vmem:[%s210 + $0xd0] sm:$0xf] %v1008
      %1137 = vst [vmem:[%s210 + $0xd4] sm:$0xf] %v1009
      %1138 = vst [vmem:[%s210 + $0xd8] sm:$0xf] %v1010
      %1139 = vst [vmem:[%s210 + $0xdc] sm:$0xf] %v1011
      %1140 = vst [vmem:[%s210 + $0xe0] sm:$0xf] %v1012
      %1141 = vst [vmem:[%s210 + $0xe4] sm:$0xf] %v1013
      %1142 = vst [vmem:[%s210 + $0xe8] sm:$0xf] %v1014
      %1143 = vst [vmem:[%s210 + $0xec] sm:$0xf] %v1015
      %1144 = vst [vmem:[%s210 + $0xf0] sm:$0xf] %v1016
      %1145 = vst [vmem:[%s210 + $0xf4] sm:$0xf] %v1017
      %1146 = vst [vmem:[%s210 + $0xf8] sm:$0xf] %v1018
      %1147 = vst [vmem:[%s210 + $0xfc] sm:$0xf] %v1019
      %v1148 = vadd.f32 %v574, %v577
      %v1149 = vadd.f32 %v1148, %v582
      %v1150 = vadd.f32 %v1149, %v585
      %v1151 = vadd.f32 %v1150, %v590
      %v1152 = vadd.f32 %v1151, %v593
      %v1153 = vadd.f32 %v1152, %v598
      %v1154 = vadd.f32 %v1153, %v601
      %v1155 = vadd.f32 %v1154, %v606
      %v1156 = vadd.f32 %v1155, %v609
      %v1157 = vadd.f32 %v1156, %v614
      %v1158 = vadd.f32 %v1157, %v617
      %v1159 = vadd.f32 %v1158, %v622
      %v1160 = vadd.f32 %v1159, %v625
      %v1161 = vadd.f32 %v1160, %v630
      %v1162 = vadd.f32 %v1161, %v633
      %v1163 = vadd.f32 %v1162, %v638
      %v1164 = vadd.f32 %v1163, %v641
      %v1165 = vadd.f32 %v1164, %v646
      %v1166 = vadd.f32 %v1165, %v649
      %v1167 = vadd.f32 %v1166, %v654
      %v1168 = vadd.f32 %v1167, %v657
      %v1169 = vadd.f32 %v1168, %v662
      %v1170 = vadd.f32 %v1169, %v665
      %v1171 = vadd.f32 %v1170, %v670
      %v1172 = vadd.f32 %v1171, %v673
      %v1173 = vadd.f32 %v1172, %v678
      %v1174 = vadd.f32 %v1173, %v681
      %v1175 = vadd.f32 %v1174, %v686
      %v1176 = vadd.f32 %v1175, %v689
      %v1177 = vadd.f32 %v1176, %v694
      %v1178 = vadd.f32 %v1177, %v697
      %v1179 = vadd.f32 %v1178, %v702
      %v1180 = vadd.f32 %v1179, %v705
      %v1181 = vadd.f32 %v1180, %v710
      %v1182 = vadd.f32 %v1181, %v713
      %v1183 = vadd.f32 %v1182, %v718
      %v1184 = vadd.f32 %v1183, %v721
      %v1185 = vadd.f32 %v1184, %v726
      %v1186 = vadd.f32 %v1185, %v729
      %v1187 = vadd.f32 %v1186, %v734
      %v1188 = vadd.f32 %v1187, %v737
      %v1189 = vadd.f32 %v1188, %v742
      %v1190 = vadd.f32 %v1189, %v745
      %v1191 = vadd.f32 %v1190, %v750
      %v1192 = vadd.f32 %v1191, %v753
      %v1193 = vadd.f32 %v1192, %v758
      %v1194 = vadd.f32 %v1193, %v761
      %v1195 = vadd.f32 %v1194, %v766
      %v1196 = vadd.f32 %v1195, %v769
      %v1197 = vadd.f32 %v1196, %v774
      %v1198 = vadd.f32 %v1197, %v777
      %v1199 = vadd.f32 %v1198, %v782
      %v1200 = vadd.f32 %v1199, %v785
      %v1201 = vadd.f32 %v1200, %v790
      %v1202 = vadd.f32 %v1201, %v793
      %v1203 = vadd.f32 %v1202, %v798
      %v1204 = vadd.f32 %v1203, %v801
      %v1205 = vadd.f32 %v1204, %v806
      %v1206 = vadd.f32 %v1205, %v809
      %v1207 = vadd.f32 %v1206, %v814
      %v1208 = vadd.f32 %v1207, %v817
      %v1209 = vadd.f32 %v1208, %v822
      %v1210 = vadd.f32 %v1209, %v825
      %v1211 = vrot.slane %v1210, 4
      %v1212 = vadd.f32 %v1210, %v1211
      %v1213 = vrot.slane %v1212, 2
      %v1214 = vadd.f32 %v1212, %v1213
      %v1215 = vrot.slane %v1214, 1
      %v1216 = vadd.f32 %v1214, %v1215
      %1217 = vst [vmem:[%s214] sm:$0x1] %v1216
      %v1218 = vmul.f32 %v574, %v574
      %v1219 = vmul.f32 %v577, %v577
      %v1220 = vmul.f32 %v582, %v582
      %v1221 = vmul.f32 %v585, %v585
      %v1222 = vmul.f32 %v590, %v590
      %v1223 = vmul.f32 %v593, %v593
      %v1224 = vmul.f32 %v598, %v598
      %v1225 = vmul.f32 %v601, %v601
      %v1226 = vmul.f32 %v606, %v606
      %v1227 = vmul.f32 %v609, %v609
      %v1228 = vmul.f32 %v614, %v614
      %v1229 = vmul.f32 %v617, %v617
      %v1230 = vmul.f32 %v622, %v622
      %v1231 = vmul.f32 %v625, %v625
      %v1232 = vmul.f32 %v630, %v630
      %v1233 = vmul.f32 %v633, %v633
      %v1234 = vmul.f32 %v638, %v638
      %v1235 = vmul.f32 %v641, %v641
      %v1236 = vmul.f32 %v646, %v646
      %v1237 = vmul.f32 %v649, %v649
      %v1238 = vmul.f32 %v654, %v654
      %v1239 = vmul.f32 %v657, %v657
      %v1240 = vmul.f32 %v662, %v662
      %v1241 = vmul.f32 %v665, %v665
      %v1242 = vmul.f32 %v670, %v670
      %v1243 = vmul.f32 %v673, %v673
      %v1244 = vmul.f32 %v678, %v678
      %v1245 = vmul.f32 %v681, %v681
      %v1246 = vmul.f32 %v686, %v686
      %v1247 = vmul.f32 %v689, %v689
      %v1248 = vmul.f32 %v694, %v694
      %v1249 = vmul.f32 %v697, %v697
      %v1250 = vmul.f32 %v702, %v702
      %v1251 = vmul.f32 %v705, %v705
      %v1252 = vmul.f32 %v710, %v710
      %v1253 = vmul.f32 %v713, %v713
      %v1254 = vmul.f32 %v718, %v718
      %v1255 = vmul.f32 %v721, %v721
      %v1256 = vmul.f32 %v726, %v726
      %v1257 = vmul.f32 %v729, %v729
      %v1258 = vmul.f32 %v734, %v734
      %v1259 = vmul.f32 %v737, %v737
      %v1260 = vmul.f32 %v742, %v742
      %v1261 = vmul.f32 %v745, %v745
      %v1262 = vmul.f32 %v750, %v750
      %v1263 = vmul.f32 %v753, %v753
      %v1264 = vmul.f32 %v758, %v758
      %v1265 = vmul.f32 %v761, %v761
      %v1266 = vmul.f32 %v766, %v766
      %v1267 = vmul.f32 %v769, %v769
      %v1268 = vmul.f32 %v774, %v774
      %v1269 = vmul.f32 %v777, %v777
      %v1270 = vmul.f32 %v782, %v782
      %v1271 = vmul.f32 %v785, %v785
      %v1272 = vmul.f32 %v790, %v790
      %v1273 = vmul.f32 %v793, %v793
      %v1274 = vmul.f32 %v798, %v798
      %v1275 = vmul.f32 %v801, %v801
      %v1276 = vmul.f32 %v806, %v806
      %v1277 = vmul.f32 %v809, %v809
      %v1278 = vmul.f32 %v814, %v814
      %v1279 = vmul.f32 %v817, %v817
      %v1280 = vmul.f32 %v822, %v822
      %v1281 = vmul.f32 %v825, %v825
      %v1282 = vadd.f32 %v1218, %v1219
      %v1283 = vadd.f32 %v1282, %v1220
      %v1284 = vadd.f32 %v1283, %v1221
      %v1285 = vadd.f32 %v1284, %v1222
      %v1286 = vadd.f32 %v1285, %v1223
      %v1287 = vadd.f32 %v1286, %v1224
      %v1288 = vadd.f32 %v1287, %v1225
      %v1289 = vadd.f32 %v1288, %v1226
      %v1290 = vadd.f32 %v1289, %v1227
      %v1291 = vadd.f32 %v1290, %v1228
      %v1292 = vadd.f32 %v1291, %v1229
      %v1293 = vadd.f32 %v1292, %v1230
      %v1294 = vadd.f32 %v1293, %v1231
      %v1295 = vadd.f32 %v1294, %v1232
      %v1296 = vadd.f32 %v1295, %v1233
      %v1297 = vadd.f32 %v1296, %v1234
      %v1298 = vadd.f32 %v1297, %v1235
      %v1299 = vadd.f32 %v1298, %v1236
      %v1300 = vadd.f32 %v1299, %v1237
      %v1301 = vadd.f32 %v1300, %v1238
      %v1302 = vadd.f32 %v1301, %v1239
      %v1303 = vadd.f32 %v1302, %v1240
      %v1304 = vadd.f32 %v1303, %v1241
      %v1305 = vadd.f32 %v1304, %v1242
      %v1306 = vadd.f32 %v1305, %v1243
      %v1307 = vadd.f32 %v1306, %v1244
      %v1308 = vadd.f32 %v1307, %v1245
      %v1309 = vadd.f32 %v1308, %v1246
      %v1310 = vadd.f32 %v1309, %v1247
      %v1311 = vadd.f32 %v1310, %v1248
      %v1312 = vadd.f32 %v1311, %v1249
      %v1313 = vadd.f32 %v1312, %v1250
      %v1314 = vadd.f32 %v1313, %v1251
      %v1315 = vadd.f32 %v1314, %v1252
      %v1316 = vadd.f32 %v1315, %v1253
      %v1317 = vadd.f32 %v1316, %v1254
      %v1318 = vadd.f32 %v1317, %v1255
      %v1319 = vadd.f32 %v1318, %v1256
      %v1320 = vadd.f32 %v1319, %v1257
      %v1321 = vadd.f32 %v1320, %v1258
      %v1322 = vadd.f32 %v1321, %v1259
      %v1323 = vadd.f32 %v1322, %v1260
      %v1324 = vadd.f32 %v1323, %v1261
      %v1325 = vadd.f32 %v1324, %v1262
      %v1326 = vadd.f32 %v1325, %v1263
      %v1327 = vadd.f32 %v1326, %v1264
      %v1328 = vadd.f32 %v1327, %v1265
      %v1329 = vadd.f32 %v1328, %v1266
      %v1330 = vadd.f32 %v1329, %v1267
      %v1331 = vadd.f32 %v1330, %v1268
      %v1332 = vadd.f32 %v1331, %v1269
      %v1333 = vadd.f32 %v1332, %v1270
      %v1334 = vadd.f32 %v1333, %v1271
      %v1335 = vadd.f32 %v1334, %v1272
      %v1336 = vadd.f32 %v1335, %v1273
      %v1337 = vadd.f32 %v1336, %v1274
      %v1338 = vadd.f32 %v1337, %v1275
      %v1339 = vadd.f32 %v1338, %v1276
      %v1340 = vadd.f32 %v1339, %v1277
      %v1341 = vadd.f32 %v1340, %v1278
      %v1342 = vadd.f32 %v1341, %v1279
      %v1343 = vadd.f32 %v1342, %v1280
      %v1344 = vadd.f32 %v1343, %v1281
      %v1345 = vrot.slane %v1344, 4
      %v1346 = vadd.f32 %v1344, %v1345
      %v1347 = vrot.slane %v1346, 2
      %v1348 = vadd.f32 %v1346, %v1347
      %v1349 = vrot.slane %v1348, 1
      %v1350 = vadd.f32 %v1348, %v1349
      %1351 = vst [vmem:[%s217] sm:$0x1] %v1350
      %s1352 = smul.u32 64, %s16
      %p1353 = scmp.lt.s32.totalorder %s1352, 127
      %s1354 = scalar_select %p1353, %s1352, 127
      %s1355 = smul.addr %s1354, 4
      %s1356 = scalar_lea.vmem %s2, %s1355
      %p1357 = scmp.lt.s32.totalorder %s16, 1
      %s1358 = scalar_select %p1357, %s16, 1
      %s1359 = scalar_lea.vmem %s3, %s1358
      %p1360 = scmp.lt.s32.totalorder %s16, 1
      %s1361 = scalar_select %p1360, %s16, 1
      %s1362 = scalar_lea.vmem %s4, %s1361
      // Predicated region
      $region29: #{bottleneck_forward.4} parent=27 // pred_check
        %p1363 = pneg %p81
      $region30: #{bottleneck_forward.4} parent=27 // pred_check_branch
        %1365 = sbr.rel (%p1363) target = $region32
      $region31: #{bottleneck_forward.4} parent=27 // pred_region
        %s1366 = smul.u32 64, %s16
      $region32: #{bottleneck_forward.4} parent=27 // pred_fallthru
        _
      // Predicated region
      $region33: #{bottleneck_forward.4} parent=27 // pred_check
        %p1367 = pneg %p107
      $region34: #{bottleneck_forward.4} parent=27 // pred_check_branch
        %1369 = sbr.rel (%p1367) target = $region36
      $region35: #{bottleneck_forward.4} parent=27 // pred_region
        _
      $region36: #{bottleneck_forward.4} parent=27 // pred_fallthru
        _
      // Predicated region
      $region37: #{bottleneck_forward.4} parent=27 // pred_check
        %p1370 = pneg %p133
      $region38: #{bottleneck_forward.4} parent=27 // pred_check_branch
        %1372 = sbr.rel (%p1370) target = $region40
      $region39: #{bottleneck_forward.4} parent=27 // pred_region
        _
      $region40: #{bottleneck_forward.4} parent=27 // pred_fallthru
        _
    $region28: #{bottleneck_forward.4} parent=5 // pred_fallthru
      _
    %p1373 = scmp.le.s32.totalorder 2, %s11
    // Predicated region
    $region41: #{bottleneck_forward.4} parent=5 // pred_check
      %p1374 = pneg %p1373
    $region42: #{bottleneck_forward.4} parent=5 // pred_check_branch
      %1376 = sbr.rel (%p1374) target = $region44
    $region43: #{bottleneck_forward.4} parent=5 // pred_region
      %s1377 = ssub.s32 %s11, 2
      // Predicated region
      $region45: #{bottleneck_forward.4} parent=43 // pred_check
        %p1378 = pneg %p87
      $region46: #{bottleneck_forward.4} parent=43 // pred_check_branch
        %1380 = sbr.rel (%p1378) target = $region48
      $region47: #{bottleneck_forward.4} parent=43 // pred_region
        %s1381 = smul.u32 64, %s17
        %p1382 = scmp.lt.s32.totalorder %s1381, 127
        %s1383 = scalar_select %p1382, %s1381, 127
        %s1384 = smul.addr %s1383, 4
        %s1385 = scalar_lea.vmem %s2, %s1384
      $region48: #{bottleneck_forward.4} parent=43 // pred_fallthru
        _
      // Predicated region
      $region49: #{bottleneck_forward.4} parent=43 // pred_check
        %p1386 = pneg %p113
      $region50: #{bottleneck_forward.4} parent=43 // pred_check_branch
        %1388 = sbr.rel (%p1386) target = $region52
      $region51: #{bottleneck_forward.4} parent=43 // pred_region
        %p1389 = scmp.lt.s32.totalorder %s17, 1
        %s1390 = scalar_select %p1389, %s17, 1
        %s1391 = scalar_lea.vmem %s3, %s1390
      $region52: #{bottleneck_forward.4} parent=43 // pred_fallthru
        _
      // Predicated region
      $region53: #{bottleneck_forward.4} parent=43 // pred_check
        %p1392 = pneg %p139
      $region54: #{bottleneck_forward.4} parent=43 // pred_check_branch
        %1394 = sbr.rel (%p1392) target = $region56
      $region55: #{bottleneck_forward.4} parent=43 // pred_region
        %p1395 = scmp.lt.s32.totalorder %s17, 1
        %s1396 = scalar_select %p1395, %s17, 1
        %s1397 = scalar_lea.vmem %s4, %s1396
      $region56: #{bottleneck_forward.4} parent=43 // pred_fallthru
        _
    $region44: #{bottleneck_forward.4} parent=5 // pred_fallthru
      _
  $region6: #{bottleneck_forward.4} parent=0 // loop_footer
    %s15 = sadd.s32 1, %s11
  $region7: #{bottleneck_forward.4} parent=0 // loop_footer_branch
    %10 = sbr.rel target = $region3
  $region8: #{bottleneck_forward.4} parent=0 // loop_exit
    _

// kernel: bottleneck_forward.7
$region0: #{bottleneck_forward.7}
  #allocation0 [shape = 'u32[]', space=smem, size = 0x4, offset = 0x4, fixed_abs, tag = 'smem constant byte address 0x4 - core index']
  #allocation1 [shape = 'u32[144,128]{1,0:T(1,128)}', space=vmem, size = 0x12000, scoped, tag = 'internal scratch']
  %s0 = inlined_call_operand.vmem [shape: bf16[1024,128], index: 0, kind: input, shape index: {}]
  %s1 = inlined_call_operand.vmem [shape: bf16[1024,128], index: 1, kind: input, shape index: {}]
  %s2 = inlined_call_operand.vmem [shape: f32[1,128], index: 2, kind: input, shape index: {}]
  %s3 = inlined_call_operand.vmem [shape: f32[1,128], index: 3, kind: input, shape index: {}]
  %s4 = inlined_call_operand.hbm [shape: f32[1024,128], index: 4, kind: output, shape index: {}]
  %s5 = sld [smem:[#allocation0]]
  $region49: #{bottleneck_forward.7} parent=0
    _
  %s7 = ssub.s32 1, %s5
  %s8 = scalar_select 0, %s7, %s5
  $region1: #{bottleneck_forward.7} parent=0
    #allocation2 [shape = 'u8[524288]{0}', space=vmem, size = 0x80000, scoped, tag = 'output window, operand 0']
    #allocation3 [shape = 's32[2]{0}', space=sflag, size = 0x8, scoped, tag = 'scoped memory for bottleneck_forward.7']
    %9 = vsyncpa [#allocation3], 0
    %s10 = scalar_lea.sflag [#allocation3], 1
    %11 = vsyncpa %s10, 0
    loop: start=0, step=1, limit=4
    $region2: #{bottleneck_forward.7} parent=1 // loop_pre_header
      _
    $region3: #{bottleneck_forward.7} parent=1 // loop_header
      %s13 = sphi 0, %s17
      %p14 = scmp.ge.s32.totalorder %s13, 4
      %s23 = sphi 0, %s25
      %s26 = sphi 0, %s23
      %s27 = sphi 0, %s26
      %s43 = sphi 0, %s27
      %s49 = sphi 0, %s51
      %s52 = sphi 0, %s49
      %s53 = sphi 0, %s52
      %s69 = sphi 0, %s53
      %s73 = sphi 0, %s73
      %s75 = sphi 0, %s73
      %s76 = sphi 0, %s75
      %s90 = sphi 0, %s76
      %s94 = sphi 0, %s94
      %s96 = sphi 0, %s94
      %s97 = sphi 0, %s96
      %s111 = sphi 0, %s97
      %s117 = sphi 0, %s119
      %s120 = sphi 0, %s117
      %s121 = sphi 0, %s120
      %s137 = sphi 0, %s121
    $region4: #{bottleneck_forward.7} parent=1 // loop_header_branch
      %16 = sbr.rel (%p14) target = $region8
    $region5: #{bottleneck_forward.7} parent=1 // loop_body
      %s18 = ssub.s32 %s13, 1
      %s19 = ssub.s32 %s13, 2
      %s20 = sadd.s32 %s13, 1
      %s21 = ssub.s32 %s13, %s20
      %p22 = scmp.eq.s32.totalorder %s21, 0
      %s24 = sadd.s32 %s23, 1
      %s25 = scalar_select %p22, %s23, %s24
      %p28 = pneg %p22
      %p29 = scmp.eq.s32.totalorder %s13, 1
      %p30 = por %p28, %p29
      %p31 = scmp.ne.s32.totalorder %s23, %s26
      %p32 = scmp.eq.s32.totalorder %s13, 0
      %p33 = por %p31, %p32
      %p34 = scmp.ne.s32.totalorder %s23, %s26
      %p35 = scmp.eq.s32.totalorder %s18, 1
      %p36 = por %p34, %p35
      %p37 = scmp.ne.s32.totalorder %s26, %s27
      %p38 = scmp.eq.s32.totalorder %s18, 0
      %p39 = por %p37, %p38
      %p40 = scmp.ne.s32.totalorder %s26, %s27
      %p41 = scmp.eq.s32.totalorder %s19, 1
      %p42 = por %p40, %p41
      %p44 = scmp.ne.s32.totalorder %s27, %s43
      %p45 = scmp.eq.s32.totalorder %s19, 0
      %p46 = por %p44, %p45
      %s47 = ssub.s32 %s13, %s20
      %p48 = scmp.eq.s32.totalorder %s47, 0
      %s50 = sadd.s32 %s49, 1
      %s51 = scalar_select %p48, %s49, %s50
      %p54 = pneg %p48
      %p55 = scmp.eq.s32.totalorder %s13, 1
      %p56 = por %p54, %p55
      %p57 = scmp.ne.s32.totalorder %s49, %s52
      %p58 = scmp.eq.s32.totalorder %s13, 0
      %p59 = por %p57, %p58
      %p60 = scmp.ne.s32.totalorder %s49, %s52
      %p61 = scmp.eq.s32.totalorder %s18, 1
      %p62 = por %p60, %p61
      %p63 = scmp.ne.s32.totalorder %s52, %s53
      %p64 = scmp.eq.s32.totalorder %s18, 0
      %p65 = por %p63, %p64
      %p66 = scmp.ne.s32.totalorder %s52, %s53
      %p67 = scmp.eq.s32.totalorder %s19, 1
      %p68 = por %p66, %p67
      %p70 = scmp.ne.s32.totalorder %s53, %s69
      %p71 = scmp.eq.s32.totalorder %s19, 0
      %p72 = por %p70, %p71
      %s74 = sadd.s32 %s73, 1
      %p77 = scmp.eq.s32.totalorder %s13, 1
      %p78 = scmp.ne.s32.totalorder %s73, %s75
      %p79 = scmp.eq.s32.totalorder %s13, 0
      %p80 = por %p78, %p79
      %p81 = scmp.ne.s32.totalorder %s73, %s75
      %p82 = scmp.eq.s32.totalorder %s18, 1
      %p83 = por %p81, %p82
      %p84 = scmp.ne.s32.totalorder %s75, %s76
      %p85 = scmp.eq.s32.totalorder %s18, 0
      %p86 = por %p84, %p85
      %p87 = scmp.ne.s32.totalorder %s75, %s76
      %p88 = scmp.eq.s32.totalorder %s19, 1
      %p89 = por %p87, %p88
      %p91 = scmp.ne.s32.totalorder %s76, %s90
      %p92 = scmp.eq.s32.totalorder %s19, 0
      %p93 = por %p91, %p92
      %s95 = sadd.s32 %s94, 1
      %p98 = scmp.eq.s32.totalorder %s13, 1
      %p99 = scmp.ne.s32.totalorder %s94, %s96
      %p100 = scmp.eq.s32.totalorder %s13, 0
      %p101 = por %p99, %p100
      %p102 = scmp.ne.s32.totalorder %s94, %s96
      %p103 = scmp.eq.s32.totalorder %s18, 1
      %p104 = por %p102, %p103
      %p105 = scmp.ne.s32.totalorder %s96, %s97
      %p106 = scmp.eq.s32.totalorder %s18, 0
      %p107 = por %p105, %p106
      %p108 = scmp.ne.s32.totalorder %s96, %s97
      %p109 = scmp.eq.s32.totalorder %s19, 1
      %p110 = por %p108, %p109
      %p112 = scmp.ne.s32.totalorder %s97, %s111
      %p113 = scmp.eq.s32.totalorder %s19, 0
      %p114 = por %p112, %p113
      %s115 = ssub.s32 %s13, %s20
      %p116 = scmp.eq.s32.totalorder %s115, 0
      %s118 = sadd.s32 %s117, 1
      %s119 = scalar_select %p116, %s117, %s118
      %p122 = pneg %p116
      %p123 = scmp.eq.s32.totalorder %s13, 1
      %p124 = por %p122, %p123
      %p125 = scmp.ne.s32.totalorder %s117, %s120
      %p126 = scmp.eq.s32.totalorder %s13, 0
      %p127 = por %p125, %p126
      %p128 = scmp.ne.s32.totalorder %s117, %s120
      %p129 = scmp.eq.s32.totalorder %s18, 1
      %p130 = por %p128, %p129
      %p131 = scmp.ne.s32.totalorder %s120, %s121
      %p132 = scmp.eq.s32.totalorder %s18, 0
      %p133 = por %p131, %p132
      %p134 = scmp.ne.s32.totalorder %s120, %s121
      %p135 = scmp.eq.s32.totalorder %s19, 1
      %p136 = por %p134, %p135
      %p138 = scmp.ne.s32.totalorder %s121, %s137
      %p139 = scmp.eq.s32.totalorder %s19, 0
      %p140 = por %p138, %p139
      %p141 = scmp.le.s32.totalorder 1, %s13
      %p142 = scmp.lt.s32.totalorder %s13, 3
      %p143 = pnand %p141, %p142
      %p144 = pneg %p143
      // Predicated region
      $region9: #{bottleneck_forward.7} parent=5 // pred_check
        _
      $region10: #{bottleneck_forward.7} parent=5 // pred_check_branch
        %146 = sbr.rel (%p143) target = $region12
      $region11: #{bottleneck_forward.7} parent=5 // pred_region
        %s147 = ssub.s32 %s13, 1
        // Predicated region
        $region13: #{bottleneck_forward.7} parent=11 // pred_check
          %p148 = pneg %p86
        $region14: #{bottleneck_forward.7} parent=11 // pred_check_branch
          %150 = sbr.rel (%p148) target = $region16
        $region15: #{bottleneck_forward.7} parent=11 // pred_region
          _
        $region16: #{bottleneck_forward.7} parent=11 // pred_fallthru
          _
        // Predicated region
        $region17: #{bottleneck_forward.7} parent=11 // pred_check
          %p151 = pneg %p107
        $region18: #{bottleneck_forward.7} parent=11 // pred_check_branch
          %153 = sbr.rel (%p151) target = $region20
        $region19: #{bottleneck_forward.7} parent=11 // pred_region
          _
        $region20: #{bottleneck_forward.7} parent=11 // pred_fallthru
          _
      $region12: #{bottleneck_forward.7} parent=5 // pred_fallthru
        _
      %p154 = scmp.lt.s32.totalorder %s13, 2
      // Predicated region
      $region21: #{bottleneck_forward.7} parent=5 // pred_check
        %p155 = pneg %p154
      $region22: #{bottleneck_forward.7} parent=5 // pred_check_branch
        %157 = sbr.rel (%p155) target = $region24
      $region23: #{bottleneck_forward.7} parent=5 // pred_region
        // Predicated region
        $region25: #{bottleneck_forward.7} parent=23 // pred_check
          %p158 = pneg %p33
        $region26: #{bottleneck_forward.7} parent=23 // pred_check_branch
          %160 = sbr.rel (%p158) target = $region28
        $region27: #{bottleneck_forward.7} parent=23 // pred_region
          %s161 = smul.u32 64, %s13
          %p162 = scmp.lt.s32.totalorder %s161, 127
          %s163 = scalar_select %p162, %s161, 127
          %s164 = smul.addr %s163, 4
          %s165 = scalar_lea.vmem %s0, %s164
          %s166 = smul.u32 64, %s13
        $region28: #{bottleneck_forward.7} parent=23 // pred_fallthru
          _
        // Predicated region
        $region29: #{bottleneck_forward.7} parent=23 // pred_check
          %p167 = pneg %p59
        $region30: #{bottleneck_forward.7} parent=23 // pred_check_branch
          %169 = sbr.rel (%p167) target = $region32
        $region31: #{bottleneck_forward.7} parent=23 // pred_region
          %s170 = smul.u32 64, %s13
          %p171 = scmp.lt.s32.totalorder %s170, 127
          %s172 = scalar_select %p171, %s170, 127
          %s173 = smul.addr %s172, 4
          %s174 = scalar_lea.vmem %s1, %s173
          %s175 = smul.u32 64, %s13
        $region32: #{bottleneck_forward.7} parent=23 // pred_fallthru
          _
      $region24: #{bottleneck_forward.7} parent=5 // pred_fallthru
        _
      %p176 = scmp.le.s32.totalorder 1, %s13
      %p177 = scmp.lt.s32.totalorder %s13, 3
      %p178 = pnand %p176, %p177
      %p179 = pneg %p178
      // Predicated region
      $region33: #{bottleneck_forward.7} parent=5 // pred_check
        _
      $region34: #{bottleneck_forward.7} parent=5 // pred_check_branch
        %181 = sbr.rel (%p178) target = $region36
      $region35: #{bottleneck_forward.7} parent=5 // pred_region
        %s182 = ssub.s32 %s13, 1
        %s183 = smul.u32 64, %s18
        %p184 = scmp.lt.s32.totalorder %s183, 127
        %s185 = scalar_select %p184, %s183, 127
        %s186 = smul.addr %s185, 4
        %s187 = scalar_lea.vmem %s0, %s186
        %p188 = pneg %p39
        %p189 = pneg %p36
        %s190 = smul.u32 64, %s18
        %p191 = scmp.lt.s32.totalorder %s190, 127
        %s192 = scalar_select %p191, %s190, 127
        %s193 = smul.addr %s192, 4
        %s194 = scalar_lea.vmem %s1, %s193
        %p195 = pneg %p65
        %p196 = pneg %p62
        %p197 = pneg %p86
        %p198 = pneg %p83
        %p199 = pneg %p107
        %p200 = pneg %p104
        %p201 = pneg %p133
        %p202 = pneg %p130
        %s203 = sand.u32 %s120, 1
        %s204 = scalar_lea.sflag [#allocation3], %s203
        %s205 = sand.u32 %s120, 1
        %s206 = smul.addr %s205, 512
        %s207 = scalar_lea.vmem [#allocation2], %s206
        %s208 = smul.u32 64, %s18
        %p209 = scmp.lt.s32.totalorder %s208, 127
        %s210 = scalar_select %p209, %s208, 127
        %s211 = smul.addr %s210, 4
        %s212 = scalar_lea.vmem %s0, %s211
        %s213 = smul.u32 64, %s18
        %s214 = smul.u32 64, %s18
        %p215 = scmp.lt.s32.totalorder %s214, 127
        %s216 = scalar_select %p215, %s214, 127
        %s217 = smul.addr %s216, 4
        %s218 = scalar_lea.vmem %s1, %s217
        %s219 = smul.u32 64, %s18
        %s220 = smul.u32 64, %s18
        %v221 = vld [vmem:[%s212] sm:$0xf]
        %v222 = vld [vmem:[%s212 + $0x4] sm:$0xf]
        %v223 = vld [vmem:[%s212 + $0x8] sm:$0xf]
        %v224 = vld [vmem:[%s212 + $0xc] sm:$0xf]
        %v225 = vld [vmem:[%s212 + $0x10] sm:$0xf]
        %v226 = vld [vmem:[%s212 + $0x14] sm:$0xf]
        %v227 = vld [vmem:[%s212 + $0x18] sm:$0xf]
        %v228 = vld [vmem:[%s212 + $0x1c] sm:$0xf]
        %v229 = vld [vmem:[%s212 + $0x20] sm:$0xf]
        %v230 = vld [vmem:[%s212 + $0x24] sm:$0xf]
        %v231 = vld [vmem:[%s212 + $0x28] sm:$0xf]
        %v232 = vld [vmem:[%s212 + $0x2c] sm:$0xf]
        %v233 = vld [vmem:[%s212 + $0x30] sm:$0xf]
        %v234 = vld [vmem:[%s212 + $0x34] sm:$0xf]
        %v235 = vld [vmem:[%s212 + $0x38] sm:$0xf]
        %v236 = vld [vmem:[%s212 + $0x3c] sm:$0xf]
        %v237 = vld [vmem:[%s212 + $0x40] sm:$0xf]
        %v238 = vld [vmem:[%s212 + $0x44] sm:$0xf]
        %v239 = vld [vmem:[%s212 + $0x48] sm:$0xf]
        %v240 = vld [vmem:[%s212 + $0x4c] sm:$0xf]
        %v241 = vld [vmem:[%s212 + $0x50] sm:$0xf]
        %v242 = vld [vmem:[%s212 + $0x54] sm:$0xf]
        %v243 = vld [vmem:[%s212 + $0x58] sm:$0xf]
        %v244 = vld [vmem:[%s212 + $0x5c] sm:$0xf]
        %v245 = vld [vmem:[%s212 + $0x60] sm:$0xf]
        %v246 = vld [vmem:[%s212 + $0x64] sm:$0xf]
        %v247 = vld [vmem:[%s212 + $0x68] sm:$0xf]
        %v248 = vld [vmem:[%s212 + $0x6c] sm:$0xf]
        %v249 = vld [vmem:[%s212 + $0x70] sm:$0xf]
        %v250 = vld [vmem:[%s212 + $0x74] sm:$0xf]
        %v251 = vld [vmem:[%s212 + $0x78] sm:$0xf]
        %v252 = vld [vmem:[%s212 + $0x7c] sm:$0xf]
        %v253 = vld [vmem:[%s212 + $0x80] sm:$0xf]
        %v254 = vld [vmem:[%s212 + $0x84] sm:$0xf]
        %v255 = vld [vmem:[%s212 + $0x88] sm:$0xf]
        %v256 = vld [vmem:[%s212 + $0x8c] sm:$0xf]
        %v257 = vld [vmem:[%s212 + $0x90] sm:$0xf]
        %v258 = vld [vmem:[%s212 + $0x94] sm:$0xf]
        %v259 = vld [vmem:[%s212 + $0x98] sm:$0xf]
        %v260 = vld [vmem:[%s212 + $0x9c] sm:$0xf]
        %v261 = vld [vmem:[%s212 + $0xa0] sm:$0xf]
        %v262 = vld [vmem:[%s212 + $0xa4] sm:$0xf]
        %v263 = vld [vmem:[%s212 + $0xa8] sm:$0xf]
        %v264 = vld [vmem:[%s212 + $0xac] sm:$0xf]
        %v265 = vld [vmem:[%s212 + $0xb0] sm:$0xf]
        %v266 = vld [vmem:[%s212 + $0xb4] sm:$0xf]
        %v267 = vld [vmem:[%s212 + $0xb8] sm:$0xf]
        %v268 = vld [vmem:[%s212 + $0xbc] sm:$0xf]
        %v269 = vld [vmem:[%s212 + $0xc0] sm:$0xf]
        %v270 = vld [vmem:[%s212 + $0xc4] sm:$0xf]
        %v271 = vld [vmem:[%s212 + $0xc8] sm:$0xf]
        %v272 = vld [vmem:[%s212 + $0xcc] sm:$0xf]
        %v273 = vld [vmem:[%s212 + $0xd0] sm:$0xf]
        %v274 = vld [vmem:[%s212 + $0xd4] sm:$0xf]
        %v275 = vld [vmem:[%s212 + $0xd8] sm:$0xf]
        %v276 = vld [vmem:[%s212 + $0xdc] sm:$0xf]
        %v277 = vld [vmem:[%s212 + $0xe0] sm:$0xf]
        %v278 = vld [vmem:[%s212 + $0xe4] sm:$0xf]
        %v279 = vld [vmem:[%s212 + $0xe8] sm:$0xf]
        %v280 = vld [vmem:[%s212 + $0xec] sm:$0xf]
        %v281 = vld [vmem:[%s212 + $0xf0] sm:$0xf]
        %v282 = vld [vmem:[%s212 + $0xf4] sm:$0xf]
        %v283 = vld [vmem:[%s212 + $0xf8] sm:$0xf]
        %v284 = vld [vmem:[%s212 + $0xfc] sm:$0xf]
        %v285 = vunpack.c.l.bf16 %v221
        %v286 = vunpack.c.l.bf16 %v222
        %v287 = vunpack.c.l.bf16 %v223
        %v288 = vunpack.c.l.bf16 %v224
        %v289 = vunpack.c.l.bf16 %v225
        %v290 = vunpack.c.l.bf16 %v226
        %v291 = vunpack.c.l.bf16 %v227
        %v292 = vunpack.c.l.bf16 %v228
        %v293 = vunpack.c.l.bf16 %v229
        %v294 = vunpack.c.l.bf16 %v230
        %v295 = vunpack.c.l.bf16 %v231
        %v296 = vunpack.c.l.bf16 %v232
        %v297 = vunpack.c.l.bf16 %v233
        %v298 = vunpack.c.l.bf16 %v234
        %v299 = vunpack.c.l.bf16 %v235
        %v300 = vunpack.c.l.bf16 %v236
        %v301 = vunpack.c.l.bf16 %v237
        %v302 = vunpack.c.l.bf16 %v238
        %v303 = vunpack.c.l.bf16 %v239
        %v304 = vunpack.c.l.bf16 %v240
        %v305 = vunpack.c.l.bf16 %v241
        %v306 = vunpack.c.l.bf16 %v242
        %v307 = vunpack.c.l.bf16 %v243
        %v308 = vunpack.c.l.bf16 %v244
        %v309 = vunpack.c.l.bf16 %v245
        %v310 = vunpack.c.l.bf16 %v246
        %v311 = vunpack.c.l.bf16 %v247
        %v312 = vunpack.c.l.bf16 %v248
        %v313 = vunpack.c.l.bf16 %v249
        %v314 = vunpack.c.l.bf16 %v250
        %v315 = vunpack.c.l.bf16 %v251
        %v316 = vunpack.c.l.bf16 %v252
        %v317 = vunpack.c.l.bf16 %v253
        %v318 = vunpack.c.l.bf16 %v254
        %v319 = vunpack.c.l.bf16 %v255
        %v320 = vunpack.c.l.bf16 %v256
        %v321 = vunpack.c.l.bf16 %v257
        %v322 = vunpack.c.l.bf16 %v258
        %v323 = vunpack.c.l.bf16 %v259
        %v324 = vunpack.c.l.bf16 %v260
        %v325 = vunpack.c.l.bf16 %v261
        %v326 = vunpack.c.l.bf16 %v262
        %v327 = vunpack.c.l.bf16 %v263
        %v328 = vunpack.c.l.bf16 %v264
        %v329 = vunpack.c.l.bf16 %v265
        %v330 = vunpack.c.l.bf16 %v266
        %v331 = vunpack.c.l.bf16 %v267
        %v332 = vunpack.c.l.bf16 %v268
        %v333 = vunpack.c.l.bf16 %v269
        %v334 = vunpack.c.l.bf16 %v270
        %v335 = vunpack.c.l.bf16 %v271
        %v336 = vunpack.c.l.bf16 %v272
        %v337 = vunpack.c.l.bf16 %v273
        %v338 = vunpack.c.l.bf16 %v274
        %v339 = vunpack.c.l.bf16 %v275
        %v340 = vunpack.c.l.bf16 %v276
        %v341 = vunpack.c.l.bf16 %v277
        %v342 = vunpack.c.l.bf16 %v278
        %v343 = vunpack.c.l.bf16 %v279
        %v344 = vunpack.c.l.bf16 %v280
        %v345 = vunpack.c.l.bf16 %v281
        %v346 = vunpack.c.l.bf16 %v282
        %v347 = vunpack.c.l.bf16 %v283
        %v348 = vunpack.c.l.bf16 %v284
        %v349 = vld [vmem:[%s2] sm:$0x1]
        %v351 = vlaneseq
        %v352 = vshrl.u32 %v351, 7
        %v353 = vsub.s32 0, %v352
        %v354 = vrot.slane %v349, %v353
        %v356 = vmul.f32 %v285, %v354
        %v357 = vmul.f32 %v286, %v354
        %v358 = vmul.f32 %v287, %v354
        %v359 = vmul.f32 %v288, %v354
        %v360 = vmul.f32 %v289, %v354
        %v361 = vmul.f32 %v290, %v354
        %v362 = vmul.f32 %v291, %v354
        %v363 = vmul.f32 %v292, %v354
        %v364 = vmul.f32 %v293, %v354
        %v365 = vmul.f32 %v294, %v354
        %v366 = vmul.f32 %v295, %v354
        %v367 = vmul.f32 %v296, %v354
        %v368 = vmul.f32 %v297, %v354
        %v369 = vmul.f32 %v298, %v354
        %v370 = vmul.f32 %v299, %v354
        %v371 = vmul.f32 %v300, %v354
        %v372 = vmul.f32 %v301, %v354
        %v373 = vmul.f32 %v302, %v354
        %v374 = vmul.f32 %v303, %v354
        %v375 = vmul.f32 %v304, %v354
        %v376 = vmul.f32 %v305, %v354
        %v377 = vmul.f32 %v306, %v354
        %v378 = vmul.f32 %v307, %v354
        %v379 = vmul.f32 %v308, %v354
        %v380 = vmul.f32 %v309, %v354
        %v381 = vmul.f32 %v310, %v354
        %v382 = vmul.f32 %v311, %v354
        %v383 = vmul.f32 %v312, %v354
        %v384 = vmul.f32 %v313, %v354
        %v385 = vmul.f32 %v314, %v354
        %v386 = vmul.f32 %v315, %v354
        %v387 = vmul.f32 %v316, %v354
        %v388 = vmul.f32 %v317, %v354
        %v389 = vmul.f32 %v318, %v354
        %v390 = vmul.f32 %v319, %v354
        %v391 = vmul.f32 %v320, %v354
        %v392 = vmul.f32 %v321, %v354
        %v393 = vmul.f32 %v322, %v354
        %v394 = vmul.f32 %v323, %v354
        %v395 = vmul.f32 %v324, %v354
        %v396 = vmul.f32 %v325, %v354
        %v397 = vmul.f32 %v326, %v354
        %v398 = vmul.f32 %v327, %v354
        %v399 = vmul.f32 %v328, %v354
        %v400 = vmul.f32 %v329, %v354
        %v401 = vmul.f32 %v330, %v354
        %v402 = vmul.f32 %v331, %v354
        %v403 = vmul.f32 %v332, %v354
        %v404 = vmul.f32 %v333, %v354
        %v405 = vmul.f32 %v334, %v354
        %v406 = vmul.f32 %v335, %v354
        %v407 = vmul.f32 %v336, %v354
        %v408 = vmul.f32 %v337, %v354
        %v409 = vmul.f32 %v338, %v354
        %v410 = vmul.f32 %v339, %v354
        %v411 = vmul.f32 %v340, %v354
        %v412 = vmul.f32 %v341, %v354
        %v413 = vmul.f32 %v342, %v354
        %v414 = vmul.f32 %v343, %v354
        %v415 = vmul.f32 %v344, %v354
        %v416 = vmul.f32 %v345, %v354
        %v417 = vmul.f32 %v346, %v354
        %v418 = vmul.f32 %v347, %v354
        %v419 = vmul.f32 %v348, %v354
        %v420 = vld [vmem:[%s3] sm:$0x1]
        %v422 = vlaneseq
        %v423 = vshrl.u32 %v422, 7
        %v424 = vsub.s32 0, %v423
        %v425 = vrot.slane %v420, %v424
        %v427 = vadd.f32 %v356, %v425
        %v428 = vadd.f32 %v357, %v425
        %v429 = vadd.f32 %v358, %v425
        %v430 = vadd.f32 %v359, %v425
        %v431 = vadd.f32 %v360, %v425
        %v432 = vadd.f32 %v361, %v425
        %v433 = vadd.f32 %v362, %v425
        %v434 = vadd.f32 %v363, %v425
        %v435 = vadd.f32 %v364, %v425
        %v436 = vadd.f32 %v365, %v425
        %v437 = vadd.f32 %v366, %v425
        %v438 = vadd.f32 %v367, %v425
        %v439 = vadd.f32 %v368, %v425
        %v440 = vadd.f32 %v369, %v425
        %v441 = vadd.f32 %v370, %v425
        %v442 = vadd.f32 %v371, %v425
        %v443 = vadd.f32 %v372, %v425
        %v444 = vadd.f32 %v373, %v425
        %v445 = vadd.f32 %v374, %v425
        %v446 = vadd.f32 %v375, %v425
        %v447 = vadd.f32 %v376, %v425
        %v448 = vadd.f32 %v377, %v425
        %v449 = vadd.f32 %v378, %v425
        %v450 = vadd.f32 %v379, %v425
        %v451 = vadd.f32 %v380, %v425
        %v452 = vadd.f32 %v381, %v425
        %v453 = vadd.f32 %v382, %v425
        %v454 = vadd.f32 %v383, %v425
        %v455 = vadd.f32 %v384, %v425
        %v456 = vadd.f32 %v385, %v425
        %v457 = vadd.f32 %v386, %v425
        %v458 = vadd.f32 %v387, %v425
        %v459 = vadd.f32 %v388, %v425
        %v460 = vadd.f32 %v389, %v425
        %v461 = vadd.f32 %v390, %v425
        %v462 = vadd.f32 %v391, %v425
        %v463 = vadd.f32 %v392, %v425
        %v464 = vadd.f32 %v393, %v425
        %v465 = vadd.f32 %v394, %v425
        %v466 = vadd.f32 %v395, %v425
        %v467 = vadd.f32 %v396, %v425
        %v468 = vadd.f32 %v397, %v425
        %v469 = vadd.f32 %v398, %v425
        %v470 = vadd.f32 %v399, %v425
        %v471 = vadd.f32 %v400, %v425
        %v472 = vadd.f32 %v401, %v425
        %v473 = vadd.f32 %v402, %v425
        %v474 = vadd.f32 %v403, %v425
        %v475 = vadd.f32 %v404, %v425
        %v476 = vadd.f32 %v405, %v425
        %v477 = vadd.f32 %v406, %v425
        %v478 = vadd.f32 %v407, %v425
        %v479 = vadd.f32 %v408, %v425
        %v480 = vadd.f32 %v409, %v425
        %v481 = vadd.f32 %v410, %v425
        %v482 = vadd.f32 %v411, %v425
        %v483 = vadd.f32 %v412, %v425
        %v484 = vadd.f32 %v413, %v425
        %v485 = vadd.f32 %v414, %v425
        %v486 = vadd.f32 %v415, %v425
        %v487 = vadd.f32 %v416, %v425
        %v488 = vadd.f32 %v417, %v425
        %v489 = vadd.f32 %v418, %v425
        %v490 = vadd.f32 %v419, %v425
        %v491 = vld [vmem:[%s218] sm:$0xf]
        %v492 = vld [vmem:[%s218 + $0x4] sm:$0xf]
        %v493 = vld [vmem:[%s218 + $0x8] sm:$0xf]
        %v494 = vld [vmem:[%s218 + $0xc] sm:$0xf]
        %v495 = vld [vmem:[%s218 + $0x10] sm:$0xf]
        %v496 = vld [vmem:[%s218 + $0x14] sm:$0xf]
        %v497 = vld [vmem:[%s218 + $0x18] sm:$0xf]
        %v498 = vld [vmem:[%s218 + $0x1c] sm:$0xf]
        %v499 = vld [vmem:[%s218 + $0x20] sm:$0xf]
        %v500 = vld [vmem:[%s218 + $0x24] sm:$0xf]
        %v501 = vld [vmem:[%s218 + $0x28] sm:$0xf]
        %v502 = vld [vmem:[%s218 + $0x2c] sm:$0xf]
        %v503 = vld [vmem:[%s218 + $0x30] sm:$0xf]
        %v504 = vld [vmem:[%s218 + $0x34] sm:$0xf]
        %v505 = vld [vmem:[%s218 + $0x38] sm:$0xf]
        %v506 = vld [vmem:[%s218 + $0x3c] sm:$0xf]
        %v507 = vld [vmem:[%s218 + $0x40] sm:$0xf]
        %v508 = vld [vmem:[%s218 + $0x44] sm:$0xf]
        %v509 = vld [vmem:[%s218 + $0x48] sm:$0xf]
        %v510 = vld [vmem:[%s218 + $0x4c] sm:$0xf]
        %v511 = vld [vmem:[%s218 + $0x50] sm:$0xf]
        %v512 = vld [vmem:[%s218 + $0x54] sm:$0xf]
        %v513 = vld [vmem:[%s218 + $0x58] sm:$0xf]
        %v514 = vld [vmem:[%s218 + $0x5c] sm:$0xf]
        %v515 = vld [vmem:[%s218 + $0x60] sm:$0xf]
        %v516 = vld [vmem:[%s218 + $0x64] sm:$0xf]
        %v517 = vld [vmem:[%s218 + $0x68] sm:$0xf]
        %v518 = vld [vmem:[%s218 + $0x6c] sm:$0xf]
        %v519 = vld [vmem:[%s218 + $0x70] sm:$0xf]
        %v520 = vld [vmem:[%s218 + $0x74] sm:$0xf]
        %v521 = vld [vmem:[%s218 + $0x78] sm:$0xf]
        %v522 = vld [vmem:[%s218 + $0x7c] sm:$0xf]
        %v523 = vld [vmem:[%s218 + $0x80] sm:$0xf]
        %v524 = vld [vmem:[%s218 + $0x84] sm:$0xf]
        %v525 = vld [vmem:[%s218 + $0x88] sm:$0xf]
        %v526 = vld [vmem:[%s218 + $0x8c] sm:$0xf]
        %v527 = vld [vmem:[%s218 + $0x90] sm:$0xf]
        %v528 = vld [vmem:[%s218 + $0x94] sm:$0xf]
        %v529 = vld [vmem:[%s218 + $0x98] sm:$0xf]
        %v530 = vld [vmem:[%s218 + $0x9c] sm:$0xf]
        %v531 = vld [vmem:[%s218 + $0xa0] sm:$0xf]
        %v532 = vld [vmem:[%s218 + $0xa4] sm:$0xf]
        %v533 = vld [vmem:[%s218 + $0xa8] sm:$0xf]
        %v534 = vld [vmem:[%s218 + $0xac] sm:$0xf]
        %v535 = vld [vmem:[%s218 + $0xb0] sm:$0xf]
        %v536 = vld [vmem:[%s218 + $0xb4] sm:$0xf]
        %v537 = vld [vmem:[%s218 + $0xb8] sm:$0xf]
        %v538 = vld [vmem:[%s218 + $0xbc] sm:$0xf]
        %v539 = vld [vmem:[%s218 + $0xc0] sm:$0xf]
        %v540 = vld [vmem:[%s218 + $0xc4] sm:$0xf]
        %v541 = vld [vmem:[%s218 + $0xc8] sm:$0xf]
        %v542 = vld [vmem:[%s218 + $0xcc] sm:$0xf]
        %v543 = vld [vmem:[%s218 + $0xd0] sm:$0xf]
        %v544 = vld [vmem:[%s218 + $0xd4] sm:$0xf]
        %v545 = vld [vmem:[%s218 + $0xd8] sm:$0xf]
        %v546 = vld [vmem:[%s218 + $0xdc] sm:$0xf]
        %v547 = vld [vmem:[%s218 + $0xe0] sm:$0xf]
        %v548 = vld [vmem:[%s218 + $0xe4] sm:$0xf]
        %v549 = vld [vmem:[%s218 + $0xe8] sm:$0xf]
        %v550 = vld [vmem:[%s218 + $0xec] sm:$0xf]
        %v551 = vld [vmem:[%s218 + $0xf0] sm:$0xf]
        %v552 = vld [vmem:[%s218 + $0xf4] sm:$0xf]
        %v553 = vld [vmem:[%s218 + $0xf8] sm:$0xf]
        %v554 = vld [vmem:[%s218 + $0xfc] sm:$0xf]
        %v555 = vunpack.c.l.bf16 %v491
        %v556 = vunpack.c.l.bf16 %v492
        %v557 = vunpack.c.l.bf16 %v493
        %v558 = vunpack.c.l.bf16 %v494
        %v559 = vunpack.c.l.bf16 %v495
        %v560 = vunpack.c.l.bf16 %v496
        %v561 = vunpack.c.l.bf16 %v497
        %v562 = vunpack.c.l.bf16 %v498
        %v563 = vunpack.c.l.bf16 %v499
        %v564 = vunpack.c.l.bf16 %v500
        %v565 = vunpack.c.l.bf16 %v501
        %v566 = vunpack.c.l.bf16 %v502
        %v567 = vunpack.c.l.bf16 %v503
        %v568 = vunpack.c.l.bf16 %v504
        %v569 = vunpack.c.l.bf16 %v505
        %v570 = vunpack.c.l.bf16 %v506
        %v571 = vunpack.c.l.bf16 %v507
        %v572 = vunpack.c.l.bf16 %v508
        %v573 = vunpack.c.l.bf16 %v509
        %v574 = vunpack.c.l.bf16 %v510
        %v575 = vunpack.c.l.bf16 %v511
        %v576 = vunpack.c.l.bf16 %v512
        %v577 = vunpack.c.l.bf16 %v513
        %v578 = vunpack.c.l.bf16 %v514
        %v579 = vunpack.c.l.bf16 %v515
        %v580 = vunpack.c.l.bf16 %v516
        %v581 = vunpack.c.l.bf16 %v517
        %v582 = vunpack.c.l.bf16 %v518
        %v583 = vunpack.c.l.bf16 %v519
        %v584 = vunpack.c.l.bf16 %v520
        %v585 = vunpack.c.l.bf16 %v521
        %v586 = vunpack.c.l.bf16 %v522
        %v587 = vunpack.c.l.bf16 %v523
        %v588 = vunpack.c.l.bf16 %v524
        %v589 = vunpack.c.l.bf16 %v525
        %v590 = vunpack.c.l.bf16 %v526
        %v591 = vunpack.c.l.bf16 %v527
        %v592 = vunpack.c.l.bf16 %v528
        %v593 = vunpack.c.l.bf16 %v529
        %v594 = vunpack.c.l.bf16 %v530
        %v595 = vunpack.c.l.bf16 %v531
        %v596 = vunpack.c.l.bf16 %v532
        %v597 = vunpack.c.l.bf16 %v533
        %v598 = vunpack.c.l.bf16 %v534
        %v599 = vunpack.c.l.bf16 %v535
        %v600 = vunpack.c.l.bf16 %v536
        %v601 = vunpack.c.l.bf16 %v537
        %v602 = vunpack.c.l.bf16 %v538
        %v603 = vunpack.c.l.bf16 %v539
        %v604 = vunpack.c.l.bf16 %v540
        %v605 = vunpack.c.l.bf16 %v541
        %v606 = vunpack.c.l.bf16 %v542
        %v607 = vunpack.c.l.bf16 %v543
        %v608 = vunpack.c.l.bf16 %v544
        %v609 = vunpack.c.l.bf16 %v545
        %v610 = vunpack.c.l.bf16 %v546
        %v611 = vunpack.c.l.bf16 %v547
        %v612 = vunpack.c.l.bf16 %v548
        %v613 = vunpack.c.l.bf16 %v549
        %v614 = vunpack.c.l.bf16 %v550
        %v615 = vunpack.c.l.bf16 %v551
        %v616 = vunpack.c.l.bf16 %v552
        %v617 = vunpack.c.l.bf16 %v553
        %v618 = vunpack.c.l.bf16 %v554
        %v619 = vadd.f32 %v427, %v555
        %v620 = vadd.f32 %v428, %v556
        %v621 = vadd.f32 %v429, %v557
        %v622 = vadd.f32 %v430, %v558
        %v623 = vadd.f32 %v431, %v559
        %v624 = vadd.f32 %v432, %v560
        %v625 = vadd.f32 %v433, %v561
        %v626 = vadd.f32 %v434, %v562
        %v627 = vadd.f32 %v435, %v563
        %v628 = vadd.f32 %v436, %v564
        %v629 = vadd.f32 %v437, %v565
        %v630 = vadd.f32 %v438, %v566
        %v631 = vadd.f32 %v439, %v567
        %v632 = vadd.f32 %v440, %v568
        %v633 = vadd.f32 %v441, %v569
        %v634 = vadd.f32 %v442, %v570
        %v635 = vadd.f32 %v443, %v571
        %v636 = vadd.f32 %v444, %v572
        %v637 = vadd.f32 %v445, %v573
        %v638 = vadd.f32 %v446, %v574
        %v639 = vadd.f32 %v447, %v575
        %v640 = vadd.f32 %v448, %v576
        %v641 = vadd.f32 %v449, %v577
        %v642 = vadd.f32 %v450, %v578
        %v643 = vadd.f32 %v451, %v579
        %v644 = vadd.f32 %v452, %v580
        %v645 = vadd.f32 %v453, %v581
        %v646 = vadd.f32 %v454, %v582
        %v647 = vadd.f32 %v455, %v583
        %v648 = vadd.f32 %v456, %v584
        %v649 = vadd.f32 %v457, %v585
        %v650 = vadd.f32 %v458, %v586
        %v651 = vadd.f32 %v459, %v587
        %v652 = vadd.f32 %v460, %v588
        %v653 = vadd.f32 %v461, %v589
        %v654 = vadd.f32 %v462, %v590
        %v655 = vadd.f32 %v463, %v591
        %v656 = vadd.f32 %v464, %v592
        %v657 = vadd.f32 %v465, %v593
        %v658 = vadd.f32 %v466, %v594
        %v659 = vadd.f32 %v467, %v595
        %v660 = vadd.f32 %v468, %v596
        %v661 = vadd.f32 %v469, %v597
        %v662 = vadd.f32 %v470, %v598
        %v663 = vadd.f32 %v471, %v599
        %v664 = vadd.f32 %v472, %v600
        %v665 = vadd.f32 %v473, %v601
        %v666 = vadd.f32 %v474, %v602
        %v667 = vadd.f32 %v475, %v603
        %v668 = vadd.f32 %v476, %v604
        %v669 = vadd.f32 %v477, %v605
        %v670 = vadd.f32 %v478, %v606
        %v671 = vadd.f32 %v479, %v607
        %v672 = vadd.f32 %v480, %v608
        %v673 = vadd.f32 %v481, %v609
        %v674 = vadd.f32 %v482, %v610
        %v675 = vadd.f32 %v483, %v611
        %v676 = vadd.f32 %v484, %v612
        %v677 = vadd.f32 %v485, %v613
        %v678 = vadd.f32 %v486, %v614
        %v679 = vadd.f32 %v487, %v615
        %v680 = vadd.f32 %v488, %v616
        %v681 = vadd.f32 %v489, %v617
        %v682 = vadd.f32 %v490, %v618
        %v683 = vmax.f32 %v619, 0.0
        %v684 = vmax.f32 %v620, 0.0
        %v685 = vmax.f32 %v621, 0.0
        %v686 = vmax.f32 %v622, 0.0
        %v687 = vmax.f32 %v623, 0.0
        %v688 = vmax.f32 %v624, 0.0
        %v689 = vmax.f32 %v625, 0.0
        %v690 = vmax.f32 %v626, 0.0
        %v691 = vmax.f32 %v627, 0.0
        %v692 = vmax.f32 %v628, 0.0
        %v693 = vmax.f32 %v629, 0.0
        %v694 = vmax.f32 %v630, 0.0
        %v695 = vmax.f32 %v631, 0.0
        %v696 = vmax.f32 %v632, 0.0
        %v697 = vmax.f32 %v633, 0.0
        %v698 = vmax.f32 %v634, 0.0
        %v699 = vmax.f32 %v635, 0.0
        %v700 = vmax.f32 %v636, 0.0
        %v701 = vmax.f32 %v637, 0.0
        %v702 = vmax.f32 %v638, 0.0
        %v703 = vmax.f32 %v639, 0.0
        %v704 = vmax.f32 %v640, 0.0
        %v705 = vmax.f32 %v641, 0.0
        %v706 = vmax.f32 %v642, 0.0
        %v707 = vmax.f32 %v643, 0.0
        %v708 = vmax.f32 %v644, 0.0
        %v709 = vmax.f32 %v645, 0.0
        %v710 = vmax.f32 %v646, 0.0
        %v711 = vmax.f32 %v647, 0.0
        %v712 = vmax.f32 %v648, 0.0
        %v713 = vmax.f32 %v649, 0.0
        %v714 = vmax.f32 %v650, 0.0
        %v715 = vmax.f32 %v651, 0.0
        %v716 = vmax.f32 %v652, 0.0
        %v717 = vmax.f32 %v653, 0.0
        %v718 = vmax.f32 %v654, 0.0
        %v719 = vmax.f32 %v655, 0.0
        %v720 = vmax.f32 %v656, 0.0
        %v721 = vmax.f32 %v657, 0.0
        %v722 = vmax.f32 %v658, 0.0
        %v723 = vmax.f32 %v659, 0.0
        %v724 = vmax.f32 %v660, 0.0
        %v725 = vmax.f32 %v661, 0.0
        %v726 = vmax.f32 %v662, 0.0
        %v727 = vmax.f32 %v663, 0.0
        %v728 = vmax.f32 %v664, 0.0
        %v729 = vmax.f32 %v665, 0.0
        %v730 = vmax.f32 %v666, 0.0
        %v731 = vmax.f32 %v667, 0.0
        %v732 = vmax.f32 %v668, 0.0
        %v733 = vmax.f32 %v669, 0.0
        %v734 = vmax.f32 %v670, 0.0
        %v735 = vmax.f32 %v671, 0.0
        %v736 = vmax.f32 %v672, 0.0
        %v737 = vmax.f32 %v673, 0.0
        %v738 = vmax.f32 %v674, 0.0
        %v739 = vmax.f32 %v675, 0.0
        %v740 = vmax.f32 %v676, 0.0
        %v741 = vmax.f32 %v677, 0.0
        %v742 = vmax.f32 %v678, 0.0
        %v743 = vmax.f32 %v679, 0.0
        %v744 = vmax.f32 %v680, 0.0
        %v745 = vmax.f32 %v681, 0.0
        %v746 = vmax.f32 %v682, 0.0
        %747 = vst [vmem:[%s207] sm:$0xff] %v683
        %748 = vst [vmem:[%s207 + $0x8] sm:$0xff] %v684
        %749 = vst [vmem:[%s207 + $0x10] sm:$0xff] %v685
        %750 = vst [vmem:[%s207 + $0x18] sm:$0xff] %v686
        %751 = vst [vmem:[%s207 + $0x20] sm:$0xff] %v687
        %752 = vst [vmem:[%s207 + $0x28] sm:$0xff] %v688
        %753 = vst [vmem:[%s207 + $0x30] sm:$0xff] %v689
        %754 = vst [vmem:[%s207 + $0x38] sm:$0xff] %v690
        %755 = vst [vmem:[%s207 + $0x40] sm:$0xff] %v691
        %756 = vst [vmem:[%s207 + $0x48] sm:$0xff] %v692
        %757 = vst [vmem:[%s207 + $0x50] sm:$0xff] %v693
        %758 = vst [vmem:[%s207 + $0x58] sm:$0xff] %v694
        %759 = vst [vmem:[%s207 + $0x60] sm:$0xff] %v695
        %760 = vst [vmem:[%s207 + $0x68] sm:$0xff] %v696
        %761 = vst [vmem:[%s207 + $0x70] sm:$0xff] %v697
        %762 = vst [vmem:[%s207 + $0x78] sm:$0xff] %v698
        %763 = vst [vmem:[%s207 + $0x80] sm:$0xff] %v699
        %764 = vst [vmem:[%s207 + $0x88] sm:$0xff] %v700
        %765 = vst [vmem:[%s207 + $0x90] sm:$0xff] %v701
        %766 = vst [vmem:[%s207 + $0x98] sm:$0xff] %v702
        %767 = vst [vmem:[%s207 + $0xa0] sm:$0xff] %v703
        %768 = vst [vmem:[%s207 + $0xa8] sm:$0xff] %v704
        %769 = vst [vmem:[%s207 + $0xb0] sm:$0xff] %v705
        %770 = vst [vmem:[%s207 + $0xb8] sm:$0xff] %v706
        %771 = vst [vmem:[%s207 + $0xc0] sm:$0xff] %v707
        %772 = vst [vmem:[%s207 + $0xc8] sm:$0xff] %v708
        %773 = vst [vmem:[%s207 + $0xd0] sm:$0xff] %v709
        %774 = vst [vmem:[%s207 + $0xd8] sm:$0xff] %v710
        %775 = vst [vmem:[%s207 + $0xe0] sm:$0xff] %v711
        %776 = vst [vmem:[%s207 + $0xe8] sm:$0xff] %v712
        %777 = vst [vmem:[%s207 + $0xf0] sm:$0xff] %v713
        %778 = vst [vmem:[%s207 + $0xf8] sm:$0xff] %v714
        %779 = vst [vmem:[%s207 + $0x100] sm:$0xff] %v715
        %780 = vst [vmem:[%s207 + $0x108] sm:$0xff] %v716
        %781 = vst [vmem:[%s207 + $0x110] sm:$0xff] %v717
        %782 = vst [vmem:[%s207 + $0x118] sm:$0xff] %v718
        %783 = vst [vmem:[%s207 + $0x120] sm:$0xff] %v719
        %784 = vst [vmem:[%s207 + $0x128] sm:$0xff] %v720
        %785 = vst [vmem:[%s207 + $0x130] sm:$0xff] %v721
        %786 = vst [vmem:[%s207 + $0x138] sm:$0xff] %v722
        %787 = vst [vmem:[%s207 + $0x140] sm:$0xff] %v723
        %788 = vst [vmem:[%s207 + $0x148] sm:$0xff] %v724
        %789 = vst [vmem:[%s207 + $0x150] sm:$0xff] %v725
        %790 = vst [vmem:[%s207 + $0x158] sm:$0xff] %v726
        %791 = vst [vmem:[%s207 + $0x160] sm:$0xff] %v727
        %792 = vst [vmem:[%s207 + $0x168] sm:$0xff] %v728
        %793 = vst [vmem:[%s207 + $0x170] sm:$0xff] %v729
        %794 = vst [vmem:[%s207 + $0x178] sm:$0xff] %v730
        %795 = vst [vmem:[%s207 + $0x180] sm:$0xff] %v731
        %796 = vst [vmem:[%s207 + $0x188] sm:$0xff] %v732
        %797 = vst [vmem:[%s207 + $0x190] sm:$0xff] %v733
        %798 = vst [vmem:[%s207 + $0x198] sm:$0xff] %v734
        %799 = vst [vmem:[%s207 + $0x1a0] sm:$0xff] %v735
        %800 = vst [vmem:[%s207 + $0x1a8] sm:$0xff] %v736
        %801 = vst [vmem:[%s207 + $0x1b0] sm:$0xff] %v737
        %802 = vst [vmem:[%s207 + $0x1b8] sm:$0xff] %v738
        %803 = vst [vmem:[%s207 + $0x1c0] sm:$0xff] %v739
        %804 = vst [vmem:[%s207 + $0x1c8] sm:$0xff] %v740
        %805 = vst [vmem:[%s207 + $0x1d0] sm:$0xff] %v741
        %806 = vst [vmem:[%s207 + $0x1d8] sm:$0xff] %v742
        %807 = vst [vmem:[%s207 + $0x1e0] sm:$0xff] %v743
        %808 = vst [vmem:[%s207 + $0x1e8] sm:$0xff] %v744
        %809 = vst [vmem:[%s207 + $0x1f0] sm:$0xff] %v745
        %810 = vst [vmem:[%s207 + $0x1f8] sm:$0xff] %v746
        %s811 = sand.u32 %s120, 1
        %s812 = scalar_lea.sflag [#allocation3], %s811
        %s813 = sand.u32 %s120, 1
        %s814 = smul.addr %s813, 512
        %s815 = scalar_lea.vmem [#allocation2], %s814
        // Predicated region
        $region37: #{bottleneck_forward.7} parent=35 // pred_check
          %p816 = pneg %p130
        $region38: #{bottleneck_forward.7} parent=35 // pred_check_branch
          %818 = sbr.rel (%p816) target = $region40
        $region39: #{bottleneck_forward.7} parent=35 // pred_region
          %s819 = smul.u32 64, %s18
          %s821 = ssub.s32 8192, 8192
          %822 = vsyncadd %s812, %s821
          %s823 = smul.addr %s819, 128
          %s824 = scalar_lea.hbm %s4, %s823
          %s825 = sshll.u32 %s815, 4
          %s826 = int_to_ptr.vmem [resolvable:$true] %s825
          %831 = dma.vmem_to_hbm [thread:$0]  %s826, 8192, %s824, %s812, 128, 128, 8
        $region40: #{bottleneck_forward.7} parent=35 // pred_fallthru
          _
      $region36: #{bottleneck_forward.7} parent=5 // pred_fallthru
        _
      %p832 = scmp.le.s32.totalorder 2, %s13
      // Predicated region
      $region41: #{bottleneck_forward.7} parent=5 // pred_check
        %p833 = pneg %p832
      $region42: #{bottleneck_forward.7} parent=5 // pred_check_branch
        %835 = sbr.rel (%p833) target = $region44
      $region43: #{bottleneck_forward.7} parent=5 // pred_region
        %s836 = ssub.s32 %s13, 2
        // Predicated region
        $region45: #{bottleneck_forward.7} parent=43 // pred_check
          %p837 = pneg %p136
        $region46: #{bottleneck_forward.7} parent=43 // pred_check_branch
          %839 = sbr.rel (%p837) target = $region48
        $region47: #{bottleneck_forward.7} parent=43 // pred_region
          %s840 = sand.u32 %s121, 1
          %s841 = scalar_lea.sflag [#allocation3], %s840
          %s842 = sand.u32 %s121, 1
          %s843 = smul.addr %s842, 512
          %s844 = scalar_lea.vmem [#allocation2], %s843
          %845 = dma.done %s841, 8192
        $region48: #{bottleneck_forward.7} parent=43 // pred_fallthru
          _
      $region44: #{bottleneck_forward.7} parent=5 // pred_fallthru
        _
    $region6: #{bottleneck_forward.7} parent=1 // loop_footer
      %s17 = sadd.s32 1, %s13
    $region7: #{bottleneck_forward.7} parent=1 // loop_footer_branch
      %12 = sbr.rel target = $region3
    $region8: #{bottleneck_forward.7} parent=1 // loop_exit
      _
    %846 = vsyncpa [#allocation3], 1
    %s847 = scalar_lea.sflag [#allocation3], 1
    %848 = vsyncpa %s847, 1

// kernel: bottleneck_forward.6
$region0: #{bottleneck_forward.6}
  #allocation0 [shape = 'u32[]', space=smem, size = 0x4, offset = 0x4, fixed_abs, tag = 'smem constant byte address 0x4 - core index']
  #allocation1 [shape = 'u32[144,128]{1,0:T(1,128)}', space=vmem, size = 0x12000, scoped, tag = 'internal scratch']
  %s0 = inlined_call_operand.vmem [shape: bf16[1024,128], index: 0, kind: input, shape index: {}]
  %s1 = inlined_call_operand.vmem [shape: f32[1,128], index: 1, kind: input, shape index: {}]
  %s2 = inlined_call_operand.vmem [shape: f32[1,128], index: 2, kind: input, shape index: {}]
  %s3 = inlined_call_operand.vmem [shape: bf16[128,128], index: 3, kind: input, shape index: {}]
  %s4 = inlined_call_operand.vmem [shape: bf16[1024,128], index: 4, kind: output, shape index: {0}]
  %s5 = inlined_call_operand.vmem [shape: f32[2,1,128], index: 5, kind: output, shape index: {1}]
  %s6 = inlined_call_operand.vmem [shape: f32[2,1,128], index: 6, kind: output, shape index: {2}]
  %7 = xla_tuple %s4, %s5, %s6
  %s8 = sld [smem:[#allocation0]]
  $region65: #{bottleneck_forward.6} parent=0
    _
  %s10 = ssub.s32 1, %s8
  %s11 = scalar_select 0, %s10, %s8
  loop: start=0, step=1, limit=4
  $region2: #{bottleneck_forward.6} parent=0 // loop_pre_header
    _
  $region3: #{bottleneck_forward.6} parent=0 // loop_header
    %s13 = sphi 0, %s17
    %p14 = scmp.ge.s32.totalorder %s13, 4
    %s23 = sphi 0, %s25
    %s26 = sphi 0, %s23
    %s27 = sphi 0, %s26
    %s43 = sphi 0, %s27
    %s47 = sphi 0, %s47
    %s49 = sphi 0, %s47
    %s50 = sphi 0, %s49
    %s64 = sphi 0, %s50
    %s68 = sphi 0, %s68
    %s70 = sphi 0, %s68
    %s71 = sphi 0, %s70
    %s85 = sphi 0, %s71
    %s89 = sphi 0, %s89
    %s91 = sphi 0, %s89
    %s92 = sphi 0, %s91
    %s106 = sphi 0, %s92
    %s112 = sphi 0, %s114
    %s115 = sphi 0, %s112
    %s116 = sphi 0, %s115
    %s132 = sphi 0, %s116
    %s138 = sphi 0, %s140
    %s141 = sphi 0, %s138
    %s142 = sphi 0, %s141
    %s158 = sphi 0, %s142
    %s164 = sphi 0, %s166
    %s167 = sphi 0, %s164
    %s168 = sphi 0, %s167
    %s184 = sphi 0, %s168
  $region4: #{bottleneck_forward.6} parent=0 // loop_header_branch
    %16 = sbr.rel (%p14) target = $region8
  $region5: #{bottleneck_forward.6} parent=0 // loop_body
    %s18 = ssub.s32 %s13, 1
    %s19 = ssub.s32 %s13, 2
    %s20 = sadd.s32 %s13, 1
    %s21 = ssub.s32 %s13, %s20
    %p22 = scmp.eq.s32.totalorder %s21, 0
    %s24 = sadd.s32 %s23, 1
    %s25 = scalar_select %p22, %s23, %s24
    %p28 = pneg %p22
    %p29 = scmp.eq.s32.totalorder %s13, 1
    %p30 = por %p28, %p29
    %p31 = scmp.ne.s32.totalorder %s23, %s26
    %p32 = scmp.eq.s32.totalorder %s13, 0
    %p33 = por %p31, %p32
    %p34 = scmp.ne.s32.totalorder %s23, %s26
    %p35 = scmp.eq.s32.totalorder %s18, 1
    %p36 = por %p34, %p35
    %p37 = scmp.ne.s32.totalorder %s26, %s27
    %p38 = scmp.eq.s32.totalorder %s18, 0
    %p39 = por %p37, %p38
    %p40 = scmp.ne.s32.totalorder %s26, %s27
    %p41 = scmp.eq.s32.totalorder %s19, 1
    %p42 = por %p40, %p41
    %p44 = scmp.ne.s32.totalorder %s27, %s43
    %p45 = scmp.eq.s32.totalorder %s19, 0
    %p46 = por %p44, %p45
    %s48 = sadd.s32 %s47, 1
    %p51 = scmp.eq.s32.totalorder %s13, 1
    %p52 = scmp.ne.s32.totalorder %s47, %s49
    %p53 = scmp.eq.s32.totalorder %s13, 0
    %p54 = por %p52, %p53
    %p55 = scmp.ne.s32.totalorder %s47, %s49
    %p56 = scmp.eq.s32.totalorder %s18, 1
    %p57 = por %p55, %p56
    %p58 = scmp.ne.s32.totalorder %s49, %s50
    %p59 = scmp.eq.s32.totalorder %s18, 0
    %p60 = por %p58, %p59
    %p61 = scmp.ne.s32.totalorder %s49, %s50
    %p62 = scmp.eq.s32.totalorder %s19, 1
    %p63 = por %p61, %p62
    %p65 = scmp.ne.s32.totalorder %s50, %s64
    %p66 = scmp.eq.s32.totalorder %s19, 0
    %p67 = por %p65, %p66
    %s69 = sadd.s32 %s68, 1
    %p72 = scmp.eq.s32.totalorder %s13, 1
    %p73 = scmp.ne.s32.totalorder %s68, %s70
    %p74 = scmp.eq.s32.totalorder %s13, 0
    %p75 = por %p73, %p74
    %p76 = scmp.ne.s32.totalorder %s68, %s70
    %p77 = scmp.eq.s32.totalorder %s18, 1
    %p78 = por %p76, %p77
    %p79 = scmp.ne.s32.totalorder %s70, %s71
    %p80 = scmp.eq.s32.totalorder %s18, 0
    %p81 = por %p79, %p80
    %p82 = scmp.ne.s32.totalorder %s70, %s71
    %p83 = scmp.eq.s32.totalorder %s19, 1
    %p84 = por %p82, %p83
    %p86 = scmp.ne.s32.totalorder %s71, %s85
    %p87 = scmp.eq.s32.totalorder %s19, 0
    %p88 = por %p86, %p87
    %s90 = sadd.s32 %s89, 1
    %p93 = scmp.eq.s32.totalorder %s13, 1
    %p94 = scmp.ne.s32.totalorder %s89, %s91
    %p95 = scmp.eq.s32.totalorder %s13, 0
    %p96 = por %p94, %p95
    %p97 = scmp.ne.s32.totalorder %s89, %s91
    %p98 = scmp.eq.s32.totalorder %s18, 1
    %p99 = por %p97, %p98
    %p100 = scmp.ne.s32.totalorder %s91, %s92
    %p101 = scmp.eq.s32.totalorder %s18, 0
    %p102 = por %p100, %p101
    %p103 = scmp.ne.s32.totalorder %s91, %s92
    %p104 = scmp.eq.s32.totalorder %s19, 1
    %p105 = por %p103, %p104
    %p107 = scmp.ne.s32.totalorder %s92, %s106
    %p108 = scmp.eq.s32.totalorder %s19, 0
    %p109 = por %p107, %p108
    %s110 = ssub.s32 %s13, %s20
    %p111 = scmp.eq.s32.totalorder %s110, 0
    %s113 = sadd.s32 %s112, 1
    %s114 = scalar_select %p111, %s112, %s113
    %p117 = pneg %p111
    %p118 = scmp.eq.s32.totalorder %s13, 1
    %p119 = por %p117, %p118
    %p120 = scmp.ne.s32.totalorder %s112, %s115
    %p121 = scmp.eq.s32.totalorder %s13, 0
    %p122 = por %p120, %p121
    %p123 = scmp.ne.s32.totalorder %s112, %s115
    %p124 = scmp.eq.s32.totalorder %s18, 1
    %p125 = por %p123, %p124
    %p126 = scmp.ne.s32.totalorder %s115, %s116
    %p127 = scmp.eq.s32.totalorder %s18, 0
    %p128 = por %p126, %p127
    %p129 = scmp.ne.s32.totalorder %s115, %s116
    %p130 = scmp.eq.s32.totalorder %s19, 1
    %p131 = por %p129, %p130
    %p133 = scmp.ne.s32.totalorder %s116, %s132
    %p134 = scmp.eq.s32.totalorder %s19, 0
    %p135 = por %p133, %p134
    %s136 = ssub.s32 %s13, %s20
    %p137 = scmp.eq.s32.totalorder %s136, 0
    %s139 = sadd.s32 %s138, 1
    %s140 = scalar_select %p137, %s138, %s139
    %p143 = pneg %p137
    %p144 = scmp.eq.s32.totalorder %s13, 1
    %p145 = por %p143, %p144
    %p146 = scmp.ne.s32.totalorder %s138, %s141
    %p147 = scmp.eq.s32.totalorder %s13, 0
    %p148 = por %p146, %p147
    %p149 = scmp.ne.s32.totalorder %s138, %s141
    %p150 = scmp.eq.s32.totalorder %s18, 1
    %p151 = por %p149, %p150
    %p152 = scmp.ne.s32.totalorder %s141, %s142
    %p153 = scmp.eq.s32.totalorder %s18, 0
    %p154 = por %p152, %p153
    %p155 = scmp.ne.s32.totalorder %s141, %s142
    %p156 = scmp.eq.s32.totalorder %s19, 1
    %p157 = por %p155, %p156
    %p159 = scmp.ne.s32.totalorder %s142, %s158
    %p160 = scmp.eq.s32.totalorder %s19, 0
    %p161 = por %p159, %p160
    %s162 = ssub.s32 %s13, %s20
    %p163 = scmp.eq.s32.totalorder %s162, 0
    %s165 = sadd.s32 %s164, 1
    %s166 = scalar_select %p163, %s164, %s165
    %p169 = pneg %p163
    %p170 = scmp.eq.s32.totalorder %s13, 1
    %p171 = por %p169, %p170
    %p172 = scmp.ne.s32.totalorder %s164, %s167
    %p173 = scmp.eq.s32.totalorder %s13, 0
    %p174 = por %p172, %p173
    %p175 = scmp.ne.s32.totalorder %s164, %s167
    %p176 = scmp.eq.s32.totalorder %s18, 1
    %p177 = por %p175, %p176
    %p178 = scmp.ne.s32.totalorder %s167, %s168
    %p179 = scmp.eq.s32.totalorder %s18, 0
    %p180 = por %p178, %p179
    %p181 = scmp.ne.s32.totalorder %s167, %s168
    %p182 = scmp.eq.s32.totalorder %s19, 1
    %p183 = por %p181, %p182
    %p185 = scmp.ne.s32.totalorder %s168, %s184
    %p186 = scmp.eq.s32.totalorder %s19, 0
    %p187 = por %p185, %p186
    %p188 = scmp.le.s32.totalorder 1, %s13
    %p189 = scmp.lt.s32.totalorder %s13, 3
    %p190 = pnand %p188, %p189
    %p191 = pneg %p190
    // Predicated region
    $region9: #{bottleneck_forward.6} parent=5 // pred_check
      _
    $region10: #{bottleneck_forward.6} parent=5 // pred_check_branch
      %193 = sbr.rel (%p190) target = $region12
    $region11: #{bottleneck_forward.6} parent=5 // pred_region
      %s194 = ssub.s32 %s13, 1
      // Predicated region
      $region13: #{bottleneck_forward.6} parent=11 // pred_check
        %p195 = pneg %p60
      $region14: #{bottleneck_forward.6} parent=11 // pred_check_branch
        %197 = sbr.rel (%p195) target = $region16
      $region15: #{bottleneck_forward.6} parent=11 // pred_region
        _
      $region16: #{bottleneck_forward.6} parent=11 // pred_fallthru
        _
      // Predicated region
      $region17: #{bottleneck_forward.6} parent=11 // pred_check
        %p198 = pneg %p81
      $region18: #{bottleneck_forward.6} parent=11 // pred_check_branch
        %200 = sbr.rel (%p198) target = $region20
      $region19: #{bottleneck_forward.6} parent=11 // pred_region
        _
      $region20: #{bottleneck_forward.6} parent=11 // pred_fallthru
        _
      // Predicated region
      $region21: #{bottleneck_forward.6} parent=11 // pred_check
        %p201 = pneg %p102
      $region22: #{bottleneck_forward.6} parent=11 // pred_check_branch
        %203 = sbr.rel (%p201) target = $region24
      $region23: #{bottleneck_forward.6} parent=11 // pred_region
        _
      $region24: #{bottleneck_forward.6} parent=11 // pred_fallthru
        _
    $region12: #{bottleneck_forward.6} parent=5 // pred_fallthru
      _
    %p204 = scmp.lt.s32.totalorder %s13, 2
    // Predicated region
    $region25: #{bottleneck_forward.6} parent=5 // pred_check
      %p205 = pneg %p204
    $region26: #{bottleneck_forward.6} parent=5 // pred_check_branch
      %207 = sbr.rel (%p205) target = $region28
    $region27: #{bottleneck_forward.6} parent=5 // pred_region
      // Predicated region
      $region29: #{bottleneck_forward.6} parent=27 // pred_check
        %p208 = pneg %p33
      $region30: #{bottleneck_forward.6} parent=27 // pred_check_branch
        %210 = sbr.rel (%p208) target = $region32
      $region31: #{bottleneck_forward.6} parent=27 // pred_region
        %s211 = smul.u32 64, %s13
        %p212 = scmp.lt.s32.totalorder %s211, 127
        %s213 = scalar_select %p212, %s211, 127
        %s214 = smul.addr %s213, 4
        %s215 = scalar_lea.vmem %s0, %s214
        %s216 = smul.u32 64, %s13
      $region32: #{bottleneck_forward.6} parent=27 // pred_fallthru
        _
    $region28: #{bottleneck_forward.6} parent=5 // pred_fallthru
      _
    %p217 = scmp.le.s32.totalorder 1, %s13
    %p218 = scmp.lt.s32.totalorder %s13, 3
    %p219 = pnand %p217, %p218
    %p220 = pneg %p219
    // Predicated region
    $region33: #{bottleneck_forward.6} parent=5 // pred_check
      _
    $region34: #{bottleneck_forward.6} parent=5 // pred_check_branch
      %222 = sbr.rel (%p219) target = $region36
    $region35: #{bottleneck_forward.6} parent=5 // pred_region
      %s223 = ssub.s32 %s13, 1
      %s224 = smul.u32 64, %s18
      %p225 = scmp.lt.s32.totalorder %s224, 127
      %s226 = scalar_select %p225, %s224, 127
      %s227 = smul.addr %s226, 4
      %s228 = scalar_lea.vmem %s0, %s227
      %p229 = pneg %p39
      %p230 = pneg %p36
      %p231 = pneg %p60
      %p232 = pneg %p57
      %p233 = pneg %p81
      %p234 = pneg %p78
      %p235 = pneg %p102
      %p236 = pneg %p99
      %p237 = pneg %p128
      %p238 = pneg %p125
      %s239 = smul.u32 64, %s18
      %p240 = scmp.lt.s32.totalorder %s239, 127
      %s241 = scalar_select %p240, %s239, 127
      %s242 = smul.addr %s241, 4
      %s243 = scalar_lea.vmem %s4, %s242
      %p244 = pneg %p154
      %p245 = pneg %p151
      %p246 = scmp.lt.s32.totalorder %s18, 1
      %s247 = scalar_select %p246, %s18, 1
      %s248 = scalar_lea.vmem %s5, %s247
      %p249 = pneg %p180
      %p250 = pneg %p177
      %p251 = scmp.lt.s32.totalorder %s18, 1
      %s252 = scalar_select %p251, %s18, 1
      %s253 = scalar_lea.vmem %s6, %s252
      %s254 = smul.u32 64, %s18
      %p255 = scmp.lt.s32.totalorder %s254, 127
      %s256 = scalar_select %p255, %s254, 127
      %s257 = smul.addr %s256, 4
      %s258 = scalar_lea.vmem %s0, %s257
      %s259 = smul.u32 64, %s18
      %s260 = smul.u32 64, %s18
      %p261 = scmp.lt.s32.totalorder %s260, 127
      %s262 = scalar_select %p261, %s260, 127
      %s263 = smul.addr %s262, 4
      %s264 = scalar_lea.vmem %s4, %s263
      %s265 = smul.u32 64, %s18
      %p266 = scmp.lt.s32.totalorder %s18, 1
      %s267 = scalar_select %p266, %s18, 1
      %s268 = scalar_lea.vmem %s5, %s267
      %p269 = scmp.lt.s32.totalorder %s18, 1
      %s270 = scalar_select %p269, %s18, 1
      %s271 = scalar_lea.vmem %s6, %s270
      %v273 = vld [vmem:[%s258] sm:$0xf]
      %v274 = vld [vmem:[%s258 + $0x4] sm:$0xf]
      %v275 = vld [vmem:[%s258 + $0x8] sm:$0xf]
      %v276 = vld [vmem:[%s258 + $0xc] sm:$0xf]
      %v277 = vld [vmem:[%s258 + $0x10] sm:$0xf]
      %v278 = vld [vmem:[%s258 + $0x14] sm:$0xf]
      %v279 = vld [vmem:[%s258 + $0x18] sm:$0xf]
      %v280 = vld [vmem:[%s258 + $0x1c] sm:$0xf]
      %v281 = vld [vmem:[%s258 + $0x20] sm:$0xf]
      %v282 = vld [vmem:[%s258 + $0x24] sm:$0xf]
      %v283 = vld [vmem:[%s258 + $0x28] sm:$0xf]
      %v284 = vld [vmem:[%s258 + $0x2c] sm:$0xf]
      %v285 = vld [vmem:[%s258 + $0x30] sm:$0xf]
      %v286 = vld [vmem:[%s258 + $0x34] sm:$0xf]
      %v287 = vld [vmem:[%s258 + $0x38] sm:$0xf]
      %v288 = vld [vmem:[%s258 + $0x3c] sm:$0xf]
      %v289 = vld [vmem:[%s258 + $0x40] sm:$0xf]
      %v290 = vld [vmem:[%s258 + $0x44] sm:$0xf]
      %v291 = vld [vmem:[%s258 + $0x48] sm:$0xf]
      %v292 = vld [vmem:[%s258 + $0x4c] sm:$0xf]
      %v293 = vld [vmem:[%s258 + $0x50] sm:$0xf]
      %v294 = vld [vmem:[%s258 + $0x54] sm:$0xf]
      %v295 = vld [vmem:[%s258 + $0x58] sm:$0xf]
      %v296 = vld [vmem:[%s258 + $0x5c] sm:$0xf]
      %v297 = vld [vmem:[%s258 + $0x60] sm:$0xf]
      %v298 = vld [vmem:[%s258 + $0x64] sm:$0xf]
      %v299 = vld [vmem:[%s258 + $0x68] sm:$0xf]
      %v300 = vld [vmem:[%s258 + $0x6c] sm:$0xf]
      %v301 = vld [vmem:[%s258 + $0x70] sm:$0xf]
      %v302 = vld [vmem:[%s258 + $0x74] sm:$0xf]
      %v303 = vld [vmem:[%s258 + $0x78] sm:$0xf]
      %v304 = vld [vmem:[%s258 + $0x7c] sm:$0xf]
      %v305 = vld [vmem:[%s258 + $0x80] sm:$0xf]
      %v306 = vld [vmem:[%s258 + $0x84] sm:$0xf]
      %v307 = vld [vmem:[%s258 + $0x88] sm:$0xf]
      %v308 = vld [vmem:[%s258 + $0x8c] sm:$0xf]
      %v309 = vld [vmem:[%s258 + $0x90] sm:$0xf]
      %v310 = vld [vmem:[%s258 + $0x94] sm:$0xf]
      %v311 = vld [vmem:[%s258 + $0x98] sm:$0xf]
      %v312 = vld [vmem:[%s258 + $0x9c] sm:$0xf]
      %v313 = vld [vmem:[%s258 + $0xa0] sm:$0xf]
      %v314 = vld [vmem:[%s258 + $0xa4] sm:$0xf]
      %v315 = vld [vmem:[%s258 + $0xa8] sm:$0xf]
      %v316 = vld [vmem:[%s258 + $0xac] sm:$0xf]
      %v317 = vld [vmem:[%s258 + $0xb0] sm:$0xf]
      %v318 = vld [vmem:[%s258 + $0xb4] sm:$0xf]
      %v319 = vld [vmem:[%s258 + $0xb8] sm:$0xf]
      %v320 = vld [vmem:[%s258 + $0xbc] sm:$0xf]
      %v321 = vld [vmem:[%s258 + $0xc0] sm:$0xf]
      %v322 = vld [vmem:[%s258 + $0xc4] sm:$0xf]
      %v323 = vld [vmem:[%s258 + $0xc8] sm:$0xf]
      %v324 = vld [vmem:[%s258 + $0xcc] sm:$0xf]
      %v325 = vld [vmem:[%s258 + $0xd0] sm:$0xf]
      %v326 = vld [vmem:[%s258 + $0xd4] sm:$0xf]
      %v327 = vld [vmem:[%s258 + $0xd8] sm:$0xf]
      %v328 = vld [vmem:[%s258 + $0xdc] sm:$0xf]
      %v329 = vld [vmem:[%s258 + $0xe0] sm:$0xf]
      %v330 = vld [vmem:[%s258 + $0xe4] sm:$0xf]
      %v331 = vld [vmem:[%s258 + $0xe8] sm:$0xf]
      %v332 = vld [vmem:[%s258 + $0xec] sm:$0xf]
      %v333 = vld [vmem:[%s258 + $0xf0] sm:$0xf]
      %v334 = vld [vmem:[%s258 + $0xf4] sm:$0xf]
      %v335 = vld [vmem:[%s258 + $0xf8] sm:$0xf]
      %v336 = vld [vmem:[%s258 + $0xfc] sm:$0xf]
      %v337 = vunpack.c.l.bf16 %v273
      %v338 = vunpack.c.l.bf16 %v274
      %v339 = vunpack.c.l.bf16 %v275
      %v340 = vunpack.c.l.bf16 %v276
      %v341 = vunpack.c.l.bf16 %v277
      %v342 = vunpack.c.l.bf16 %v278
      %v343 = vunpack.c.l.bf16 %v279
      %v344 = vunpack.c.l.bf16 %v280
      %v345 = vunpack.c.l.bf16 %v281
      %v346 = vunpack.c.l.bf16 %v282
      %v347 = vunpack.c.l.bf16 %v283
      %v348 = vunpack.c.l.bf16 %v284
      %v349 = vunpack.c.l.bf16 %v285
      %v350 = vunpack.c.l.bf16 %v286
      %v351 = vunpack.c.l.bf16 %v287
      %v352 = vunpack.c.l.bf16 %v288
      %v353 = vunpack.c.l.bf16 %v289
      %v354 = vunpack.c.l.bf16 %v290
      %v355 = vunpack.c.l.bf16 %v291
      %v356 = vunpack.c.l.bf16 %v292
      %v357 = vunpack.c.l.bf16 %v293
      %v358 = vunpack.c.l.bf16 %v294
      %v359 = vunpack.c.l.bf16 %v295
      %v360 = vunpack.c.l.bf16 %v296
      %v361 = vunpack.c.l.bf16 %v297
      %v362 = vunpack.c.l.bf16 %v298
      %v363 = vunpack.c.l.bf16 %v299
      %v364 = vunpack.c.l.bf16 %v300
      %v365 = vunpack.c.l.bf16 %v301
      %v366 = vunpack.c.l.bf16 %v302
      %v367 = vunpack.c.l.bf16 %v303
      %v368 = vunpack.c.l.bf16 %v304
      %v369 = vunpack.c.l.bf16 %v305
      %v370 = vunpack.c.l.bf16 %v306
      %v371 = vunpack.c.l.bf16 %v307
      %v372 = vunpack.c.l.bf16 %v308
      %v373 = vunpack.c.l.bf16 %v309
      %v374 = vunpack.c.l.bf16 %v310
      %v375 = vunpack.c.l.bf16 %v311
      %v376 = vunpack.c.l.bf16 %v312
      %v377 = vunpack.c.l.bf16 %v313
      %v378 = vunpack.c.l.bf16 %v314
      %v379 = vunpack.c.l.bf16 %v315
      %v380 = vunpack.c.l.bf16 %v316
      %v381 = vunpack.c.l.bf16 %v317
      %v382 = vunpack.c.l.bf16 %v318
      %v383 = vunpack.c.l.bf16 %v319
      %v384 = vunpack.c.l.bf16 %v320
      %v385 = vunpack.c.l.bf16 %v321
      %v386 = vunpack.c.l.bf16 %v322
      %v387 = vunpack.c.l.bf16 %v323
      %v388 = vunpack.c.l.bf16 %v324
      %v389 = vunpack.c.l.bf16 %v325
      %v390 = vunpack.c.l.bf16 %v326
      %v391 = vunpack.c.l.bf16 %v327
      %v392 = vunpack.c.l.bf16 %v328
      %v393 = vunpack.c.l.bf16 %v329
      %v394 = vunpack.c.l.bf16 %v330
      %v395 = vunpack.c.l.bf16 %v331
      %v396 = vunpack.c.l.bf16 %v332
      %v397 = vunpack.c.l.bf16 %v333
      %v398 = vunpack.c.l.bf16 %v334
      %v399 = vunpack.c.l.bf16 %v335
      %v400 = vunpack.c.l.bf16 %v336
      %v401 = vld [vmem:[%s1] sm:$0x1]
      %v403 = vlaneseq
      %v404 = vshrl.u32 %v403, 7
      %v405 = vsub.s32 0, %v404
      %v406 = vrot.slane %v401, %v405
      %v408 = vmul.f32 %v337, %v406
      %v409 = vmul.f32 %v338, %v406
      %v410 = vmul.f32 %v339, %v406
      %v411 = vmul.f32 %v340, %v406
      %v412 = vmul.f32 %v341, %v406
      %v413 = vmul.f32 %v342, %v406
      %v414 = vmul.f32 %v343, %v406
      %v415 = vmul.f32 %v344, %v406
      %v416 = vmul.f32 %v345, %v406
      %v417 = vmul.f32 %v346, %v406
      %v418 = vmul.f32 %v347, %v406
      %v419 = vmul.f32 %v348, %v406
      %v420 = vmul.f32 %v349, %v406
      %v421 = vmul.f32 %v350, %v406
      %v422 = vmul.f32 %v351, %v406
      %v423 = vmul.f32 %v352, %v406
      %v424 = vmul.f32 %v353, %v406
      %v425 = vmul.f32 %v354, %v406
      %v426 = vmul.f32 %v355, %v406
      %v427 = vmul.f32 %v356, %v406
      %v428 = vmul.f32 %v357, %v406
      %v429 = vmul.f32 %v358, %v406
      %v430 = vmul.f32 %v359, %v406
      %v431 = vmul.f32 %v360, %v406
      %v432 = vmul.f32 %v361, %v406
      %v433 = vmul.f32 %v362, %v406
      %v434 = vmul.f32 %v363, %v406
      %v435 = vmul.f32 %v364, %v406
      %v436 = vmul.f32 %v365, %v406
      %v437 = vmul.f32 %v366, %v406
      %v438 = vmul.f32 %v367, %v406
      %v439 = vmul.f32 %v368, %v406
      %v440 = vmul.f32 %v369, %v406
      %v441 = vmul.f32 %v370, %v406
      %v442 = vmul.f32 %v371, %v406
      %v443 = vmul.f32 %v372, %v406
      %v444 = vmul.f32 %v373, %v406
      %v445 = vmul.f32 %v374, %v406
      %v446 = vmul.f32 %v375, %v406
      %v447 = vmul.f32 %v376, %v406
      %v448 = vmul.f32 %v377, %v406
      %v449 = vmul.f32 %v378, %v406
      %v450 = vmul.f32 %v379, %v406
      %v451 = vmul.f32 %v380, %v406
      %v452 = vmul.f32 %v381, %v406
      %v453 = vmul.f32 %v382, %v406
      %v454 = vmul.f32 %v383, %v406
      %v455 = vmul.f32 %v384, %v406
      %v456 = vmul.f32 %v385, %v406
      %v457 = vmul.f32 %v386, %v406
      %v458 = vmul.f32 %v387, %v406
      %v459 = vmul.f32 %v388, %v406
      %v460 = vmul.f32 %v389, %v406
      %v461 = vmul.f32 %v390, %v406
      %v462 = vmul.f32 %v391, %v406
      %v463 = vmul.f32 %v392, %v406
      %v464 = vmul.f32 %v393, %v406
      %v465 = vmul.f32 %v394, %v406
      %v466 = vmul.f32 %v395, %v406
      %v467 = vmul.f32 %v396, %v406
      %v468 = vmul.f32 %v397, %v406
      %v469 = vmul.f32 %v398, %v406
      %v470 = vmul.f32 %v399, %v406
      %v471 = vmul.f32 %v400, %v406
      %v472 = vld [vmem:[%s2] sm:$0x1]
      %v474 = vlaneseq
      %v475 = vshrl.u32 %v474, 7
      %v476 = vsub.s32 0, %v475
      %v477 = vrot.slane %v472, %v476
      %v479 = vadd.f32 %v408, %v477
      %v480 = vadd.f32 %v409, %v477
      %v481 = vadd.f32 %v410, %v477
      %v482 = vadd.f32 %v411, %v477
      %v483 = vadd.f32 %v412, %v477
      %v484 = vadd.f32 %v413, %v477
      %v485 = vadd.f32 %v414, %v477
      %v486 = vadd.f32 %v415, %v477
      %v487 = vadd.f32 %v416, %v477
      %v488 = vadd.f32 %v417, %v477
      %v489 = vadd.f32 %v418, %v477
      %v490 = vadd.f32 %v419, %v477
      %v491 = vadd.f32 %v420, %v477
      %v492 = vadd.f32 %v421, %v477
      %v493 = vadd.f32 %v422, %v477
      %v494 = vadd.f32 %v423, %v477
      %v495 = vadd.f32 %v424, %v477
      %v496 = vadd.f32 %v425, %v477
      %v497 = vadd.f32 %v426, %v477
      %v498 = vadd.f32 %v427, %v477
      %v499 = vadd.f32 %v428, %v477
      %v500 = vadd.f32 %v429, %v477
      %v501 = vadd.f32 %v430, %v477
      %v502 = vadd.f32 %v431, %v477
      %v503 = vadd.f32 %v432, %v477
      %v504 = vadd.f32 %v433, %v477
      %v505 = vadd.f32 %v434, %v477
      %v506 = vadd.f32 %v435, %v477
      %v507 = vadd.f32 %v436, %v477
      %v508 = vadd.f32 %v437, %v477
      %v509 = vadd.f32 %v438, %v477
      %v510 = vadd.f32 %v439, %v477
      %v511 = vadd.f32 %v440, %v477
      %v512 = vadd.f32 %v441, %v477
      %v513 = vadd.f32 %v442, %v477
      %v514 = vadd.f32 %v443, %v477
      %v515 = vadd.f32 %v444, %v477
      %v516 = vadd.f32 %v445, %v477
      %v517 = vadd.f32 %v446, %v477
      %v518 = vadd.f32 %v447, %v477
      %v519 = vadd.f32 %v448, %v477
      %v520 = vadd.f32 %v449, %v477
      %v521 = vadd.f32 %v450, %v477
      %v522 = vadd.f32 %v451, %v477
      %v523 = vadd.f32 %v452, %v477
      %v524 = vadd.f32 %v453, %v477
      %v525 = vadd.f32 %v454, %v477
      %v526 = vadd.f32 %v455, %v477
      %v527 = vadd.f32 %v456, %v477
      %v528 = vadd.f32 %v457, %v477
      %v529 = vadd.f32 %v458, %v477
      %v530 = vadd.f32 %v459, %v477
      %v531 = vadd.f32 %v460, %v477
      %v532 = vadd.f32 %v461, %v477
      %v533 = vadd.f32 %v462, %v477
      %v534 = vadd.f32 %v463, %v477
      %v535 = vadd.f32 %v464, %v477
      %v536 = vadd.f32 %v465, %v477
      %v537 = vadd.f32 %v466, %v477
      %v538 = vadd.f32 %v467, %v477
      %v539 = vadd.f32 %v468, %v477
      %v540 = vadd.f32 %v469, %v477
      %v541 = vadd.f32 %v470, %v477
      %v542 = vadd.f32 %v471, %v477
      %v543 = vmax.f32 %v479, 0.0
      %v544 = vmax.f32 %v480, 0.0
      %v545 = vmax.f32 %v481, 0.0
      %v546 = vmax.f32 %v482, 0.0
      %v547 = vmax.f32 %v483, 0.0
      %v548 = vmax.f32 %v484, 0.0
      %v549 = vmax.f32 %v485, 0.0
      %v550 = vmax.f32 %v486, 0.0
      %v551 = vmax.f32 %v487, 0.0
      %v552 = vmax.f32 %v488, 0.0
      %v553 = vmax.f32 %v489, 0.0
      %v554 = vmax.f32 %v490, 0.0
      %v555 = vmax.f32 %v491, 0.0
      %v556 = vmax.f32 %v492, 0.0
      %v557 = vmax.f32 %v493, 0.0
      %v558 = vmax.f32 %v494, 0.0
      %v559 = vmax.f32 %v495, 0.0
      %v560 = vmax.f32 %v496, 0.0
      %v561 = vmax.f32 %v497, 0.0
      %v562 = vmax.f32 %v498, 0.0
      %v563 = vmax.f32 %v499, 0.0
      %v564 = vmax.f32 %v500, 0.0
      %v565 = vmax.f32 %v501, 0.0
      %v566 = vmax.f32 %v502, 0.0
      %v567 = vmax.f32 %v503, 0.0
      %v568 = vmax.f32 %v504, 0.0
      %v569 = vmax.f32 %v505, 0.0
      %v570 = vmax.f32 %v506, 0.0
      %v571 = vmax.f32 %v507, 0.0
      %v572 = vmax.f32 %v508, 0.0
      %v573 = vmax.f32 %v509, 0.0
      %v574 = vmax.f32 %v510, 0.0
      %v575 = vmax.f32 %v511, 0.0
      %v576 = vmax.f32 %v512, 0.0
      %v577 = vmax.f32 %v513, 0.0
      %v578 = vmax.f32 %v514, 0.0
      %v579 = vmax.f32 %v515, 0.0
      %v580 = vmax.f32 %v516, 0.0
      %v581 = vmax.f32 %v517, 0.0
      %v582 = vmax.f32 %v518, 0.0
      %v583 = vmax.f32 %v519, 0.0
      %v584 = vmax.f32 %v520, 0.0
      %v585 = vmax.f32 %v521, 0.0
      %v586 = vmax.f32 %v522, 0.0
      %v587 = vmax.f32 %v523, 0.0
      %v588 = vmax.f32 %v524, 0.0
      %v589 = vmax.f32 %v525, 0.0
      %v590 = vmax.f32 %v526, 0.0
      %v591 = vmax.f32 %v527, 0.0
      %v592 = vmax.f32 %v528, 0.0
      %v593 = vmax.f32 %v529, 0.0
      %v594 = vmax.f32 %v530, 0.0
      %v595 = vmax.f32 %v531, 0.0
      %v596 = vmax.f32 %v532, 0.0
      %v597 = vmax.f32 %v533, 0.0
      %v598 = vmax.f32 %v534, 0.0
      %v599 = vmax.f32 %v535, 0.0
      %v600 = vmax.f32 %v536, 0.0
      %v601 = vmax.f32 %v537, 0.0
      %v602 = vmax.f32 %v538, 0.0
      %v603 = vmax.f32 %v539, 0.0
      %v604 = vmax.f32 %v540, 0.0
      %v605 = vmax.f32 %v541, 0.0
      %v606 = vmax.f32 %v542, 0.0
      %v607 = vpack.c.bf16 %v544, %v543
      %v608 = vpack.c.bf16 %v546, %v545
      %v609 = vpack.c.bf16 %v548, %v547
      %v610 = vpack.c.bf16 %v550, %v549
      %v611 = vpack.c.bf16 %v552, %v551
      %v612 = vpack.c.bf16 %v554, %v553
      %v613 = vpack.c.bf16 %v556, %v555
      %v614 = vpack.c.bf16 %v558, %v557
      %v615 = vpack.c.bf16 %v560, %v559
      %v616 = vpack.c.bf16 %v562, %v561
      %v617 = vpack.c.bf16 %v564, %v563
      %v618 = vpack.c.bf16 %v566, %v565
      %v619 = vpack.c.bf16 %v568, %v567
      %v620 = vpack.c.bf16 %v570, %v569
      %v621 = vpack.c.bf16 %v572, %v571
      %v622 = vpack.c.bf16 %v574, %v573
      %v623 = vpack.c.bf16 %v576, %v575
      %v624 = vpack.c.bf16 %v578, %v577
      %v625 = vpack.c.bf16 %v580, %v579
      %v626 = vpack.c.bf16 %v582, %v581
      %v627 = vpack.c.bf16 %v584, %v583
      %v628 = vpack.c.bf16 %v586, %v585
      %v629 = vpack.c.bf16 %v588, %v587
      %v630 = vpack.c.bf16 %v590, %v589
      %v631 = vpack.c.bf16 %v592, %v591
      %v632 = vpack.c.bf16 %v594, %v593
      %v633 = vpack.c.bf16 %v596, %v595
      %v634 = vpack.c.bf16 %v598, %v597
      %v635 = vpack.c.bf16 %v600, %v599
      %v636 = vpack.c.bf16 %v602, %v601
      %v637 = vpack.c.bf16 %v604, %v603
      %v638 = vpack.c.bf16 %v606, %v605
      %v639 = vld [vmem:[%s3] sm:$0xf]
      %v640 = vld [vmem:[%s3 + $0x4] sm:$0xf]
      %v641 = vld [vmem:[%s3 + $0x8] sm:$0xf]
      %v642 = vld [vmem:[%s3 + $0xc] sm:$0xf]
      %v643 = vld [vmem:[%s3 + $0x10] sm:$0xf]
      %v644 = vld [vmem:[%s3 + $0x14] sm:$0xf]
      %v645 = vld [vmem:[%s3 + $0x18] sm:$0xf]
      %v646 = vld [vmem:[%s3 + $0x1c] sm:$0xf]
      %v647 = vld [vmem:[%s3 + $0x20] sm:$0xf]
      %v648 = vld [vmem:[%s3 + $0x24] sm:$0xf]
      %v649 = vld [vmem:[%s3 + $0x28] sm:$0xf]
      %v650 = vld [vmem:[%s3 + $0x2c] sm:$0xf]
      %v651 = vld [vmem:[%s3 + $0x30] sm:$0xf]
      %v652 = vld [vmem:[%s3 + $0x34] sm:$0xf]
      %v653 = vld [vmem:[%s3 + $0x38] sm:$0xf]
      %v654 = vld [vmem:[%s3 + $0x3c] sm:$0xf]
      %v671 = vunpack.c.l.b16 %v639
      %v672 = vunpack.c.l.b16 %v640
      %v673 = vunpack.c.l.b16 %v641
      %v674 = vunpack.c.l.b16 %v642
      %v675 = vunpack.c.l.b16 %v643
      %v676 = vunpack.c.l.b16 %v644
      %v677 = vunpack.c.l.b16 %v645
      %v678 = vunpack.c.l.b16 %v646
      %v679 = vunpack.c.l.b16 %v647
      %v680 = vunpack.c.l.b16 %v648
      %v681 = vunpack.c.l.b16 %v649
      %v682 = vunpack.c.l.b16 %v650
      %v683 = vunpack.c.l.b16 %v651
      %v684 = vunpack.c.l.b16 %v652
      %v685 = vunpack.c.l.b16 %v653
      %v686 = vunpack.c.l.b16 %v654
      %v687 = vpack.c.b16 %v672, %v671
      %v688 = vpack.c.b16 %v674, %v673
      %v689 = vpack.c.b16 %v676, %v675
      %v690 = vpack.c.b16 %v678, %v677
      %v691 = vpack.c.b16 %v680, %v679
      %v692 = vpack.c.b16 %v682, %v681
      %v693 = vpack.c.b16 %v684, %v683
      %v694 = vpack.c.b16 %v686, %v685
      %703 = vmatprep.subr.bf16.mxu0 0
      %704 = vmatpush1.bf16.msra.mxu0 %v687
      %705 = vmatprep.subr.bf16.mxu0 0
      %706 = vmatpush1.bf16.msra.mxu0 %v688
      %707 = vmatprep.subr.bf16.mxu0 0
      %708 = vmatpush1.bf16.msra.mxu0 %v689
      %709 = vmatprep.subr.bf16.mxu0 0
      %710 = vmatpush1.bf16.msra.mxu0 %v690
      %711 = vmatprep.subr.bf16.mxu0 0
      %712 = vmatpush1.bf16.msra.mxu0 %v691
      %713 = vmatprep.subr.bf16.mxu0 0
      %714 = vmatpush1.bf16.msra.mxu0 %v692
      %715 = vmatprep.subr.bf16.mxu0 0
      %716 = vmatpush1.bf16.msra.mxu0 %v693
      %717 = vmatprep.subr.bf16.mxu0 0
      %718 = vmatpush1.bf16.msra.mxu0 %v694
      %719 = vmatprep.subr.bf16.mxu0 0
      %720 = vmatpush1.bf16.msra.mxu0 0
      %721 = vmatprep.subr.bf16.mxu0 0
      %722 = vmatpush1.bf16.msra.mxu0 0
      %723 = vmatprep.subr.bf16.mxu0 0
      %724 = vmatpush1.bf16.msra.mxu0 0
      %725 = vmatprep.subr.bf16.mxu0 0
      %726 = vmatpush1.bf16.msra.mxu0 0
      %727 = vmatprep.subr.bf16.mxu0 0
      %728 = vmatpush1.bf16.msra.mxu0 0
      %729 = vmatprep.subr.bf16.mxu0 0
      %730 = vmatpush1.bf16.msra.mxu0 0
      %731 = vmatprep.subr.bf16.mxu0 0
      %732 = vmatpush1.bf16.msra.mxu0 0
      %733 = vmatprep.subr.bf16.mxu0 0
      %734 = vmatpush1.bf16.msra.mxu0 0
      %735 = vmatprep.mubr.bf16.mxu0 0
      %736 = vmatmul.mubr.bf16.gmra.mrb[0].mxu0 %v607
      %v737 = vpop.f32.mrb[0].mxu0
      %v738 = vadd.f32 0.0, %v737
      %v739 = vpop.f32.mrb[0].mxu0
      %v740 = vpop.f32.mrb[0].mxu0
      %v741 = vadd.f32 0.0, %v740
      %v742 = vpop.f32.mrb[0].mxu0
      %743 = vmatprep.mubr.bf16.mxu0 0
      %744 = vmatmul.mubr.bf16.gmra.mrb[0].mxu0 %v608
      %v745 = vpop.f32.mrb[0].mxu0
      %v746 = vadd.f32 0.0, %v745
      %v747 = vpop.f32.mrb[0].mxu0
      %v748 = vpop.f32.mrb[0].mxu0
      %v749 = vadd.f32 0.0, %v748
      %v750 = vpop.f32.mrb[0].mxu0
      %751 = vmatprep.mubr.bf16.mxu0 0
      %752 = vmatmul.mubr.bf16.gmra.mrb[0].mxu0 %v609
      %v753 = vpop.f32.mrb[0].mxu0
      %v754 = vadd.f32 0.0, %v753
      %v755 = vpop.f32.mrb[0].mxu0
      %v756 = vpop.f32.mrb[0].mxu0
      %v757 = vadd.f32 0.0, %v756
      %v758 = vpop.f32.mrb[0].mxu0
      %759 = vmatprep.mubr.bf16.mxu0 0
      %760 = vmatmul.mubr.bf16.gmra.mrb[0].mxu0 %v610
      %v761 = vpop.f32.mrb[0].mxu0
      %v762 = vadd.f32 0.0, %v761
      %v763 = vpop.f32.mrb[0].mxu0
      %v764 = vpop.f32.mrb[0].mxu0
      %v765 = vadd.f32 0.0, %v764
      %v766 = vpop.f32.mrb[0].mxu0
      %767 = vmatprep.mubr.bf16.mxu0 0
      %768 = vmatmul.mubr.bf16.gmra.mrb[0].mxu0 %v611
      %v769 = vpop.f32.mrb[0].mxu0
      %v770 = vadd.f32 0.0, %v769
      %v771 = vpop.f32.mrb[0].mxu0
      %v772 = vpop.f32.mrb[0].mxu0
      %v773 = vadd.f32 0.0, %v772
      %v774 = vpop.f32.mrb[0].mxu0
      %775 = vmatprep.mubr.bf16.mxu0 0
      %776 = vmatmul.mubr.bf16.gmra.mrb[0].mxu0 %v612
      %v777 = vpop.f32.mrb[0].mxu0
      %v778 = vadd.f32 0.0, %v777
      %v779 = vpop.f32.mrb[0].mxu0
      %v780 = vpop.f32.mrb[0].mxu0
      %v781 = vadd.f32 0.0, %v780
      %v782 = vpop.f32.mrb[0].mxu0
      %783 = vmatprep.mubr.bf16.mxu0 0
      %784 = vmatmul.mubr.bf16.gmra.mrb[0].mxu0 %v613
      %v785 = vpop.f32.mrb[0].mxu0
      %v786 = vadd.f32 0.0, %v785
      %v787 = vpop.f32.mrb[0].mxu0
      %v788 = vpop.f32.mrb[0].mxu0
      %v789 = vadd.f32 0.0, %v788
      %v790 = vpop.f32.mrb[0].mxu0
      %791 = vmatprep.mubr.bf16.mxu0 0
      %792 = vmatmul.mubr.bf16.gmra.mrb[0].mxu0 %v614
      %v793 = vpop.f32.mrb[0].mxu0
      %v794 = vadd.f32 0.0, %v793
      %v795 = vpop.f32.mrb[0].mxu0
      %v796 = vpop.f32.mrb[0].mxu0
      %v797 = vadd.f32 0.0, %v796
      %v798 = vpop.f32.mrb[0].mxu0
      %799 = vmatprep.mubr.bf16.mxu0 0
      %800 = vmatmul.mubr.bf16.gmra.mrb[0].mxu0 %v615
      %v801 = vpop.f32.mrb[0].mxu0
      %v802 = vadd.f32 0.0, %v801
      %v803 = vpop.f32.mrb[0].mxu0
      %v804 = vpop.f32.mrb[0].mxu0
      %v805 = vadd.f32 0.0, %v804
      %v806 = vpop.f32.mrb[0].mxu0
      %807 = vmatprep.mubr.bf16.mxu0 0
      %808 = vmatmul.mubr.bf16.gmra.mrb[0].mxu0 %v616
      %v809 = vpop.f32.mrb[0].mxu0
      %v810 = vadd.f32 0.0, %v809
      %v811 = vpop.f32.mrb[0].mxu0
      %v812 = vpop.f32.mrb[0].mxu0
      %v813 = vadd.f32 0.0, %v812
      %v814 = vpop.f32.mrb[0].mxu0
      %815 = vmatprep.mubr.bf16.mxu0 0
      %816 = vmatmul.mubr.bf16.gmra.mrb[0].mxu0 %v617
      %v817 = vpop.f32.mrb[0].mxu0
      %v818 = vadd.f32 0.0, %v817
      %v819 = vpop.f32.mrb[0].mxu0
      %v820 = vpop.f32.mrb[0].mxu0
      %v821 = vadd.f32 0.0, %v820
      %v822 = vpop.f32.mrb[0].mxu0
      %823 = vmatprep.mubr.bf16.mxu0 0
      %824 = vmatmul.mubr.bf16.gmra.mrb[0].mxu0 %v618
      %v825 = vpop.f32.mrb[0].mxu0
      %v826 = vadd.f32 0.0, %v825
      %v827 = vpop.f32.mrb[0].mxu0
      %v828 = vpop.f32.mrb[0].mxu0
      %v829 = vadd.f32 0.0, %v828
      %v830 = vpop.f32.mrb[0].mxu0
      %831 = vmatprep.mubr.bf16.mxu0 0
      %832 = vmatmul.mubr.bf16.gmra.mrb[0].mxu0 %v619
      %v833 = vpop.f32.mrb[0].mxu0
      %v834 = vadd.f32 0.0, %v833
      %v835 = vpop.f32.mrb[0].mxu0
      %v836 = vpop.f32.mrb[0].mxu0
      %v837 = vadd.f32 0.0, %v836
      %v838 = vpop.f32.mrb[0].mxu0
      %839 = vmatprep.mubr.bf16.mxu0 0
      %840 = vmatmul.mubr.bf16.gmra.mrb[0].mxu0 %v620
      %v841 = vpop.f32.mrb[0].mxu0
      %v842 = vadd.f32 0.0, %v841
      %v843 = vpop.f32.mrb[0].mxu0
      %v844 = vpop.f32.mrb[0].mxu0
      %v845 = vadd.f32 0.0, %v844
      %v846 = vpop.f32.mrb[0].mxu0
      %847 = vmatprep.mubr.bf16.mxu0 0
      %848 = vmatmul.mubr.bf16.gmra.mrb[0].mxu0 %v621
      %v849 = vpop.f32.mrb[0].mxu0
      %v850 = vadd.f32 0.0, %v849
      %v851 = vpop.f32.mrb[0].mxu0
      %v852 = vpop.f32.mrb[0].mxu0
      %v853 = vadd.f32 0.0, %v852
      %v854 = vpop.f32.mrb[0].mxu0
      %855 = vmatprep.mubr.bf16.mxu0 0
      %856 = vmatmul.mubr.bf16.gmra.mrb[0].mxu0 %v622
      %v857 = vpop.f32.mrb[0].mxu0
      %v858 = vadd.f32 0.0, %v857
      %v859 = vpop.f32.mrb[0].mxu0
      %v860 = vpop.f32.mrb[0].mxu0
      %v861 = vadd.f32 0.0, %v860
      %v862 = vpop.f32.mrb[0].mxu0
      %863 = vmatprep.mubr.bf16.mxu0 0
      %864 = vmatmul.mubr.bf16.gmra.mrb[0].mxu0 %v623
      %v865 = vpop.f32.mrb[0].mxu0
      %v866 = vadd.f32 0.0, %v865
      %v867 = vpop.f32.mrb[0].mxu0
      %v868 = vpop.f32.mrb[0].mxu0
      %v869 = vadd.f32 0.0, %v868
      %v870 = vpop.f32.mrb[0].mxu0
      %871 = vmatprep.mubr.bf16.mxu0 0
      %872 = vmatmul.mubr.bf16.gmra.mrb[0].mxu0 %v624
      %v873 = vpop.f32.mrb[0].mxu0
      %v874 = vadd.f32 0.0, %v873
      %v875 = vpop.f32.mrb[0].mxu0
      %v876 = vpop.f32.mrb[0].mxu0
      %v877 = vadd.f32 0.0, %v876
      %v878 = vpop.f32.mrb[0].mxu0
      %879 = vmatprep.mubr.bf16.mxu0 0
      %880 = vmatmul.mubr.bf16.gmra.mrb[0].mxu0 %v625
      %v881 = vpop.f32.mrb[0].mxu0
      %v882 = vadd.f32 0.0, %v881
      %v883 = vpop.f32.mrb[0].mxu0
      %v884 = vpop.f32.mrb[0].mxu0
      %v885 = vadd.f32 0.0, %v884
      %v886 = vpop.f32.mrb[0].mxu0
      %887 = vmatprep.mubr.bf16.mxu0 0
      %888 = vmatmul.mubr.bf16.gmra.mrb[0].mxu0 %v626
      %v889 = vpop.f32.mrb[0].mxu0
      %v890 = vadd.f32 0.0, %v889
      %v891 = vpop.f32.mrb[0].mxu0
      %v892 = vpop.f32.mrb[0].mxu0
      %v893 = vadd.f32 0.0, %v892
      %v894 = vpop.f32.mrb[0].mxu0
      %895 = vmatprep.mubr.bf16.mxu0 0
      %896 = vmatmul.mubr.bf16.gmra.mrb[0].mxu0 %v627
      %v897 = vpop.f32.mrb[0].mxu0
      %v898 = vadd.f32 0.0, %v897
      %v899 = vpop.f32.mrb[0].mxu0
      %v900 = vpop.f32.mrb[0].mxu0
      %v901 = vadd.f32 0.0, %v900
      %v902 = vpop.f32.mrb[0].mxu0
      %903 = vmatprep.mubr.bf16.mxu0 0
      %904 = vmatmul.mubr.bf16.gmra.mrb[0].mxu0 %v628
      %v905 = vpop.f32.mrb[0].mxu0
      %v906 = vadd.f32 0.0, %v905
      %v907 = vpop.f32.mrb[0].mxu0
      %v908 = vpop.f32.mrb[0].mxu0
      %v909 = vadd.f32 0.0, %v908
      %v910 = vpop.f32.mrb[0].mxu0
      %911 = vmatprep.mubr.bf16.mxu0 0
      %912 = vmatmul.mubr.bf16.gmra.mrb[0].mxu0 %v629
      %v913 = vpop.f32.mrb[0].mxu0
      %v914 = vadd.f32 0.0, %v913
      %v915 = vpop.f32.mrb[0].mxu0
      %v916 = vpop.f32.mrb[0].mxu0
      %v917 = vadd.f32 0.0, %v916
      %v918 = vpop.f32.mrb[0].mxu0
      %919 = vmatprep.mubr.bf16.mxu0 0
      %920 = vmatmul.mubr.bf16.gmra.mrb[0].mxu0 %v630
      %v921 = vpop.f32.mrb[0].mxu0
      %v922 = vadd.f32 0.0, %v921
      %v923 = vpop.f32.mrb[0].mxu0
      %v924 = vpop.f32.mrb[0].mxu0
      %v925 = vadd.f32 0.0, %v924
      %v926 = vpop.f32.mrb[0].mxu0
      %927 = vmatprep.mubr.bf16.mxu0 0
      %928 = vmatmul.mubr.bf16.gmra.mrb[0].mxu0 %v631
      %v929 = vpop.f32.mrb[0].mxu0
      %v930 = vadd.f32 0.0, %v929
      %v931 = vpop.f32.mrb[0].mxu0
      %v932 = vpop.f32.mrb[0].mxu0
      %v933 = vadd.f32 0.0, %v932
      %v934 = vpop.f32.mrb[0].mxu0
      %935 = vmatprep.mubr.bf16.mxu0 0
      %936 = vmatmul.mubr.bf16.gmra.mrb[0].mxu0 %v632
      %v937 = vpop.f32.mrb[0].mxu0
      %v938 = vadd.f32 0.0, %v937
      %v939 = vpop.f32.mrb[0].mxu0
      %v940 = vpop.f32.mrb[0].mxu0
      %v941 = vadd.f32 0.0, %v940
      %v942 = vpop.f32.mrb[0].mxu0
      %943 = vmatprep.mubr.bf16.mxu0 0
      %944 = vmatmul.mubr.bf16.gmra.mrb[0].mxu0 %v633
      %v945 = vpop.f32.mrb[0].mxu0
      %v946 = vadd.f32 0.0, %v945
      %v947 = vpop.f32.mrb[0].mxu0
      %v948 = vpop.f32.mrb[0].mxu0
      %v949 = vadd.f32 0.0, %v948
      %v950 = vpop.f32.mrb[0].mxu0
      %951 = vmatprep.mubr.bf16.mxu0 0
      %952 = vmatmul.mubr.bf16.gmra.mrb[0].mxu0 %v634
      %v953 = vpop.f32.mrb[0].mxu0
      %v954 = vadd.f32 0.0, %v953
      %v955 = vpop.f32.mrb[0].mxu0
      %v956 = vpop.f32.mrb[0].mxu0
      %v957 = vadd.f32 0.0, %v956
      %v958 = vpop.f32.mrb[0].mxu0
      %959 = vmatprep.mubr.bf16.mxu0 0
      %960 = vmatmul.mubr.bf16.gmra.mrb[0].mxu0 %v635
      %v961 = vpop.f32.mrb[0].mxu0
      %v962 = vadd.f32 0.0, %v961
      %v963 = vpop.f32.mrb[0].mxu0
      %v964 = vpop.f32.mrb[0].mxu0
      %v965 = vadd.f32 0.0, %v964
      %v966 = vpop.f32.mrb[0].mxu0
      %967 = vmatprep.mubr.bf16.mxu0 0
      %968 = vmatmul.mubr.bf16.gmra.mrb[0].mxu0 %v636
      %v969 = vpop.f32.mrb[0].mxu0
      %v970 = vadd.f32 0.0, %v969
      %v971 = vpop.f32.mrb[0].mxu0
      %v972 = vpop.f32.mrb[0].mxu0
      %v973 = vadd.f32 0.0, %v972
      %v974 = vpop.f32.mrb[0].mxu0
      %975 = vmatprep.mubr.bf16.mxu0 0
      %976 = vmatmul.mubr.bf16.gmra.mrb[0].mxu0 %v637
      %v977 = vpop.f32.mrb[0].mxu0
      %v978 = vadd.f32 0.0, %v977
      %v979 = vpop.f32.mrb[0].mxu0
      %v980 = vpop.f32.mrb[0].mxu0
      %v981 = vadd.f32 0.0, %v980
      %v982 = vpop.f32.mrb[0].mxu0
      %983 = vmatprep.mubr.bf16.mxu0 0
      %984 = vmatmul.mubr.bf16.gmra.mrb[0].mxu0 %v638
      %v985 = vpop.f32.mrb[0].mxu0
      %v986 = vadd.f32 0.0, %v985
      %v987 = vpop.f32.mrb[0].mxu0
      %v988 = vpop.f32.mrb[0].mxu0
      %v989 = vadd.f32 0.0, %v988
      %v990 = vpop.f32.mrb[0].mxu0
      %991 = vdwg.mxu0
      %v992 = vpack.c.bf16 %v741, %v738
      %v993 = vpack.c.bf16 %v749, %v746
      %v994 = vpack.c.bf16 %v757, %v754
      %v995 = vpack.c.bf16 %v765, %v762
      %v996 = vpack.c.bf16 %v773, %v770
      %v997 = vpack.c.bf16 %v781, %v778
      %v998 = vpack.c.bf16 %v789, %v786
      %v999 = vpack.c.bf16 %v797, %v794
      %v1000 = vpack.c.bf16 %v805, %v802
      %v1001 = vpack.c.bf16 %v813, %v810
      %v1002 = vpack.c.bf16 %v821, %v818
      %v1003 = vpack.c.bf16 %v829, %v826
      %v1004 = vpack.c.bf16 %v837, %v834
      %v1005 = vpack.c.bf16 %v845, %v842
      %v1006 = vpack.c.bf16 %v853, %v850
      %v1007 = vpack.c.bf16 %v861, %v858
      %v1008 = vpack.c.bf16 %v869, %v866
      %v1009 = vpack.c.bf16 %v877, %v874
      %v1010 = vpack.c.bf16 %v885, %v882
      %v1011 = vpack.c.bf16 %v893, %v890
      %v1012 = vpack.c.bf16 %v901, %v898
      %v1013 = vpack.c.bf16 %v909, %v906
      %v1014 = vpack.c.bf16 %v917, %v914
      %v1015 = vpack.c.bf16 %v925, %v922
      %v1016 = vpack.c.bf16 %v933, %v930
      %v1017 = vpack.c.bf16 %v941, %v938
      %v1018 = vpack.c.bf16 %v949, %v946
      %v1019 = vpack.c.bf16 %v957, %v954
      %v1020 = vpack.c.bf16 %v965, %v962
      %v1021 = vpack.c.bf16 %v973, %v970
      %v1022 = vpack.c.bf16 %v981, %v978
      %v1023 = vpack.c.bf16 %v989, %v986
      %v1056 = vunpack.c.l.b16 %v992
      %v1057 = vunpack.c.h.b16 %v992
      %v1058 = vunpack.c.l.b16 %v993
      %v1059 = vunpack.c.h.b16 %v993
      %v1060 = vunpack.c.l.b16 %v994
      %v1061 = vunpack.c.h.b16 %v994
      %v1062 = vunpack.c.l.b16 %v995
      %v1063 = vunpack.c.h.b16 %v995
      %v1064 = vunpack.c.l.b16 %v996
      %v1065 = vunpack.c.h.b16 %v996
      %v1066 = vunpack.c.l.b16 %v997
      %v1067 = vunpack.c.h.b16 %v997
      %v1068 = vunpack.c.l.b16 %v998
      %v1069 = vunpack.c.h.b16 %v998
      %v1070 = vunpack.c.l.b16 %v999
      %v1071 = vunpack.c.h.b16 %v999
      %v1072 = vunpack.c.l.b16 %v1000
      %v1073 = vunpack.c.h.b16 %v1000
      %v1074 = vunpack.c.l.b16 %v1001
      %v1075 = vunpack.c.h.b16 %v1001
      %v1076 = vunpack.c.l.b16 %v1002
      %v1077 = vunpack.c.h.b16 %v1002
      %v1078 = vunpack.c.l.b16 %v1003
      %v1079 = vunpack.c.h.b16 %v1003
      %v1080 = vunpack.c.l.b16 %v1004
      %v1081 = vunpack.c.h.b16 %v1004
      %v1082 = vunpack.c.l.b16 %v1005
      %v1083 = vunpack.c.h.b16 %v1005
      %v1084 = vunpack.c.l.b16 %v1006
      %v1085 = vunpack.c.h.b16 %v1006
      %v1086 = vunpack.c.l.b16 %v1007
      %v1087 = vunpack.c.h.b16 %v1007
      %v1088 = vunpack.c.l.b16 %v1008
      %v1089 = vunpack.c.h.b16 %v1008
      %v1090 = vunpack.c.l.b16 %v1009
      %v1091 = vunpack.c.h.b16 %v1009
      %v1092 = vunpack.c.l.b16 %v1010
      %v1093 = vunpack.c.h.b16 %v1010
      %v1094 = vunpack.c.l.b16 %v1011
      %v1095 = vunpack.c.h.b16 %v1011
      %v1096 = vunpack.c.l.b16 %v1012
      %v1097 = vunpack.c.h.b16 %v1012
      %v1098 = vunpack.c.l.b16 %v1013
      %v1099 = vunpack.c.h.b16 %v1013
      %v1100 = vunpack.c.l.b16 %v1014
      %v1101 = vunpack.c.h.b16 %v1014
      %v1102 = vunpack.c.l.b16 %v1015
      %v1103 = vunpack.c.h.b16 %v1015
      %v1104 = vunpack.c.l.b16 %v1016
      %v1105 = vunpack.c.h.b16 %v1016
      %v1106 = vunpack.c.l.b16 %v1017
      %v1107 = vunpack.c.h.b16 %v1017
      %v1108 = vunpack.c.l.b16 %v1018
      %v1109 = vunpack.c.h.b16 %v1018
      %v1110 = vunpack.c.l.b16 %v1019
      %v1111 = vunpack.c.h.b16 %v1019
      %v1112 = vunpack.c.l.b16 %v1020
      %v1113 = vunpack.c.h.b16 %v1020
      %v1114 = vunpack.c.l.b16 %v1021
      %v1115 = vunpack.c.h.b16 %v1021
      %v1116 = vunpack.c.l.b16 %v1022
      %v1117 = vunpack.c.h.b16 %v1022
      %v1118 = vunpack.c.l.b16 %v1023
      %v1119 = vunpack.c.h.b16 %v1023
      %v1120 = vpack.c.b16 %v1056, %v1056
      %v1121 = vpack.c.b16 %v1057, %v1057
      %v1122 = vpack.c.b16 %v1058, %v1058
      %v1123 = vpack.c.b16 %v1059, %v1059
      %v1124 = vpack.c.b16 %v1060, %v1060
      %v1125 = vpack.c.b16 %v1061, %v1061
      %v1126 = vpack.c.b16 %v1062, %v1062
      %v1127 = vpack.c.b16 %v1063, %v1063
      %v1128 = vpack.c.b16 %v1064, %v1064
      %v1129 = vpack.c.b16 %v1065, %v1065
      %v1130 = vpack.c.b16 %v1066, %v1066
      %v1131 = vpack.c.b16 %v1067, %v1067
      %v1132 = vpack.c.b16 %v1068, %v1068
      %v1133 = vpack.c.b16 %v1069, %v1069
      %v1134 = vpack.c.b16 %v1070, %v1070
      %v1135 = vpack.c.b16 %v1071, %v1071
      %v1136 = vpack.c.b16 %v1072, %v1072
      %v1137 = vpack.c.b16 %v1073, %v1073
      %v1138 = vpack.c.b16 %v1074, %v1074
      %v1139 = vpack.c.b16 %v1075, %v1075
      %v1140 = vpack.c.b16 %v1076, %v1076
      %v1141 = vpack.c.b16 %v1077, %v1077
      %v1142 = vpack.c.b16 %v1078, %v1078
      %v1143 = vpack.c.b16 %v1079, %v1079
      %v1144 = vpack.c.b16 %v1080, %v1080
      %v1145 = vpack.c.b16 %v1081, %v1081
      %v1146 = vpack.c.b16 %v1082, %v1082
      %v1147 = vpack.c.b16 %v1083, %v1083
      %v1148 = vpack.c.b16 %v1084, %v1084
      %v1149 = vpack.c.b16 %v1085, %v1085
      %v1150 = vpack.c.b16 %v1086, %v1086
      %v1151 = vpack.c.b16 %v1087, %v1087
      %v1152 = vpack.c.b16 %v1088, %v1088
      %v1153 = vpack.c.b16 %v1089, %v1089
      %v1154 = vpack.c.b16 %v1090, %v1090
      %v1155 = vpack.c.b16 %v1091, %v1091
      %v1156 = vpack.c.b16 %v1092, %v1092
      %v1157 = vpack.c.b16 %v1093, %v1093
      %v1158 = vpack.c.b16 %v1094, %v1094
      %v1159 = vpack.c.b16 %v1095, %v1095
      %v1160 = vpack.c.b16 %v1096, %v1096
      %v1161 = vpack.c.b16 %v1097, %v1097
      %v1162 = vpack.c.b16 %v1098, %v1098
      %v1163 = vpack.c.b16 %v1099, %v1099
      %v1164 = vpack.c.b16 %v1100, %v1100
      %v1165 = vpack.c.b16 %v1101, %v1101
      %v1166 = vpack.c.b16 %v1102, %v1102
      %v1167 = vpack.c.b16 %v1103, %v1103
      %v1168 = vpack.c.b16 %v1104, %v1104
      %v1169 = vpack.c.b16 %v1105, %v1105
      %v1170 = vpack.c.b16 %v1106, %v1106
      %v1171 = vpack.c.b16 %v1107, %v1107
      %v1172 = vpack.c.b16 %v1108, %v1108
      %v1173 = vpack.c.b16 %v1109, %v1109
      %v1174 = vpack.c.b16 %v1110, %v1110
      %v1175 = vpack.c.b16 %v1111, %v1111
      %v1176 = vpack.c.b16 %v1112, %v1112
      %v1177 = vpack.c.b16 %v1113, %v1113
      %v1178 = vpack.c.b16 %v1114, %v1114
      %v1179 = vpack.c.b16 %v1115, %v1115
      %v1180 = vpack.c.b16 %v1116, %v1116
      %v1181 = vpack.c.b16 %v1117, %v1117
      %v1182 = vpack.c.b16 %v1118, %v1118
      %v1183 = vpack.c.b16 %v1119, %v1119
      %1248 = vst [vmem:[%s264] sm:$0xf] %v1120
      %1249 = vst [vmem:[%s264 + $0x4] sm:$0xf] %v1121
      %1250 = vst [vmem:[%s264 + $0x8] sm:$0xf] %v1122
      %1251 = vst [vmem:[%s264 + $0xc] sm:$0xf] %v1123
      %1252 = vst [vmem:[%s264 + $0x10] sm:$0xf] %v1124
      %1253 = vst [vmem:[%s264 + $0x14] sm:$0xf] %v1125
      %1254 = vst [vmem:[%s264 + $0x18] sm:$0xf] %v1126
      %1255 = vst [vmem:[%s264 + $0x1c] sm:$0xf] %v1127
      %1256 = vst [vmem:[%s264 + $0x20] sm:$0xf] %v1128
      %1257 = vst [vmem:[%s264 + $0x24] sm:$0xf] %v1129
      %1258 = vst [vmem:[%s264 + $0x28] sm:$0xf] %v1130
      %1259 = vst [vmem:[%s264 + $0x2c] sm:$0xf] %v1131
      %1260 = vst [vmem:[%s264 + $0x30] sm:$0xf] %v1132
      %1261 = vst [vmem:[%s264 + $0x34] sm:$0xf] %v1133
      %1262 = vst [vmem:[%s264 + $0x38] sm:$0xf] %v1134
      %1263 = vst [vmem:[%s264 + $0x3c] sm:$0xf] %v1135
      %1264 = vst [vmem:[%s264 + $0x40] sm:$0xf] %v1136
      %1265 = vst [vmem:[%s264 + $0x44] sm:$0xf] %v1137
      %1266 = vst [vmem:[%s264 + $0x48] sm:$0xf] %v1138
      %1267 = vst [vmem:[%s264 + $0x4c] sm:$0xf] %v1139
      %1268 = vst [vmem:[%s264 + $0x50] sm:$0xf] %v1140
      %1269 = vst [vmem:[%s264 + $0x54] sm:$0xf] %v1141
      %1270 = vst [vmem:[%s264 + $0x58] sm:$0xf] %v1142
      %1271 = vst [vmem:[%s264 + $0x5c] sm:$0xf] %v1143
      %1272 = vst [vmem:[%s264 + $0x60] sm:$0xf] %v1144
      %1273 = vst [vmem:[%s264 + $0x64] sm:$0xf] %v1145
      %1274 = vst [vmem:[%s264 + $0x68] sm:$0xf] %v1146
      %1275 = vst [vmem:[%s264 + $0x6c] sm:$0xf] %v1147
      %1276 = vst [vmem:[%s264 + $0x70] sm:$0xf] %v1148
      %1277 = vst [vmem:[%s264 + $0x74] sm:$0xf] %v1149
      %1278 = vst [vmem:[%s264 + $0x78] sm:$0xf] %v1150
      %1279 = vst [vmem:[%s264 + $0x7c] sm:$0xf] %v1151
      %1280 = vst [vmem:[%s264 + $0x80] sm:$0xf] %v1152
      %1281 = vst [vmem:[%s264 + $0x84] sm:$0xf] %v1153
      %1282 = vst [vmem:[%s264 + $0x88] sm:$0xf] %v1154
      %1283 = vst [vmem:[%s264 + $0x8c] sm:$0xf] %v1155
      %1284 = vst [vmem:[%s264 + $0x90] sm:$0xf] %v1156
      %1285 = vst [vmem:[%s264 + $0x94] sm:$0xf] %v1157
      %1286 = vst [vmem:[%s264 + $0x98] sm:$0xf] %v1158
      %1287 = vst [vmem:[%s264 + $0x9c] sm:$0xf] %v1159
      %1288 = vst [vmem:[%s264 + $0xa0] sm:$0xf] %v1160
      %1289 = vst [vmem:[%s264 + $0xa4] sm:$0xf] %v1161
      %1290 = vst [vmem:[%s264 + $0xa8] sm:$0xf] %v1162
      %1291 = vst [vmem:[%s264 + $0xac] sm:$0xf] %v1163
      %1292 = vst [vmem:[%s264 + $0xb0] sm:$0xf] %v1164
      %1293 = vst [vmem:[%s264 + $0xb4] sm:$0xf] %v1165
      %1294 = vst [vmem:[%s264 + $0xb8] sm:$0xf] %v1166
      %1295 = vst [vmem:[%s264 + $0xbc] sm:$0xf] %v1167
      %1296 = vst [vmem:[%s264 + $0xc0] sm:$0xf] %v1168
      %1297 = vst [vmem:[%s264 + $0xc4] sm:$0xf] %v1169
      %1298 = vst [vmem:[%s264 + $0xc8] sm:$0xf] %v1170
      %1299 = vst [vmem:[%s264 + $0xcc] sm:$0xf] %v1171
      %1300 = vst [vmem:[%s264 + $0xd0] sm:$0xf] %v1172
      %1301 = vst [vmem:[%s264 + $0xd4] sm:$0xf] %v1173
      %1302 = vst [vmem:[%s264 + $0xd8] sm:$0xf] %v1174
      %1303 = vst [vmem:[%s264 + $0xdc] sm:$0xf] %v1175
      %1304 = vst [vmem:[%s264 + $0xe0] sm:$0xf] %v1176
      %1305 = vst [vmem:[%s264 + $0xe4] sm:$0xf] %v1177
      %1306 = vst [vmem:[%s264 + $0xe8] sm:$0xf] %v1178
      %1307 = vst [vmem:[%s264 + $0xec] sm:$0xf] %v1179
      %1308 = vst [vmem:[%s264 + $0xf0] sm:$0xf] %v1180
      %1309 = vst [vmem:[%s264 + $0xf4] sm:$0xf] %v1181
      %1310 = vst [vmem:[%s264 + $0xf8] sm:$0xf] %v1182
      %1311 = vst [vmem:[%s264 + $0xfc] sm:$0xf] %v1183
      %v1312 = vadd.f32 %v738, %v741
      %v1313 = vadd.f32 %v1312, %v746
      %v1314 = vadd.f32 %v1313, %v749
      %v1315 = vadd.f32 %v1314, %v754
      %v1316 = vadd.f32 %v1315, %v757
      %v1317 = vadd.f32 %v1316, %v762
      %v1318 = vadd.f32 %v1317, %v765
      %v1319 = vadd.f32 %v1318, %v770
      %v1320 = vadd.f32 %v1319, %v773
      %v1321 = vadd.f32 %v1320, %v778
      %v1322 = vadd.f32 %v1321, %v781
      %v1323 = vadd.f32 %v1322, %v786
      %v1324 = vadd.f32 %v1323, %v789
      %v1325 = vadd.f32 %v1324, %v794
      %v1326 = vadd.f32 %v1325, %v797
      %v1327 = vadd.f32 %v1326, %v802
      %v1328 = vadd.f32 %v1327, %v805
      %v1329 = vadd.f32 %v1328, %v810
      %v1330 = vadd.f32 %v1329, %v813
      %v1331 = vadd.f32 %v1330, %v818
      %v1332 = vadd.f32 %v1331, %v821
      %v1333 = vadd.f32 %v1332, %v826
      %v1334 = vadd.f32 %v1333, %v829
      %v1335 = vadd.f32 %v1334, %v834
      %v1336 = vadd.f32 %v1335, %v837
      %v1337 = vadd.f32 %v1336, %v842
      %v1338 = vadd.f32 %v1337, %v845
      %v1339 = vadd.f32 %v1338, %v850
      %v1340 = vadd.f32 %v1339, %v853
      %v1341 = vadd.f32 %v1340, %v858
      %v1342 = vadd.f32 %v1341, %v861
      %v1343 = vadd.f32 %v1342, %v866
      %v1344 = vadd.f32 %v1343, %v869
      %v1345 = vadd.f32 %v1344, %v874
      %v1346 = vadd.f32 %v1345, %v877
      %v1347 = vadd.f32 %v1346, %v882
      %v1348 = vadd.f32 %v1347, %v885
      %v1349 = vadd.f32 %v1348, %v890
      %v1350 = vadd.f32 %v1349, %v893
      %v1351 = vadd.f32 %v1350, %v898
      %v1352 = vadd.f32 %v1351, %v901
      %v1353 = vadd.f32 %v1352, %v906
      %v1354 = vadd.f32 %v1353, %v909
      %v1355 = vadd.f32 %v1354, %v914
      %v1356 = vadd.f32 %v1355, %v917
      %v1357 = vadd.f32 %v1356, %v922
      %v1358 = vadd.f32 %v1357, %v925
      %v1359 = vadd.f32 %v1358, %v930
      %v1360 = vadd.f32 %v1359, %v933
      %v1361 = vadd.f32 %v1360, %v938
      %v1362 = vadd.f32 %v1361, %v941
      %v1363 = vadd.f32 %v1362, %v946
      %v1364 = vadd.f32 %v1363, %v949
      %v1365 = vadd.f32 %v1364, %v954
      %v1366 = vadd.f32 %v1365, %v957
      %v1367 = vadd.f32 %v1366, %v962
      %v1368 = vadd.f32 %v1367, %v965
      %v1369 = vadd.f32 %v1368, %v970
      %v1370 = vadd.f32 %v1369, %v973
      %v1371 = vadd.f32 %v1370, %v978
      %v1372 = vadd.f32 %v1371, %v981
      %v1373 = vadd.f32 %v1372, %v986
      %v1374 = vadd.f32 %v1373, %v989
      %v1375 = vrot.slane %v1374, 4
      %v1376 = vadd.f32 %v1374, %v1375
      %v1377 = vrot.slane %v1376, 2
      %v1378 = vadd.f32 %v1376, %v1377
      %v1379 = vrot.slane %v1378, 1
      %v1380 = vadd.f32 %v1378, %v1379
      %1381 = vst [vmem:[%s268] sm:$0x1] %v1380
      %v1382 = vmul.f32 %v738, %v738
      %v1383 = vmul.f32 %v741, %v741
      %v1384 = vmul.f32 %v746, %v746
      %v1385 = vmul.f32 %v749, %v749
      %v1386 = vmul.f32 %v754, %v754
      %v1387 = vmul.f32 %v757, %v757
      %v1388 = vmul.f32 %v762, %v762
      %v1389 = vmul.f32 %v765, %v765
      %v1390 = vmul.f32 %v770, %v770
      %v1391 = vmul.f32 %v773, %v773
      %v1392 = vmul.f32 %v778, %v778
      %v1393 = vmul.f32 %v781, %v781
      %v1394 = vmul.f32 %v786, %v786
      %v1395 = vmul.f32 %v789, %v789
      %v1396 = vmul.f32 %v794, %v794
      %v1397 = vmul.f32 %v797, %v797
      %v1398 = vmul.f32 %v802, %v802
      %v1399 = vmul.f32 %v805, %v805
      %v1400 = vmul.f32 %v810, %v810
      %v1401 = vmul.f32 %v813, %v813
      %v1402 = vmul.f32 %v818, %v818
      %v1403 = vmul.f32 %v821, %v821
      %v1404 = vmul.f32 %v826, %v826
      %v1405 = vmul.f32 %v829, %v829
      %v1406 = vmul.f32 %v834, %v834
      %v1407 = vmul.f32 %v837, %v837
      %v1408 = vmul.f32 %v842, %v842
      %v1409 = vmul.f32 %v845, %v845
      %v1410 = vmul.f32 %v850, %v850
      %v1411 = vmul.f32 %v853, %v853
      %v1412 = vmul.f32 %v858, %v858
      %v1413 = vmul.f32 %v861, %v861
      %v1414 = vmul.f32 %v866, %v866
      %v1415 = vmul.f32 %v869, %v869
      %v1416 = vmul.f32 %v874, %v874
      %v1417 = vmul.f32 %v877, %v877
      %v1418 = vmul.f32 %v882, %v882
      %v1419 = vmul.f32 %v885, %v885
      %v1420 = vmul.f32 %v890, %v890
      %v1421 = vmul.f32 %v893, %v893
      %v1422 = vmul.f32 %v898, %v898
      %v1423 = vmul.f32 %v901, %v901
      %v1424 = vmul.f32 %v906, %v906
      %v1425 = vmul.f32 %v909, %v909
      %v1426 = vmul.f32 %v914, %v914
      %v1427 = vmul.f32 %v917, %v917
      %v1428 = vmul.f32 %v922, %v922
      %v1429 = vmul.f32 %v925, %v925
      %v1430 = vmul.f32 %v930, %v930
      %v1431 = vmul.f32 %v933, %v933
      %v1432 = vmul.f32 %v938, %v938
      %v1433 = vmul.f32 %v941, %v941
      %v1434 = vmul.f32 %v946, %v946
      %v1435 = vmul.f32 %v949, %v949
      %v1436 = vmul.f32 %v954, %v954
      %v1437 = vmul.f32 %v957, %v957
      %v1438 = vmul.f32 %v962, %v962
      %v1439 = vmul.f32 %v965, %v965
      %v1440 = vmul.f32 %v970, %v970
      %v1441 = vmul.f32 %v973, %v973
      %v1442 = vmul.f32 %v978, %v978
      %v1443 = vmul.f32 %v981, %v981
      %v1444 = vmul.f32 %v986, %v986
      %v1445 = vmul.f32 %v989, %v989
      %v1446 = vadd.f32 %v1382, %v1383
      %v1447 = vadd.f32 %v1446, %v1384
      %v1448 = vadd.f32 %v1447, %v1385
      %v1449 = vadd.f32 %v1448, %v1386
      %v1450 = vadd.f32 %v1449, %v1387
      %v1451 = vadd.f32 %v1450, %v1388
      %v1452 = vadd.f32 %v1451, %v1389
      %v1453 = vadd.f32 %v1452, %v1390
      %v1454 = vadd.f32 %v1453, %v1391
      %v1455 = vadd.f32 %v1454, %v1392
      %v1456 = vadd.f32 %v1455, %v1393
      %v1457 = vadd.f32 %v1456, %v1394
      %v1458 = vadd.f32 %v1457, %v1395
      %v1459 = vadd.f32 %v1458, %v1396
      %v1460 = vadd.f32 %v1459, %v1397
      %v1461 = vadd.f32 %v1460, %v1398
      %v1462 = vadd.f32 %v1461, %v1399
      %v1463 = vadd.f32 %v1462, %v1400
      %v1464 = vadd.f32 %v1463, %v1401
      %v1465 = vadd.f32 %v1464, %v1402
      %v1466 = vadd.f32 %v1465, %v1403
      %v1467 = vadd.f32 %v1466, %v1404
      %v1468 = vadd.f32 %v1467, %v1405
      %v1469 = vadd.f32 %v1468, %v1406
      %v1470 = vadd.f32 %v1469, %v1407
      %v1471 = vadd.f32 %v1470, %v1408
      %v1472 = vadd.f32 %v1471, %v1409
      %v1473 = vadd.f32 %v1472, %v1410
      %v1474 = vadd.f32 %v1473, %v1411
      %v1475 = vadd.f32 %v1474, %v1412
      %v1476 = vadd.f32 %v1475, %v1413
      %v1477 = vadd.f32 %v1476, %v1414
      %v1478 = vadd.f32 %v1477, %v1415
      %v1479 = vadd.f32 %v1478, %v1416
      %v1480 = vadd.f32 %v1479, %v1417
      %v1481 = vadd.f32 %v1480, %v1418
      %v1482 = vadd.f32 %v1481, %v1419
      %v1483 = vadd.f32 %v1482, %v1420
      %v1484 = vadd.f32 %v1483, %v1421
      %v1485 = vadd.f32 %v1484, %v1422
      %v1486 = vadd.f32 %v1485, %v1423
      %v1487 = vadd.f32 %v1486, %v1424
      %v1488 = vadd.f32 %v1487, %v1425
      %v1489 = vadd.f32 %v1488, %v1426
      %v1490 = vadd.f32 %v1489, %v1427
      %v1491 = vadd.f32 %v1490, %v1428
      %v1492 = vadd.f32 %v1491, %v1429
      %v1493 = vadd.f32 %v1492, %v1430
      %v1494 = vadd.f32 %v1493, %v1431
      %v1495 = vadd.f32 %v1494, %v1432
      %v1496 = vadd.f32 %v1495, %v1433
      %v1497 = vadd.f32 %v1496, %v1434
      %v1498 = vadd.f32 %v1497, %v1435
      %v1499 = vadd.f32 %v1498, %v1436
      %v1500 = vadd.f32 %v1499, %v1437
      %v1501 = vadd.f32 %v1500, %v1438
      %v1502 = vadd.f32 %v1501, %v1439
      %v1503 = vadd.f32 %v1502, %v1440
      %v1504 = vadd.f32 %v1503, %v1441
      %v1505 = vadd.f32 %v1504, %v1442
      %v1506 = vadd.f32 %v1505, %v1443
      %v1507 = vadd.f32 %v1506, %v1444
      %v1508 = vadd.f32 %v1507, %v1445
      %v1509 = vrot.slane %v1508, 4
      %v1510 = vadd.f32 %v1508, %v1509
      %v1511 = vrot.slane %v1510, 2
      %v1512 = vadd.f32 %v1510, %v1511
      %v1513 = vrot.slane %v1512, 1
      %v1514 = vadd.f32 %v1512, %v1513
      %1515 = vst [vmem:[%s271] sm:$0x1] %v1514
      %s1516 = smul.u32 64, %s18
      %p1517 = scmp.lt.s32.totalorder %s1516, 127
      %s1518 = scalar_select %p1517, %s1516, 127
      %s1519 = smul.addr %s1518, 4
      %s1520 = scalar_lea.vmem %s4, %s1519
      %p1521 = scmp.lt.s32.totalorder %s18, 1
      %s1522 = scalar_select %p1521, %s18, 1
      %s1523 = scalar_lea.vmem %s5, %s1522
      %p1524 = scmp.lt.s32.totalorder %s18, 1
      %s1525 = scalar_select %p1524, %s18, 1
      %s1526 = scalar_lea.vmem %s6, %s1525
      // Predicated region
      $region37: #{bottleneck_forward.6} parent=35 // pred_check
        %p1527 = pneg %p125
      $region38: #{bottleneck_forward.6} parent=35 // pred_check_branch
        %1529 = sbr.rel (%p1527) target = $region40
      $region39: #{bottleneck_forward.6} parent=35 // pred_region
        %s1530 = smul.u32 64, %s18
      $region40: #{bottleneck_forward.6} parent=35 // pred_fallthru
        _
      // Predicated region
      $region41: #{bottleneck_forward.6} parent=35 // pred_check
        %p1531 = pneg %p151
      $region42: #{bottleneck_forward.6} parent=35 // pred_check_branch
        %1533 = sbr.rel (%p1531) target = $region44
      $region43: #{bottleneck_forward.6} parent=35 // pred_region
        _
      $region44: #{bottleneck_forward.6} parent=35 // pred_fallthru
        _
      // Predicated region
      $region45: #{bottleneck_forward.6} parent=35 // pred_check
        %p1534 = pneg %p177
      $region46: #{bottleneck_forward.6} parent=35 // pred_check_branch
        %1536 = sbr.rel (%p1534) target = $region48
      $region47: #{bottleneck_forward.6} parent=35 // pred_region
        _
      $region48: #{bottleneck_forward.6} parent=35 // pred_fallthru
        _
    $region36: #{bottleneck_forward.6} parent=5 // pred_fallthru
      _
    %p1537 = scmp.le.s32.totalorder 2, %s13
    // Predicated region
    $region49: #{bottleneck_forward.6} parent=5 // pred_check
      %p1538 = pneg %p1537
    $region50: #{bottleneck_forward.6} parent=5 // pred_check_branch
      %1540 = sbr.rel (%p1538) target = $region52
    $region51: #{bottleneck_forward.6} parent=5 // pred_region
      %s1541 = ssub.s32 %s13, 2
      // Predicated region
      $region53: #{bottleneck_forward.6} parent=51 // pred_check
        %p1542 = pneg %p131
      $region54: #{bottleneck_forward.6} parent=51 // pred_check_branch
        %1544 = sbr.rel (%p1542) target = $region56
      $region55: #{bottleneck_forward.6} parent=51 // pred_region
        %s1545 = smul.u32 64, %s19
        %p1546 = scmp.lt.s32.totalorder %s1545, 127
        %s1547 = scalar_select %p1546, %s1545, 127
        %s1548 = smul.addr %s1547, 4
        %s1549 = scalar_lea.vmem %s4, %s1548
      $region56: #{bottleneck_forward.6} parent=51 // pred_fallthru
        _
      // Predicated region
      $region57: #{bottleneck_forward.6} parent=51 // pred_check
        %p1550 = pneg %p157
      $region58: #{bottleneck_forward.6} parent=51 // pred_check_branch
        %1552 = sbr.rel (%p1550) target = $region60
      $region59: #{bottleneck_forward.6} parent=51 // pred_region
        %p1553 = scmp.lt.s32.totalorder %s19, 1
        %s1554 = scalar_select %p1553, %s19, 1
        %s1555 = scalar_lea.vmem %s5, %s1554
      $region60: #{bottleneck_forward.6} parent=51 // pred_fallthru
        _
      // Predicated region
      $region61: #{bottleneck_forward.6} parent=51 // pred_check
        %p1556 = pneg %p183
      $region62: #{bottleneck_forward.6} parent=51 // pred_check_branch
        %1558 = sbr.rel (%p1556) target = $region64
      $region63: #{bottleneck_forward.6} parent=51 // pred_region
        %p1559 = scmp.lt.s32.totalorder %s19, 1
        %s1560 = scalar_select %p1559, %s19, 1
        %s1561 = scalar_lea.vmem %s6, %s1560
      $region64: #{bottleneck_forward.6} parent=51 // pred_fallthru
        _
    $region52: #{bottleneck_forward.6} parent=5 // pred_fallthru
      _
  $region6: #{bottleneck_forward.6} parent=0 // loop_footer
    %s17 = sadd.s32 1, %s13
  $region7: #{bottleneck_forward.6} parent=0 // loop_footer_branch
    %12 = sbr.rel target = $region3
  $region8: #{bottleneck_forward.6} parent=0 // loop_exit
    _

// kernel: bottleneck_forward.5
$region0: #{bottleneck_forward.5}
  #allocation0 [shape = 'u32[]', space=smem, size = 0x4, offset = 0x4, fixed_abs, tag = 'smem constant byte address 0x4 - core index']
  #allocation1 [shape = 'u32[144,128]{1,0:T(1,128)}', space=vmem, size = 0x12000, scoped, tag = 'internal scratch']
  #allocation2 [shape = 'bf16[18,18,128]{2,1,0:T(8,128)(2,1)}', space=vmem, size = 0x1b000, scoped, tag = 'scratch operand']
  #allocation3 [shape = 'bf16[256,1152]{1,0:T(16,128)(2,1)}', space=vmem, size = 0x90000, scoped, tag = 'scratch operand']
  %s0 = inlined_call_operand.vmem [shape: bf16[4,16,16,128], index: 0, kind: input, shape index: {}]
  %s1 = inlined_call_operand.vmem [shape: f32[1,128], index: 1, kind: input, shape index: {}]
  %s2 = inlined_call_operand.vmem [shape: f32[1,128], index: 2, kind: input, shape index: {}]
  %s3 = inlined_call_operand.vmem [shape: bf16[1152,128], index: 3, kind: input, shape index: {}]
  %s4 = inlined_call_operand.vmem [shape: bf16[1024,128], index: 4, kind: output, shape index: {0}]
  %s5 = inlined_call_operand.vmem [shape: f32[4,1,128], index: 5, kind: output, shape index: {1}]
  %s6 = inlined_call_operand.vmem [shape: f32[4,1,128], index: 6, kind: output, shape index: {2}]
  %7 = xla_tuple %s4, %s5, %s6
  %s8 = sld [smem:[#allocation0]]
  $region65: #{bottleneck_forward.5} parent=0
    _
  %s10 = ssub.s32 1, %s8
  %s11 = scalar_select 0, %s10, %s8
  loop: start=0, step=1, limit=6
  $region2: #{bottleneck_forward.5} parent=0 // loop_pre_header
    _
  $region3: #{bottleneck_forward.5} parent=0 // loop_header
    %s13 = sphi 0, %s17
    %p14 = scmp.ge.s32.totalorder %s13, 6
    %s23 = sphi 0, %s25
    %s26 = sphi 0, %s23
    %s27 = sphi 0, %s26
    %s43 = sphi 0, %s27
    %s47 = sphi 0, %s47
    %s49 = sphi 0, %s47
    %s50 = sphi 0, %s49
    %s64 = sphi 0, %s50
    %s68 = sphi 0, %s68
    %s70 = sphi 0, %s68
    %s71 = sphi 0, %s70
    %s85 = sphi 0, %s71
    %s89 = sphi 0, %s89
    %s91 = sphi 0, %s89
    %s92 = sphi 0, %s91
    %s106 = sphi 0, %s92
    %s112 = sphi 0, %s114
    %s115 = sphi 0, %s112
    %s116 = sphi 0, %s115
    %s132 = sphi 0, %s116
    %s138 = sphi 0, %s140
    %s141 = sphi 0, %s138
    %s142 = sphi 0, %s141
    %s158 = sphi 0, %s142
    %s164 = sphi 0, %s166
    %s167 = sphi 0, %s164
    %s168 = sphi 0, %s167
    %s184 = sphi 0, %s168
  $region4: #{bottleneck_forward.5} parent=0 // loop_header_branch
    %16 = sbr.rel (%p14) target = $region8
  $region5: #{bottleneck_forward.5} parent=0 // loop_body
    %s18 = ssub.s32 %s13, 1
    %s19 = ssub.s32 %s13, 2
    %s20 = sadd.s32 %s13, 1
    %s21 = ssub.s32 %s13, %s20
    %p22 = scmp.eq.s32.totalorder %s21, 0
    %s24 = sadd.s32 %s23, 1
    %s25 = scalar_select %p22, %s23, %s24
    %p28 = pneg %p22
    %p29 = scmp.eq.s32.totalorder %s13, 3
    %p30 = por %p28, %p29
    %p31 = scmp.ne.s32.totalorder %s23, %s26
    %p32 = scmp.eq.s32.totalorder %s13, 0
    %p33 = por %p31, %p32
    %p34 = scmp.ne.s32.totalorder %s23, %s26
    %p35 = scmp.eq.s32.totalorder %s18, 3
    %p36 = por %p34, %p35
    %p37 = scmp.ne.s32.totalorder %s26, %s27
    %p38 = scmp.eq.s32.totalorder %s18, 0
    %p39 = por %p37, %p38
    %p40 = scmp.ne.s32.totalorder %s26, %s27
    %p41 = scmp.eq.s32.totalorder %s19, 3
    %p42 = por %p40, %p41
    %p44 = scmp.ne.s32.totalorder %s27, %s43
    %p45 = scmp.eq.s32.totalorder %s19, 0
    %p46 = por %p44, %p45
    %s48 = sadd.s32 %s47, 1
    %p51 = scmp.eq.s32.totalorder %s13, 3
    %p52 = scmp.ne.s32.totalorder %s47, %s49
    %p53 = scmp.eq.s32.totalorder %s13, 0
    %p54 = por %p52, %p53
    %p55 = scmp.ne.s32.totalorder %s47, %s49
    %p56 = scmp.eq.s32.totalorder %s18, 3
    %p57 = por %p55, %p56
    %p58 = scmp.ne.s32.totalorder %s49, %s50
    %p59 = scmp.eq.s32.totalorder %s18, 0
    %p60 = por %p58, %p59
    %p61 = scmp.ne.s32.totalorder %s49, %s50
    %p62 = scmp.eq.s32.totalorder %s19, 3
    %p63 = por %p61, %p62
    %p65 = scmp.ne.s32.totalorder %s50, %s64
    %p66 = scmp.eq.s32.totalorder %s19, 0
    %p67 = por %p65, %p66
    %s69 = sadd.s32 %s68, 1
    %p72 = scmp.eq.s32.totalorder %s13, 3
    %p73 = scmp.ne.s32.totalorder %s68, %s70
    %p74 = scmp.eq.s32.totalorder %s13, 0
    %p75 = por %p73, %p74
    %p76 = scmp.ne.s32.totalorder %s68, %s70
    %p77 = scmp.eq.s32.totalorder %s18, 3
    %p78 = por %p76, %p77
    %p79 = scmp.ne.s32.totalorder %s70, %s71
    %p80 = scmp.eq.s32.totalorder %s18, 0
    %p81 = por %p79, %p80
    %p82 = scmp.ne.s32.totalorder %s70, %s71
    %p83 = scmp.eq.s32.totalorder %s19, 3
    %p84 = por %p82, %p83
    %p86 = scmp.ne.s32.totalorder %s71, %s85
    %p87 = scmp.eq.s32.totalorder %s19, 0
    %p88 = por %p86, %p87
    %s90 = sadd.s32 %s89, 1
    %p93 = scmp.eq.s32.totalorder %s13, 3
    %p94 = scmp.ne.s32.totalorder %s89, %s91
    %p95 = scmp.eq.s32.totalorder %s13, 0
    %p96 = por %p94, %p95
    %p97 = scmp.ne.s32.totalorder %s89, %s91
    %p98 = scmp.eq.s32.totalorder %s18, 3
    %p99 = por %p97, %p98
    %p100 = scmp.ne.s32.totalorder %s91, %s92
    %p101 = scmp.eq.s32.totalorder %s18, 0
    %p102 = por %p100, %p101
    %p103 = scmp.ne.s32.totalorder %s91, %s92
    %p104 = scmp.eq.s32.totalorder %s19, 3
    %p105 = por %p103, %p104
    %p107 = scmp.ne.s32.totalorder %s92, %s106
    %p108 = scmp.eq.s32.totalorder %s19, 0
    %p109 = por %p107, %p108
    %s110 = ssub.s32 %s13, %s20
    %p111 = scmp.eq.s32.totalorder %s110, 0
    %s113 = sadd.s32 %s112, 1
    %s114 = scalar_select %p111, %s112, %s113
    %p117 = pneg %p111
    %p118 = scmp.eq.s32.totalorder %s13, 3
    %p119 = por %p117, %p118
    %p120 = scmp.ne.s32.totalorder %s112, %s115
    %p121 = scmp.eq.s32.totalorder %s13, 0
    %p122 = por %p120, %p121
    %p123 = scmp.ne.s32.totalorder %s112, %s115
    %p124 = scmp.eq.s32.totalorder %s18, 3
    %p125 = por %p123, %p124
    %p126 = scmp.ne.s32.totalorder %s115, %s116
    %p127 = scmp.eq.s32.totalorder %s18, 0
    %p128 = por %p126, %p127
    %p129 = scmp.ne.s32.totalorder %s115, %s116
    %p130 = scmp.eq.s32.totalorder %s19, 3
    %p131 = por %p129, %p130
    %p133 = scmp.ne.s32.totalorder %s116, %s132
    %p134 = scmp.eq.s32.totalorder %s19, 0
    %p135 = por %p133, %p134
    %s136 = ssub.s32 %s13, %s20
    %p137 = scmp.eq.s32.totalorder %s136, 0
    %s139 = sadd.s32 %s138, 1
    %s140 = scalar_select %p137, %s138, %s139
    %p143 = pneg %p137
    %p144 = scmp.eq.s32.totalorder %s13, 3
    %p145 = por %p143, %p144
    %p146 = scmp.ne.s32.totalorder %s138, %s141
    %p147 = scmp.eq.s32.totalorder %s13, 0
    %p148 = por %p146, %p147
    %p149 = scmp.ne.s32.totalorder %s138, %s141
    %p150 = scmp.eq.s32.totalorder %s18, 3
    %p151 = por %p149, %p150
    %p152 = scmp.ne.s32.totalorder %s141, %s142
    %p153 = scmp.eq.s32.totalorder %s18, 0
    %p154 = por %p152, %p153
    %p155 = scmp.ne.s32.totalorder %s141, %s142
    %p156 = scmp.eq.s32.totalorder %s19, 3
    %p157 = por %p155, %p156
    %p159 = scmp.ne.s32.totalorder %s142, %s158
    %p160 = scmp.eq.s32.totalorder %s19, 0
    %p161 = por %p159, %p160
    %s162 = ssub.s32 %s13, %s20
    %p163 = scmp.eq.s32.totalorder %s162, 0
    %s165 = sadd.s32 %s164, 1
    %s166 = scalar_select %p163, %s164, %s165
    %p169 = pneg %p163
    %p170 = scmp.eq.s32.totalorder %s13, 3
    %p171 = por %p169, %p170
    %p172 = scmp.ne.s32.totalorder %s164, %s167
    %p173 = scmp.eq.s32.totalorder %s13, 0
    %p174 = por %p172, %p173
    %p175 = scmp.ne.s32.totalorder %s164, %s167
    %p176 = scmp.eq.s32.totalorder %s18, 3
    %p177 = por %p175, %p176
    %p178 = scmp.ne.s32.totalorder %s167, %s168
    %p179 = scmp.eq.s32.totalorder %s18, 0
    %p180 = por %p178, %p179
    %p181 = scmp.ne.s32.totalorder %s167, %s168
    %p182 = scmp.eq.s32.totalorder %s19, 3
    %p183 = por %p181, %p182
    %p185 = scmp.ne.s32.totalorder %s168, %s184
    %p186 = scmp.eq.s32.totalorder %s19, 0
    %p187 = por %p185, %p186
    %p188 = scmp.le.s32.totalorder 1, %s13
    %p189 = scmp.lt.s32.totalorder %s13, 5
    %p190 = pnand %p188, %p189
    %p191 = pneg %p190
    // Predicated region
    $region9: #{bottleneck_forward.5} parent=5 // pred_check
      _
    $region10: #{bottleneck_forward.5} parent=5 // pred_check_branch
      %193 = sbr.rel (%p190) target = $region12
    $region11: #{bottleneck_forward.5} parent=5 // pred_region
      %s194 = ssub.s32 %s13, 1
      // Predicated region
      $region13: #{bottleneck_forward.5} parent=11 // pred_check
        %p195 = pneg %p60
      $region14: #{bottleneck_forward.5} parent=11 // pred_check_branch
        %197 = sbr.rel (%p195) target = $region16
      $region15: #{bottleneck_forward.5} parent=11 // pred_region
        _
      $region16: #{bottleneck_forward.5} parent=11 // pred_fallthru
        _
      // Predicated region
      $region17: #{bottleneck_forward.5} parent=11 // pred_check
        %p198 = pneg %p81
      $region18: #{bottleneck_forward.5} parent=11 // pred_check_branch
        %200 = sbr.rel (%p198) target = $region20
      $region19: #{bottleneck_forward.5} parent=11 // pred_region
        _
      $region20: #{bottleneck_forward.5} parent=11 // pred_fallthru
        _
      // Predicated region
      $region21: #{bottleneck_forward.5} parent=11 // pred_check
        %p201 = pneg %p102
      $region22: #{bottleneck_forward.5} parent=11 // pred_check_branch
        %203 = sbr.rel (%p201) target = $region24
      $region23: #{bottleneck_forward.5} parent=11 // pred_region
        _
      $region24: #{bottleneck_forward.5} parent=11 // pred_fallthru
        _
    $region12: #{bottleneck_forward.5} parent=5 // pred_fallthru
      _
    %p204 = scmp.lt.s32.totalorder %s13, 4
    // Predicated region
    $region25: #{bottleneck_forward.5} parent=5 // pred_check
      %p205 = pneg %p204
    $region26: #{bottleneck_forward.5} parent=5 // pred_check_branch
      %207 = sbr.rel (%p205) target = $region28
    $region27: #{bottleneck_forward.5} parent=5 // pred_region
      // Predicated region
      $region29: #{bottleneck_forward.5} parent=27 // pred_check
        %p208 = pneg %p33
      $region30: #{bottleneck_forward.5} parent=27 // pred_check_branch
        %210 = sbr.rel (%p208) target = $region32
      $region31: #{bottleneck_forward.5} parent=27 // pred_region
        %p211 = scmp.lt.s32.totalorder %s13, 3
        %s212 = scalar_select %p211, %s13, 3
        %s213 = smul.addr %s212, 32
        %s214 = smul.addr %s213, 4
        %s215 = scalar_lea.vmem %s0, %s214
      $region32: #{bottleneck_forward.5} parent=27 // pred_fallthru
        _
    $region28: #{bottleneck_forward.5} parent=5 // pred_fallthru
      _
    %p216 = scmp.le.s32.totalorder 1, %s13
    %p217 = scmp.lt.s32.totalorder %s13, 5
    %p218 = pnand %p216, %p217
    %p219 = pneg %p218
    // Predicated region
    $region33: #{bottleneck_forward.5} parent=5 // pred_check
      _
    $region34: #{bottleneck_forward.5} parent=5 // pred_check_branch
      %221 = sbr.rel (%p218) target = $region36
    $region35: #{bottleneck_forward.5} parent=5 // pred_region
      %s222 = ssub.s32 %s13, 1
      %p223 = scmp.lt.s32.totalorder %s18, 3
      %s224 = scalar_select %p223, %s18, 3
      %s225 = smul.addr %s224, 32
      %s226 = smul.addr %s225, 4
      %s227 = scalar_lea.vmem %s0, %s226
      %p228 = pneg %p39
      %p229 = pneg %p36
      %p230 = pneg %p60
      %p231 = pneg %p57
      %p232 = pneg %p81
      %p233 = pneg %p78
      %p234 = pneg %p102
      %p235 = pneg %p99
      %p236 = pneg %p128
      %p237 = pneg %p125
      %s238 = smul.u32 32, %s18
      %p239 = scmp.lt.s32.totalorder %s238, 127
      %s240 = scalar_select %p239, %s238, 127
      %s241 = smul.addr %s240, 4
      %s242 = scalar_lea.vmem %s4, %s241
      %p243 = pneg %p154
      %p244 = pneg %p151
      %p245 = scmp.lt.s32.totalorder %s18, 3
      %s246 = scalar_select %p245, %s18, 3
      %s247 = scalar_lea.vmem %s5, %s246
      %p248 = pneg %p180
      %p249 = pneg %p177
      %p250 = scmp.lt.s32.totalorder %s18, 3
      %s251 = scalar_select %p250, %s18, 3
      %s252 = scalar_lea.vmem %s6, %s251
      %p253 = scmp.lt.s32.totalorder %s18, 3
      %s254 = scalar_select %p253, %s18, 3
      %s255 = smul.addr %s254, 32
      %s256 = smul.addr %s255, 4
      %s257 = scalar_lea.vmem %s0, %s256
      %s258 = smul.u32 32, %s18
      %p259 = scmp.lt.s32.totalorder %s258, 127
      %s260 = scalar_select %p259, %s258, 127
      %s261 = smul.addr %s260, 4
      %s262 = scalar_lea.vmem %s4, %s261
      %s263 = smul.u32 32, %s18
      %p264 = scmp.lt.s32.totalorder %s18, 3
      %s265 = scalar_select %p264, %s18, 3
      %s266 = scalar_lea.vmem %s5, %s265
      %p267 = scmp.lt.s32.totalorder %s18, 3
      %s268 = scalar_select %p267, %s18, 3
      %s269 = scalar_lea.vmem %s6, %s268
      %v271 = vld [vmem:[%s257] sm:$0xf]
      %v272 = vld [vmem:[%s257 + $0x4] sm:$0xf]
      %v273 = vld [vmem:[%s257 + $0x8] sm:$0xf]
      %v274 = vld [vmem:[%s257 + $0xc] sm:$0xf]
      %v275 = vld [vmem:[%s257 + $0x10] sm:$0xf]
      %v276 = vld [vmem:[%s257 + $0x14] sm:$0xf]
      %v277 = vld [vmem:[%s257 + $0x18] sm:$0xf]
      %v278 = vld [vmem:[%s257 + $0x1c] sm:$0xf]
      %v279 = vld [vmem:[%s257 + $0x20] sm:$0xf]
      %v280 = vld [vmem:[%s257 + $0x24] sm:$0xf]
      %v281 = vld [vmem:[%s257 + $0x28] sm:$0xf]
      %v282 = vld [vmem:[%s257 + $0x2c] sm:$0xf]
      %v283 = vld [vmem:[%s257 + $0x30] sm:$0xf]
      %v284 = vld [vmem:[%s257 + $0x34] sm:$0xf]
      %v285 = vld [vmem:[%s257 + $0x38] sm:$0xf]
      %v286 = vld [vmem:[%s257 + $0x3c] sm:$0xf]
      %v287 = vld [vmem:[%s257 + $0x40] sm:$0xf]
      %v288 = vld [vmem:[%s257 + $0x44] sm:$0xf]
      %v289 = vld [vmem:[%s257 + $0x48] sm:$0xf]
      %v290 = vld [vmem:[%s257 + $0x4c] sm:$0xf]
      %v291 = vld [vmem:[%s257 + $0x50] sm:$0xf]
      %v292 = vld [vmem:[%s257 + $0x54] sm:$0xf]
      %v293 = vld [vmem:[%s257 + $0x58] sm:$0xf]
      %v294 = vld [vmem:[%s257 + $0x5c] sm:$0xf]
      %v295 = vld [vmem:[%s257 + $0x60] sm:$0xf]
      %v296 = vld [vmem:[%s257 + $0x64] sm:$0xf]
      %v297 = vld [vmem:[%s257 + $0x68] sm:$0xf]
      %v298 = vld [vmem:[%s257 + $0x6c] sm:$0xf]
      %v299 = vld [vmem:[%s257 + $0x70] sm:$0xf]
      %v300 = vld [vmem:[%s257 + $0x74] sm:$0xf]
      %v301 = vld [vmem:[%s257 + $0x78] sm:$0xf]
      %v302 = vld [vmem:[%s257 + $0x7c] sm:$0xf]
      %v303 = vunpack.c.l.bf16 %v271
      %v304 = vunpack.c.l.bf16 %v272
      %v305 = vunpack.c.l.bf16 %v273
      %v306 = vunpack.c.l.bf16 %v274
      %v307 = vunpack.c.l.bf16 %v275
      %v308 = vunpack.c.l.bf16 %v276
      %v309 = vunpack.c.l.bf16 %v277
      %v310 = vunpack.c.l.bf16 %v278
      %v311 = vunpack.c.l.bf16 %v279
      %v312 = vunpack.c.l.bf16 %v280
      %v313 = vunpack.c.l.bf16 %v281
      %v314 = vunpack.c.l.bf16 %v282
      %v315 = vunpack.c.l.bf16 %v283
      %v316 = vunpack.c.l.bf16 %v284
      %v317 = vunpack.c.l.bf16 %v285
      %v318 = vunpack.c.l.bf16 %v286
      %v319 = vunpack.c.l.bf16 %v287
      %v320 = vunpack.c.l.bf16 %v288
      %v321 = vunpack.c.l.bf16 %v289
      %v322 = vunpack.c.l.bf16 %v290
      %v323 = vunpack.c.l.bf16 %v291
      %v324 = vunpack.c.l.bf16 %v292
      %v325 = vunpack.c.l.bf16 %v293
      %v326 = vunpack.c.l.bf16 %v294
      %v327 = vunpack.c.l.bf16 %v295
      %v328 = vunpack.c.l.bf16 %v296
      %v329 = vunpack.c.l.bf16 %v297
      %v330 = vunpack.c.l.bf16 %v298
      %v331 = vunpack.c.l.bf16 %v299
      %v332 = vunpack.c.l.bf16 %v300
      %v333 = vunpack.c.l.bf16 %v301
      %v334 = vunpack.c.l.bf16 %v302
      %v335 = vld [vmem:[%s1] sm:$0x1]
      %v337 = vlaneseq
      %v338 = vshrl.u32 %v337, 7
      %v339 = vsub.s32 0, %v338
      %v340 = vrot.slane %v335, %v339
      %v342 = vmul.f32 %v303, %v340
      %v343 = vmul.f32 %v304, %v340
      %v344 = vmul.f32 %v305, %v340
      %v345 = vmul.f32 %v306, %v340
      %v346 = vmul.f32 %v307, %v340
      %v347 = vmul.f32 %v308, %v340
      %v348 = vmul.f32 %v309, %v340
      %v349 = vmul.f32 %v310, %v340
      %v350 = vmul.f32 %v311, %v340
      %v351 = vmul.f32 %v312, %v340
      %v352 = vmul.f32 %v313, %v340
      %v353 = vmul.f32 %v314, %v340
      %v354 = vmul.f32 %v315, %v340
      %v355 = vmul.f32 %v316, %v340
      %v356 = vmul.f32 %v317, %v340
      %v357 = vmul.f32 %v318, %v340
      %v358 = vmul.f32 %v319, %v340
      %v359 = vmul.f32 %v320, %v340
      %v360 = vmul.f32 %v321, %v340
      %v361 = vmul.f32 %v322, %v340
      %v362 = vmul.f32 %v323, %v340
      %v363 = vmul.f32 %v324, %v340
      %v364 = vmul.f32 %v325, %v340
      %v365 = vmul.f32 %v326, %v340
      %v366 = vmul.f32 %v327, %v340
      %v367 = vmul.f32 %v328, %v340
      %v368 = vmul.f32 %v329, %v340
      %v369 = vmul.f32 %v330, %v340
      %v370 = vmul.f32 %v331, %v340
      %v371 = vmul.f32 %v332, %v340
      %v372 = vmul.f32 %v333, %v340
      %v373 = vmul.f32 %v334, %v340
      %v374 = vld [vmem:[%s2] sm:$0x1]
      %v376 = vlaneseq
      %v377 = vshrl.u32 %v376, 7
      %v378 = vsub.s32 0, %v377
      %v379 = vrot.slane %v374, %v378
      %v381 = vadd.f32 %v342, %v379
      %v382 = vadd.f32 %v343, %v379
      %v383 = vadd.f32 %v344, %v379
      %v384 = vadd.f32 %v345, %v379
      %v385 = vadd.f32 %v346, %v379
      %v386 = vadd.f32 %v347, %v379
      %v387 = vadd.f32 %v348, %v379
      %v388 = vadd.f32 %v349, %v379
      %v389 = vadd.f32 %v350, %v379
      %v390 = vadd.f32 %v351, %v379
      %v391 = vadd.f32 %v352, %v379
      %v392 = vadd.f32 %v353, %v379
      %v393 = vadd.f32 %v354, %v379
      %v394 = vadd.f32 %v355, %v379
      %v395 = vadd.f32 %v356, %v379
      %v396 = vadd.f32 %v357, %v379
      %v397 = vadd.f32 %v358, %v379
      %v398 = vadd.f32 %v359, %v379
      %v399 = vadd.f32 %v360, %v379
      %v400 = vadd.f32 %v361, %v379
      %v401 = vadd.f32 %v362, %v379
      %v402 = vadd.f32 %v363, %v379
      %v403 = vadd.f32 %v364, %v379
      %v404 = vadd.f32 %v365, %v379
      %v405 = vadd.f32 %v366, %v379
      %v406 = vadd.f32 %v367, %v379
      %v407 = vadd.f32 %v368, %v379
      %v408 = vadd.f32 %v369, %v379
      %v409 = vadd.f32 %v370, %v379
      %v410 = vadd.f32 %v371, %v379
      %v411 = vadd.f32 %v372, %v379
      %v412 = vadd.f32 %v373, %v379
      %v413 = vmax.f32 %v381, 0.0
      %v414 = vmax.f32 %v382, 0.0
      %v415 = vmax.f32 %v383, 0.0
      %v416 = vmax.f32 %v384, 0.0
      %v417 = vmax.f32 %v385, 0.0
      %v418 = vmax.f32 %v386, 0.0
      %v419 = vmax.f32 %v387, 0.0
      %v420 = vmax.f32 %v388, 0.0
      %v421 = vmax.f32 %v389, 0.0
      %v422 = vmax.f32 %v390, 0.0
      %v423 = vmax.f32 %v391, 0.0
      %v424 = vmax.f32 %v392, 0.0
      %v425 = vmax.f32 %v393, 0.0
      %v426 = vmax.f32 %v394, 0.0
      %v427 = vmax.f32 %v395, 0.0
      %v428 = vmax.f32 %v396, 0.0
      %v429 = vmax.f32 %v397, 0.0
      %v430 = vmax.f32 %v398, 0.0
      %v431 = vmax.f32 %v399, 0.0
      %v432 = vmax.f32 %v400, 0.0
      %v433 = vmax.f32 %v401, 0.0
      %v434 = vmax.f32 %v402, 0.0
      %v435 = vmax.f32 %v403, 0.0
      %v436 = vmax.f32 %v404, 0.0
      %v437 = vmax.f32 %v405, 0.0
      %v438 = vmax.f32 %v406, 0.0
      %v439 = vmax.f32 %v407, 0.0
      %v440 = vmax.f32 %v408, 0.0
      %v441 = vmax.f32 %v409, 0.0
      %v442 = vmax.f32 %v410, 0.0
      %v443 = vmax.f32 %v411, 0.0
      %v444 = vmax.f32 %v412, 0.0
      %v445 = vpack.c.bf16 %v414, %v413
      %v446 = vpack.c.bf16 %v416, %v415
      %v447 = vpack.c.bf16 %v418, %v417
      %v448 = vpack.c.bf16 %v420, %v419
      %v449 = vpack.c.bf16 %v422, %v421
      %v450 = vpack.c.bf16 %v424, %v423
      %v451 = vpack.c.bf16 %v426, %v425
      %v452 = vpack.c.bf16 %v428, %v427
      %v453 = vpack.c.bf16 %v430, %v429
      %v454 = vpack.c.bf16 %v432, %v431
      %v455 = vpack.c.bf16 %v434, %v433
      %v456 = vpack.c.bf16 %v436, %v435
      %v457 = vpack.c.bf16 %v438, %v437
      %v458 = vpack.c.bf16 %v440, %v439
      %v459 = vpack.c.bf16 %v442, %v441
      %v460 = vpack.c.bf16 %v444, %v443
      %461 = vst [vmem:[#allocation2] sm:$0xf] 0
      %462 = vst [vmem:[#allocation2 + $0x4] sm:$0xf] 0
      %463 = vst [vmem:[#allocation2 + $0x8] sm:$0x1] 0
      %464 = vst [vmem:[#allocation2 + $0xc] sm:$0xf] 0
      %465 = vst [vmem:[#allocation2 + $0x10] sm:$0xf] 0
      %466 = vst [vmem:[#allocation2 + $0x14] sm:$0x1] 0
      %467 = vst [vmem:[#allocation2 + $0x18] sm:$0xf] 0
      %468 = vst [vmem:[#allocation2 + $0x1c] sm:$0xf] 0
      %469 = vst [vmem:[#allocation2 + $0x20] sm:$0x1] 0
      %470 = vst [vmem:[#allocation2 + $0x24] sm:$0xf] 0
      %471 = vst [vmem:[#allocation2 + $0x28] sm:$0xf] 0
      %472 = vst [vmem:[#allocation2 + $0x2c] sm:$0x1] 0
      %473 = vst [vmem:[#allocation2 + $0x30] sm:$0xf] 0
      %474 = vst [vmem:[#allocation2 + $0x34] sm:$0xf] 0
      %475 = vst [vmem:[#allocation2 + $0x38] sm:$0x1] 0
      %476 = vst [vmem:[#allocation2 + $0x3c] sm:$0xf] 0
      %477 = vst [vmem:[#allocation2 + $0x40] sm:$0xf] 0
      %478 = vst [vmem:[#allocation2 + $0x44] sm:$0x1] 0
      %479 = vst [vmem:[#allocation2 + $0x48] sm:$0xf] 0
      %480 = vst [vmem:[#allocation2 + $0x4c] sm:$0xf] 0
      %481 = vst [vmem:[#allocation2 + $0x50] sm:$0x1] 0
      %482 = vst [vmem:[#allocation2 + $0x54] sm:$0xf] 0
      %483 = vst [vmem:[#allocation2 + $0x58] sm:$0xf] 0
      %484 = vst [vmem:[#allocation2 + $0x5c] sm:$0x1] 0
      %485 = vst [vmem:[#allocation2 + $0x60] sm:$0xf] 0
      %486 = vst [vmem:[#allocation2 + $0x64] sm:$0xf] 0
      %487 = vst [vmem:[#allocation2 + $0x68] sm:$0x1] 0
      %488 = vst [vmem:[#allocation2 + $0x6c] sm:$0xf] 0
      %489 = vst [vmem:[#allocation2 + $0x70] sm:$0xf] 0
      %490 = vst [vmem:[#allocation2 + $0x74] sm:$0x1] 0
      %491 = vst [vmem:[#allocation2 + $0x78] sm:$0xf] 0
      %492 = vst [vmem:[#allocation2 + $0x7c] sm:$0xf] 0
      %493 = vst [vmem:[#allocation2 + $0x80] sm:$0x1] 0
      %494 = vst [vmem:[#allocation2 + $0x84] sm:$0xf] 0
      %495 = vst [vmem:[#allocation2 + $0x88] sm:$0xf] 0
      %496 = vst [vmem:[#allocation2 + $0x8c] sm:$0x1] 0
      %497 = vst [vmem:[#allocation2 + $0x90] sm:$0xf] 0
      %498 = vst [vmem:[#allocation2 + $0x94] sm:$0xf] 0
      %499 = vst [vmem:[#allocation2 + $0x98] sm:$0x1] 0
      %500 = vst [vmem:[#allocation2 + $0x9c] sm:$0xf] 0
      %501 = vst [vmem:[#allocation2 + $0xa0] sm:$0xf] 0
      %502 = vst [vmem:[#allocation2 + $0xa4] sm:$0x1] 0
      %503 = vst [vmem:[#allocation2 + $0xa8] sm:$0xf] 0
      %504 = vst [vmem:[#allocation2 + $0xac] sm:$0xf] 0
      %505 = vst [vmem:[#allocation2 + $0xb0] sm:$0x1] 0
      %506 = vst [vmem:[#allocation2 + $0xb4] sm:$0xf] 0
      %507 = vst [vmem:[#allocation2 + $0xb8] sm:$0xf] 0
      %508 = vst [vmem:[#allocation2 + $0xbc] sm:$0x1] 0
      %509 = vst [vmem:[#allocation2 + $0xc0] sm:$0xf] 0
      %510 = vst [vmem:[#allocation2 + $0xc4] sm:$0xf] 0
      %511 = vst [vmem:[#allocation2 + $0xc8] sm:$0x1] 0
      %512 = vst [vmem:[#allocation2 + $0xcc] sm:$0xf] 0
      %513 = vst [vmem:[#allocation2 + $0xd0] sm:$0xf] 0
      %514 = vst [vmem:[#allocation2 + $0xd4] sm:$0x1] 0
      %v531 = vunpack.c.l.b16 %v445
      %v532 = vunpack.c.h.b16 %v445
      %v533 = vunpack.c.l.b16 %v446
      %v534 = vunpack.c.h.b16 %v446
      %v535 = vunpack.c.l.b16 %v447
      %v536 = vunpack.c.h.b16 %v447
      %v537 = vunpack.c.l.b16 %v448
      %v538 = vunpack.c.h.b16 %v448
      %v539 = vunpack.c.l.b16 %v449
      %v540 = vunpack.c.h.b16 %v449
      %v541 = vunpack.c.l.b16 %v450
      %v542 = vunpack.c.h.b16 %v450
      %v543 = vunpack.c.l.b16 %v451
      %v544 = vunpack.c.h.b16 %v451
      %v545 = vunpack.c.l.b16 %v452
      %v546 = vunpack.c.h.b16 %v452
      %v547 = vunpack.c.l.b16 %v453
      %v548 = vunpack.c.h.b16 %v453
      %v549 = vunpack.c.l.b16 %v454
      %v550 = vunpack.c.h.b16 %v454
      %v551 = vunpack.c.l.b16 %v455
      %v552 = vunpack.c.h.b16 %v455
      %v553 = vunpack.c.l.b16 %v456
      %v554 = vunpack.c.h.b16 %v456
      %v555 = vunpack.c.l.b16 %v457
      %v556 = vunpack.c.h.b16 %v457
      %v557 = vunpack.c.l.b16 %v458
      %v558 = vunpack.c.h.b16 %v458
      %v559 = vunpack.c.l.b16 %v459
      %v560 = vunpack.c.h.b16 %v459
      %v561 = vunpack.c.l.b16 %v460
      %v562 = vunpack.c.h.b16 %v460
      %v563 = vpack.c.b16 %v531, %v531
      %v564 = vpack.c.b16 %v532, %v532
      %v565 = vpack.c.b16 %v533, %v533
      %v566 = vpack.c.b16 %v534, %v534
      %v567 = vpack.c.b16 %v535, %v535
      %v568 = vpack.c.b16 %v536, %v536
      %v569 = vpack.c.b16 %v537, %v537
      %v570 = vpack.c.b16 %v538, %v538
      %v571 = vpack.c.b16 %v539, %v539
      %v572 = vpack.c.b16 %v540, %v540
      %v573 = vpack.c.b16 %v541, %v541
      %v574 = vpack.c.b16 %v542, %v542
      %v575 = vpack.c.b16 %v543, %v543
      %v576 = vpack.c.b16 %v544, %v544
      %v577 = vpack.c.b16 %v545, %v545
      %v578 = vpack.c.b16 %v546, %v546
      %v579 = vpack.c.b16 %v547, %v547
      %v580 = vpack.c.b16 %v548, %v548
      %v581 = vpack.c.b16 %v549, %v549
      %v582 = vpack.c.b16 %v550, %v550
      %v583 = vpack.c.b16 %v551, %v551
      %v584 = vpack.c.b16 %v552, %v552
      %v585 = vpack.c.b16 %v553, %v553
      %v586 = vpack.c.b16 %v554, %v554
      %v587 = vpack.c.b16 %v555, %v555
      %v588 = vpack.c.b16 %v556, %v556
      %v589 = vpack.c.b16 %v557, %v557
      %v590 = vpack.c.b16 %v558, %v558
      %v591 = vpack.c.b16 %v559, %v559
      %v592 = vpack.c.b16 %v560, %v560
      %v593 = vpack.c.b16 %v561, %v561
      %v594 = vpack.c.b16 %v562, %v562
      %vm595 = vsmask.f32 256
      %vm596 = vsmask.f32 4368
      %vm597 = vmor %vm595, %vm596
      %v599 = vshrl.u32 %v563, 16
      %v601 = vrot.slane %v599, 7
      %v602 = vshll.u32 %v563, 16
      %v604 = vor.u32 %v601, %v602
      %v605 = vrot.slane %v601, 4
      %v607 = vshrl.u32 %v564, 16
      %v609 = vrot.slane %v607, 7
      %v610 = vshll.u32 %v564, 16
      %v612 = vor.u32 %v609, %v610
      %v613 = vsel %vm597, %v605, %v612
      %v614 = vrot.slane %v609, 4
      %v616 = vshrl.u32 %v565, 16
      %v618 = vrot.slane %v616, 7
      %v619 = vshll.u32 %v565, 16
      %v621 = vor.u32 %v618, %v619
      %v622 = vrot.slane %v618, 4
      %v624 = vshrl.u32 %v566, 16
      %v626 = vrot.slane %v624, 7
      %v627 = vshll.u32 %v566, 16
      %v629 = vor.u32 %v626, %v627
      %v630 = vsel %vm597, %v622, %v629
      %v631 = vrot.slane %v626, 4
      %v633 = vshrl.u32 %v567, 16
      %v635 = vrot.slane %v633, 7
      %v636 = vshll.u32 %v567, 16
      %v638 = vor.u32 %v635, %v636
      %v639 = vrot.slane %v635, 4
      %v641 = vshrl.u32 %v568, 16
      %v643 = vrot.slane %v641, 7
      %v644 = vshll.u32 %v568, 16
      %v646 = vor.u32 %v643, %v644
      %v647 = vsel %vm597, %v639, %v646
      %v648 = vrot.slane %v643, 4
      %v650 = vshrl.u32 %v569, 16
      %v652 = vrot.slane %v650, 7
      %v653 = vshll.u32 %v569, 16
      %v655 = vor.u32 %v652, %v653
      %v656 = vrot.slane %v652, 4
      %v658 = vshrl.u32 %v570, 16
      %v660 = vrot.slane %v658, 7
      %v661 = vshll.u32 %v570, 16
      %v663 = vor.u32 %v660, %v661
      %v664 = vsel %vm597, %v656, %v663
      %v665 = vrot.slane %v660, 4
      %v667 = vshrl.u32 %v571, 16
      %v669 = vrot.slane %v667, 7
      %v670 = vshll.u32 %v571, 16
      %v672 = vor.u32 %v669, %v670
      %v673 = vrot.slane %v669, 4
      %v675 = vshrl.u32 %v572, 16
      %v677 = vrot.slane %v675, 7
      %v678 = vshll.u32 %v572, 16
      %v680 = vor.u32 %v677, %v678
      %v681 = vsel %vm597, %v673, %v680
      %v682 = vrot.slane %v677, 4
      %v684 = vshrl.u32 %v573, 16
      %v686 = vrot.slane %v684, 7
      %v687 = vshll.u32 %v573, 16
      %v689 = vor.u32 %v686, %v687
      %v690 = vrot.slane %v686, 4
      %v692 = vshrl.u32 %v574, 16
      %v694 = vrot.slane %v692, 7
      %v695 = vshll.u32 %v574, 16
      %v697 = vor.u32 %v694, %v695
      %v698 = vsel %vm597, %v690, %v697
      %v699 = vrot.slane %v694, 4
      %v701 = vshrl.u32 %v575, 16
      %v703 = vrot.slane %v701, 7
      %v704 = vshll.u32 %v575, 16
      %v706 = vor.u32 %v703, %v704
      %v707 = vrot.slane %v703, 4
      %v709 = vshrl.u32 %v576, 16
      %v711 = vrot.slane %v709, 7
      %v712 = vshll.u32 %v576, 16
      %v714 = vor.u32 %v711, %v712
      %v715 = vsel %vm597, %v707, %v714
      %v716 = vrot.slane %v711, 4
      %v718 = vshrl.u32 %v577, 16
      %v720 = vrot.slane %v718, 7
      %v721 = vshll.u32 %v577, 16
      %v723 = vor.u32 %v720, %v721
      %v724 = vrot.slane %v720, 4
      %v726 = vshrl.u32 %v578, 16
      %v728 = vrot.slane %v726, 7
      %v729 = vshll.u32 %v578, 16
      %v731 = vor.u32 %v728, %v729
      %v732 = vsel %vm597, %v724, %v731
      %v733 = vrot.slane %v728, 4
      %v735 = vshrl.u32 %v579, 16
      %v737 = vrot.slane %v735, 7
      %v738 = vshll.u32 %v579, 16
      %v740 = vor.u32 %v737, %v738
      %v741 = vrot.slane %v737, 4
      %v743 = vshrl.u32 %v580, 16
      %v745 = vrot.slane %v743, 7
      %v746 = vshll.u32 %v580, 16
      %v748 = vor.u32 %v745, %v746
      %v749 = vsel %vm597, %v741, %v748
      %v750 = vrot.slane %v745, 4
      %v752 = vshrl.u32 %v581, 16
      %v754 = vrot.slane %v752, 7
      %v755 = vshll.u32 %v581, 16
      %v757 = vor.u32 %v754, %v755
      %v758 = vrot.slane %v754, 4
      %v760 = vshrl.u32 %v582, 16
      %v762 = vrot.slane %v760, 7
      %v763 = vshll.u32 %v582, 16
      %v765 = vor.u32 %v762, %v763
      %v766 = vsel %vm597, %v758, %v765
      %v767 = vrot.slane %v762, 4
      %v769 = vshrl.u32 %v583, 16
      %v771 = vrot.slane %v769, 7
      %v772 = vshll.u32 %v583, 16
      %v774 = vor.u32 %v771, %v772
      %v775 = vrot.slane %v771, 4
      %v777 = vshrl.u32 %v584, 16
      %v779 = vrot.slane %v777, 7
      %v780 = vshll.u32 %v584, 16
      %v782 = vor.u32 %v779, %v780
      %v783 = vsel %vm597, %v775, %v782
      %v784 = vrot.slane %v779, 4
      %v786 = vshrl.u32 %v585, 16
      %v788 = vrot.slane %v786, 7
      %v789 = vshll.u32 %v585, 16
      %v791 = vor.u32 %v788, %v789
      %v792 = vrot.slane %v788, 4
      %v794 = vshrl.u32 %v586, 16
      %v796 = vrot.slane %v794, 7
      %v797 = vshll.u32 %v586, 16
      %v799 = vor.u32 %v796, %v797
      %v800 = vsel %vm597, %v792, %v799
      %v801 = vrot.slane %v796, 4
      %v803 = vshrl.u32 %v587, 16
      %v805 = vrot.slane %v803, 7
      %v806 = vshll.u32 %v587, 16
      %v808 = vor.u32 %v805, %v806
      %v809 = vrot.slane %v805, 4
      %v811 = vshrl.u32 %v588, 16
      %v813 = vrot.slane %v811, 7
      %v814 = vshll.u32 %v588, 16
      %v816 = vor.u32 %v813, %v814
      %v817 = vsel %vm597, %v809, %v816
      %v818 = vrot.slane %v813, 4
      %v820 = vshrl.u32 %v589, 16
      %v822 = vrot.slane %v820, 7
      %v823 = vshll.u32 %v589, 16
      %v825 = vor.u32 %v822, %v823
      %v826 = vrot.slane %v822, 4
      %v828 = vshrl.u32 %v590, 16
      %v830 = vrot.slane %v828, 7
      %v831 = vshll.u32 %v590, 16
      %v833 = vor.u32 %v830, %v831
      %v834 = vsel %vm597, %v826, %v833
      %v835 = vrot.slane %v830, 4
      %v837 = vshrl.u32 %v591, 16
      %v839 = vrot.slane %v837, 7
      %v840 = vshll.u32 %v591, 16
      %v842 = vor.u32 %v839, %v840
      %v843 = vrot.slane %v839, 4
      %v845 = vshrl.u32 %v592, 16
      %v847 = vrot.slane %v845, 7
      %v848 = vshll.u32 %v592, 16
      %v850 = vor.u32 %v847, %v848
      %v851 = vsel %vm597, %v843, %v850
      %v852 = vrot.slane %v847, 4
      %v854 = vshrl.u32 %v593, 16
      %v856 = vrot.slane %v854, 7
      %v857 = vshll.u32 %v593, 16
      %v859 = vor.u32 %v856, %v857
      %v860 = vrot.slane %v856, 4
      %v862 = vshrl.u32 %v594, 16
      %v864 = vrot.slane %v862, 7
      %v865 = vshll.u32 %v594, 16
      %v867 = vor.u32 %v864, %v865
      %v868 = vsel %vm597, %v860, %v867
      %v869 = vrot.slane %v864, 4
      %s918 = scalar_lea.vmem [#allocation2], 12
      %vm919 = vcmask 1043456
      %vm920 = vsmask.f32 7938
      %vm921 = vmand %vm919, %vm920
      %v922 = vld [vmem:[%s918] sm:$0xf]
      %v923 = vsel %vm921, %v604, %v922
      %924 = vst [vmem:[%s918] sm:$0xf] %v923
      %925 = vst [vmem:[%s918 + $0x4] sm:$0xf] %v613
      %vm926 = vcmask 1040384
      %vm927 = vmand %vm926, %vm595
      %v928 = vld [vmem:[%s918 + $0x8] sm:$0x1]
      %v929 = vsel %vm927, %v614, %v928
      %930 = vst [vmem:[%s918 + $0x8] sm:$0x1] %v929
      %v931 = vld [vmem:[%s918 + $0xc] sm:$0xf]
      %v932 = vsel %vm921, %v621, %v931
      %933 = vst [vmem:[%s918 + $0xc] sm:$0xf] %v932
      %934 = vst [vmem:[%s918 + $0x10] sm:$0xf] %v630
      %v935 = vld [vmem:[%s918 + $0x14] sm:$0x1]
      %v936 = vsel %vm927, %v631, %v935
      %937 = vst [vmem:[%s918 + $0x14] sm:$0x1] %v936
      %v938 = vld [vmem:[%s918 + $0x18] sm:$0xf]
      %v939 = vsel %vm921, %v638, %v938
      %940 = vst [vmem:[%s918 + $0x18] sm:$0xf] %v939
      %941 = vst [vmem:[%s918 + $0x1c] sm:$0xf] %v647
      %v942 = vld [vmem:[%s918 + $0x20] sm:$0x1]
      %v943 = vsel %vm927, %v648, %v942
      %944 = vst [vmem:[%s918 + $0x20] sm:$0x1] %v943
      %v945 = vld [vmem:[%s918 + $0x24] sm:$0xf]
      %v946 = vsel %vm921, %v655, %v945
      %947 = vst [vmem:[%s918 + $0x24] sm:$0xf] %v946
      %948 = vst [vmem:[%s918 + $0x28] sm:$0xf] %v664
      %v949 = vld [vmem:[%s918 + $0x2c] sm:$0x1]
      %v950 = vsel %vm927, %v665, %v949
      %951 = vst [vmem:[%s918 + $0x2c] sm:$0x1] %v950
      %v952 = vld [vmem:[%s918 + $0x30] sm:$0xf]
      %v953 = vsel %vm921, %v672, %v952
      %954 = vst [vmem:[%s918 + $0x30] sm:$0xf] %v953
      %955 = vst [vmem:[%s918 + $0x34] sm:$0xf] %v681
      %v956 = vld [vmem:[%s918 + $0x38] sm:$0x1]
      %v957 = vsel %vm927, %v682, %v956
      %958 = vst [vmem:[%s918 + $0x38] sm:$0x1] %v957
      %v959 = vld [vmem:[%s918 + $0x3c] sm:$0xf]
      %v960 = vsel %vm921, %v689, %v959
      %961 = vst [vmem:[%s918 + $0x3c] sm:$0xf] %v960
      %962 = vst [vmem:[%s918 + $0x40] sm:$0xf] %v698
      %v963 = vld [vmem:[%s918 + $0x44] sm:$0x1]
      %v964 = vsel %vm927, %v699, %v963
      %965 = vst [vmem:[%s918 + $0x44] sm:$0x1] %v964
      %v966 = vld [vmem:[%s918 + $0x48] sm:$0xf]
      %v967 = vsel %vm921, %v706, %v966
      %968 = vst [vmem:[%s918 + $0x48] sm:$0xf] %v967
      %969 = vst [vmem:[%s918 + $0x4c] sm:$0xf] %v715
      %v970 = vld [vmem:[%s918 + $0x50] sm:$0x1]
      %v971 = vsel %vm927, %v716, %v970
      %972 = vst [vmem:[%s918 + $0x50] sm:$0x1] %v971
      %v973 = vld [vmem:[%s918 + $0x54] sm:$0xf]
      %v974 = vsel %vm921, %v723, %v973
      %975 = vst [vmem:[%s918 + $0x54] sm:$0xf] %v974
      %976 = vst [vmem:[%s918 + $0x58] sm:$0xf] %v732
      %v977 = vld [vmem:[%s918 + $0x5c] sm:$0x1]
      %v978 = vsel %vm927, %v733, %v977
      %979 = vst [vmem:[%s918 + $0x5c] sm:$0x1] %v978
      %v980 = vld [vmem:[%s918 + $0x60] sm:$0xf]
      %v981 = vsel %vm921, %v740, %v980
      %982 = vst [vmem:[%s918 + $0x60] sm:$0xf] %v981
      %983 = vst [vmem:[%s918 + $0x64] sm:$0xf] %v749
      %v984 = vld [vmem:[%s918 + $0x68] sm:$0x1]
      %v985 = vsel %vm927, %v750, %v984
      %986 = vst [vmem:[%s918 + $0x68] sm:$0x1] %v985
      %v987 = vld [vmem:[%s918 + $0x6c] sm:$0xf]
      %v988 = vsel %vm921, %v757, %v987
      %989 = vst [vmem:[%s918 + $0x6c] sm:$0xf] %v988
      %990 = vst [vmem:[%s918 + $0x70] sm:$0xf] %v766
      %v991 = vld [vmem:[%s918 + $0x74] sm:$0x1]
      %v992 = vsel %vm927, %v767, %v991
      %993 = vst [vmem:[%s918 + $0x74] sm:$0x1] %v992
      %v994 = vld [vmem:[%s918 + $0x78] sm:$0xf]
      %v995 = vsel %vm921, %v774, %v994
      %996 = vst [vmem:[%s918 + $0x78] sm:$0xf] %v995
      %997 = vst [vmem:[%s918 + $0x7c] sm:$0xf] %v783
      %v998 = vld [vmem:[%s918 + $0x80] sm:$0x1]
      %v999 = vsel %vm927, %v784, %v998
      %1000 = vst [vmem:[%s918 + $0x80] sm:$0x1] %v999
      %v1001 = vld [vmem:[%s918 + $0x84] sm:$0xf]
      %v1002 = vsel %vm921, %v791, %v1001
      %1003 = vst [vmem:[%s918 + $0x84] sm:$0xf] %v1002
      %1004 = vst [vmem:[%s918 + $0x88] sm:$0xf] %v800
      %v1005 = vld [vmem:[%s918 + $0x8c] sm:$0x1]
      %v1006 = vsel %vm927, %v801, %v1005
      %1007 = vst [vmem:[%s918 + $0x8c] sm:$0x1] %v1006
      %v1008 = vld [vmem:[%s918 + $0x90] sm:$0xf]
      %v1009 = vsel %vm921, %v808, %v1008
      %1010 = vst [vmem:[%s918 + $0x90] sm:$0xf] %v1009
      %1011 = vst [vmem:[%s918 + $0x94] sm:$0xf] %v817
      %v1012 = vld [vmem:[%s918 + $0x98] sm:$0x1]
      %v1013 = vsel %vm927, %v818, %v1012
      %1014 = vst [vmem:[%s918 + $0x98] sm:$0x1] %v1013
      %v1015 = vld [vmem:[%s918 + $0x9c] sm:$0xf]
      %v1016 = vsel %vm921, %v825, %v1015
      %1017 = vst [vmem:[%s918 + $0x9c] sm:$0xf] %v1016
      %1018 = vst [vmem:[%s918 + $0xa0] sm:$0xf] %v834
      %v1019 = vld [vmem:[%s918 + $0xa4] sm:$0x1]
      %v1020 = vsel %vm927, %v835, %v1019
      %1021 = vst [vmem:[%s918 + $0xa4] sm:$0x1] %v1020
      %v1022 = vld [vmem:[%s918 + $0xa8] sm:$0xf]
      %v1023 = vsel %vm921, %v842, %v1022
      %1024 = vst [vmem:[%s918 + $0xa8] sm:$0xf] %v1023
      %1025 = vst [vmem:[%s918 + $0xac] sm:$0xf] %v851
      %v1026 = vld [vmem:[%s918 + $0xb0] sm:$0x1]
      %v1027 = vsel %vm927, %v852, %v1026
      %1028 = vst [vmem:[%s918 + $0xb0] sm:$0x1] %v1027
      %v1029 = vld [vmem:[%s918 + $0xb4] sm:$0xf]
      %v1030 = vsel %vm921, %v859, %v1029
      %1031 = vst [vmem:[%s918 + $0xb4] sm:$0xf] %v1030
      %1032 = vst [vmem:[%s918 + $0xb8] sm:$0xf] %v868
      %v1033 = vld [vmem:[%s918 + $0xbc] sm:$0x1]
      %v1034 = vsel %vm927, %v869, %v1033
      %1035 = vst [vmem:[%s918 + $0xbc] sm:$0x1] %v1034
      %v1036 = vld [vmem:[#allocation2] sm:$0xf]
      %v1037 = vld [vmem:[#allocation2 + $0x4] sm:$0xf]
      %v1038 = vld [vmem:[#allocation2 + $0xc] sm:$0xf]
      %v1039 = vld [vmem:[#allocation2 + $0x10] sm:$0xf]
      %v1040 = vld [vmem:[#allocation2 + $0x18] sm:$0xf]
      %v1041 = vld [vmem:[#allocation2 + $0x1c] sm:$0xf]
      %v1042 = vld [vmem:[#allocation2 + $0x24] sm:$0xf]
      %v1043 = vld [vmem:[#allocation2 + $0x28] sm:$0xf]
      %v1044 = vld [vmem:[#allocation2 + $0x30] sm:$0xf]
      %v1045 = vld [vmem:[#allocation2 + $0x34] sm:$0xf]
      %v1046 = vld [vmem:[#allocation2 + $0x3c] sm:$0xf]
      %v1047 = vld [vmem:[#allocation2 + $0x40] sm:$0xf]
      %v1048 = vld [vmem:[#allocation2 + $0x48] sm:$0xf]
      %v1049 = vld [vmem:[#allocation2 + $0x4c] sm:$0xf]
      %v1050 = vld [vmem:[#allocation2 + $0x54] sm:$0xf]
      %v1051 = vld [vmem:[#allocation2 + $0x58] sm:$0xf]
      %v1052 = vld [vmem:[#allocation2 + $0x60] sm:$0xf]
      %v1053 = vld [vmem:[#allocation2 + $0x64] sm:$0xf]
      %v1054 = vld [vmem:[#allocation2 + $0x6c] sm:$0xf]
      %v1055 = vld [vmem:[#allocation2 + $0x70] sm:$0xf]
      %v1056 = vld [vmem:[#allocation2 + $0x78] sm:$0xf]
      %v1057 = vld [vmem:[#allocation2 + $0x7c] sm:$0xf]
      %v1058 = vld [vmem:[#allocation2 + $0x84] sm:$0xf]
      %v1059 = vld [vmem:[#allocation2 + $0x88] sm:$0xf]
      %v1060 = vld [vmem:[#allocation2 + $0x90] sm:$0xf]
      %v1061 = vld [vmem:[#allocation2 + $0x94] sm:$0xf]
      %v1062 = vld [vmem:[#allocation2 + $0x9c] sm:$0xf]
      %v1063 = vld [vmem:[#allocation2 + $0xa0] sm:$0xf]
      %v1064 = vld [vmem:[#allocation2 + $0xa8] sm:$0xf]
      %v1065 = vld [vmem:[#allocation2 + $0xac] sm:$0xf]
      %v1066 = vld [vmem:[#allocation2 + $0xb4] sm:$0xf]
      %v1067 = vld [vmem:[#allocation2 + $0xb8] sm:$0xf]
      %v1100 = vunpack.c.l.b16 %v1036
      %v1101 = vunpack.c.l.b16 %v1037
      %v1102 = vunpack.c.l.b16 %v1038
      %v1103 = vunpack.c.l.b16 %v1039
      %v1104 = vunpack.c.l.b16 %v1040
      %v1105 = vunpack.c.l.b16 %v1041
      %v1106 = vunpack.c.l.b16 %v1042
      %v1107 = vunpack.c.l.b16 %v1043
      %v1108 = vunpack.c.l.b16 %v1044
      %v1109 = vunpack.c.l.b16 %v1045
      %v1110 = vunpack.c.l.b16 %v1046
      %v1111 = vunpack.c.l.b16 %v1047
      %v1112 = vunpack.c.l.b16 %v1048
      %v1113 = vunpack.c.l.b16 %v1049
      %v1114 = vunpack.c.l.b16 %v1050
      %v1115 = vunpack.c.l.b16 %v1051
      %v1116 = vunpack.c.l.b16 %v1052
      %v1117 = vunpack.c.l.b16 %v1053
      %v1118 = vunpack.c.l.b16 %v1054
      %v1119 = vunpack.c.l.b16 %v1055
      %v1120 = vunpack.c.l.b16 %v1056
      %v1121 = vunpack.c.l.b16 %v1057
      %v1122 = vunpack.c.l.b16 %v1058
      %v1123 = vunpack.c.l.b16 %v1059
      %v1124 = vunpack.c.l.b16 %v1060
      %v1125 = vunpack.c.l.b16 %v1061
      %v1126 = vunpack.c.l.b16 %v1062
      %v1127 = vunpack.c.l.b16 %v1063
      %v1128 = vunpack.c.l.b16 %v1064
      %v1129 = vunpack.c.l.b16 %v1065
      %v1130 = vunpack.c.l.b16 %v1066
      %v1131 = vunpack.c.l.b16 %v1067
      %v1132 = vpack.c.b16 %v1101, %v1100
      %v1133 = vpack.c.b16 %v1103, %v1102
      %v1134 = vpack.c.b16 %v1105, %v1104
      %v1135 = vpack.c.b16 %v1107, %v1106
      %v1136 = vpack.c.b16 %v1109, %v1108
      %v1137 = vpack.c.b16 %v1111, %v1110
      %v1138 = vpack.c.b16 %v1113, %v1112
      %v1139 = vpack.c.b16 %v1115, %v1114
      %v1140 = vpack.c.b16 %v1117, %v1116
      %v1141 = vpack.c.b16 %v1119, %v1118
      %v1142 = vpack.c.b16 %v1121, %v1120
      %v1143 = vpack.c.b16 %v1123, %v1122
      %v1144 = vpack.c.b16 %v1125, %v1124
      %v1145 = vpack.c.b16 %v1127, %v1126
      %v1146 = vpack.c.b16 %v1129, %v1128
      %v1147 = vpack.c.b16 %v1131, %v1130
      %1164 = vst [vmem:[#allocation3] sm:$0xff] %v1132
      %1165 = vst [vmem:[#allocation3 + $0x48] sm:$0xff] %v1133
      %1166 = vst [vmem:[#allocation3 + $0x90] sm:$0xff] %v1134
      %1167 = vst [vmem:[#allocation3 + $0xd8] sm:$0xff] %v1135
      %1168 = vst [vmem:[#allocation3 + $0x120] sm:$0xff] %v1136
      %1169 = vst [vmem:[#allocation3 + $0x168] sm:$0xff] %v1137
      %1170 = vst [vmem:[#allocation3 + $0x1b0] sm:$0xff] %v1138
      %1171 = vst [vmem:[#allocation3 + $0x1f8] sm:$0xff] %v1139
      %1172 = vst [vmem:[#allocation3 + $0x240] sm:$0xff] %v1140
      %1173 = vst [vmem:[#allocation3 + $0x288] sm:$0xff] %v1141
      %1174 = vst [vmem:[#allocation3 + $0x2d0] sm:$0xff] %v1142
      %1175 = vst [vmem:[#allocation3 + $0x318] sm:$0xff] %v1143
      %1176 = vst [vmem:[#allocation3 + $0x360] sm:$0xff] %v1144
      %1177 = vst [vmem:[#allocation3 + $0x3a8] sm:$0xff] %v1145
      %1178 = vst [vmem:[#allocation3 + $0x3f0] sm:$0xff] %v1146
      %1179 = vst [vmem:[#allocation3 + $0x438] sm:$0xff] %v1147
      %v1180 = vld [vmem:[#allocation2] sm:$0xf]
      %v1181 = vld [vmem:[#allocation2 + $0x4] sm:$0xf]
      %v1182 = vld [vmem:[#allocation2 + $0x8] sm:$0x1]
      %v1183 = vld [vmem:[#allocation2 + $0xc] sm:$0xf]
      %v1184 = vld [vmem:[#allocation2 + $0x10] sm:$0xf]
      %v1185 = vld [vmem:[#allocation2 + $0x14] sm:$0x1]
      %v1186 = vld [vmem:[#allocation2 + $0x18] sm:$0xf]
      %v1187 = vld [vmem:[#allocation2 + $0x1c] sm:$0xf]
      %v1188 = vld [vmem:[#allocation2 + $0x20] sm:$0x1]
      %v1189 = vld [vmem:[#allocation2 + $0x24] sm:$0xf]
      %v1190 = vld [vmem:[#allocation2 + $0x28] sm:$0xf]
      %v1191 = vld [vmem:[#allocation2 + $0x2c] sm:$0x1]
      %v1192 = vld [vmem:[#allocation2 + $0x30] sm:$0xf]
      %v1193 = vld [vmem:[#allocation2 + $0x34] sm:$0xf]
      %v1194 = vld [vmem:[#allocation2 + $0x38] sm:$0x1]
      %v1195 = vld [vmem:[#allocation2 + $0x3c] sm:$0xf]
      %v1196 = vld [vmem:[#allocation2 + $0x40] sm:$0xf]
      %v1197 = vld [vmem:[#allocation2 + $0x44] sm:$0x1]
      %v1198 = vld [vmem:[#allocation2 + $0x48] sm:$0xf]
      %v1199 = vld [vmem:[#allocation2 + $0x4c] sm:$0xf]
      %v1200 = vld [vmem:[#allocation2 + $0x50] sm:$0x1]
      %v1201 = vld [vmem:[#allocation2 + $0x54] sm:$0xf]
      %v1202 = vld [vmem:[#allocation2 + $0x58] sm:$0xf]
      %v1203 = vld [vmem:[#allocation2 + $0x5c] sm:$0x1]
      %v1204 = vld [vmem:[#allocation2 + $0x60] sm:$0xf]
      %v1205 = vld [vmem:[#allocation2 + $0x64] sm:$0xf]
      %v1206 = vld [vmem:[#allocation2 + $0x68] sm:$0x1]
      %v1207 = vld [vmem:[#allocation2 + $0x6c] sm:$0xf]
      %v1208 = vld [vmem:[#allocation2 + $0x70] sm:$0xf]
      %v1209 = vld [vmem:[#allocation2 + $0x74] sm:$0x1]
      %v1210 = vld [vmem:[#allocation2 + $0x78] sm:$0xf]
      %v1211 = vld [vmem:[#allocation2 + $0x7c] sm:$0xf]
      %v1212 = vld [vmem:[#allocation2 + $0x80] sm:$0x1]
      %v1213 = vld [vmem:[#allocation2 + $0x84] sm:$0xf]
      %v1214 = vld [vmem:[#allocation2 + $0x88] sm:$0xf]
      %v1215 = vld [vmem:[#allocation2 + $0x8c] sm:$0x1]
      %v1216 = vld [vmem:[#allocation2 + $0x90] sm:$0xf]
      %v1217 = vld [vmem:[#allocation2 + $0x94] sm:$0xf]
      %v1218 = vld [vmem:[#allocation2 + $0x98] sm:$0x1]
      %v1219 = vld [vmem:[#allocation2 + $0x9c] sm:$0xf]
      %v1220 = vld [vmem:[#allocation2 + $0xa0] sm:$0xf]
      %v1221 = vld [vmem:[#allocation2 + $0xa4] sm:$0x1]
      %v1222 = vld [vmem:[#allocation2 + $0xa8] sm:$0xf]
      %v1223 = vld [vmem:[#allocation2 + $0xac] sm:$0xf]
      %v1224 = vld [vmem:[#allocation2 + $0xb0] sm:$0x1]
      %v1225 = vld [vmem:[#allocation2 + $0xb4] sm:$0xf]
      %v1226 = vld [vmem:[#allocation2 + $0xb8] sm:$0xf]
      %v1227 = vld [vmem:[#allocation2 + $0xbc] sm:$0x1]
      %vm1228 = vsmask.f32 3328
      %vm1229 = vsmask.f32 7440
      %vm1230 = vmor %vm1228, %vm1229
      %v1232 = vshrl.u32 %v1180, 16
      %v1234 = vrot.slane %v1232, 4
      %v1235 = vshll.u32 %v1180, 16
      %v1237 = vrot.slane %v1235, 5
      %v1238 = vor.u32 %v1234, %v1237
      %v1239 = vrot.slane %v1238, 4
      %v1241 = vshll.u32 %v1181, 16
      %v1243 = vrot.slane %v1241, 5
      %v1244 = vsel %vm1230, %v1239, %v1243
      %v1245 = vshrl.u32 %v1181, 16
      %v1247 = vrot.slane %v1245, 4
      %v1248 = vor.u32 %v1247, %v1243
      %v1249 = vrot.slane %v1248, 4
      %v1251 = vshll.u32 %v1182, 16
      %v1253 = vrot.slane %v1251, 5
      %v1254 = vsel %vm1230, %v1249, %v1253
      %v1256 = vshrl.u32 %v1183, 16
      %v1258 = vrot.slane %v1256, 4
      %v1259 = vshll.u32 %v1183, 16
      %v1261 = vrot.slane %v1259, 5
      %v1262 = vor.u32 %v1258, %v1261
      %v1263 = vrot.slane %v1262, 4
      %v1265 = vshll.u32 %v1184, 16
      %v1267 = vrot.slane %v1265, 5
      %v1268 = vsel %vm1230, %v1263, %v1267
      %v1269 = vshrl.u32 %v1184, 16
      %v1271 = vrot.slane %v1269, 4
      %v1272 = vor.u32 %v1271, %v1267
      %v1273 = vrot.slane %v1272, 4
      %v1275 = vshll.u32 %v1185, 16
      %v1277 = vrot.slane %v1275, 5
      %v1278 = vsel %vm1230, %v1273, %v1277
      %v1280 = vshrl.u32 %v1186, 16
      %v1282 = vrot.slane %v1280, 4
      %v1283 = vshll.u32 %v1186, 16
      %v1285 = vrot.slane %v1283, 5
      %v1286 = vor.u32 %v1282, %v1285
      %v1287 = vrot.slane %v1286, 4
      %v1289 = vshll.u32 %v1187, 16
      %v1291 = vrot.slane %v1289, 5
      %v1292 = vsel %vm1230, %v1287, %v1291
      %v1293 = vshrl.u32 %v1187, 16
      %v1295 = vrot.slane %v1293, 4
      %v1296 = vor.u32 %v1295, %v1291
      %v1297 = vrot.slane %v1296, 4
      %v1299 = vshll.u32 %v1188, 16
      %v1301 = vrot.slane %v1299, 5
      %v1302 = vsel %vm1230, %v1297, %v1301
      %v1304 = vshrl.u32 %v1189, 16
      %v1306 = vrot.slane %v1304, 4
      %v1307 = vshll.u32 %v1189, 16
      %v1309 = vrot.slane %v1307, 5
      %v1310 = vor.u32 %v1306, %v1309
      %v1311 = vrot.slane %v1310, 4
      %v1313 = vshll.u32 %v1190, 16
      %v1315 = vrot.slane %v1313, 5
      %v1316 = vsel %vm1230, %v1311, %v1315
      %v1317 = vshrl.u32 %v1190, 16
      %v1319 = vrot.slane %v1317, 4
      %v1320 = vor.u32 %v1319, %v1315
      %v1321 = vrot.slane %v1320, 4
      %v1323 = vshll.u32 %v1191, 16
      %v1325 = vrot.slane %v1323, 5
      %v1326 = vsel %vm1230, %v1321, %v1325
      %v1328 = vshrl.u32 %v1192, 16
      %v1330 = vrot.slane %v1328, 4
      %v1331 = vshll.u32 %v1192, 16
      %v1333 = vrot.slane %v1331, 5
      %v1334 = vor.u32 %v1330, %v1333
      %v1335 = vrot.slane %v1334, 4
      %v1337 = vshll.u32 %v1193, 16
      %v1339 = vrot.slane %v1337, 5
      %v1340 = vsel %vm1230, %v1335, %v1339
      %v1341 = vshrl.u32 %v1193, 16
      %v1343 = vrot.slane %v1341, 4
      %v1344 = vor.u32 %v1343, %v1339
      %v1345 = vrot.slane %v1344, 4
      %v1347 = vshll.u32 %v1194, 16
      %v1349 = vrot.slane %v1347, 5
      %v1350 = vsel %vm1230, %v1345, %v1349
      %v1352 = vshrl.u32 %v1195, 16
      %v1354 = vrot.slane %v1352, 4
      %v1355 = vshll.u32 %v1195, 16
      %v1357 = vrot.slane %v1355, 5
      %v1358 = vor.u32 %v1354, %v1357
      %v1359 = vrot.slane %v1358, 4
      %v1361 = vshll.u32 %v1196, 16
      %v1363 = vrot.slane %v1361, 5
      %v1364 = vsel %vm1230, %v1359, %v1363
      %v1365 = vshrl.u32 %v1196, 16
      %v1367 = vrot.slane %v1365, 4
      %v1368 = vor.u32 %v1367, %v1363
      %v1369 = vrot.slane %v1368, 4
      %v1371 = vshll.u32 %v1197, 16
      %v1373 = vrot.slane %v1371, 5
      %v1374 = vsel %vm1230, %v1369, %v1373
      %v1376 = vshrl.u32 %v1198, 16
      %v1378 = vrot.slane %v1376, 4
      %v1379 = vshll.u32 %v1198, 16
      %v1381 = vrot.slane %v1379, 5
      %v1382 = vor.u32 %v1378, %v1381
      %v1383 = vrot.slane %v1382, 4
      %v1385 = vshll.u32 %v1199, 16
      %v1387 = vrot.slane %v1385, 5
      %v1388 = vsel %vm1230, %v1383, %v1387
      %v1389 = vshrl.u32 %v1199, 16
      %v1391 = vrot.slane %v1389, 4
      %v1392 = vor.u32 %v1391, %v1387
      %v1393 = vrot.slane %v1392, 4
      %v1395 = vshll.u32 %v1200, 16
      %v1397 = vrot.slane %v1395, 5
      %v1398 = vsel %vm1230, %v1393, %v1397
      %v1400 = vshrl.u32 %v1201, 16
      %v1402 = vrot.slane %v1400, 4
      %v1403 = vshll.u32 %v1201, 16
      %v1405 = vrot.slane %v1403, 5
      %v1406 = vor.u32 %v1402, %v1405
      %v1407 = vrot.slane %v1406, 4
      %v1409 = vshll.u32 %v1202, 16
      %v1411 = vrot.slane %v1409, 5
      %v1412 = vsel %vm1230, %v1407, %v1411
      %v1413 = vshrl.u32 %v1202, 16
      %v1415 = vrot.slane %v1413, 4
      %v1416 = vor.u32 %v1415, %v1411
      %v1417 = vrot.slane %v1416, 4
      %v1419 = vshll.u32 %v1203, 16
      %v1421 = vrot.slane %v1419, 5
      %v1422 = vsel %vm1230, %v1417, %v1421
      %v1424 = vshrl.u32 %v1204, 16
      %v1426 = vrot.slane %v1424, 4
      %v1427 = vshll.u32 %v1204, 16
      %v1429 = vrot.slane %v1427, 5
      %v1430 = vor.u32 %v1426, %v1429
      %v1431 = vrot.slane %v1430, 4
      %v1433 = vshll.u32 %v1205, 16
      %v1435 = vrot.slane %v1433, 5
      %v1436 = vsel %vm1230, %v1431, %v1435
      %v1437 = vshrl.u32 %v1205, 16
      %v1439 = vrot.slane %v1437, 4
      %v1440 = vor.u32 %v1439, %v1435
      %v1441 = vrot.slane %v1440, 4
      %v1443 = vshll.u32 %v1206, 16
      %v1445 = vrot.slane %v1443, 5
      %v1446 = vsel %vm1230, %v1441, %v1445
      %v1448 = vshrl.u32 %v1207, 16
      %v1450 = vrot.slane %v1448, 4
      %v1451 = vshll.u32 %v1207, 16
      %v1453 = vrot.slane %v1451, 5
      %v1454 = vor.u32 %v1450, %v1453
      %v1455 = vrot.slane %v1454, 4
      %v1457 = vshll.u32 %v1208, 16
      %v1459 = vrot.slane %v1457, 5
      %v1460 = vsel %vm1230, %v1455, %v1459
      %v1461 = vshrl.u32 %v1208, 16
      %v1463 = vrot.slane %v1461, 4
      %v1464 = vor.u32 %v1463, %v1459
      %v1465 = vrot.slane %v1464, 4
      %v1467 = vshll.u32 %v1209, 16
      %v1469 = vrot.slane %v1467, 5
      %v1470 = vsel %vm1230, %v1465, %v1469
      %v1472 = vshrl.u32 %v1210, 16
      %v1474 = vrot.slane %v1472, 4
      %v1475 = vshll.u32 %v1210, 16
      %v1477 = vrot.slane %v1475, 5
      %v1478 = vor.u32 %v1474, %v1477
      %v1479 = vrot.slane %v1478, 4
      %v1481 = vshll.u32 %v1211, 16
      %v1483 = vrot.slane %v1481, 5
      %v1484 = vsel %vm1230, %v1479, %v1483
      %v1485 = vshrl.u32 %v1211, 16
      %v1487 = vrot.slane %v1485, 4
      %v1488 = vor.u32 %v1487, %v1483
      %v1489 = vrot.slane %v1488, 4
      %v1491 = vshll.u32 %v1212, 16
      %v1493 = vrot.slane %v1491, 5
      %v1494 = vsel %vm1230, %v1489, %v1493
      %v1496 = vshrl.u32 %v1213, 16
      %v1498 = vrot.slane %v1496, 4
      %v1499 = vshll.u32 %v1213, 16
      %v1501 = vrot.slane %v1499, 5
      %v1502 = vor.u32 %v1498, %v1501
      %v1503 = vrot.slane %v1502, 4
      %v1505 = vshll.u32 %v1214, 16
      %v1507 = vrot.slane %v1505, 5
      %v1508 = vsel %vm1230, %v1503, %v1507
      %v1509 = vshrl.u32 %v1214, 16
      %v1511 = vrot.slane %v1509, 4
      %v1512 = vor.u32 %v1511, %v1507
      %v1513 = vrot.slane %v1512, 4
      %v1515 = vshll.u32 %v1215, 16
      %v1517 = vrot.slane %v1515, 5
      %v1518 = vsel %vm1230, %v1513, %v1517
      %v1520 = vshrl.u32 %v1216, 16
      %v1522 = vrot.slane %v1520, 4
      %v1523 = vshll.u32 %v1216, 16
      %v1525 = vrot.slane %v1523, 5
      %v1526 = vor.u32 %v1522, %v1525
      %v1527 = vrot.slane %v1526, 4
      %v1529 = vshll.u32 %v1217, 16
      %v1531 = vrot.slane %v1529, 5
      %v1532 = vsel %vm1230, %v1527, %v1531
      %v1533 = vshrl.u32 %v1217, 16
      %v1535 = vrot.slane %v1533, 4
      %v1536 = vor.u32 %v1535, %v1531
      %v1537 = vrot.slane %v1536, 4
      %v1539 = vshll.u32 %v1218, 16
      %v1541 = vrot.slane %v1539, 5
      %v1542 = vsel %vm1230, %v1537, %v1541
      %v1544 = vshrl.u32 %v1219, 16
      %v1546 = vrot.slane %v1544, 4
      %v1547 = vshll.u32 %v1219, 16
      %v1549 = vrot.slane %v1547, 5
      %v1550 = vor.u32 %v1546, %v1549
      %v1551 = vrot.slane %v1550, 4
      %v1553 = vshll.u32 %v1220, 16
      %v1555 = vrot.slane %v1553, 5
      %v1556 = vsel %vm1230, %v1551, %v1555
      %v1557 = vshrl.u32 %v1220, 16
      %v1559 = vrot.slane %v1557, 4
      %v1560 = vor.u32 %v1559, %v1555
      %v1561 = vrot.slane %v1560, 4
      %v1563 = vshll.u32 %v1221, 16
      %v1565 = vrot.slane %v1563, 5
      %v1566 = vsel %vm1230, %v1561, %v1565
      %v1568 = vshrl.u32 %v1222, 16
      %v1570 = vrot.slane %v1568, 4
      %v1571 = vshll.u32 %v1222, 16
      %v1573 = vrot.slane %v1571, 5
      %v1574 = vor.u32 %v1570, %v1573
      %v1575 = vrot.slane %v1574, 4
      %v1577 = vshll.u32 %v1223, 16
      %v1579 = vrot.slane %v1577, 5
      %v1580 = vsel %vm1230, %v1575, %v1579
      %v1581 = vshrl.u32 %v1223, 16
      %v1583 = vrot.slane %v1581, 4
      %v1584 = vor.u32 %v1583, %v1579
      %v1585 = vrot.slane %v1584, 4
      %v1587 = vshll.u32 %v1224, 16
      %v1589 = vrot.slane %v1587, 5
      %v1590 = vsel %vm1230, %v1585, %v1589
      %v1592 = vshrl.u32 %v1225, 16
      %v1594 = vrot.slane %v1592, 4
      %v1595 = vshll.u32 %v1225, 16
      %v1597 = vrot.slane %v1595, 5
      %v1598 = vor.u32 %v1594, %v1597
      %v1599 = vrot.slane %v1598, 4
      %v1601 = vshll.u32 %v1226, 16
      %v1603 = vrot.slane %v1601, 5
      %v1604 = vsel %vm1230, %v1599, %v1603
      %v1605 = vshrl.u32 %v1226, 16
      %v1607 = vrot.slane %v1605, 4
      %v1608 = vor.u32 %v1607, %v1603
      %v1609 = vrot.slane %v1608, 4
      %v1611 = vshll.u32 %v1227, 16
      %v1613 = vrot.slane %v1611, 5
      %v1614 = vsel %vm1230, %v1609, %v1613
      %v1615 = vunpack.c.l.b16 %v1244
      %v1616 = vunpack.c.l.b16 %v1254
      %v1617 = vunpack.c.l.b16 %v1268
      %v1618 = vunpack.c.l.b16 %v1278
      %v1619 = vunpack.c.l.b16 %v1292
      %v1620 = vunpack.c.l.b16 %v1302
      %v1621 = vunpack.c.l.b16 %v1316
      %v1622 = vunpack.c.l.b16 %v1326
      %v1623 = vunpack.c.l.b16 %v1340
      %v1624 = vunpack.c.l.b16 %v1350
      %v1625 = vunpack.c.l.b16 %v1364
      %v1626 = vunpack.c.l.b16 %v1374
      %v1627 = vunpack.c.l.b16 %v1388
      %v1628 = vunpack.c.l.b16 %v1398
      %v1629 = vunpack.c.l.b16 %v1412
      %v1630 = vunpack.c.l.b16 %v1422
      %v1631 = vunpack.c.l.b16 %v1436
      %v1632 = vunpack.c.l.b16 %v1446
      %v1633 = vunpack.c.l.b16 %v1460
      %v1634 = vunpack.c.l.b16 %v1470
      %v1635 = vunpack.c.l.b16 %v1484
      %v1636 = vunpack.c.l.b16 %v1494
      %v1637 = vunpack.c.l.b16 %v1508
      %v1638 = vunpack.c.l.b16 %v1518
      %v1639 = vunpack.c.l.b16 %v1532
      %v1640 = vunpack.c.l.b16 %v1542
      %v1641 = vunpack.c.l.b16 %v1556
      %v1642 = vunpack.c.l.b16 %v1566
      %v1643 = vunpack.c.l.b16 %v1580
      %v1644 = vunpack.c.l.b16 %v1590
      %v1645 = vunpack.c.l.b16 %v1604
      %v1646 = vunpack.c.l.b16 %v1614
      %v1647 = vpack.c.b16 %v1616, %v1615
      %v1648 = vpack.c.b16 %v1618, %v1617
      %v1649 = vpack.c.b16 %v1620, %v1619
      %v1650 = vpack.c.b16 %v1622, %v1621
      %v1651 = vpack.c.b16 %v1624, %v1623
      %v1652 = vpack.c.b16 %v1626, %v1625
      %v1653 = vpack.c.b16 %v1628, %v1627
      %v1654 = vpack.c.b16 %v1630, %v1629
      %v1655 = vpack.c.b16 %v1632, %v1631
      %v1656 = vpack.c.b16 %v1634, %v1633
      %v1657 = vpack.c.b16 %v1636, %v1635
      %v1658 = vpack.c.b16 %v1638, %v1637
      %v1659 = vpack.c.b16 %v1640, %v1639
      %v1660 = vpack.c.b16 %v1642, %v1641
      %v1661 = vpack.c.b16 %v1644, %v1643
      %v1662 = vpack.c.b16 %v1646, %v1645
      %1679 = vst [vmem:[#allocation3 + $0x8] sm:$0xff] %v1647
      %1680 = vst [vmem:[#allocation3 + $0x50] sm:$0xff] %v1648
      %1681 = vst [vmem:[#allocation3 + $0x98] sm:$0xff] %v1649
      %1682 = vst [vmem:[#allocation3 + $0xe0] sm:$0xff] %v1650
      %1683 = vst [vmem:[#allocation3 + $0x128] sm:$0xff] %v1651
      %1684 = vst [vmem:[#allocation3 + $0x170] sm:$0xff] %v1652
      %1685 = vst [vmem:[#allocation3 + $0x1b8] sm:$0xff] %v1653
      %1686 = vst [vmem:[#allocation3 + $0x200] sm:$0xff] %v1654
      %1687 = vst [vmem:[#allocation3 + $0x248] sm:$0xff] %v1655
      %1688 = vst [vmem:[#allocation3 + $0x290] sm:$0xff] %v1656
      %1689 = vst [vmem:[#allocation3 + $0x2d8] sm:$0xff] %v1657
      %1690 = vst [vmem:[#allocation3 + $0x320] sm:$0xff] %v1658
      %1691 = vst [vmem:[#allocation3 + $0x368] sm:$0xff] %v1659
      %1692 = vst [vmem:[#allocation3 + $0x3b0] sm:$0xff] %v1660
      %1693 = vst [vmem:[#allocation3 + $0x3f8] sm:$0xff] %v1661
      %1694 = vst [vmem:[#allocation3 + $0x440] sm:$0xff] %v1662
      %v1695 = vld [vmem:[#allocation2] sm:$0xe]
      %v1696 = vld [vmem:[#allocation2 + $0x4] sm:$0xf]
      %v1697 = vld [vmem:[#allocation2 + $0x8] sm:$0x1]
      %v1698 = vld [vmem:[#allocation2 + $0xc] sm:$0xe]
      %v1699 = vld [vmem:[#allocation2 + $0x10] sm:$0xf]
      %v1700 = vld [vmem:[#allocation2 + $0x14] sm:$0x1]
      %v1701 = vld [vmem:[#allocation2 + $0x18] sm:$0xe]
      %v1702 = vld [vmem:[#allocation2 + $0x1c] sm:$0xf]
      %v1703 = vld [vmem:[#allocation2 + $0x20] sm:$0x1]
      %v1704 = vld [vmem:[#allocation2 + $0x24] sm:$0xe]
      %v1705 = vld [vmem:[#allocation2 + $0x28] sm:$0xf]
      %v1706 = vld [vmem:[#allocation2 + $0x2c] sm:$0x1]
      %v1707 = vld [vmem:[#allocation2 + $0x30] sm:$0xe]
      %v1708 = vld [vmem:[#allocation2 + $0x34] sm:$0xf]
      %v1709 = vld [vmem:[#allocation2 + $0x38] sm:$0x1]
      %v1710 = vld [vmem:[#allocation2 + $0x3c] sm:$0xe]
      %v1711 = vld [vmem:[#allocation2 + $0x40] sm:$0xf]
      %v1712 = vld [vmem:[#allocation2 + $0x44] sm:$0x1]
      %v1713 = vld [vmem:[#allocation2 + $0x48] sm:$0xe]
      %v1714 = vld [vmem:[#allocation2 + $0x4c] sm:$0xf]
      %v1715 = vld [vmem:[#allocation2 + $0x50] sm:$0x1]
      %v1716 = vld [vmem:[#allocation2 + $0x54] sm:$0xe]
      %v1717 = vld [vmem:[#allocation2 + $0x58] sm:$0xf]
      %v1718 = vld [vmem:[#allocation2 + $0x5c] sm:$0x1]
      %v1719 = vld [vmem:[#allocation2 + $0x60] sm:$0xe]
      %v1720 = vld [vmem:[#allocation2 + $0x64] sm:$0xf]
      %v1721 = vld [vmem:[#allocation2 + $0x68] sm:$0x1]
      %v1722 = vld [vmem:[#allocation2 + $0x6c] sm:$0xe]
      %v1723 = vld [vmem:[#allocation2 + $0x70] sm:$0xf]
      %v1724 = vld [vmem:[#allocation2 + $0x74] sm:$0x1]
      %v1725 = vld [vmem:[#allocation2 + $0x78] sm:$0xe]
      %v1726 = vld [vmem:[#allocation2 + $0x7c] sm:$0xf]
      %v1727 = vld [vmem:[#allocation2 + $0x80] sm:$0x1]
      %v1728 = vld [vmem:[#allocation2 + $0x84] sm:$0xe]
      %v1729 = vld [vmem:[#allocation2 + $0x88] sm:$0xf]
      %v1730 = vld [vmem:[#allocation2 + $0x8c] sm:$0x1]
      %v1731 = vld [vmem:[#allocation2 + $0x90] sm:$0xe]
      %v1732 = vld [vmem:[#allocation2 + $0x94] sm:$0xf]
      %v1733 = vld [vmem:[#allocation2 + $0x98] sm:$0x1]
      %v1734 = vld [vmem:[#allocation2 + $0x9c] sm:$0xe]
      %v1735 = vld [vmem:[#allocation2 + $0xa0] sm:$0xf]
      %v1736 = vld [vmem:[#allocation2 + $0xa4] sm:$0x1]
      %v1737 = vld [vmem:[#allocation2 + $0xa8] sm:$0xe]
      %v1738 = vld [vmem:[#allocation2 + $0xac] sm:$0xf]
      %v1739 = vld [vmem:[#allocation2 + $0xb0] sm:$0x1]
      %v1740 = vld [vmem:[#allocation2 + $0xb4] sm:$0xe]
      %v1741 = vld [vmem:[#allocation2 + $0xb8] sm:$0xf]
      %v1742 = vld [vmem:[#allocation2 + $0xbc] sm:$0x1]
      %vm1791 = vcmask 1042432
      %vm1792 = vcmask 1046532
      %vm1793 = vmor %vm1791, %vm1792
      %v1794 = vrot.slane %v1695, 5
      %v1795 = vrot.slane %v1794, 4
      %v1796 = vrot.slane %v1696, 5
      %v1797 = vsel %vm1793, %v1795, %v1796
      %v1798 = vrot.slane %v1796, 4
      %v1799 = vrot.slane %v1697, 5
      %v1800 = vsel %vm1793, %v1798, %v1799
      %v1801 = vrot.slane %v1698, 5
      %v1802 = vrot.slane %v1801, 4
      %v1803 = vrot.slane %v1699, 5
      %v1804 = vsel %vm1793, %v1802, %v1803
      %v1805 = vrot.slane %v1803, 4
      %v1806 = vrot.slane %v1700, 5
      %v1807 = vsel %vm1793, %v1805, %v1806
      %v1808 = vrot.slane %v1701, 5
      %v1809 = vrot.slane %v1808, 4
      %v1810 = vrot.slane %v1702, 5
      %v1811 = vsel %vm1793, %v1809, %v1810
      %v1812 = vrot.slane %v1810, 4
      %v1813 = vrot.slane %v1703, 5
      %v1814 = vsel %vm1793, %v1812, %v1813
      %v1815 = vrot.slane %v1704, 5
      %v1816 = vrot.slane %v1815, 4
      %v1817 = vrot.slane %v1705, 5
      %v1818 = vsel %vm1793, %v1816, %v1817
      %v1819 = vrot.slane %v1817, 4
      %v1820 = vrot.slane %v1706, 5
      %v1821 = vsel %vm1793, %v1819, %v1820
      %v1822 = vrot.slane %v1707, 5
      %v1823 = vrot.slane %v1822, 4
      %v1824 = vrot.slane %v1708, 5
      %v1825 = vsel %vm1793, %v1823, %v1824
      %v1826 = vrot.slane %v1824, 4
      %v1827 = vrot.slane %v1709, 5
      %v1828 = vsel %vm1793, %v1826, %v1827
      %v1829 = vrot.slane %v1710, 5
      %v1830 = vrot.slane %v1829, 4
      %v1831 = vrot.slane %v1711, 5
      %v1832 = vsel %vm1793, %v1830, %v1831
      %v1833 = vrot.slane %v1831, 4
      %v1834 = vrot.slane %v1712, 5
      %v1835 = vsel %vm1793, %v1833, %v1834
      %v1836 = vrot.slane %v1713, 5
      %v1837 = vrot.slane %v1836, 4
      %v1838 = vrot.slane %v1714, 5
      %v1839 = vsel %vm1793, %v1837, %v1838
      %v1840 = vrot.slane %v1838, 4
      %v1841 = vrot.slane %v1715, 5
      %v1842 = vsel %vm1793, %v1840, %v1841
      %v1843 = vrot.slane %v1716, 5
      %v1844 = vrot.slane %v1843, 4
      %v1845 = vrot.slane %v1717, 5
      %v1846 = vsel %vm1793, %v1844, %v1845
      %v1847 = vrot.slane %v1845, 4
      %v1848 = vrot.slane %v1718, 5
      %v1849 = vsel %vm1793, %v1847, %v1848
      %v1850 = vrot.slane %v1719, 5
      %v1851 = vrot.slane %v1850, 4
      %v1852 = vrot.slane %v1720, 5
      %v1853 = vsel %vm1793, %v1851, %v1852
      %v1854 = vrot.slane %v1852, 4
      %v1855 = vrot.slane %v1721, 5
      %v1856 = vsel %vm1793, %v1854, %v1855
      %v1857 = vrot.slane %v1722, 5
      %v1858 = vrot.slane %v1857, 4
      %v1859 = vrot.slane %v1723, 5
      %v1860 = vsel %vm1793, %v1858, %v1859
      %v1861 = vrot.slane %v1859, 4
      %v1862 = vrot.slane %v1724, 5
      %v1863 = vsel %vm1793, %v1861, %v1862
      %v1864 = vrot.slane %v1725, 5
      %v1865 = vrot.slane %v1864, 4
      %v1866 = vrot.slane %v1726, 5
      %v1867 = vsel %vm1793, %v1865, %v1866
      %v1868 = vrot.slane %v1866, 4
      %v1869 = vrot.slane %v1727, 5
      %v1870 = vsel %vm1793, %v1868, %v1869
      %v1871 = vrot.slane %v1728, 5
      %v1872 = vrot.slane %v1871, 4
      %v1873 = vrot.slane %v1729, 5
      %v1874 = vsel %vm1793, %v1872, %v1873
      %v1875 = vrot.slane %v1873, 4
      %v1876 = vrot.slane %v1730, 5
      %v1877 = vsel %vm1793, %v1875, %v1876
      %v1878 = vrot.slane %v1731, 5
      %v1879 = vrot.slane %v1878, 4
      %v1880 = vrot.slane %v1732, 5
      %v1881 = vsel %vm1793, %v1879, %v1880
      %v1882 = vrot.slane %v1880, 4
      %v1883 = vrot.slane %v1733, 5
      %v1884 = vsel %vm1793, %v1882, %v1883
      %v1885 = vrot.slane %v1734, 5
      %v1886 = vrot.slane %v1885, 4
      %v1887 = vrot.slane %v1735, 5
      %v1888 = vsel %vm1793, %v1886, %v1887
      %v1889 = vrot.slane %v1887, 4
      %v1890 = vrot.slane %v1736, 5
      %v1891 = vsel %vm1793, %v1889, %v1890
      %v1892 = vrot.slane %v1737, 5
      %v1893 = vrot.slane %v1892, 4
      %v1894 = vrot.slane %v1738, 5
      %v1895 = vsel %vm1793, %v1893, %v1894
      %v1896 = vrot.slane %v1894, 4
      %v1897 = vrot.slane %v1739, 5
      %v1898 = vsel %vm1793, %v1896, %v1897
      %v1899 = vrot.slane %v1740, 5
      %v1900 = vrot.slane %v1899, 4
      %v1901 = vrot.slane %v1741, 5
      %v1902 = vsel %vm1793, %v1900, %v1901
      %v1903 = vrot.slane %v1901, 4
      %v1904 = vrot.slane %v1742, 5
      %v1905 = vsel %vm1793, %v1903, %v1904
      %v1906 = vunpack.c.l.b16 %v1797
      %v1907 = vunpack.c.l.b16 %v1800
      %v1908 = vunpack.c.l.b16 %v1804
      %v1909 = vunpack.c.l.b16 %v1807
      %v1910 = vunpack.c.l.b16 %v1811
      %v1911 = vunpack.c.l.b16 %v1814
      %v1912 = vunpack.c.l.b16 %v1818
      %v1913 = vunpack.c.l.b16 %v1821
      %v1914 = vunpack.c.l.b16 %v1825
      %v1915 = vunpack.c.l.b16 %v1828
      %v1916 = vunpack.c.l.b16 %v1832
      %v1917 = vunpack.c.l.b16 %v1835
      %v1918 = vunpack.c.l.b16 %v1839
      %v1919 = vunpack.c.l.b16 %v1842
      %v1920 = vunpack.c.l.b16 %v1846
      %v1921 = vunpack.c.l.b16 %v1849
      %v1922 = vunpack.c.l.b16 %v1853
      %v1923 = vunpack.c.l.b16 %v1856
      %v1924 = vunpack.c.l.b16 %v1860
      %v1925 = vunpack.c.l.b16 %v1863
      %v1926 = vunpack.c.l.b16 %v1867
      %v1927 = vunpack.c.l.b16 %v1870
      %v1928 = vunpack.c.l.b16 %v1874
      %v1929 = vunpack.c.l.b16 %v1877
      %v1930 = vunpack.c.l.b16 %v1881
      %v1931 = vunpack.c.l.b16 %v1884
      %v1932 = vunpack.c.l.b16 %v1888
      %v1933 = vunpack.c.l.b16 %v1891
      %v1934 = vunpack.c.l.b16 %v1895
      %v1935 = vunpack.c.l.b16 %v1898
      %v1936 = vunpack.c.l.b16 %v1902
      %v1937 = vunpack.c.l.b16 %v1905
      %v1938 = vpack.c.b16 %v1907, %v1906
      %v1939 = vpack.c.b16 %v1909, %v1908
      %v1940 = vpack.c.b16 %v1911, %v1910
      %v1941 = vpack.c.b16 %v1913, %v1912
      %v1942 = vpack.c.b16 %v1915, %v1914
      %v1943 = vpack.c.b16 %v1917, %v1916
      %v1944 = vpack.c.b16 %v1919, %v1918
      %v1945 = vpack.c.b16 %v1921, %v1920
      %v1946 = vpack.c.b16 %v1923, %v1922
      %v1947 = vpack.c.b16 %v1925, %v1924
      %v1948 = vpack.c.b16 %v1927, %v1926
      %v1949 = vpack.c.b16 %v1929, %v1928
      %v1950 = vpack.c.b16 %v1931, %v1930
      %v1951 = vpack.c.b16 %v1933, %v1932
      %v1952 = vpack.c.b16 %v1935, %v1934
      %v1953 = vpack.c.b16 %v1937, %v1936
      %1970 = vst [vmem:[#allocation3 + $0x10] sm:$0xff] %v1938
      %1971 = vst [vmem:[#allocation3 + $0x58] sm:$0xff] %v1939
      %1972 = vst [vmem:[#allocation3 + $0xa0] sm:$0xff] %v1940
      %1973 = vst [vmem:[#allocation3 + $0xe8] sm:$0xff] %v1941
      %1974 = vst [vmem:[#allocation3 + $0x130] sm:$0xff] %v1942
      %1975 = vst [vmem:[#allocation3 + $0x178] sm:$0xff] %v1943
      %1976 = vst [vmem:[#allocation3 + $0x1c0] sm:$0xff] %v1944
      %1977 = vst [vmem:[#allocation3 + $0x208] sm:$0xff] %v1945
      %1978 = vst [vmem:[#allocation3 + $0x250] sm:$0xff] %v1946
      %1979 = vst [vmem:[#allocation3 + $0x298] sm:$0xff] %v1947
      %1980 = vst [vmem:[#allocation3 + $0x2e0] sm:$0xff] %v1948
      %1981 = vst [vmem:[#allocation3 + $0x328] sm:$0xff] %v1949
      %1982 = vst [vmem:[#allocation3 + $0x370] sm:$0xff] %v1950
      %1983 = vst [vmem:[#allocation3 + $0x3b8] sm:$0xff] %v1951
      %1984 = vst [vmem:[#allocation3 + $0x400] sm:$0xff] %v1952
      %1985 = vst [vmem:[#allocation3 + $0x448] sm:$0xff] %v1953
      %v1986 = vld [vmem:[%s918] sm:$0xf]
      %v1987 = vld [vmem:[%s918 + $0x4] sm:$0xf]
      %v1988 = vld [vmem:[%s918 + $0xc] sm:$0xf]
      %v1989 = vld [vmem:[%s918 + $0x10] sm:$0xf]
      %v1990 = vld [vmem:[%s918 + $0x18] sm:$0xf]
      %v1991 = vld [vmem:[%s918 + $0x1c] sm:$0xf]
      %v1992 = vld [vmem:[%s918 + $0x24] sm:$0xf]
      %v1993 = vld [vmem:[%s918 + $0x28] sm:$0xf]
      %v1994 = vld [vmem:[%s918 + $0x30] sm:$0xf]
      %v1995 = vld [vmem:[%s918 + $0x34] sm:$0xf]
      %v1996 = vld [vmem:[%s918 + $0x3c] sm:$0xf]
      %v1997 = vld [vmem:[%s918 + $0x40] sm:$0xf]
      %v1998 = vld [vmem:[%s918 + $0x48] sm:$0xf]
      %v1999 = vld [vmem:[%s918 + $0x4c] sm:$0xf]
      %v2000 = vld [vmem:[%s918 + $0x54] sm:$0xf]
      %v2001 = vld [vmem:[%s918 + $0x58] sm:$0xf]
      %v2002 = vld [vmem:[%s918 + $0x60] sm:$0xf]
      %v2003 = vld [vmem:[%s918 + $0x64] sm:$0xf]
      %v2004 = vld [vmem:[%s918 + $0x6c] sm:$0xf]
      %v2005 = vld [vmem:[%s918 + $0x70] sm:$0xf]
      %v2006 = vld [vmem:[%s918 + $0x78] sm:$0xf]
      %v2007 = vld [vmem:[%s918 + $0x7c] sm:$0xf]
      %v2008 = vld [vmem:[%s918 + $0x84] sm:$0xf]
      %v2009 = vld [vmem:[%s918 + $0x88] sm:$0xf]
      %v2010 = vld [vmem:[%s918 + $0x90] sm:$0xf]
      %v2011 = vld [vmem:[%s918 + $0x94] sm:$0xf]
      %v2012 = vld [vmem:[%s918 + $0x9c] sm:$0xf]
      %v2013 = vld [vmem:[%s918 + $0xa0] sm:$0xf]
      %v2014 = vld [vmem:[%s918 + $0xa8] sm:$0xf]
      %v2015 = vld [vmem:[%s918 + $0xac] sm:$0xf]
      %v2016 = vld [vmem:[%s918 + $0xb4] sm:$0xf]
      %v2017 = vld [vmem:[%s918 + $0xb8] sm:$0xf]
      %v2050 = vunpack.c.l.b16 %v1986
      %v2051 = vunpack.c.l.b16 %v1987
      %v2052 = vunpack.c.l.b16 %v1988
      %v2053 = vunpack.c.l.b16 %v1989
      %v2054 = vunpack.c.l.b16 %v1990
      %v2055 = vunpack.c.l.b16 %v1991
      %v2056 = vunpack.c.l.b16 %v1992
      %v2057 = vunpack.c.l.b16 %v1993
      %v2058 = vunpack.c.l.b16 %v1994
      %v2059 = vunpack.c.l.b16 %v1995
      %v2060 = vunpack.c.l.b16 %v1996
      %v2061 = vunpack.c.l.b16 %v1997
      %v2062 = vunpack.c.l.b16 %v1998
      %v2063 = vunpack.c.l.b16 %v1999
      %v2064 = vunpack.c.l.b16 %v2000
      %v2065 = vunpack.c.l.b16 %v2001
      %v2066 = vunpack.c.l.b16 %v2002
      %v2067 = vunpack.c.l.b16 %v2003
      %v2068 = vunpack.c.l.b16 %v2004
      %v2069 = vunpack.c.l.b16 %v2005
      %v2070 = vunpack.c.l.b16 %v2006
      %v2071 = vunpack.c.l.b16 %v2007
      %v2072 = vunpack.c.l.b16 %v2008
      %v2073 = vunpack.c.l.b16 %v2009
      %v2074 = vunpack.c.l.b16 %v2010
      %v2075 = vunpack.c.l.b16 %v2011
      %v2076 = vunpack.c.l.b16 %v2012
      %v2077 = vunpack.c.l.b16 %v2013
      %v2078 = vunpack.c.l.b16 %v2014
      %v2079 = vunpack.c.l.b16 %v2015
      %v2080 = vunpack.c.l.b16 %v2016
      %v2081 = vunpack.c.l.b16 %v2017
      %v2082 = vpack.c.b16 %v2051, %v2050
      %v2083 = vpack.c.b16 %v2053, %v2052
      %v2084 = vpack.c.b16 %v2055, %v2054
      %v2085 = vpack.c.b16 %v2057, %v2056
      %v2086 = vpack.c.b16 %v2059, %v2058
      %v2087 = vpack.c.b16 %v2061, %v2060
      %v2088 = vpack.c.b16 %v2063, %v2062
      %v2089 = vpack.c.b16 %v2065, %v2064
      %v2090 = vpack.c.b16 %v2067, %v2066
      %v2091 = vpack.c.b16 %v2069, %v2068
      %v2092 = vpack.c.b16 %v2071, %v2070
      %v2093 = vpack.c.b16 %v2073, %v2072
      %v2094 = vpack.c.b16 %v2075, %v2074
      %v2095 = vpack.c.b16 %v2077, %v2076
      %v2096 = vpack.c.b16 %v2079, %v2078
      %v2097 = vpack.c.b16 %v2081, %v2080
      %2114 = vst [vmem:[#allocation3 + $0x18] sm:$0xff] %v2082
      %2115 = vst [vmem:[#allocation3 + $0x60] sm:$0xff] %v2083
      %2116 = vst [vmem:[#allocation3 + $0xa8] sm:$0xff] %v2084
      %2117 = vst [vmem:[#allocation3 + $0xf0] sm:$0xff] %v2085
      %2118 = vst [vmem:[#allocation3 + $0x138] sm:$0xff] %v2086
      %2119 = vst [vmem:[#allocation3 + $0x180] sm:$0xff] %v2087
      %2120 = vst [vmem:[#allocation3 + $0x1c8] sm:$0xff] %v2088
      %2121 = vst [vmem:[#allocation3 + $0x210] sm:$0xff] %v2089
      %2122 = vst [vmem:[#allocation3 + $0x258] sm:$0xff] %v2090
      %2123 = vst [vmem:[#allocation3 + $0x2a0] sm:$0xff] %v2091
      %2124 = vst [vmem:[#allocation3 + $0x2e8] sm:$0xff] %v2092
      %2125 = vst [vmem:[#allocation3 + $0x330] sm:$0xff] %v2093
      %2126 = vst [vmem:[#allocation3 + $0x378] sm:$0xff] %v2094
      %2127 = vst [vmem:[#allocation3 + $0x3c0] sm:$0xff] %v2095
      %2128 = vst [vmem:[#allocation3 + $0x408] sm:$0xff] %v2096
      %2129 = vst [vmem:[#allocation3 + $0x450] sm:$0xff] %v2097
      %v2130 = vld [vmem:[%s918] sm:$0xf]
      %v2131 = vld [vmem:[%s918 + $0x4] sm:$0xf]
      %v2132 = vld [vmem:[%s918 + $0x8] sm:$0x1]
      %v2133 = vld [vmem:[%s918 + $0xc] sm:$0xf]
      %v2134 = vld [vmem:[%s918 + $0x10] sm:$0xf]
      %v2135 = vld [vmem:[%s918 + $0x14] sm:$0x1]
      %v2136 = vld [vmem:[%s918 + $0x18] sm:$0xf]
      %v2137 = vld [vmem:[%s918 + $0x1c] sm:$0xf]
      %v2138 = vld [vmem:[%s918 + $0x20] sm:$0x1]
      %v2139 = vld [vmem:[%s918 + $0x24] sm:$0xf]
      %v2140 = vld [vmem:[%s918 + $0x28] sm:$0xf]
      %v2141 = vld [vmem:[%s918 + $0x2c] sm:$0x1]
      %v2142 = vld [vmem:[%s918 + $0x30] sm:$0xf]
      %v2143 = vld [vmem:[%s918 + $0x34] sm:$0xf]
      %v2144 = vld [vmem:[%s918 + $0x38] sm:$0x1]
      %v2145 = vld [vmem:[%s918 + $0x3c] sm:$0xf]
      %v2146 = vld [vmem:[%s918 + $0x40] sm:$0xf]
      %v2147 = vld [vmem:[%s918 + $0x44] sm:$0x1]
      %v2148 = vld [vmem:[%s918 + $0x48] sm:$0xf]
      %v2149 = vld [vmem:[%s918 + $0x4c] sm:$0xf]
      %v2150 = vld [vmem:[%s918 + $0x50] sm:$0x1]
      %v2151 = vld [vmem:[%s918 + $0x54] sm:$0xf]
      %v2152 = vld [vmem:[%s918 + $0x58] sm:$0xf]
      %v2153 = vld [vmem:[%s918 + $0x5c] sm:$0x1]
      %v2154 = vld [vmem:[%s918 + $0x60] sm:$0xf]
      %v2155 = vld [vmem:[%s918 + $0x64] sm:$0xf]
      %v2156 = vld [vmem:[%s918 + $0x68] sm:$0x1]
      %v2157 = vld [vmem:[%s918 + $0x6c] sm:$0xf]
      %v2158 = vld [vmem:[%s918 + $0x70] sm:$0xf]
      %v2159 = vld [vmem:[%s918 + $0x74] sm:$0x1]
      %v2160 = vld [vmem:[%s918 + $0x78] sm:$0xf]
      %v2161 = vld [vmem:[%s918 + $0x7c] sm:$0xf]
      %v2162 = vld [vmem:[%s918 + $0x80] sm:$0x1]
      %v2163 = vld [vmem:[%s918 + $0x84] sm:$0xf]
      %v2164 = vld [vmem:[%s918 + $0x88] sm:$0xf]
      %v2165 = vld [vmem:[%s918 + $0x8c] sm:$0x1]
      %v2166 = vld [vmem:[%s918 + $0x90] sm:$0xf]
      %v2167 = vld [vmem:[%s918 + $0x94] sm:$0xf]
      %v2168 = vld [vmem:[%s918 + $0x98] sm:$0x1]
      %v2169 = vld [vmem:[%s918 + $0x9c] sm:$0xf]
      %v2170 = vld [vmem:[%s918 + $0xa0] sm:$0xf]
      %v2171 = vld [vmem:[%s918 + $0xa4] sm:$0x1]
      %v2172 = vld [vmem:[%s918 + $0xa8] sm:$0xf]
      %v2173 = vld [vmem:[%s918 + $0xac] sm:$0xf]
      %v2174 = vld [vmem:[%s918 + $0xb0] sm:$0x1]
      %v2175 = vld [vmem:[%s918 + $0xb4] sm:$0xf]
      %v2176 = vld [vmem:[%s918 + $0xb8] sm:$0xf]
      %v2177 = vld [vmem:[%s918 + $0xbc] sm:$0x1]
      %v2179 = vshrl.u32 %v2130, 16
      %v2181 = vrot.slane %v2179, 4
      %v2182 = vshll.u32 %v2130, 16
      %v2184 = vrot.slane %v2182, 5
      %v2185 = vor.u32 %v2181, %v2184
      %v2186 = vrot.slane %v2185, 4
      %v2188 = vshll.u32 %v2131, 16
      %v2190 = vrot.slane %v2188, 5
      %v2191 = vsel %vm1230, %v2186, %v2190
      %v2192 = vshrl.u32 %v2131, 16
      %v2194 = vrot.slane %v2192, 4
      %v2195 = vor.u32 %v2194, %v2190
      %v2196 = vrot.slane %v2195, 4
      %v2198 = vshll.u32 %v2132, 16
      %v2200 = vrot.slane %v2198, 5
      %v2201 = vsel %vm1230, %v2196, %v2200
      %v2203 = vshrl.u32 %v2133, 16
      %v2205 = vrot.slane %v2203, 4
      %v2206 = vshll.u32 %v2133, 16
      %v2208 = vrot.slane %v2206, 5
      %v2209 = vor.u32 %v2205, %v2208
      %v2210 = vrot.slane %v2209, 4
      %v2212 = vshll.u32 %v2134, 16
      %v2214 = vrot.slane %v2212, 5
      %v2215 = vsel %vm1230, %v2210, %v2214
      %v2216 = vshrl.u32 %v2134, 16
      %v2218 = vrot.slane %v2216, 4
      %v2219 = vor.u32 %v2218, %v2214
      %v2220 = vrot.slane %v2219, 4
      %v2222 = vshll.u32 %v2135, 16
      %v2224 = vrot.slane %v2222, 5
      %v2225 = vsel %vm1230, %v2220, %v2224
      %v2227 = vshrl.u32 %v2136, 16
      %v2229 = vrot.slane %v2227, 4
      %v2230 = vshll.u32 %v2136, 16
      %v2232 = vrot.slane %v2230, 5
      %v2233 = vor.u32 %v2229, %v2232
      %v2234 = vrot.slane %v2233, 4
      %v2236 = vshll.u32 %v2137, 16
      %v2238 = vrot.slane %v2236, 5
      %v2239 = vsel %vm1230, %v2234, %v2238
      %v2240 = vshrl.u32 %v2137, 16
      %v2242 = vrot.slane %v2240, 4
      %v2243 = vor.u32 %v2242, %v2238
      %v2244 = vrot.slane %v2243, 4
      %v2246 = vshll.u32 %v2138, 16
      %v2248 = vrot.slane %v2246, 5
      %v2249 = vsel %vm1230, %v2244, %v2248
      %v2251 = vshrl.u32 %v2139, 16
      %v2253 = vrot.slane %v2251, 4
      %v2254 = vshll.u32 %v2139, 16
      %v2256 = vrot.slane %v2254, 5
      %v2257 = vor.u32 %v2253, %v2256
      %v2258 = vrot.slane %v2257, 4
      %v2260 = vshll.u32 %v2140, 16
      %v2262 = vrot.slane %v2260, 5
      %v2263 = vsel %vm1230, %v2258, %v2262
      %v2264 = vshrl.u32 %v2140, 16
      %v2266 = vrot.slane %v2264, 4
      %v2267 = vor.u32 %v2266, %v2262
      %v2268 = vrot.slane %v2267, 4
      %v2270 = vshll.u32 %v2141, 16
      %v2272 = vrot.slane %v2270, 5
      %v2273 = vsel %vm1230, %v2268, %v2272
      %v2275 = vshrl.u32 %v2142, 16
      %v2277 = vrot.slane %v2275, 4
      %v2278 = vshll.u32 %v2142, 16
      %v2280 = vrot.slane %v2278, 5
      %v2281 = vor.u32 %v2277, %v2280
      %v2282 = vrot.slane %v2281, 4
      %v2284 = vshll.u32 %v2143, 16
      %v2286 = vrot.slane %v2284, 5
      %v2287 = vsel %vm1230, %v2282, %v2286
      %v2288 = vshrl.u32 %v2143, 16
      %v2290 = vrot.slane %v2288, 4
      %v2291 = vor.u32 %v2290, %v2286
      %v2292 = vrot.slane %v2291, 4
      %v2294 = vshll.u32 %v2144, 16
      %v2296 = vrot.slane %v2294, 5
      %v2297 = vsel %vm1230, %v2292, %v2296
      %v2299 = vshrl.u32 %v2145, 16
      %v2301 = vrot.slane %v2299, 4
      %v2302 = vshll.u32 %v2145, 16
      %v2304 = vrot.slane %v2302, 5
      %v2305 = vor.u32 %v2301, %v2304
      %v2306 = vrot.slane %v2305, 4
      %v2308 = vshll.u32 %v2146, 16
      %v2310 = vrot.slane %v2308, 5
      %v2311 = vsel %vm1230, %v2306, %v2310
      %v2312 = vshrl.u32 %v2146, 16
      %v2314 = vrot.slane %v2312, 4
      %v2315 = vor.u32 %v2314, %v2310
      %v2316 = vrot.slane %v2315, 4
      %v2318 = vshll.u32 %v2147, 16
      %v2320 = vrot.slane %v2318, 5
      %v2321 = vsel %vm1230, %v2316, %v2320
      %v2323 = vshrl.u32 %v2148, 16
      %v2325 = vrot.slane %v2323, 4
      %v2326 = vshll.u32 %v2148, 16
      %v2328 = vrot.slane %v2326, 5
      %v2329 = vor.u32 %v2325, %v2328
      %v2330 = vrot.slane %v2329, 4
      %v2332 = vshll.u32 %v2149, 16
      %v2334 = vrot.slane %v2332, 5
      %v2335 = vsel %vm1230, %v2330, %v2334
      %v2336 = vshrl.u32 %v2149, 16
      %v2338 = vrot.slane %v2336, 4
      %v2339 = vor.u32 %v2338, %v2334
      %v2340 = vrot.slane %v2339, 4
      %v2342 = vshll.u32 %v2150, 16
      %v2344 = vrot.slane %v2342, 5
      %v2345 = vsel %vm1230, %v2340, %v2344
      %v2347 = vshrl.u32 %v2151, 16
      %v2349 = vrot.slane %v2347, 4
      %v2350 = vshll.u32 %v2151, 16
      %v2352 = vrot.slane %v2350, 5
      %v2353 = vor.u32 %v2349, %v2352
      %v2354 = vrot.slane %v2353, 4
      %v2356 = vshll.u32 %v2152, 16
      %v2358 = vrot.slane %v2356, 5
      %v2359 = vsel %vm1230, %v2354, %v2358
      %v2360 = vshrl.u32 %v2152, 16
      %v2362 = vrot.slane %v2360, 4
      %v2363 = vor.u32 %v2362, %v2358
      %v2364 = vrot.slane %v2363, 4
      %v2366 = vshll.u32 %v2153, 16
      %v2368 = vrot.slane %v2366, 5
      %v2369 = vsel %vm1230, %v2364, %v2368
      %v2371 = vshrl.u32 %v2154, 16
      %v2373 = vrot.slane %v2371, 4
      %v2374 = vshll.u32 %v2154, 16
      %v2376 = vrot.slane %v2374, 5
      %v2377 = vor.u32 %v2373, %v2376
      %v2378 = vrot.slane %v2377, 4
      %v2380 = vshll.u32 %v2155, 16
      %v2382 = vrot.slane %v2380, 5
      %v2383 = vsel %vm1230, %v2378, %v2382
      %v2384 = vshrl.u32 %v2155, 16
      %v2386 = vrot.slane %v2384, 4
      %v2387 = vor.u32 %v2386, %v2382
      %v2388 = vrot.slane %v2387, 4
      %v2390 = vshll.u32 %v2156, 16
      %v2392 = vrot.slane %v2390, 5
      %v2393 = vsel %vm1230, %v2388, %v2392
      %v2395 = vshrl.u32 %v2157, 16
      %v2397 = vrot.slane %v2395, 4
      %v2398 = vshll.u32 %v2157, 16
      %v2400 = vrot.slane %v2398, 5
      %v2401 = vor.u32 %v2397, %v2400
      %v2402 = vrot.slane %v2401, 4
      %v2404 = vshll.u32 %v2158, 16
      %v2406 = vrot.slane %v2404, 5
      %v2407 = vsel %vm1230, %v2402, %v2406
      %v2408 = vshrl.u32 %v2158, 16
      %v2410 = vrot.slane %v2408, 4
      %v2411 = vor.u32 %v2410, %v2406
      %v2412 = vrot.slane %v2411, 4
      %v2414 = vshll.u32 %v2159, 16
      %v2416 = vrot.slane %v2414, 5
      %v2417 = vsel %vm1230, %v2412, %v2416
      %v2419 = vshrl.u32 %v2160, 16
      %v2421 = vrot.slane %v2419, 4
      %v2422 = vshll.u32 %v2160, 16
      %v2424 = vrot.slane %v2422, 5
      %v2425 = vor.u32 %v2421, %v2424
      %v2426 = vrot.slane %v2425, 4
      %v2428 = vshll.u32 %v2161, 16
      %v2430 = vrot.slane %v2428, 5
      %v2431 = vsel %vm1230, %v2426, %v2430
      %v2432 = vshrl.u32 %v2161, 16
      %v2434 = vrot.slane %v2432, 4
      %v2435 = vor.u32 %v2434, %v2430
      %v2436 = vrot.slane %v2435, 4
      %v2438 = vshll.u32 %v2162, 16
      %v2440 = vrot.slane %v2438, 5
      %v2441 = vsel %vm1230, %v2436, %v2440
      %v2443 = vshrl.u32 %v2163, 16
      %v2445 = vrot.slane %v2443, 4
      %v2446 = vshll.u32 %v2163, 16
      %v2448 = vrot.slane %v2446, 5
      %v2449 = vor.u32 %v2445, %v2448
      %v2450 = vrot.slane %v2449, 4
      %v2452 = vshll.u32 %v2164, 16
      %v2454 = vrot.slane %v2452, 5
      %v2455 = vsel %vm1230, %v2450, %v2454
      %v2456 = vshrl.u32 %v2164, 16
      %v2458 = vrot.slane %v2456, 4
      %v2459 = vor.u32 %v2458, %v2454
      %v2460 = vrot.slane %v2459, 4
      %v2462 = vshll.u32 %v2165, 16
      %v2464 = vrot.slane %v2462, 5
      %v2465 = vsel %vm1230, %v2460, %v2464
      %v2467 = vshrl.u32 %v2166, 16
      %v2469 = vrot.slane %v2467, 4
      %v2470 = vshll.u32 %v2166, 16
      %v2472 = vrot.slane %v2470, 5
      %v2473 = vor.u32 %v2469, %v2472
      %v2474 = vrot.slane %v2473, 4
      %v2476 = vshll.u32 %v2167, 16
      %v2478 = vrot.slane %v2476, 5
      %v2479 = vsel %vm1230, %v2474, %v2478
      %v2480 = vshrl.u32 %v2167, 16
      %v2482 = vrot.slane %v2480, 4
      %v2483 = vor.u32 %v2482, %v2478
      %v2484 = vrot.slane %v2483, 4
      %v2486 = vshll.u32 %v2168, 16
      %v2488 = vrot.slane %v2486, 5
      %v2489 = vsel %vm1230, %v2484, %v2488
      %v2491 = vshrl.u32 %v2169, 16
      %v2493 = vrot.slane %v2491, 4
      %v2494 = vshll.u32 %v2169, 16
      %v2496 = vrot.slane %v2494, 5
      %v2497 = vor.u32 %v2493, %v2496
      %v2498 = vrot.slane %v2497, 4
      %v2500 = vshll.u32 %v2170, 16
      %v2502 = vrot.slane %v2500, 5
      %v2503 = vsel %vm1230, %v2498, %v2502
      %v2504 = vshrl.u32 %v2170, 16
      %v2506 = vrot.slane %v2504, 4
      %v2507 = vor.u32 %v2506, %v2502
      %v2508 = vrot.slane %v2507, 4
      %v2510 = vshll.u32 %v2171, 16
      %v2512 = vrot.slane %v2510, 5
      %v2513 = vsel %vm1230, %v2508, %v2512
      %v2515 = vshrl.u32 %v2172, 16
      %v2517 = vrot.slane %v2515, 4
      %v2518 = vshll.u32 %v2172, 16
      %v2520 = vrot.slane %v2518, 5
      %v2521 = vor.u32 %v2517, %v2520
      %v2522 = vrot.slane %v2521, 4
      %v2524 = vshll.u32 %v2173, 16
      %v2526 = vrot.slane %v2524, 5
      %v2527 = vsel %vm1230, %v2522, %v2526
      %v2528 = vshrl.u32 %v2173, 16
      %v2530 = vrot.slane %v2528, 4
      %v2531 = vor.u32 %v2530, %v2526
      %v2532 = vrot.slane %v2531, 4
      %v2534 = vshll.u32 %v2174, 16
      %v2536 = vrot.slane %v2534, 5
      %v2537 = vsel %vm1230, %v2532, %v2536
      %v2539 = vshrl.u32 %v2175, 16
      %v2541 = vrot.slane %v2539, 4
      %v2542 = vshll.u32 %v2175, 16
      %v2544 = vrot.slane %v2542, 5
      %v2545 = vor.u32 %v2541, %v2544
      %v2546 = vrot.slane %v2545, 4
      %v2548 = vshll.u32 %v2176, 16
      %v2550 = vrot.slane %v2548, 5
      %v2551 = vsel %vm1230, %v2546, %v2550
      %v2552 = vshrl.u32 %v2176, 16
      %v2554 = vrot.slane %v2552, 4
      %v2555 = vor.u32 %v2554, %v2550
      %v2556 = vrot.slane %v2555, 4
      %v2558 = vshll.u32 %v2177, 16
      %v2560 = vrot.slane %v2558, 5
      %v2561 = vsel %vm1230, %v2556, %v2560
      %v2562 = vunpack.c.l.b16 %v2191
      %v2563 = vunpack.c.l.b16 %v2201
      %v2564 = vunpack.c.l.b16 %v2215
      %v2565 = vunpack.c.l.b16 %v2225
      %v2566 = vunpack.c.l.b16 %v2239
      %v2567 = vunpack.c.l.b16 %v2249
      %v2568 = vunpack.c.l.b16 %v2263
      %v2569 = vunpack.c.l.b16 %v2273
      %v2570 = vunpack.c.l.b16 %v2287
      %v2571 = vunpack.c.l.b16 %v2297
      %v2572 = vunpack.c.l.b16 %v2311
      %v2573 = vunpack.c.l.b16 %v2321
      %v2574 = vunpack.c.l.b16 %v2335
      %v2575 = vunpack.c.l.b16 %v2345
      %v2576 = vunpack.c.l.b16 %v2359
      %v2577 = vunpack.c.l.b16 %v2369
      %v2578 = vunpack.c.l.b16 %v2383
      %v2579 = vunpack.c.l.b16 %v2393
      %v2580 = vunpack.c.l.b16 %v2407
      %v2581 = vunpack.c.l.b16 %v2417
      %v2582 = vunpack.c.l.b16 %v2431
      %v2583 = vunpack.c.l.b16 %v2441
      %v2584 = vunpack.c.l.b16 %v2455
      %v2585 = vunpack.c.l.b16 %v2465
      %v2586 = vunpack.c.l.b16 %v2479
      %v2587 = vunpack.c.l.b16 %v2489
      %v2588 = vunpack.c.l.b16 %v2503
      %v2589 = vunpack.c.l.b16 %v2513
      %v2590 = vunpack.c.l.b16 %v2527
      %v2591 = vunpack.c.l.b16 %v2537
      %v2592 = vunpack.c.l.b16 %v2551
      %v2593 = vunpack.c.l.b16 %v2561
      %v2594 = vpack.c.b16 %v2563, %v2562
      %v2595 = vpack.c.b16 %v2565, %v2564
      %v2596 = vpack.c.b16 %v2567, %v2566
      %v2597 = vpack.c.b16 %v2569, %v2568
      %v2598 = vpack.c.b16 %v2571, %v2570
      %v2599 = vpack.c.b16 %v2573, %v2572
      %v2600 = vpack.c.b16 %v2575, %v2574
      %v2601 = vpack.c.b16 %v2577, %v2576
      %v2602 = vpack.c.b16 %v2579, %v2578
      %v2603 = vpack.c.b16 %v2581, %v2580
      %v2604 = vpack.c.b16 %v2583, %v2582
      %v2605 = vpack.c.b16 %v2585, %v2584
      %v2606 = vpack.c.b16 %v2587, %v2586
      %v2607 = vpack.c.b16 %v2589, %v2588
      %v2608 = vpack.c.b16 %v2591, %v2590
      %v2609 = vpack.c.b16 %v2593, %v2592
      %2626 = vst [vmem:[#allocation3 + $0x20] sm:$0xff] %v2594
      %2627 = vst [vmem:[#allocation3 + $0x68] sm:$0xff] %v2595
      %2628 = vst [vmem:[#allocation3 + $0xb0] sm:$0xff] %v2596
      %2629 = vst [vmem:[#allocation3 + $0xf8] sm:$0xff] %v2597
      %2630 = vst [vmem:[#allocation3 + $0x140] sm:$0xff] %v2598
      %2631 = vst [vmem:[#allocation3 + $0x188] sm:$0xff] %v2599
      %2632 = vst [vmem:[#allocation3 + $0x1d0] sm:$0xff] %v2600
      %2633 = vst [vmem:[#allocation3 + $0x218] sm:$0xff] %v2601
      %2634 = vst [vmem:[#allocation3 + $0x260] sm:$0xff] %v2602
      %2635 = vst [vmem:[#allocation3 + $0x2a8] sm:$0xff] %v2603
      %2636 = vst [vmem:[#allocation3 + $0x2f0] sm:$0xff] %v2604
      %2637 = vst [vmem:[#allocation3 + $0x338] sm:$0xff] %v2605
      %2638 = vst [vmem:[#allocation3 + $0x380] sm:$0xff] %v2606
      %2639 = vst [vmem:[#allocation3 + $0x3c8] sm:$0xff] %v2607
      %2640 = vst [vmem:[#allocation3 + $0x410] sm:$0xff] %v2608
      %2641 = vst [vmem:[#allocation3 + $0x458] sm:$0xff] %v2609
      %v2642 = vld [vmem:[%s918] sm:$0xe]
      %v2643 = vld [vmem:[%s918 + $0x4] sm:$0xf]
      %v2644 = vld [vmem:[%s918 + $0x8] sm:$0x1]
      %v2645 = vld [vmem:[%s918 + $0xc] sm:$0xe]
      %v2646 = vld [vmem:[%s918 + $0x10] sm:$0xf]
      %v2647 = vld [vmem:[%s918 + $0x14] sm:$0x1]
      %v2648 = vld [vmem:[%s918 + $0x18] sm:$0xe]
      %v2649 = vld [vmem:[%s918 + $0x1c] sm:$0xf]
      %v2650 = vld [vmem:[%s918 + $0x20] sm:$0x1]
      %v2651 = vld [vmem:[%s918 + $0x24] sm:$0xe]
      %v2652 = vld [vmem:[%s918 + $0x28] sm:$0xf]
      %v2653 = vld [vmem:[%s918 + $0x2c] sm:$0x1]
      %v2654 = vld [vmem:[%s918 + $0x30] sm:$0xe]
      %v2655 = vld [vmem:[%s918 + $0x34] sm:$0xf]
      %v2656 = vld [vmem:[%s918 + $0x38] sm:$0x1]
      %v2657 = vld [vmem:[%s918 + $0x3c] sm:$0xe]
      %v2658 = vld [vmem:[%s918 + $0x40] sm:$0xf]
      %v2659 = vld [vmem:[%s918 + $0x44] sm:$0x1]
      %v2660 = vld [vmem:[%s918 + $0x48] sm:$0xe]
      %v2661 = vld [vmem:[%s918 + $0x4c] sm:$0xf]
      %v2662 = vld [vmem:[%s918 + $0x50] sm:$0x1]
      %v2663 = vld [vmem:[%s918 + $0x54] sm:$0xe]
      %v2664 = vld [vmem:[%s918 + $0x58] sm:$0xf]
      %v2665 = vld [vmem:[%s918 + $0x5c] sm:$0x1]
      %v2666 = vld [vmem:[%s918 + $0x60] sm:$0xe]
      %v2667 = vld [vmem:[%s918 + $0x64] sm:$0xf]
      %v2668 = vld [vmem:[%s918 + $0x68] sm:$0x1]
      %v2669 = vld [vmem:[%s918 + $0x6c] sm:$0xe]
      %v2670 = vld [vmem:[%s918 + $0x70] sm:$0xf]
      %v2671 = vld [vmem:[%s918 + $0x74] sm:$0x1]
      %v2672 = vld [vmem:[%s918 + $0x78] sm:$0xe]
      %v2673 = vld [vmem:[%s918 + $0x7c] sm:$0xf]
      %v2674 = vld [vmem:[%s918 + $0x80] sm:$0x1]
      %v2675 = vld [vmem:[%s918 + $0x84] sm:$0xe]
      %v2676 = vld [vmem:[%s918 + $0x88] sm:$0xf]
      %v2677 = vld [vmem:[%s918 + $0x8c] sm:$0x1]
      %v2678 = vld [vmem:[%s918 + $0x90] sm:$0xe]
      %v2679 = vld [vmem:[%s918 + $0x94] sm:$0xf]
      %v2680 = vld [vmem:[%s918 + $0x98] sm:$0x1]
      %v2681 = vld [vmem:[%s918 + $0x9c] sm:$0xe]
      %v2682 = vld [vmem:[%s918 + $0xa0] sm:$0xf]
      %v2683 = vld [vmem:[%s918 + $0xa4] sm:$0x1]
      %v2684 = vld [vmem:[%s918 + $0xa8] sm:$0xe]
      %v2685 = vld [vmem:[%s918 + $0xac] sm:$0xf]
      %v2686 = vld [vmem:[%s918 + $0xb0] sm:$0x1]
      %v2687 = vld [vmem:[%s918 + $0xb4] sm:$0xe]
      %v2688 = vld [vmem:[%s918 + $0xb8] sm:$0xf]
      %v2689 = vld [vmem:[%s918 + $0xbc] sm:$0x1]
      %v2738 = vrot.slane %v2642, 5
      %v2739 = vrot.slane %v2738, 4
      %v2740 = vrot.slane %v2643, 5
      %v2741 = vsel %vm1793, %v2739, %v2740
      %v2742 = vrot.slane %v2740, 4
      %v2743 = vrot.slane %v2644, 5
      %v2744 = vsel %vm1793, %v2742, %v2743
      %v2745 = vrot.slane %v2645, 5
      %v2746 = vrot.slane %v2745, 4
      %v2747 = vrot.slane %v2646, 5
      %v2748 = vsel %vm1793, %v2746, %v2747
      %v2749 = vrot.slane %v2747, 4
      %v2750 = vrot.slane %v2647, 5
      %v2751 = vsel %vm1793, %v2749, %v2750
      %v2752 = vrot.slane %v2648, 5
      %v2753 = vrot.slane %v2752, 4
      %v2754 = vrot.slane %v2649, 5
      %v2755 = vsel %vm1793, %v2753, %v2754
      %v2756 = vrot.slane %v2754, 4
      %v2757 = vrot.slane %v2650, 5
      %v2758 = vsel %vm1793, %v2756, %v2757
      %v2759 = vrot.slane %v2651, 5
      %v2760 = vrot.slane %v2759, 4
      %v2761 = vrot.slane %v2652, 5
      %v2762 = vsel %vm1793, %v2760, %v2761
      %v2763 = vrot.slane %v2761, 4
      %v2764 = vrot.slane %v2653, 5
      %v2765 = vsel %vm1793, %v2763, %v2764
      %v2766 = vrot.slane %v2654, 5
      %v2767 = vrot.slane %v2766, 4
      %v2768 = vrot.slane %v2655, 5
      %v2769 = vsel %vm1793, %v2767, %v2768
      %v2770 = vrot.slane %v2768, 4
      %v2771 = vrot.slane %v2656, 5
      %v2772 = vsel %vm1793, %v2770, %v2771
      %v2773 = vrot.slane %v2657, 5
      %v2774 = vrot.slane %v2773, 4
      %v2775 = vrot.slane %v2658, 5
      %v2776 = vsel %vm1793, %v2774, %v2775
      %v2777 = vrot.slane %v2775, 4
      %v2778 = vrot.slane %v2659, 5
      %v2779 = vsel %vm1793, %v2777, %v2778
      %v2780 = vrot.slane %v2660, 5
      %v2781 = vrot.slane %v2780, 4
      %v2782 = vrot.slane %v2661, 5
      %v2783 = vsel %vm1793, %v2781, %v2782
      %v2784 = vrot.slane %v2782, 4
      %v2785 = vrot.slane %v2662, 5
      %v2786 = vsel %vm1793, %v2784, %v2785
      %v2787 = vrot.slane %v2663, 5
      %v2788 = vrot.slane %v2787, 4
      %v2789 = vrot.slane %v2664, 5
      %v2790 = vsel %vm1793, %v2788, %v2789
      %v2791 = vrot.slane %v2789, 4
      %v2792 = vrot.slane %v2665, 5
      %v2793 = vsel %vm1793, %v2791, %v2792
      %v2794 = vrot.slane %v2666, 5
      %v2795 = vrot.slane %v2794, 4
      %v2796 = vrot.slane %v2667, 5
      %v2797 = vsel %vm1793, %v2795, %v2796
      %v2798 = vrot.slane %v2796, 4
      %v2799 = vrot.slane %v2668, 5
      %v2800 = vsel %vm1793, %v2798, %v2799
      %v2801 = vrot.slane %v2669, 5
      %v2802 = vrot.slane %v2801, 4
      %v2803 = vrot.slane %v2670, 5
      %v2804 = vsel %vm1793, %v2802, %v2803
      %v2805 = vrot.slane %v2803, 4
      %v2806 = vrot.slane %v2671, 5
      %v2807 = vsel %vm1793, %v2805, %v2806
      %v2808 = vrot.slane %v2672, 5
      %v2809 = vrot.slane %v2808, 4
      %v2810 = vrot.slane %v2673, 5
      %v2811 = vsel %vm1793, %v2809, %v2810
      %v2812 = vrot.slane %v2810, 4
      %v2813 = vrot.slane %v2674, 5
      %v2814 = vsel %vm1793, %v2812, %v2813
      %v2815 = vrot.slane %v2675, 5
      %v2816 = vrot.slane %v2815, 4
      %v2817 = vrot.slane %v2676, 5
      %v2818 = vsel %vm1793, %v2816, %v2817
      %v2819 = vrot.slane %v2817, 4
      %v2820 = vrot.slane %v2677, 5
      %v2821 = vsel %vm1793, %v2819, %v2820
      %v2822 = vrot.slane %v2678, 5
      %v2823 = vrot.slane %v2822, 4
      %v2824 = vrot.slane %v2679, 5
      %v2825 = vsel %vm1793, %v2823, %v2824
      %v2826 = vrot.slane %v2824, 4
      %v2827 = vrot.slane %v2680, 5
      %v2828 = vsel %vm1793, %v2826, %v2827
      %v2829 = vrot.slane %v2681, 5
      %v2830 = vrot.slane %v2829, 4
      %v2831 = vrot.slane %v2682, 5
      %v2832 = vsel %vm1793, %v2830, %v2831
      %v2833 = vrot.slane %v2831, 4
      %v2834 = vrot.slane %v2683, 5
      %v2835 = vsel %vm1793, %v2833, %v2834
      %v2836 = vrot.slane %v2684, 5
      %v2837 = vrot.slane %v2836, 4
      %v2838 = vrot.slane %v2685, 5
      %v2839 = vsel %vm1793, %v2837, %v2838
      %v2840 = vrot.slane %v2838, 4
      %v2841 = vrot.slane %v2686, 5
      %v2842 = vsel %vm1793, %v2840, %v2841
      %v2843 = vrot.slane %v2687, 5
      %v2844 = vrot.slane %v2843, 4
      %v2845 = vrot.slane %v2688, 5
      %v2846 = vsel %vm1793, %v2844, %v2845
      %v2847 = vrot.slane %v2845, 4
      %v2848 = vrot.slane %v2689, 5
      %v2849 = vsel %vm1793, %v2847, %v2848
      %v2850 = vunpack.c.l.b16 %v2741
      %v2851 = vunpack.c.l.b16 %v2744
      %v2852 = vunpack.c.l.b16 %v2748
      %v2853 = vunpack.c.l.b16 %v2751
      %v2854 = vunpack.c.l.b16 %v2755
      %v2855 = vunpack.c.l.b16 %v2758
      %v2856 = vunpack.c.l.b16 %v2762
      %v2857 = vunpack.c.l.b16 %v2765
      %v2858 = vunpack.c.l.b16 %v2769
      %v2859 = vunpack.c.l.b16 %v2772
      %v2860 = vunpack.c.l.b16 %v2776
      %v2861 = vunpack.c.l.b16 %v2779
      %v2862 = vunpack.c.l.b16 %v2783
      %v2863 = vunpack.c.l.b16 %v2786
      %v2864 = vunpack.c.l.b16 %v2790
      %v2865 = vunpack.c.l.b16 %v2793
      %v2866 = vunpack.c.l.b16 %v2797
      %v2867 = vunpack.c.l.b16 %v2800
      %v2868 = vunpack.c.l.b16 %v2804
      %v2869 = vunpack.c.l.b16 %v2807
      %v2870 = vunpack.c.l.b16 %v2811
      %v2871 = vunpack.c.l.b16 %v2814
      %v2872 = vunpack.c.l.b16 %v2818
      %v2873 = vunpack.c.l.b16 %v2821
      %v2874 = vunpack.c.l.b16 %v2825
      %v2875 = vunpack.c.l.b16 %v2828
      %v2876 = vunpack.c.l.b16 %v2832
      %v2877 = vunpack.c.l.b16 %v2835
      %v2878 = vunpack.c.l.b16 %v2839
      %v2879 = vunpack.c.l.b16 %v2842
      %v2880 = vunpack.c.l.b16 %v2846
      %v2881 = vunpack.c.l.b16 %v2849
      %v2882 = vpack.c.b16 %v2851, %v2850
      %v2883 = vpack.c.b16 %v2853, %v2852
      %v2884 = vpack.c.b16 %v2855, %v2854
      %v2885 = vpack.c.b16 %v2857, %v2856
      %v2886 = vpack.c.b16 %v2859, %v2858
      %v2887 = vpack.c.b16 %v2861, %v2860
      %v2888 = vpack.c.b16 %v2863, %v2862
      %v2889 = vpack.c.b16 %v2865, %v2864
      %v2890 = vpack.c.b16 %v2867, %v2866
      %v2891 = vpack.c.b16 %v2869, %v2868
      %v2892 = vpack.c.b16 %v2871, %v2870
      %v2893 = vpack.c.b16 %v2873, %v2872
      %v2894 = vpack.c.b16 %v2875, %v2874
      %v2895 = vpack.c.b16 %v2877, %v2876
      %v2896 = vpack.c.b16 %v2879, %v2878
      %v2897 = vpack.c.b16 %v2881, %v2880
      %2914 = vst [vmem:[#allocation3 + $0x28] sm:$0xff] %v2882
      %2915 = vst [vmem:[#allocation3 + $0x70] sm:$0xff] %v2883
      %2916 = vst [vmem:[#allocation3 + $0xb8] sm:$0xff] %v2884
      %2917 = vst [vmem:[#allocation3 + $0x100] sm:$0xff] %v2885
      %2918 = vst [vmem:[#allocation3 + $0x148] sm:$0xff] %v2886
      %2919 = vst [vmem:[#allocation3 + $0x190] sm:$0xff] %v2887
      %2920 = vst [vmem:[#allocation3 + $0x1d8] sm:$0xff] %v2888
      %2921 = vst [vmem:[#allocation3 + $0x220] sm:$0xff] %v2889
      %2922 = vst [vmem:[#allocation3 + $0x268] sm:$0xff] %v2890
      %2923 = vst [vmem:[#allocation3 + $0x2b0] sm:$0xff] %v2891
      %2924 = vst [vmem:[#allocation3 + $0x2f8] sm:$0xff] %v2892
      %2925 = vst [vmem:[#allocation3 + $0x340] sm:$0xff] %v2893
      %2926 = vst [vmem:[#allocation3 + $0x388] sm:$0xff] %v2894
      %2927 = vst [vmem:[#allocation3 + $0x3d0] sm:$0xff] %v2895
      %2928 = vst [vmem:[#allocation3 + $0x418] sm:$0xff] %v2896
      %2929 = vst [vmem:[#allocation3 + $0x460] sm:$0xff] %v2897
      %s2930 = scalar_lea.vmem [#allocation2], 24
      %v2931 = vld [vmem:[%s2930] sm:$0xf]
      %v2932 = vld [vmem:[%s2930 + $0x4] sm:$0xf]
      %v2933 = vld [vmem:[%s2930 + $0xc] sm:$0xf]
      %v2934 = vld [vmem:[%s2930 + $0x10] sm:$0xf]
      %v2935 = vld [vmem:[%s2930 + $0x18] sm:$0xf]
      %v2936 = vld [vmem:[%s2930 + $0x1c] sm:$0xf]
      %v2937 = vld [vmem:[%s2930 + $0x24] sm:$0xf]
      %v2938 = vld [vmem:[%s2930 + $0x28] sm:$0xf]
      %v2939 = vld [vmem:[%s2930 + $0x30] sm:$0xf]
      %v2940 = vld [vmem:[%s2930 + $0x34] sm:$0xf]
      %v2941 = vld [vmem:[%s2930 + $0x3c] sm:$0xf]
      %v2942 = vld [vmem:[%s2930 + $0x40] sm:$0xf]
      %v2943 = vld [vmem:[%s2930 + $0x48] sm:$0xf]
      %v2944 = vld [vmem:[%s2930 + $0x4c] sm:$0xf]
      %v2945 = vld [vmem:[%s2930 + $0x54] sm:$0xf]
      %v2946 = vld [vmem:[%s2930 + $0x58] sm:$0xf]
      %v2947 = vld [vmem:[%s2930 + $0x60] sm:$0xf]
      %v2948 = vld [vmem:[%s2930 + $0x64] sm:$0xf]
      %v2949 = vld [vmem:[%s2930 + $0x6c] sm:$0xf]
      %v2950 = vld [vmem:[%s2930 + $0x70] sm:$0xf]
      %v2951 = vld [vmem:[%s2930 + $0x78] sm:$0xf]
      %v2952 = vld [vmem:[%s2930 + $0x7c] sm:$0xf]
      %v2953 = vld [vmem:[%s2930 + $0x84] sm:$0xf]
      %v2954 = vld [vmem:[%s2930 + $0x88] sm:$0xf]
      %v2955 = vld [vmem:[%s2930 + $0x90] sm:$0xf]
      %v2956 = vld [vmem:[%s2930 + $0x94] sm:$0xf]
      %v2957 = vld [vmem:[%s2930 + $0x9c] sm:$0xf]
      %v2958 = vld [vmem:[%s2930 + $0xa0] sm:$0xf]
      %v2959 = vld [vmem:[%s2930 + $0xa8] sm:$0xf]
      %v2960 = vld [vmem:[%s2930 + $0xac] sm:$0xf]
      %v2961 = vld [vmem:[%s2930 + $0xb4] sm:$0xf]
      %v2962 = vld [vmem:[%s2930 + $0xb8] sm:$0xf]
      %v2995 = vunpack.c.l.b16 %v2931
      %v2996 = vunpack.c.l.b16 %v2932
      %v2997 = vunpack.c.l.b16 %v2933
      %v2998 = vunpack.c.l.b16 %v2934
      %v2999 = vunpack.c.l.b16 %v2935
      %v3000 = vunpack.c.l.b16 %v2936
      %v3001 = vunpack.c.l.b16 %v2937
      %v3002 = vunpack.c.l.b16 %v2938
      %v3003 = vunpack.c.l.b16 %v2939
      %v3004 = vunpack.c.l.b16 %v2940
      %v3005 = vunpack.c.l.b16 %v2941
      %v3006 = vunpack.c.l.b16 %v2942
      %v3007 = vunpack.c.l.b16 %v2943
      %v3008 = vunpack.c.l.b16 %v2944
      %v3009 = vunpack.c.l.b16 %v2945
      %v3010 = vunpack.c.l.b16 %v2946
      %v3011 = vunpack.c.l.b16 %v2947
      %v3012 = vunpack.c.l.b16 %v2948
      %v3013 = vunpack.c.l.b16 %v2949
      %v3014 = vunpack.c.l.b16 %v2950
      %v3015 = vunpack.c.l.b16 %v2951
      %v3016 = vunpack.c.l.b16 %v2952
      %v3017 = vunpack.c.l.b16 %v2953
      %v3018 = vunpack.c.l.b16 %v2954
      %v3019 = vunpack.c.l.b16 %v2955
      %v3020 = vunpack.c.l.b16 %v2956
      %v3021 = vunpack.c.l.b16 %v2957
      %v3022 = vunpack.c.l.b16 %v2958
      %v3023 = vunpack.c.l.b16 %v2959
      %v3024 = vunpack.c.l.b16 %v2960
      %v3025 = vunpack.c.l.b16 %v2961
      %v3026 = vunpack.c.l.b16 %v2962
      %v3027 = vpack.c.b16 %v2996, %v2995
      %v3028 = vpack.c.b16 %v2998, %v2997
      %v3029 = vpack.c.b16 %v3000, %v2999
      %v3030 = vpack.c.b16 %v3002, %v3001
      %v3031 = vpack.c.b16 %v3004, %v3003
      %v3032 = vpack.c.b16 %v3006, %v3005
      %v3033 = vpack.c.b16 %v3008, %v3007
      %v3034 = vpack.c.b16 %v3010, %v3009
      %v3035 = vpack.c.b16 %v3012, %v3011
      %v3036 = vpack.c.b16 %v3014, %v3013
      %v3037 = vpack.c.b16 %v3016, %v3015
      %v3038 = vpack.c.b16 %v3018, %v3017
      %v3039 = vpack.c.b16 %v3020, %v3019
      %v3040 = vpack.c.b16 %v3022, %v3021
      %v3041 = vpack.c.b16 %v3024, %v3023
      %v3042 = vpack.c.b16 %v3026, %v3025
      %3059 = vst [vmem:[#allocation3 + $0x30] sm:$0xff] %v3027
      %3060 = vst [vmem:[#allocation3 + $0x78] sm:$0xff] %v3028
      %3061 = vst [vmem:[#allocation3 + $0xc0] sm:$0xff] %v3029
      %3062 = vst [vmem:[#allocation3 + $0x108] sm:$0xff] %v3030
      %3063 = vst [vmem:[#allocation3 + $0x150] sm:$0xff] %v3031
      %3064 = vst [vmem:[#allocation3 + $0x198] sm:$0xff] %v3032
      %3065 = vst [vmem:[#allocation3 + $0x1e0] sm:$0xff] %v3033
      %3066 = vst [vmem:[#allocation3 + $0x228] sm:$0xff] %v3034
      %3067 = vst [vmem:[#allocation3 + $0x270] sm:$0xff] %v3035
      %3068 = vst [vmem:[#allocation3 + $0x2b8] sm:$0xff] %v3036
      %3069 = vst [vmem:[#allocation3 + $0x300] sm:$0xff] %v3037
      %3070 = vst [vmem:[#allocation3 + $0x348] sm:$0xff] %v3038
      %3071 = vst [vmem:[#allocation3 + $0x390] sm:$0xff] %v3039
      %3072 = vst [vmem:[#allocation3 + $0x3d8] sm:$0xff] %v3040
      %3073 = vst [vmem:[#allocation3 + $0x420] sm:$0xff] %v3041
      %3074 = vst [vmem:[#allocation3 + $0x468] sm:$0xff] %v3042
      %v3075 = vld [vmem:[%s2930] sm:$0xf]
      %v3076 = vld [vmem:[%s2930 + $0x4] sm:$0xf]
      %v3077 = vld [vmem:[%s2930 + $0x8] sm:$0x1]
      %v3078 = vld [vmem:[%s2930 + $0xc] sm:$0xf]
      %v3079 = vld [vmem:[%s2930 + $0x10] sm:$0xf]
      %v3080 = vld [vmem:[%s2930 + $0x14] sm:$0x1]
      %v3081 = vld [vmem:[%s2930 + $0x18] sm:$0xf]
      %v3082 = vld [vmem:[%s2930 + $0x1c] sm:$0xf]
      %v3083 = vld [vmem:[%s2930 + $0x20] sm:$0x1]
      %v3084 = vld [vmem:[%s2930 + $0x24] sm:$0xf]
      %v3085 = vld [vmem:[%s2930 + $0x28] sm:$0xf]
      %v3086 = vld [vmem:[%s2930 + $0x2c] sm:$0x1]
      %v3087 = vld [vmem:[%s2930 + $0x30] sm:$0xf]
      %v3088 = vld [vmem:[%s2930 + $0x34] sm:$0xf]
      %v3089 = vld [vmem:[%s2930 + $0x38] sm:$0x1]
      %v3090 = vld [vmem:[%s2930 + $0x3c] sm:$0xf]
      %v3091 = vld [vmem:[%s2930 + $0x40] sm:$0xf]
      %v3092 = vld [vmem:[%s2930 + $0x44] sm:$0x1]
      %v3093 = vld [vmem:[%s2930 + $0x48] sm:$0xf]
      %v3094 = vld [vmem:[%s2930 + $0x4c] sm:$0xf]
      %v3095 = vld [vmem:[%s2930 + $0x50] sm:$0x1]
      %v3096 = vld [vmem:[%s2930 + $0x54] sm:$0xf]
      %v3097 = vld [vmem:[%s2930 + $0x58] sm:$0xf]
      %v3098 = vld [vmem:[%s2930 + $0x5c] sm:$0x1]
      %v3099 = vld [vmem:[%s2930 + $0x60] sm:$0xf]
      %v3100 = vld [vmem:[%s2930 + $0x64] sm:$0xf]
      %v3101 = vld [vmem:[%s2930 + $0x68] sm:$0x1]
      %v3102 = vld [vmem:[%s2930 + $0x6c] sm:$0xf]
      %v3103 = vld [vmem:[%s2930 + $0x70] sm:$0xf]
      %v3104 = vld [vmem:[%s2930 + $0x74] sm:$0x1]
      %v3105 = vld [vmem:[%s2930 + $0x78] sm:$0xf]
      %v3106 = vld [vmem:[%s2930 + $0x7c] sm:$0xf]
      %v3107 = vld [vmem:[%s2930 + $0x80] sm:$0x1]
      %v3108 = vld [vmem:[%s2930 + $0x84] sm:$0xf]
      %v3109 = vld [vmem:[%s2930 + $0x88] sm:$0xf]
      %v3110 = vld [vmem:[%s2930 + $0x8c] sm:$0x1]
      %v3111 = vld [vmem:[%s2930 + $0x90] sm:$0xf]
      %v3112 = vld [vmem:[%s2930 + $0x94] sm:$0xf]
      %v3113 = vld [vmem:[%s2930 + $0x98] sm:$0x1]
      %v3114 = vld [vmem:[%s2930 + $0x9c] sm:$0xf]
      %v3115 = vld [vmem:[%s2930 + $0xa0] sm:$0xf]
      %v3116 = vld [vmem:[%s2930 + $0xa4] sm:$0x1]
      %v3117 = vld [vmem:[%s2930 + $0xa8] sm:$0xf]
      %v3118 = vld [vmem:[%s2930 + $0xac] sm:$0xf]
      %v3119 = vld [vmem:[%s2930 + $0xb0] sm:$0x1]
      %v3120 = vld [vmem:[%s2930 + $0xb4] sm:$0xf]
      %v3121 = vld [vmem:[%s2930 + $0xb8] sm:$0xf]
      %v3122 = vld [vmem:[%s2930 + $0xbc] sm:$0x1]
      %v3124 = vshrl.u32 %v3075, 16
      %v3126 = vrot.slane %v3124, 4
      %v3127 = vshll.u32 %v3075, 16
      %v3129 = vrot.slane %v3127, 5
      %v3130 = vor.u32 %v3126, %v3129
      %v3131 = vrot.slane %v3130, 4
      %v3133 = vshll.u32 %v3076, 16
      %v3135 = vrot.slane %v3133, 5
      %v3136 = vsel %vm1230, %v3131, %v3135
      %v3137 = vshrl.u32 %v3076, 16
      %v3139 = vrot.slane %v3137, 4
      %v3140 = vor.u32 %v3139, %v3135
      %v3141 = vrot.slane %v3140, 4
      %v3143 = vshll.u32 %v3077, 16
      %v3145 = vrot.slane %v3143, 5
      %v3146 = vsel %vm1230, %v3141, %v3145
      %v3148 = vshrl.u32 %v3078, 16
      %v3150 = vrot.slane %v3148, 4
      %v3151 = vshll.u32 %v3078, 16
      %v3153 = vrot.slane %v3151, 5
      %v3154 = vor.u32 %v3150, %v3153
      %v3155 = vrot.slane %v3154, 4
      %v3157 = vshll.u32 %v3079, 16
      %v3159 = vrot.slane %v3157, 5
      %v3160 = vsel %vm1230, %v3155, %v3159
      %v3161 = vshrl.u32 %v3079, 16
      %v3163 = vrot.slane %v3161, 4
      %v3164 = vor.u32 %v3163, %v3159
      %v3165 = vrot.slane %v3164, 4
      %v3167 = vshll.u32 %v3080, 16
      %v3169 = vrot.slane %v3167, 5
      %v3170 = vsel %vm1230, %v3165, %v3169
      %v3172 = vshrl.u32 %v3081, 16
      %v3174 = vrot.slane %v3172, 4
      %v3175 = vshll.u32 %v3081, 16
      %v3177 = vrot.slane %v3175, 5
      %v3178 = vor.u32 %v3174, %v3177
      %v3179 = vrot.slane %v3178, 4
      %v3181 = vshll.u32 %v3082, 16
      %v3183 = vrot.slane %v3181, 5
      %v3184 = vsel %vm1230, %v3179, %v3183
      %v3185 = vshrl.u32 %v3082, 16
      %v3187 = vrot.slane %v3185, 4
      %v3188 = vor.u32 %v3187, %v3183
      %v3189 = vrot.slane %v3188, 4
      %v3191 = vshll.u32 %v3083, 16
      %v3193 = vrot.slane %v3191, 5
      %v3194 = vsel %vm1230, %v3189, %v3193
      %v3196 = vshrl.u32 %v3084, 16
      %v3198 = vrot.slane %v3196, 4
      %v3199 = vshll.u32 %v3084, 16
      %v3201 = vrot.slane %v3199, 5
      %v3202 = vor.u32 %v3198, %v3201
      %v3203 = vrot.slane %v3202, 4
      %v3205 = vshll.u32 %v3085, 16
      %v3207 = vrot.slane %v3205, 5
      %v3208 = vsel %vm1230, %v3203, %v3207
      %v3209 = vshrl.u32 %v3085, 16
      %v3211 = vrot.slane %v3209, 4
      %v3212 = vor.u32 %v3211, %v3207
      %v3213 = vrot.slane %v3212, 4
      %v3215 = vshll.u32 %v3086, 16
      %v3217 = vrot.slane %v3215, 5
      %v3218 = vsel %vm1230, %v3213, %v3217
      %v3220 = vshrl.u32 %v3087, 16
      %v3222 = vrot.slane %v3220, 4
      %v3223 = vshll.u32 %v3087, 16
      %v3225 = vrot.slane %v3223, 5
      %v3226 = vor.u32 %v3222, %v3225
      %v3227 = vrot.slane %v3226, 4
      %v3229 = vshll.u32 %v3088, 16
      %v3231 = vrot.slane %v3229, 5
      %v3232 = vsel %vm1230, %v3227, %v3231
      %v3233 = vshrl.u32 %v3088, 16
      %v3235 = vrot.slane %v3233, 4
      %v3236 = vor.u32 %v3235, %v3231
      %v3237 = vrot.slane %v3236, 4
      %v3239 = vshll.u32 %v3089, 16
      %v3241 = vrot.slane %v3239, 5
      %v3242 = vsel %vm1230, %v3237, %v3241
      %v3244 = vshrl.u32 %v3090, 16
      %v3246 = vrot.slane %v3244, 4
      %v3247 = vshll.u32 %v3090, 16
      %v3249 = vrot.slane %v3247, 5
      %v3250 = vor.u32 %v3246, %v3249
      %v3251 = vrot.slane %v3250, 4
      %v3253 = vshll.u32 %v3091, 16
      %v3255 = vrot.slane %v3253, 5
      %v3256 = vsel %vm1230, %v3251, %v3255
      %v3257 = vshrl.u32 %v3091, 16
      %v3259 = vrot.slane %v3257, 4
      %v3260 = vor.u32 %v3259, %v3255
      %v3261 = vrot.slane %v3260, 4
      %v3263 = vshll.u32 %v3092, 16
      %v3265 = vrot.slane %v3263, 5
      %v3266 = vsel %vm1230, %v3261, %v3265
      %v3268 = vshrl.u32 %v3093, 16
      %v3270 = vrot.slane %v3268, 4
      %v3271 = vshll.u32 %v3093, 16
      %v3273 = vrot.slane %v3271, 5
      %v3274 = vor.u32 %v3270, %v3273
      %v3275 = vrot.slane %v3274, 4
      %v3277 = vshll.u32 %v3094, 16
      %v3279 = vrot.slane %v3277, 5
      %v3280 = vsel %vm1230, %v3275, %v3279
      %v3281 = vshrl.u32 %v3094, 16
      %v3283 = vrot.slane %v3281, 4
      %v3284 = vor.u32 %v3283, %v3279
      %v3285 = vrot.slane %v3284, 4
      %v3287 = vshll.u32 %v3095, 16
      %v3289 = vrot.slane %v3287, 5
      %v3290 = vsel %vm1230, %v3285, %v3289
      %v3292 = vshrl.u32 %v3096, 16
      %v3294 = vrot.slane %v3292, 4
      %v3295 = vshll.u32 %v3096, 16
      %v3297 = vrot.slane %v3295, 5
      %v3298 = vor.u32 %v3294, %v3297
      %v3299 = vrot.slane %v3298, 4
      %v3301 = vshll.u32 %v3097, 16
      %v3303 = vrot.slane %v3301, 5
      %v3304 = vsel %vm1230, %v3299, %v3303
      %v3305 = vshrl.u32 %v3097, 16
      %v3307 = vrot.slane %v3305, 4
      %v3308 = vor.u32 %v3307, %v3303
      %v3309 = vrot.slane %v3308, 4
      %v3311 = vshll.u32 %v3098, 16
      %v3313 = vrot.slane %v3311, 5
      %v3314 = vsel %vm1230, %v3309, %v3313
      %v3316 = vshrl.u32 %v3099, 16
      %v3318 = vrot.slane %v3316, 4
      %v3319 = vshll.u32 %v3099, 16
      %v3321 = vrot.slane %v3319, 5
      %v3322 = vor.u32 %v3318, %v3321
      %v3323 = vrot.slane %v3322, 4
      %v3325 = vshll.u32 %v3100, 16
      %v3327 = vrot.slane %v3325, 5
      %v3328 = vsel %vm1230, %v3323, %v3327
      %v3329 = vshrl.u32 %v3100, 16
      %v3331 = vrot.slane %v3329, 4
      %v3332 = vor.u32 %v3331, %v3327
      %v3333 = vrot.slane %v3332, 4
      %v3335 = vshll.u32 %v3101, 16
      %v3337 = vrot.slane %v3335, 5
      %v3338 = vsel %vm1230, %v3333, %v3337
      %v3340 = vshrl.u32 %v3102, 16
      %v3342 = vrot.slane %v3340, 4
      %v3343 = vshll.u32 %v3102, 16
      %v3345 = vrot.slane %v3343, 5
      %v3346 = vor.u32 %v3342, %v3345
      %v3347 = vrot.slane %v3346, 4
      %v3349 = vshll.u32 %v3103, 16
      %v3351 = vrot.slane %v3349, 5
      %v3352 = vsel %vm1230, %v3347, %v3351
      %v3353 = vshrl.u32 %v3103, 16
      %v3355 = vrot.slane %v3353, 4
      %v3356 = vor.u32 %v3355, %v3351
      %v3357 = vrot.slane %v3356, 4
      %v3359 = vshll.u32 %v3104, 16
      %v3361 = vrot.slane %v3359, 5
      %v3362 = vsel %vm1230, %v3357, %v3361
      %v3364 = vshrl.u32 %v3105, 16
      %v3366 = vrot.slane %v3364, 4
      %v3367 = vshll.u32 %v3105, 16
      %v3369 = vrot.slane %v3367, 5
      %v3370 = vor.u32 %v3366, %v3369
      %v3371 = vrot.slane %v3370, 4
      %v3373 = vshll.u32 %v3106, 16
      %v3375 = vrot.slane %v3373, 5
      %v3376 = vsel %vm1230, %v3371, %v3375
      %v3377 = vshrl.u32 %v3106, 16
      %v3379 = vrot.slane %v3377, 4
      %v3380 = vor.u32 %v3379, %v3375
      %v3381 = vrot.slane %v3380, 4
      %v3383 = vshll.u32 %v3107, 16
      %v3385 = vrot.slane %v3383, 5
      %v3386 = vsel %vm1230, %v3381, %v3385
      %v3388 = vshrl.u32 %v3108, 16
      %v3390 = vrot.slane %v3388, 4
      %v3391 = vshll.u32 %v3108, 16
      %v3393 = vrot.slane %v3391, 5
      %v3394 = vor.u32 %v3390, %v3393
      %v3395 = vrot.slane %v3394, 4
      %v3397 = vshll.u32 %v3109, 16
      %v3399 = vrot.slane %v3397, 5
      %v3400 = vsel %vm1230, %v3395, %v3399
      %v3401 = vshrl.u32 %v3109, 16
      %v3403 = vrot.slane %v3401, 4
      %v3404 = vor.u32 %v3403, %v3399
      %v3405 = vrot.slane %v3404, 4
      %v3407 = vshll.u32 %v3110, 16
      %v3409 = vrot.slane %v3407, 5
      %v3410 = vsel %vm1230, %v3405, %v3409
      %v3412 = vshrl.u32 %v3111, 16
      %v3414 = vrot.slane %v3412, 4
      %v3415 = vshll.u32 %v3111, 16
      %v3417 = vrot.slane %v3415, 5
      %v3418 = vor.u32 %v3414, %v3417
      %v3419 = vrot.slane %v3418, 4
      %v3421 = vshll.u32 %v3112, 16
      %v3423 = vrot.slane %v3421, 5
      %v3424 = vsel %vm1230, %v3419, %v3423
      %v3425 = vshrl.u32 %v3112, 16
      %v3427 = vrot.slane %v3425, 4
      %v3428 = vor.u32 %v3427, %v3423
      %v3429 = vrot.slane %v3428, 4
      %v3431 = vshll.u32 %v3113, 16
      %v3433 = vrot.slane %v3431, 5
      %v3434 = vsel %vm1230, %v3429, %v3433
      %v3436 = vshrl.u32 %v3114, 16
      %v3438 = vrot.slane %v3436, 4
      %v3439 = vshll.u32 %v3114, 16
      %v3441 = vrot.slane %v3439, 5
      %v3442 = vor.u32 %v3438, %v3441
      %v3443 = vrot.slane %v3442, 4
      %v3445 = vshll.u32 %v3115, 16
      %v3447 = vrot.slane %v3445, 5
      %v3448 = vsel %vm1230, %v3443, %v3447
      %v3449 = vshrl.u32 %v3115, 16
      %v3451 = vrot.slane %v3449, 4
      %v3452 = vor.u32 %v3451, %v3447
      %v3453 = vrot.slane %v3452, 4
      %v3455 = vshll.u32 %v3116, 16
      %v3457 = vrot.slane %v3455, 5
      %v3458 = vsel %vm1230, %v3453, %v3457
      %v3460 = vshrl.u32 %v3117, 16
      %v3462 = vrot.slane %v3460, 4
      %v3463 = vshll.u32 %v3117, 16
      %v3465 = vrot.slane %v3463, 5
      %v3466 = vor.u32 %v3462, %v3465
      %v3467 = vrot.slane %v3466, 4
      %v3469 = vshll.u32 %v3118, 16
      %v3471 = vrot.slane %v3469, 5
      %v3472 = vsel %vm1230, %v3467, %v3471
      %v3473 = vshrl.u32 %v3118, 16
      %v3475 = vrot.slane %v3473, 4
      %v3476 = vor.u32 %v3475, %v3471
      %v3477 = vrot.slane %v3476, 4
      %v3479 = vshll.u32 %v3119, 16
      %v3481 = vrot.slane %v3479, 5
      %v3482 = vsel %vm1230, %v3477, %v3481
      %v3484 = vshrl.u32 %v3120, 16
      %v3486 = vrot.slane %v3484, 4
      %v3487 = vshll.u32 %v3120, 16
      %v3489 = vrot.slane %v3487, 5
      %v3490 = vor.u32 %v3486, %v3489
      %v3491 = vrot.slane %v3490, 4
      %v3493 = vshll.u32 %v3121, 16
      %v3495 = vrot.slane %v3493, 5
      %v3496 = vsel %vm1230, %v3491, %v3495
      %v3497 = vshrl.u32 %v3121, 16
      %v3499 = vrot.slane %v3497, 4
      %v3500 = vor.u32 %v3499, %v3495
      %v3501 = vrot.slane %v3500, 4
      %v3503 = vshll.u32 %v3122, 16
      %v3505 = vrot.slane %v3503, 5
      %v3506 = vsel %vm1230, %v3501, %v3505
      %v3507 = vunpack.c.l.b16 %v3136
      %v3508 = vunpack.c.l.b16 %v3146
      %v3509 = vunpack.c.l.b16 %v3160
      %v3510 = vunpack.c.l.b16 %v3170
      %v3511 = vunpack.c.l.b16 %v3184
      %v3512 = vunpack.c.l.b16 %v3194
      %v3513 = vunpack.c.l.b16 %v3208
      %v3514 = vunpack.c.l.b16 %v3218
      %v3515 = vunpack.c.l.b16 %v3232
      %v3516 = vunpack.c.l.b16 %v3242
      %v3517 = vunpack.c.l.b16 %v3256
      %v3518 = vunpack.c.l.b16 %v3266
      %v3519 = vunpack.c.l.b16 %v3280
      %v3520 = vunpack.c.l.b16 %v3290
      %v3521 = vunpack.c.l.b16 %v3304
      %v3522 = vunpack.c.l.b16 %v3314
      %v3523 = vunpack.c.l.b16 %v3328
      %v3524 = vunpack.c.l.b16 %v3338
      %v3525 = vunpack.c.l.b16 %v3352
      %v3526 = vunpack.c.l.b16 %v3362
      %v3527 = vunpack.c.l.b16 %v3376
      %v3528 = vunpack.c.l.b16 %v3386
      %v3529 = vunpack.c.l.b16 %v3400
      %v3530 = vunpack.c.l.b16 %v3410
      %v3531 = vunpack.c.l.b16 %v3424
      %v3532 = vunpack.c.l.b16 %v3434
      %v3533 = vunpack.c.l.b16 %v3448
      %v3534 = vunpack.c.l.b16 %v3458
      %v3535 = vunpack.c.l.b16 %v3472
      %v3536 = vunpack.c.l.b16 %v3482
      %v3537 = vunpack.c.l.b16 %v3496
      %v3538 = vunpack.c.l.b16 %v3506
      %v3539 = vpack.c.b16 %v3508, %v3507
      %v3540 = vpack.c.b16 %v3510, %v3509
      %v3541 = vpack.c.b16 %v3512, %v3511
      %v3542 = vpack.c.b16 %v3514, %v3513
      %v3543 = vpack.c.b16 %v3516, %v3515
      %v3544 = vpack.c.b16 %v3518, %v3517
      %v3545 = vpack.c.b16 %v3520, %v3519
      %v3546 = vpack.c.b16 %v3522, %v3521
      %v3547 = vpack.c.b16 %v3524, %v3523
      %v3548 = vpack.c.b16 %v3526, %v3525
      %v3549 = vpack.c.b16 %v3528, %v3527
      %v3550 = vpack.c.b16 %v3530, %v3529
      %v3551 = vpack.c.b16 %v3532, %v3531
      %v3552 = vpack.c.b16 %v3534, %v3533
      %v3553 = vpack.c.b16 %v3536, %v3535
      %v3554 = vpack.c.b16 %v3538, %v3537
      %3571 = vst [vmem:[#allocation3 + $0x38] sm:$0xff] %v3539
      %3572 = vst [vmem:[#allocation3 + $0x80] sm:$0xff] %v3540
      %3573 = vst [vmem:[#allocation3 + $0xc8] sm:$0xff] %v3541
      %3574 = vst [vmem:[#allocation3 + $0x110] sm:$0xff] %v3542
      %3575 = vst [vmem:[#allocation3 + $0x158] sm:$0xff] %v3543
      %3576 = vst [vmem:[#allocation3 + $0x1a0] sm:$0xff] %v3544
      %3577 = vst [vmem:[#allocation3 + $0x1e8] sm:$0xff] %v3545
      %3578 = vst [vmem:[#allocation3 + $0x230] sm:$0xff] %v3546
      %3579 = vst [vmem:[#allocation3 + $0x278] sm:$0xff] %v3547
      %3580 = vst [vmem:[#allocation3 + $0x2c0] sm:$0xff] %v3548
      %3581 = vst [vmem:[#allocation3 + $0x308] sm:$0xff] %v3549
      %3582 = vst [vmem:[#allocation3 + $0x350] sm:$0xff] %v3550
      %3583 = vst [vmem:[#allocation3 + $0x398] sm:$0xff] %v3551
      %3584 = vst [vmem:[#allocation3 + $0x3e0] sm:$0xff] %v3552
      %3585 = vst [vmem:[#allocation3 + $0x428] sm:$0xff] %v3553
      %3586 = vst [vmem:[#allocation3 + $0x470] sm:$0xff] %v3554
      %v3587 = vld [vmem:[%s2930] sm:$0xe]
      %v3588 = vld [vmem:[%s2930 + $0x4] sm:$0xf]
      %v3589 = vld [vmem:[%s2930 + $0x8] sm:$0x1]
      %v3590 = vld [vmem:[%s2930 + $0xc] sm:$0xe]
      %v3591 = vld [vmem:[%s2930 + $0x10] sm:$0xf]
      %v3592 = vld [vmem:[%s2930 + $0x14] sm:$0x1]
      %v3593 = vld [vmem:[%s2930 + $0x18] sm:$0xe]
      %v3594 = vld [vmem:[%s2930 + $0x1c] sm:$0xf]
      %v3595 = vld [vmem:[%s2930 + $0x20] sm:$0x1]
      %v3596 = vld [vmem:[%s2930 + $0x24] sm:$0xe]
      %v3597 = vld [vmem:[%s2930 + $0x28] sm:$0xf]
      %v3598 = vld [vmem:[%s2930 + $0x2c] sm:$0x1]
      %v3599 = vld [vmem:[%s2930 + $0x30] sm:$0xe]
      %v3600 = vld [vmem:[%s2930 + $0x34] sm:$0xf]
      %v3601 = vld [vmem:[%s2930 + $0x38] sm:$0x1]
      %v3602 = vld [vmem:[%s2930 + $0x3c] sm:$0xe]
      %v3603 = vld [vmem:[%s2930 + $0x40] sm:$0xf]
      %v3604 = vld [vmem:[%s2930 + $0x44] sm:$0x1]
      %v3605 = vld [vmem:[%s2930 + $0x48] sm:$0xe]
      %v3606 = vld [vmem:[%s2930 + $0x4c] sm:$0xf]
      %v3607 = vld [vmem:[%s2930 + $0x50] sm:$0x1]
      %v3608 = vld [vmem:[%s2930 + $0x54] sm:$0xe]
      %v3609 = vld [vmem:[%s2930 + $0x58] sm:$0xf]
      %v3610 = vld [vmem:[%s2930 + $0x5c] sm:$0x1]
      %v3611 = vld [vmem:[%s2930 + $0x60] sm:$0xe]
      %v3612 = vld [vmem:[%s2930 + $0x64] sm:$0xf]
      %v3613 = vld [vmem:[%s2930 + $0x68] sm:$0x1]
      %v3614 = vld [vmem:[%s2930 + $0x6c] sm:$0xe]
      %v3615 = vld [vmem:[%s2930 + $0x70] sm:$0xf]
      %v3616 = vld [vmem:[%s2930 + $0x74] sm:$0x1]
      %v3617 = vld [vmem:[%s2930 + $0x78] sm:$0xe]
      %v3618 = vld [vmem:[%s2930 + $0x7c] sm:$0xf]
      %v3619 = vld [vmem:[%s2930 + $0x80] sm:$0x1]
      %v3620 = vld [vmem:[%s2930 + $0x84] sm:$0xe]
      %v3621 = vld [vmem:[%s2930 + $0x88] sm:$0xf]
      %v3622 = vld [vmem:[%s2930 + $0x8c] sm:$0x1]
      %v3623 = vld [vmem:[%s2930 + $0x90] sm:$0xe]
      %v3624 = vld [vmem:[%s2930 + $0x94] sm:$0xf]
      %v3625 = vld [vmem:[%s2930 + $0x98] sm:$0x1]
      %v3626 = vld [vmem:[%s2930 + $0x9c] sm:$0xe]
      %v3627 = vld [vmem:[%s2930 + $0xa0] sm:$0xf]
      %v3628 = vld [vmem:[%s2930 + $0xa4] sm:$0x1]
      %v3629 = vld [vmem:[%s2930 + $0xa8] sm:$0xe]
      %v3630 = vld [vmem:[%s2930 + $0xac] sm:$0xf]
      %v3631 = vld [vmem:[%s2930 + $0xb0] sm:$0x1]
      %v3632 = vld [vmem:[%s2930 + $0xb4] sm:$0xe]
      %v3633 = vld [vmem:[%s2930 + $0xb8] sm:$0xf]
      %v3634 = vld [vmem:[%s2930 + $0xbc] sm:$0x1]
      %v3683 = vrot.slane %v3587, 5
      %v3684 = vrot.slane %v3683, 4
      %v3685 = vrot.slane %v3588, 5
      %v3686 = vsel %vm1793, %v3684, %v3685
      %v3687 = vrot.slane %v3685, 4
      %v3688 = vrot.slane %v3589, 5
      %v3689 = vsel %vm1793, %v3687, %v3688
      %v3690 = vrot.slane %v3590, 5
      %v3691 = vrot.slane %v3690, 4
      %v3692 = vrot.slane %v3591, 5
      %v3693 = vsel %vm1793, %v3691, %v3692
      %v3694 = vrot.slane %v3692, 4
      %v3695 = vrot.slane %v3592, 5
      %v3696 = vsel %vm1793, %v3694, %v3695
      %v3697 = vrot.slane %v3593, 5
      %v3698 = vrot.slane %v3697, 4
      %v3699 = vrot.slane %v3594, 5
      %v3700 = vsel %vm1793, %v3698, %v3699
      %v3701 = vrot.slane %v3699, 4
      %v3702 = vrot.slane %v3595, 5
      %v3703 = vsel %vm1793, %v3701, %v3702
      %v3704 = vrot.slane %v3596, 5
      %v3705 = vrot.slane %v3704, 4
      %v3706 = vrot.slane %v3597, 5
      %v3707 = vsel %vm1793, %v3705, %v3706
      %v3708 = vrot.slane %v3706, 4
      %v3709 = vrot.slane %v3598, 5
      %v3710 = vsel %vm1793, %v3708, %v3709
      %v3711 = vrot.slane %v3599, 5
      %v3712 = vrot.slane %v3711, 4
      %v3713 = vrot.slane %v3600, 5
      %v3714 = vsel %vm1793, %v3712, %v3713
      %v3715 = vrot.slane %v3713, 4
      %v3716 = vrot.slane %v3601, 5
      %v3717 = vsel %vm1793, %v3715, %v3716
      %v3718 = vrot.slane %v3602, 5
      %v3719 = vrot.slane %v3718, 4
      %v3720 = vrot.slane %v3603, 5
      %v3721 = vsel %vm1793, %v3719, %v3720
      %v3722 = vrot.slane %v3720, 4
      %v3723 = vrot.slane %v3604, 5
      %v3724 = vsel %vm1793, %v3722, %v3723
      %v3725 = vrot.slane %v3605, 5
      %v3726 = vrot.slane %v3725, 4
      %v3727 = vrot.slane %v3606, 5
      %v3728 = vsel %vm1793, %v3726, %v3727
      %v3729 = vrot.slane %v3727, 4
      %v3730 = vrot.slane %v3607, 5
      %v3731 = vsel %vm1793, %v3729, %v3730
      %v3732 = vrot.slane %v3608, 5
      %v3733 = vrot.slane %v3732, 4
      %v3734 = vrot.slane %v3609, 5
      %v3735 = vsel %vm1793, %v3733, %v3734
      %v3736 = vrot.slane %v3734, 4
      %v3737 = vrot.slane %v3610, 5
      %v3738 = vsel %vm1793, %v3736, %v3737
      %v3739 = vrot.slane %v3611, 5
      %v3740 = vrot.slane %v3739, 4
      %v3741 = vrot.slane %v3612, 5
      %v3742 = vsel %vm1793, %v3740, %v3741
      %v3743 = vrot.slane %v3741, 4
      %v3744 = vrot.slane %v3613, 5
      %v3745 = vsel %vm1793, %v3743, %v3744
      %v3746 = vrot.slane %v3614, 5
      %v3747 = vrot.slane %v3746, 4
      %v3748 = vrot.slane %v3615, 5
      %v3749 = vsel %vm1793, %v3747, %v3748
      %v3750 = vrot.slane %v3748, 4
      %v3751 = vrot.slane %v3616, 5
      %v3752 = vsel %vm1793, %v3750, %v3751
      %v3753 = vrot.slane %v3617, 5
      %v3754 = vrot.slane %v3753, 4
      %v3755 = vrot.slane %v3618, 5
      %v3756 = vsel %vm1793, %v3754, %v3755
      %v3757 = vrot.slane %v3755, 4
      %v3758 = vrot.slane %v3619, 5
      %v3759 = vsel %vm1793, %v3757, %v3758
      %v3760 = vrot.slane %v3620, 5
      %v3761 = vrot.slane %v3760, 4
      %v3762 = vrot.slane %v3621, 5
      %v3763 = vsel %vm1793, %v3761, %v3762
      %v3764 = vrot.slane %v3762, 4
      %v3765 = vrot.slane %v3622, 5
      %v3766 = vsel %vm1793, %v3764, %v3765
      %v3767 = vrot.slane %v3623, 5
      %v3768 = vrot.slane %v3767, 4
      %v3769 = vrot.slane %v3624, 5
      %v3770 = vsel %vm1793, %v3768, %v3769
      %v3771 = vrot.slane %v3769, 4
      %v3772 = vrot.slane %v3625, 5
      %v3773 = vsel %vm1793, %v3771, %v3772
      %v3774 = vrot.slane %v3626, 5
      %v3775 = vrot.slane %v3774, 4
      %v3776 = vrot.slane %v3627, 5
      %v3777 = vsel %vm1793, %v3775, %v3776
      %v3778 = vrot.slane %v3776, 4
      %v3779 = vrot.slane %v3628, 5
      %v3780 = vsel %vm1793, %v3778, %v3779
      %v3781 = vrot.slane %v3629, 5
      %v3782 = vrot.slane %v3781, 4
      %v3783 = vrot.slane %v3630, 5
      %v3784 = vsel %vm1793, %v3782, %v3783
      %v3785 = vrot.slane %v3783, 4
      %v3786 = vrot.slane %v3631, 5
      %v3787 = vsel %vm1793, %v3785, %v3786
      %v3788 = vrot.slane %v3632, 5
      %v3789 = vrot.slane %v3788, 4
      %v3790 = vrot.slane %v3633, 5
      %v3791 = vsel %vm1793, %v3789, %v3790
      %v3792 = vrot.slane %v3790, 4
      %v3793 = vrot.slane %v3634, 5
      %v3794 = vsel %vm1793, %v3792, %v3793
      %v3795 = vunpack.c.l.b16 %v3686
      %v3796 = vunpack.c.l.b16 %v3689
      %v3797 = vunpack.c.l.b16 %v3693
      %v3798 = vunpack.c.l.b16 %v3696
      %v3799 = vunpack.c.l.b16 %v3700
      %v3800 = vunpack.c.l.b16 %v3703
      %v3801 = vunpack.c.l.b16 %v3707
      %v3802 = vunpack.c.l.b16 %v3710
      %v3803 = vunpack.c.l.b16 %v3714
      %v3804 = vunpack.c.l.b16 %v3717
      %v3805 = vunpack.c.l.b16 %v3721
      %v3806 = vunpack.c.l.b16 %v3724
      %v3807 = vunpack.c.l.b16 %v3728
      %v3808 = vunpack.c.l.b16 %v3731
      %v3809 = vunpack.c.l.b16 %v3735
      %v3810 = vunpack.c.l.b16 %v3738
      %v3811 = vunpack.c.l.b16 %v3742
      %v3812 = vunpack.c.l.b16 %v3745
      %v3813 = vunpack.c.l.b16 %v3749
      %v3814 = vunpack.c.l.b16 %v3752
      %v3815 = vunpack.c.l.b16 %v3756
      %v3816 = vunpack.c.l.b16 %v3759
      %v3817 = vunpack.c.l.b16 %v3763
      %v3818 = vunpack.c.l.b16 %v3766
      %v3819 = vunpack.c.l.b16 %v3770
      %v3820 = vunpack.c.l.b16 %v3773
      %v3821 = vunpack.c.l.b16 %v3777
      %v3822 = vunpack.c.l.b16 %v3780
      %v3823 = vunpack.c.l.b16 %v3784
      %v3824 = vunpack.c.l.b16 %v3787
      %v3825 = vunpack.c.l.b16 %v3791
      %v3826 = vunpack.c.l.b16 %v3794
      %v3827 = vpack.c.b16 %v3796, %v3795
      %v3828 = vpack.c.b16 %v3798, %v3797
      %v3829 = vpack.c.b16 %v3800, %v3799
      %v3830 = vpack.c.b16 %v3802, %v3801
      %v3831 = vpack.c.b16 %v3804, %v3803
      %v3832 = vpack.c.b16 %v3806, %v3805
      %v3833 = vpack.c.b16 %v3808, %v3807
      %v3834 = vpack.c.b16 %v3810, %v3809
      %v3835 = vpack.c.b16 %v3812, %v3811
      %v3836 = vpack.c.b16 %v3814, %v3813
      %v3837 = vpack.c.b16 %v3816, %v3815
      %v3838 = vpack.c.b16 %v3818, %v3817
      %v3839 = vpack.c.b16 %v3820, %v3819
      %v3840 = vpack.c.b16 %v3822, %v3821
      %v3841 = vpack.c.b16 %v3824, %v3823
      %v3842 = vpack.c.b16 %v3826, %v3825
      %3859 = vst [vmem:[#allocation3 + $0x40] sm:$0xff] %v3827
      %3860 = vst [vmem:[#allocation3 + $0x88] sm:$0xff] %v3828
      %3861 = vst [vmem:[#allocation3 + $0xd0] sm:$0xff] %v3829
      %3862 = vst [vmem:[#allocation3 + $0x118] sm:$0xff] %v3830
      %3863 = vst [vmem:[#allocation3 + $0x160] sm:$0xff] %v3831
      %3864 = vst [vmem:[#allocation3 + $0x1a8] sm:$0xff] %v3832
      %3865 = vst [vmem:[#allocation3 + $0x1f0] sm:$0xff] %v3833
      %3866 = vst [vmem:[#allocation3 + $0x238] sm:$0xff] %v3834
      %3867 = vst [vmem:[#allocation3 + $0x280] sm:$0xff] %v3835
      %3868 = vst [vmem:[#allocation3 + $0x2c8] sm:$0xff] %v3836
      %3869 = vst [vmem:[#allocation3 + $0x310] sm:$0xff] %v3837
      %3870 = vst [vmem:[#allocation3 + $0x358] sm:$0xff] %v3838
      %3871 = vst [vmem:[#allocation3 + $0x3a0] sm:$0xff] %v3839
      %3872 = vst [vmem:[#allocation3 + $0x3e8] sm:$0xff] %v3840
      %3873 = vst [vmem:[#allocation3 + $0x430] sm:$0xff] %v3841
      %3874 = vst [vmem:[#allocation3 + $0x478] sm:$0xff] %v3842
      %v3875 = vld [vmem:[#allocation3] sm:$0xff]
      %v3876 = vld [vmem:[#allocation3 + $0x8] sm:$0xff]
      %v3877 = vld [vmem:[#allocation3 + $0x10] sm:$0xff]
      %v3878 = vld [vmem:[#allocation3 + $0x18] sm:$0xff]
      %v3879 = vld [vmem:[#allocation3 + $0x20] sm:$0xff]
      %v3880 = vld [vmem:[#allocation3 + $0x28] sm:$0xff]
      %v3881 = vld [vmem:[#allocation3 + $0x30] sm:$0xff]
      %v3882 = vld [vmem:[#allocation3 + $0x38] sm:$0xff]
      %v3883 = vld [vmem:[#allocation3 + $0x40] sm:$0xff]
      %v3884 = vld [vmem:[#allocation3 + $0x48] sm:$0xff]
      %v3885 = vld [vmem:[#allocation3 + $0x50] sm:$0xff]
      %v3886 = vld [vmem:[#allocation3 + $0x58] sm:$0xff]
      %v3887 = vld [vmem:[#allocation3 + $0x60] sm:$0xff]
      %v3888 = vld [vmem:[#allocation3 + $0x68] sm:$0xff]
      %v3889 = vld [vmem:[#allocation3 + $0x70] sm:$0xff]
      %v3890 = vld [vmem:[#allocation3 + $0x78] sm:$0xff]
      %v3891 = vld [vmem:[#allocation3 + $0x80] sm:$0xff]
      %v3892 = vld [vmem:[#allocation3 + $0x88] sm:$0xff]
      %v3893 = vld [vmem:[#allocation3 + $0x90] sm:$0xff]
      %v3894 = vld [vmem:[#allocation3 + $0x98] sm:$0xff]
      %v3895 = vld [vmem:[#allocation3 + $0xa0] sm:$0xff]
      %v3896 = vld [vmem:[#allocation3 + $0xa8] sm:$0xff]
      %v3897 = vld [vmem:[#allocation3 + $0xb0] sm:$0xff]
      %v3898 = vld [vmem:[#allocation3 + $0xb8] sm:$0xff]
      %v3899 = vld [vmem:[#allocation3 + $0xc0] sm:$0xff]
      %v3900 = vld [vmem:[#allocation3 + $0xc8] sm:$0xff]
      %v3901 = vld [vmem:[#allocation3 + $0xd0] sm:$0xff]
      %v3902 = vld [vmem:[#allocation3 + $0xd8] sm:$0xff]
      %v3903 = vld [vmem:[#allocation3 + $0xe0] sm:$0xff]
      %v3904 = vld [vmem:[#allocation3 + $0xe8] sm:$0xff]
      %v3905 = vld [vmem:[#allocation3 + $0xf0] sm:$0xff]
      %v3906 = vld [vmem:[#allocation3 + $0xf8] sm:$0xff]
      %v3907 = vld [vmem:[#allocation3 + $0x100] sm:$0xff]
      %v3908 = vld [vmem:[#allocation3 + $0x108] sm:$0xff]
      %v3909 = vld [vmem:[#allocation3 + $0x110] sm:$0xff]
      %v3910 = vld [vmem:[#allocation3 + $0x118] sm:$0xff]
      %v3911 = vld [vmem:[#allocation3 + $0x120] sm:$0xff]
      %v3912 = vld [vmem:[#allocation3 + $0x128] sm:$0xff]
      %v3913 = vld [vmem:[#allocation3 + $0x130] sm:$0xff]
      %v3914 = vld [vmem:[#allocation3 + $0x138] sm:$0xff]
      %v3915 = vld [vmem:[#allocation3 + $0x140] sm:$0xff]
      %v3916 = vld [vmem:[#allocation3 + $0x148] sm:$0xff]
      %v3917 = vld [vmem:[#allocation3 + $0x150] sm:$0xff]
      %v3918 = vld [vmem:[#allocation3 + $0x158] sm:$0xff]
      %v3919 = vld [vmem:[#allocation3 + $0x160] sm:$0xff]
      %v3920 = vld [vmem:[#allocation3 + $0x168] sm:$0xff]
      %v3921 = vld [vmem:[#allocation3 + $0x170] sm:$0xff]
      %v3922 = vld [vmem:[#allocation3 + $0x178] sm:$0xff]
      %v3923 = vld [vmem:[#allocation3 + $0x180] sm:$0xff]
      %v3924 = vld [vmem:[#allocation3 + $0x188] sm:$0xff]
      %v3925 = vld [vmem:[#allocation3 + $0x190] sm:$0xff]
      %v3926 = vld [vmem:[#allocation3 + $0x198] sm:$0xff]
      %v3927 = vld [vmem:[#allocation3 + $0x1a0] sm:$0xff]
      %v3928 = vld [vmem:[#allocation3 + $0x1a8] sm:$0xff]
      %v3929 = vld [vmem:[#allocation3 + $0x1b0] sm:$0xff]
      %v3930 = vld [vmem:[#allocation3 + $0x1b8] sm:$0xff]
      %v3931 = vld [vmem:[#allocation3 + $0x1c0] sm:$0xff]
      %v3932 = vld [vmem:[#allocation3 + $0x1c8] sm:$0xff]
      %v3933 = vld [vmem:[#allocation3 + $0x1d0] sm:$0xff]
      %v3934 = vld [vmem:[#allocation3 + $0x1d8] sm:$0xff]
      %v3935 = vld [vmem:[#allocation3 + $0x1e0] sm:$0xff]
      %v3936 = vld [vmem:[#allocation3 + $0x1e8] sm:$0xff]
      %v3937 = vld [vmem:[#allocation3 + $0x1f0] sm:$0xff]
      %v3938 = vld [vmem:[#allocation3 + $0x1f8] sm:$0xff]
      %v3939 = vld [vmem:[#allocation3 + $0x200] sm:$0xff]
      %v3940 = vld [vmem:[#allocation3 + $0x208] sm:$0xff]
      %v3941 = vld [vmem:[#allocation3 + $0x210] sm:$0xff]
      %v3942 = vld [vmem:[#allocation3 + $0x218] sm:$0xff]
      %v3943 = vld [vmem:[#allocation3 + $0x220] sm:$0xff]
      %v3944 = vld [vmem:[#allocation3 + $0x228] sm:$0xff]
      %v3945 = vld [vmem:[#allocation3 + $0x230] sm:$0xff]
      %v3946 = vld [vmem:[#allocation3 + $0x238] sm:$0xff]
      %v3947 = vld [vmem:[#allocation3 + $0x240] sm:$0xff]
      %v3948 = vld [vmem:[#allocation3 + $0x248] sm:$0xff]
      %v3949 = vld [vmem:[#allocation3 + $0x250] sm:$0xff]
      %v3950 = vld [vmem:[#allocation3 + $0x258] sm:$0xff]
      %v3951 = vld [vmem:[#allocation3 + $0x260] sm:$0xff]
      %v3952 = vld [vmem:[#allocation3 + $0x268] sm:$0xff]
      %v3953 = vld [vmem:[#allocation3 + $0x270] sm:$0xff]
      %v3954 = vld [vmem:[#allocation3 + $0x278] sm:$0xff]
      %v3955 = vld [vmem:[#allocation3 + $0x280] sm:$0xff]
      %v3956 = vld [vmem:[#allocation3 + $0x288] sm:$0xff]
      %v3957 = vld [vmem:[#allocation3 + $0x290] sm:$0xff]
      %v3958 = vld [vmem:[#allocation3 + $0x298] sm:$0xff]
      %v3959 = vld [vmem:[#allocation3 + $0x2a0] sm:$0xff]
      %v3960 = vld [vmem:[#allocation3 + $0x2a8] sm:$0xff]
      %v3961 = vld [vmem:[#allocation3 + $0x2b0] sm:$0xff]
      %v3962 = vld [vmem:[#allocation3 + $0x2b8] sm:$0xff]
      %v3963 = vld [vmem:[#allocation3 + $0x2c0] sm:$0xff]
      %v3964 = vld [vmem:[#allocation3 + $0x2c8] sm:$0xff]
      %v3965 = vld [vmem:[#allocation3 + $0x2d0] sm:$0xff]
      %v3966 = vld [vmem:[#allocation3 + $0x2d8] sm:$0xff]
      %v3967 = vld [vmem:[#allocation3 + $0x2e0] sm:$0xff]
      %v3968 = vld [vmem:[#allocation3 + $0x2e8] sm:$0xff]
      %v3969 = vld [vmem:[#allocation3 + $0x2f0] sm:$0xff]
      %v3970 = vld [vmem:[#allocation3 + $0x2f8] sm:$0xff]
      %v3971 = vld [vmem:[#allocation3 + $0x300] sm:$0xff]
      %v3972 = vld [vmem:[#allocation3 + $0x308] sm:$0xff]
      %v3973 = vld [vmem:[#allocation3 + $0x310] sm:$0xff]
      %v3974 = vld [vmem:[#allocation3 + $0x318] sm:$0xff]
      %v3975 = vld [vmem:[#allocation3 + $0x320] sm:$0xff]
      %v3976 = vld [vmem:[#allocation3 + $0x328] sm:$0xff]
      %v3977 = vld [vmem:[#allocation3 + $0x330] sm:$0xff]
      %v3978 = vld [vmem:[#allocation3 + $0x338] sm:$0xff]
      %v3979 = vld [vmem:[#allocation3 + $0x340] sm:$0xff]
      %v3980 = vld [vmem:[#allocation3 + $0x348] sm:$0xff]
      %v3981 = vld [vmem:[#allocation3 + $0x350] sm:$0xff]
      %v3982 = vld [vmem:[#allocation3 + $0x358] sm:$0xff]
      %v3983 = vld [vmem:[#allocation3 + $0x360] sm:$0xff]
      %v3984 = vld [vmem:[#allocation3 + $0x368] sm:$0xff]
      %v3985 = vld [vmem:[#allocation3 + $0x370] sm:$0xff]
      %v3986 = vld [vmem:[#allocation3 + $0x378] sm:$0xff]
      %v3987 = vld [vmem:[#allocation3 + $0x380] sm:$0xff]
      %v3988 = vld [vmem:[#allocation3 + $0x388] sm:$0xff]
      %v3989 = vld [vmem:[#allocation3 + $0x390] sm:$0xff]
      %v3990 = vld [vmem:[#allocation3 + $0x398] sm:$0xff]
      %v3991 = vld [vmem:[#allocation3 + $0x3a0] sm:$0xff]
      %v3992 = vld [vmem:[#allocation3 + $0x3a8] sm:$0xff]
      %v3993 = vld [vmem:[#allocation3 + $0x3b0] sm:$0xff]
      %v3994 = vld [vmem:[#allocation3 + $0x3b8] sm:$0xff]
      %v3995 = vld [vmem:[#allocation3 + $0x3c0] sm:$0xff]
      %v3996 = vld [vmem:[#allocation3 + $0x3c8] sm:$0xff]
      %v3997 = vld [vmem:[#allocation3 + $0x3d0] sm:$0xff]
      %v3998 = vld [vmem:[#allocation3 + $0x3d8] sm:$0xff]
      %v3999 = vld [vmem:[#allocation3 + $0x3e0] sm:$0xff]
      %v4000 = vld [vmem:[#allocation3 + $0x3e8] sm:$0xff]
      %v4001 = vld [vmem:[#allocation3 + $0x3f0] sm:$0xff]
      %v4002 = vld [vmem:[#allocation3 + $0x3f8] sm:$0xff]
      %v4003 = vld [vmem:[#allocation3 + $0x400] sm:$0xff]
      %v4004 = vld [vmem:[#allocation3 + $0x408] sm:$0xff]
      %v4005 = vld [vmem:[#allocation3 + $0x410] sm:$0xff]
      %v4006 = vld [vmem:[#allocation3 + $0x418] sm:$0xff]
      %v4007 = vld [vmem:[#allocation3 + $0x420] sm:$0xff]
      %v4008 = vld [vmem:[#allocation3 + $0x428] sm:$0xff]
      %v4009 = vld [vmem:[#allocation3 + $0x430] sm:$0xff]
      %v4010 = vld [vmem:[#allocation3 + $0x438] sm:$0xff]
      %v4011 = vld [vmem:[#allocation3 + $0x440] sm:$0xff]
      %v4012 = vld [vmem:[#allocation3 + $0x448] sm:$0xff]
      %v4013 = vld [vmem:[#allocation3 + $0x450] sm:$0xff]
      %v4014 = vld [vmem:[#allocation3 + $0x458] sm:$0xff]
      %v4015 = vld [vmem:[#allocation3 + $0x460] sm:$0xff]
      %v4016 = vld [vmem:[#allocation3 + $0x468] sm:$0xff]
      %v4017 = vld [vmem:[#allocation3 + $0x470] sm:$0xff]
      %v4018 = vld [vmem:[#allocation3 + $0x478] sm:$0xff]
      %v4019 = vld [vmem:[%s3] sm:$0xf]
      %v4020 = vld [vmem:[%s3 + $0x4] sm:$0xf]
      %v4021 = vld [vmem:[%s3 + $0x8] sm:$0xf]
      %v4022 = vld [vmem:[%s3 + $0xc] sm:$0xf]
      %v4023 = vld [vmem:[%s3 + $0x10] sm:$0xf]
      %v4024 = vld [vmem:[%s3 + $0x14] sm:$0xf]
      %v4025 = vld [vmem:[%s3 + $0x18] sm:$0xf]
      %v4026 = vld [vmem:[%s3 + $0x1c] sm:$0xf]
      %v4027 = vld [vmem:[%s3 + $0x20] sm:$0xf]
      %v4028 = vld [vmem:[%s3 + $0x24] sm:$0xf]
      %v4029 = vld [vmem:[%s3 + $0x28] sm:$0xf]
      %v4030 = vld [vmem:[%s3 + $0x2c] sm:$0xf]
      %v4031 = vld [vmem:[%s3 + $0x30] sm:$0xf]
      %v4032 = vld [vmem:[%s3 + $0x34] sm:$0xf]
      %v4033 = vld [vmem:[%s3 + $0x38] sm:$0xf]
      %v4034 = vld [vmem:[%s3 + $0x3c] sm:$0xf]
      %v4035 = vld [vmem:[%s3 + $0x40] sm:$0xf]
      %v4036 = vld [vmem:[%s3 + $0x44] sm:$0xf]
      %v4037 = vld [vmem:[%s3 + $0x48] sm:$0xf]
      %v4038 = vld [vmem:[%s3 + $0x4c] sm:$0xf]
      %v4039 = vld [vmem:[%s3 + $0x50] sm:$0xf]
      %v4040 = vld [vmem:[%s3 + $0x54] sm:$0xf]
      %v4041 = vld [vmem:[%s3 + $0x58] sm:$0xf]
      %v4042 = vld [vmem:[%s3 + $0x5c] sm:$0xf]
      %v4043 = vld [vmem:[%s3 + $0x60] sm:$0xf]
      %v4044 = vld [vmem:[%s3 + $0x64] sm:$0xf]
      %v4045 = vld [vmem:[%s3 + $0x68] sm:$0xf]
      %v4046 = vld [vmem:[%s3 + $0x6c] sm:$0xf]
      %v4047 = vld [vmem:[%s3 + $0x70] sm:$0xf]
      %v4048 = vld [vmem:[%s3 + $0x74] sm:$0xf]
      %v4049 = vld [vmem:[%s3 + $0x78] sm:$0xf]
      %v4050 = vld [vmem:[%s3 + $0x7c] sm:$0xf]
      %v4051 = vld [vmem:[%s3 + $0x80] sm:$0xf]
      %v4052 = vld [vmem:[%s3 + $0x84] sm:$0xf]
      %v4053 = vld [vmem:[%s3 + $0x88] sm:$0xf]
      %v4054 = vld [vmem:[%s3 + $0x8c] sm:$0xf]
      %v4055 = vld [vmem:[%s3 + $0x90] sm:$0xf]
      %v4056 = vld [vmem:[%s3 + $0x94] sm:$0xf]
      %v4057 = vld [vmem:[%s3 + $0x98] sm:$0xf]
      %v4058 = vld [vmem:[%s3 + $0x9c] sm:$0xf]
      %v4059 = vld [vmem:[%s3 + $0xa0] sm:$0xf]
      %v4060 = vld [vmem:[%s3 + $0xa4] sm:$0xf]
      %v4061 = vld [vmem:[%s3 + $0xa8] sm:$0xf]
      %v4062 = vld [vmem:[%s3 + $0xac] sm:$0xf]
      %v4063 = vld [vmem:[%s3 + $0xb0] sm:$0xf]
      %v4064 = vld [vmem:[%s3 + $0xb4] sm:$0xf]
      %v4065 = vld [vmem:[%s3 + $0xb8] sm:$0xf]
      %v4066 = vld [vmem:[%s3 + $0xbc] sm:$0xf]
      %v4067 = vld [vmem:[%s3 + $0xc0] sm:$0xf]
      %v4068 = vld [vmem:[%s3 + $0xc4] sm:$0xf]
      %v4069 = vld [vmem:[%s3 + $0xc8] sm:$0xf]
      %v4070 = vld [vmem:[%s3 + $0xcc] sm:$0xf]
      %v4071 = vld [vmem:[%s3 + $0xd0] sm:$0xf]
      %v4072 = vld [vmem:[%s3 + $0xd4] sm:$0xf]
      %v4073 = vld [vmem:[%s3 + $0xd8] sm:$0xf]
      %v4074 = vld [vmem:[%s3 + $0xdc] sm:$0xf]
      %v4075 = vld [vmem:[%s3 + $0xe0] sm:$0xf]
      %v4076 = vld [vmem:[%s3 + $0xe4] sm:$0xf]
      %v4077 = vld [vmem:[%s3 + $0xe8] sm:$0xf]
      %v4078 = vld [vmem:[%s3 + $0xec] sm:$0xf]
      %v4079 = vld [vmem:[%s3 + $0xf0] sm:$0xf]
      %v4080 = vld [vmem:[%s3 + $0xf4] sm:$0xf]
      %v4081 = vld [vmem:[%s3 + $0xf8] sm:$0xf]
      %v4082 = vld [vmem:[%s3 + $0xfc] sm:$0xf]
      %v4083 = vld [vmem:[%s3 + $0x100] sm:$0xf]
      %v4084 = vld [vmem:[%s3 + $0x104] sm:$0xf]
      %v4085 = vld [vmem:[%s3 + $0x108] sm:$0xf]
      %v4086 = vld [vmem:[%s3 + $0x10c] sm:$0xf]
      %v4087 = vld [vmem:[%s3 + $0x110] sm:$0xf]
      %v4088 = vld [vmem:[%s3 + $0x114] sm:$0xf]
      %v4089 = vld [vmem:[%s3 + $0x118] sm:$0xf]
      %v4090 = vld [vmem:[%s3 + $0x11c] sm:$0xf]
      %v4091 = vld [vmem:[%s3 + $0x120] sm:$0xf]
      %v4092 = vld [vmem:[%s3 + $0x124] sm:$0xf]
      %v4093 = vld [vmem:[%s3 + $0x128] sm:$0xf]
      %v4094 = vld [vmem:[%s3 + $0x12c] sm:$0xf]
      %v4095 = vld [vmem:[%s3 + $0x130] sm:$0xf]
      %v4096 = vld [vmem:[%s3 + $0x134] sm:$0xf]
      %v4097 = vld [vmem:[%s3 + $0x138] sm:$0xf]
      %v4098 = vld [vmem:[%s3 + $0x13c] sm:$0xf]
      %v4099 = vld [vmem:[%s3 + $0x140] sm:$0xf]
      %v4100 = vld [vmem:[%s3 + $0x144] sm:$0xf]
      %v4101 = vld [vmem:[%s3 + $0x148] sm:$0xf]
      %v4102 = vld [vmem:[%s3 + $0x14c] sm:$0xf]
      %v4103 = vld [vmem:[%s3 + $0x150] sm:$0xf]
      %v4104 = vld [vmem:[%s3 + $0x154] sm:$0xf]
      %v4105 = vld [vmem:[%s3 + $0x158] sm:$0xf]
      %v4106 = vld [vmem:[%s3 + $0x15c] sm:$0xf]
      %v4107 = vld [vmem:[%s3 + $0x160] sm:$0xf]
      %v4108 = vld [vmem:[%s3 + $0x164] sm:$0xf]
      %v4109 = vld [vmem:[%s3 + $0x168] sm:$0xf]
      %v4110 = vld [vmem:[%s3 + $0x16c] sm:$0xf]
      %v4111 = vld [vmem:[%s3 + $0x170] sm:$0xf]
      %v4112 = vld [vmem:[%s3 + $0x174] sm:$0xf]
      %v4113 = vld [vmem:[%s3 + $0x178] sm:$0xf]
      %v4114 = vld [vmem:[%s3 + $0x17c] sm:$0xf]
      %v4115 = vld [vmem:[%s3 + $0x180] sm:$0xf]
      %v4116 = vld [vmem:[%s3 + $0x184] sm:$0xf]
      %v4117 = vld [vmem:[%s3 + $0x188] sm:$0xf]
      %v4118 = vld [vmem:[%s3 + $0x18c] sm:$0xf]
      %v4119 = vld [vmem:[%s3 + $0x190] sm:$0xf]
      %v4120 = vld [vmem:[%s3 + $0x194] sm:$0xf]
      %v4121 = vld [vmem:[%s3 + $0x198] sm:$0xf]
      %v4122 = vld [vmem:[%s3 + $0x19c] sm:$0xf]
      %v4123 = vld [vmem:[%s3 + $0x1a0] sm:$0xf]
      %v4124 = vld [vmem:[%s3 + $0x1a4] sm:$0xf]
      %v4125 = vld [vmem:[%s3 + $0x1a8] sm:$0xf]
      %v4126 = vld [vmem:[%s3 + $0x1ac] sm:$0xf]
      %v4127 = vld [vmem:[%s3 + $0x1b0] sm:$0xf]
      %v4128 = vld [vmem:[%s3 + $0x1b4] sm:$0xf]
      %v4129 = vld [vmem:[%s3 + $0x1b8] sm:$0xf]
      %v4130 = vld [vmem:[%s3 + $0x1bc] sm:$0xf]
      %v4131 = vld [vmem:[%s3 + $0x1c0] sm:$0xf]
      %v4132 = vld [vmem:[%s3 + $0x1c4] sm:$0xf]
      %v4133 = vld [vmem:[%s3 + $0x1c8] sm:$0xf]
      %v4134 = vld [vmem:[%s3 + $0x1cc] sm:$0xf]
      %v4135 = vld [vmem:[%s3 + $0x1d0] sm:$0xf]
      %v4136 = vld [vmem:[%s3 + $0x1d4] sm:$0xf]
      %v4137 = vld [vmem:[%s3 + $0x1d8] sm:$0xf]
      %v4138 = vld [vmem:[%s3 + $0x1dc] sm:$0xf]
      %v4139 = vld [vmem:[%s3 + $0x1e0] sm:$0xf]
      %v4140 = vld [vmem:[%s3 + $0x1e4] sm:$0xf]
      %v4141 = vld [vmem:[%s3 + $0x1e8] sm:$0xf]
      %v4142 = vld [vmem:[%s3 + $0x1ec] sm:$0xf]
      %v4143 = vld [vmem:[%s3 + $0x1f0] sm:$0xf]
      %v4144 = vld [vmem:[%s3 + $0x1f4] sm:$0xf]
      %v4145 = vld [vmem:[%s3 + $0x1f8] sm:$0xf]
      %v4146 = vld [vmem:[%s3 + $0x1fc] sm:$0xf]
      %v4147 = vld [vmem:[%s3 + $0x200] sm:$0xf]
      %v4148 = vld [vmem:[%s3 + $0x204] sm:$0xf]
      %v4149 = vld [vmem:[%s3 + $0x208] sm:$0xf]
      %v4150 = vld [vmem:[%s3 + $0x20c] sm:$0xf]
      %v4151 = vld [vmem:[%s3 + $0x210] sm:$0xf]
      %v4152 = vld [vmem:[%s3 + $0x214] sm:$0xf]
      %v4153 = vld [vmem:[%s3 + $0x218] sm:$0xf]
      %v4154 = vld [vmem:[%s3 + $0x21c] sm:$0xf]
      %v4155 = vld [vmem:[%s3 + $0x220] sm:$0xf]
      %v4156 = vld [vmem:[%s3 + $0x224] sm:$0xf]
      %v4157 = vld [vmem:[%s3 + $0x228] sm:$0xf]
      %v4158 = vld [vmem:[%s3 + $0x22c] sm:$0xf]
      %v4159 = vld [vmem:[%s3 + $0x230] sm:$0xf]
      %v4160 = vld [vmem:[%s3 + $0x234] sm:$0xf]
      %v4161 = vld [vmem:[%s3 + $0x238] sm:$0xf]
      %v4162 = vld [vmem:[%s3 + $0x23c] sm:$0xf]
      %v4307 = vunpack.c.l.b16 %v4019
      %v4308 = vunpack.c.l.b16 %v4020
      %v4309 = vunpack.c.l.b16 %v4021
      %v4310 = vunpack.c.l.b16 %v4022
      %v4311 = vunpack.c.l.b16 %v4023
      %v4312 = vunpack.c.l.b16 %v4024
      %v4313 = vunpack.c.l.b16 %v4025
      %v4314 = vunpack.c.l.b16 %v4026
      %v4315 = vunpack.c.l.b16 %v4027
      %v4316 = vunpack.c.l.b16 %v4028
      %v4317 = vunpack.c.l.b16 %v4029
      %v4318 = vunpack.c.l.b16 %v4030
      %v4319 = vunpack.c.l.b16 %v4031
      %v4320 = vunpack.c.l.b16 %v4032
      %v4321 = vunpack.c.l.b16 %v4033
      %v4322 = vunpack.c.l.b16 %v4034
      %v4323 = vunpack.c.l.b16 %v4035
      %v4324 = vunpack.c.l.b16 %v4036
      %v4325 = vunpack.c.l.b16 %v4037
      %v4326 = vunpack.c.l.b16 %v4038
      %v4327 = vunpack.c.l.b16 %v4039
      %v4328 = vunpack.c.l.b16 %v4040
      %v4329 = vunpack.c.l.b16 %v4041
      %v4330 = vunpack.c.l.b16 %v4042
      %v4331 = vunpack.c.l.b16 %v4043
      %v4332 = vunpack.c.l.b16 %v4044
      %v4333 = vunpack.c.l.b16 %v4045
      %v4334 = vunpack.c.l.b16 %v4046
      %v4335 = vunpack.c.l.b16 %v4047
      %v4336 = vunpack.c.l.b16 %v4048
      %v4337 = vunpack.c.l.b16 %v4049
      %v4338 = vunpack.c.l.b16 %v4050
      %v4339 = vunpack.c.l.b16 %v4051
      %v4340 = vunpack.c.l.b16 %v4052
      %v4341 = vunpack.c.l.b16 %v4053
      %v4342 = vunpack.c.l.b16 %v4054
      %v4343 = vunpack.c.l.b16 %v4055
      %v4344 = vunpack.c.l.b16 %v4056
      %v4345 = vunpack.c.l.b16 %v4057
      %v4346 = vunpack.c.l.b16 %v4058
      %v4347 = vunpack.c.l.b16 %v4059
      %v4348 = vunpack.c.l.b16 %v4060
      %v4349 = vunpack.c.l.b16 %v4061
      %v4350 = vunpack.c.l.b16 %v4062
      %v4351 = vunpack.c.l.b16 %v4063
      %v4352 = vunpack.c.l.b16 %v4064
      %v4353 = vunpack.c.l.b16 %v4065
      %v4354 = vunpack.c.l.b16 %v4066
      %v4355 = vunpack.c.l.b16 %v4067
      %v4356 = vunpack.c.l.b16 %v4068
      %v4357 = vunpack.c.l.b16 %v4069
      %v4358 = vunpack.c.l.b16 %v4070
      %v4359 = vunpack.c.l.b16 %v4071
      %v4360 = vunpack.c.l.b16 %v4072
      %v4361 = vunpack.c.l.b16 %v4073
      %v4362 = vunpack.c.l.b16 %v4074
      %v4363 = vunpack.c.l.b16 %v4075
      %v4364 = vunpack.c.l.b16 %v4076
      %v4365 = vunpack.c.l.b16 %v4077
      %v4366 = vunpack.c.l.b16 %v4078
      %v4367 = vunpack.c.l.b16 %v4079
      %v4368 = vunpack.c.l.b16 %v4080
      %v4369 = vunpack.c.l.b16 %v4081
      %v4370 = vunpack.c.l.b16 %v4082
      %v4371 = vunpack.c.l.b16 %v4083
      %v4372 = vunpack.c.l.b16 %v4084
      %v4373 = vunpack.c.l.b16 %v4085
      %v4374 = vunpack.c.l.b16 %v4086
      %v4375 = vunpack.c.l.b16 %v4087
      %v4376 = vunpack.c.l.b16 %v4088
      %v4377 = vunpack.c.l.b16 %v4089
      %v4378 = vunpack.c.l.b16 %v4090
      %v4379 = vunpack.c.l.b16 %v4091
      %v4380 = vunpack.c.l.b16 %v4092
      %v4381 = vunpack.c.l.b16 %v4093
      %v4382 = vunpack.c.l.b16 %v4094
      %v4383 = vunpack.c.l.b16 %v4095
      %v4384 = vunpack.c.l.b16 %v4096
      %v4385 = vunpack.c.l.b16 %v4097
      %v4386 = vunpack.c.l.b16 %v4098
      %v4387 = vunpack.c.l.b16 %v4099
      %v4388 = vunpack.c.l.b16 %v4100
      %v4389 = vunpack.c.l.b16 %v4101
      %v4390 = vunpack.c.l.b16 %v4102
      %v4391 = vunpack.c.l.b16 %v4103
      %v4392 = vunpack.c.l.b16 %v4104
      %v4393 = vunpack.c.l.b16 %v4105
      %v4394 = vunpack.c.l.b16 %v4106
      %v4395 = vunpack.c.l.b16 %v4107
      %v4396 = vunpack.c.l.b16 %v4108
      %v4397 = vunpack.c.l.b16 %v4109
      %v4398 = vunpack.c.l.b16 %v4110
      %v4399 = vunpack.c.l.b16 %v4111
      %v4400 = vunpack.c.l.b16 %v4112
      %v4401 = vunpack.c.l.b16 %v4113
      %v4402 = vunpack.c.l.b16 %v4114
      %v4403 = vunpack.c.l.b16 %v4115
      %v4404 = vunpack.c.l.b16 %v4116
      %v4405 = vunpack.c.l.b16 %v4117
      %v4406 = vunpack.c.l.b16 %v4118
      %v4407 = vunpack.c.l.b16 %v4119
      %v4408 = vunpack.c.l.b16 %v4120
      %v4409 = vunpack.c.l.b16 %v4121
      %v4410 = vunpack.c.l.b16 %v4122
      %v4411 = vunpack.c.l.b16 %v4123
      %v4412 = vunpack.c.l.b16 %v4124
      %v4413 = vunpack.c.l.b16 %v4125
      %v4414 = vunpack.c.l.b16 %v4126
      %v4415 = vunpack.c.l.b16 %v4127
      %v4416 = vunpack.c.l.b16 %v4128
      %v4417 = vunpack.c.l.b16 %v4129
      %v4418 = vunpack.c.l.b16 %v4130
      %v4419 = vunpack.c.l.b16 %v4131
      %v4420 = vunpack.c.l.b16 %v4132
      %v4421 = vunpack.c.l.b16 %v4133
      %v4422 = vunpack.c.l.b16 %v4134
      %v4423 = vunpack.c.l.b16 %v4135
      %v4424 = vunpack.c.l.b16 %v4136
      %v4425 = vunpack.c.l.b16 %v4137
      %v4426 = vunpack.c.l.b16 %v4138
      %v4427 = vunpack.c.l.b16 %v4139
      %v4428 = vunpack.c.l.b16 %v4140
      %v4429 = vunpack.c.l.b16 %v4141
      %v4430 = vunpack.c.l.b16 %v4142
      %v4431 = vunpack.c.l.b16 %v4143
      %v4432 = vunpack.c.l.b16 %v4144
      %v4433 = vunpack.c.l.b16 %v4145
      %v4434 = vunpack.c.l.b16 %v4146
      %v4435 = vunpack.c.l.b16 %v4147
      %v4436 = vunpack.c.l.b16 %v4148
      %v4437 = vunpack.c.l.b16 %v4149
      %v4438 = vunpack.c.l.b16 %v4150
      %v4439 = vunpack.c.l.b16 %v4151
      %v4440 = vunpack.c.l.b16 %v4152
      %v4441 = vunpack.c.l.b16 %v4153
      %v4442 = vunpack.c.l.b16 %v4154
      %v4443 = vunpack.c.l.b16 %v4155
      %v4444 = vunpack.c.l.b16 %v4156
      %v4445 = vunpack.c.l.b16 %v4157
      %v4446 = vunpack.c.l.b16 %v4158
      %v4447 = vunpack.c.l.b16 %v4159
      %v4448 = vunpack.c.l.b16 %v4160
      %v4449 = vunpack.c.l.b16 %v4161
      %v4450 = vunpack.c.l.b16 %v4162
      %v4451 = vpack.c.b16 %v4308, %v4307
      %v4452 = vpack.c.b16 %v4310, %v4309
      %v4453 = vpack.c.b16 %v4312, %v4311
      %v4454 = vpack.c.b16 %v4314, %v4313
      %v4455 = vpack.c.b16 %v4316, %v4315
      %v4456 = vpack.c.b16 %v4318, %v4317
      %v4457 = vpack.c.b16 %v4320, %v4319
      %v4458 = vpack.c.b16 %v4322, %v4321
      %v4459 = vpack.c.b16 %v4324, %v4323
      %v4460 = vpack.c.b16 %v4326, %v4325
      %v4461 = vpack.c.b16 %v4328, %v4327
      %v4462 = vpack.c.b16 %v4330, %v4329
      %v4463 = vpack.c.b16 %v4332, %v4331
      %v4464 = vpack.c.b16 %v4334, %v4333
      %v4465 = vpack.c.b16 %v4336, %v4335
      %v4466 = vpack.c.b16 %v4338, %v4337
      %v4467 = vpack.c.b16 %v4340, %v4339
      %v4468 = vpack.c.b16 %v4342, %v4341
      %v4469 = vpack.c.b16 %v4344, %v4343
      %v4470 = vpack.c.b16 %v4346, %v4345
      %v4471 = vpack.c.b16 %v4348, %v4347
      %v4472 = vpack.c.b16 %v4350, %v4349
      %v4473 = vpack.c.b16 %v4352, %v4351
      %v4474 = vpack.c.b16 %v4354, %v4353
      %v4475 = vpack.c.b16 %v4356, %v4355
      %v4476 = vpack.c.b16 %v4358, %v4357
      %v4477 = vpack.c.b16 %v4360, %v4359
      %v4478 = vpack.c.b16 %v4362, %v4361
      %v4479 = vpack.c.b16 %v4364, %v4363
      %v4480 = vpack.c.b16 %v4366, %v4365
      %v4481 = vpack.c.b16 %v4368, %v4367
      %v4482 = vpack.c.b16 %v4370, %v4369
      %v4483 = vpack.c.b16 %v4372, %v4371
      %v4484 = vpack.c.b16 %v4374, %v4373
      %v4485 = vpack.c.b16 %v4376, %v4375
      %v4486 = vpack.c.b16 %v4378, %v4377
      %v4487 = vpack.c.b16 %v4380, %v4379
      %v4488 = vpack.c.b16 %v4382, %v4381
      %v4489 = vpack.c.b16 %v4384, %v4383
      %v4490 = vpack.c.b16 %v4386, %v4385
      %v4491 = vpack.c.b16 %v4388, %v4387
      %v4492 = vpack.c.b16 %v4390, %v4389
      %v4493 = vpack.c.b16 %v4392, %v4391
      %v4494 = vpack.c.b16 %v4394, %v4393
      %v4495 = vpack.c.b16 %v4396, %v4395
      %v4496 = vpack.c.b16 %v4398, %v4397
      %v4497 = vpack.c.b16 %v4400, %v4399
      %v4498 = vpack.c.b16 %v4402, %v4401
      %v4499 = vpack.c.b16 %v4404, %v4403
      %v4500 = vpack.c.b16 %v4406, %v4405
      %v4501 = vpack.c.b16 %v4408, %v4407
      %v4502 = vpack.c.b16 %v4410, %v4409
      %v4503 = vpack.c.b16 %v4412, %v4411
      %v4504 = vpack.c.b16 %v4414, %v4413
      %v4505 = vpack.c.b16 %v4416, %v4415
      %v4506 = vpack.c.b16 %v4418, %v4417
      %v4507 = vpack.c.b16 %v4420, %v4419
      %v4508 = vpack.c.b16 %v4422, %v4421
      %v4509 = vpack.c.b16 %v4424, %v4423
      %v4510 = vpack.c.b16 %v4426, %v4425
      %v4511 = vpack.c.b16 %v4428, %v4427
      %v4512 = vpack.c.b16 %v4430, %v4429
      %v4513 = vpack.c.b16 %v4432, %v4431
      %v4514 = vpack.c.b16 %v4434, %v4433
      %v4515 = vpack.c.b16 %v4436, %v4435
      %v4516 = vpack.c.b16 %v4438, %v4437
      %v4517 = vpack.c.b16 %v4440, %v4439
      %v4518 = vpack.c.b16 %v4442, %v4441
      %v4519 = vpack.c.b16 %v4444, %v4443
      %v4520 = vpack.c.b16 %v4446, %v4445
      %v4521 = vpack.c.b16 %v4448, %v4447
      %v4522 = vpack.c.b16 %v4450, %v4449
      %4595 = vmatprep.subr.bf16.mxu0 0
      %4596 = vmatpush1.bf16.msra.mxu0 %v4451
      %4597 = vmatprep.subr.bf16.mxu0 0
      %4598 = vmatpush1.bf16.msra.mxu0 %v4452
      %4599 = vmatprep.subr.bf16.mxu0 0
      %4600 = vmatpush1.bf16.msra.mxu0 %v4453
      %4601 = vmatprep.subr.bf16.mxu0 0
      %4602 = vmatpush1.bf16.msra.mxu0 %v4454
      %4603 = vmatprep.subr.bf16.mxu0 0
      %4604 = vmatpush1.bf16.msra.mxu0 %v4455
      %4605 = vmatprep.subr.bf16.mxu0 0
      %4606 = vmatpush1.bf16.msra.mxu0 %v4456
      %4607 = vmatprep.subr.bf16.mxu0 0
      %4608 = vmatpush1.bf16.msra.mxu0 %v4457
      %4609 = vmatprep.subr.bf16.mxu0 0
      %4610 = vmatpush1.bf16.msra.mxu0 %v4458
      %4611 = vmatprep.subr.bf16.mxu0 0
      %4612 = vmatpush1.bf16.msra.mxu0 %v4459
      %4613 = vmatprep.subr.bf16.mxu0 0
      %4614 = vmatpush1.bf16.msra.mxu0 %v4460
      %4615 = vmatprep.subr.bf16.mxu0 0
      %4616 = vmatpush1.bf16.msra.mxu0 %v4461
      %4617 = vmatprep.subr.bf16.mxu0 0
      %4618 = vmatpush1.bf16.msra.mxu0 %v4462
      %4619 = vmatprep.subr.bf16.mxu0 0
      %4620 = vmatpush1.bf16.msra.mxu0 %v4463
      %4621 = vmatprep.subr.bf16.mxu0 0
      %4622 = vmatpush1.bf16.msra.mxu0 %v4464
      %4623 = vmatprep.subr.bf16.mxu0 0
      %4624 = vmatpush1.bf16.msra.mxu0 %v4465
      %4625 = vmatprep.subr.bf16.mxu0 0
      %4626 = vmatpush1.bf16.msra.mxu0 %v4466
      %4627 = vmatprep.mubr.bf16.mxu0 %v3876
      %4628 = vmatmul.mubr.bf16.gmra.mrb[0].mxu0 %v3875
      %v4629 = vpop.f32.mrb[0].mxu0
      %v4630 = vadd.f32 0.0, %v4629
      %v4631 = vpop.f32.mrb[0].mxu0
      %v4632 = vpop.f32.mrb[0].mxu0
      %v4633 = vadd.f32 0.0, %v4632
      %v4634 = vpop.f32.mrb[0].mxu0
      %4635 = vmatprep.mubr.bf16.mxu0 %v3885
      %4636 = vmatmul.mubr.bf16.gmra.mrb[0].mxu0 %v3884
      %v4637 = vpop.f32.mrb[0].mxu0
      %v4638 = vadd.f32 0.0, %v4637
      %v4639 = vpop.f32.mrb[0].mxu0
      %v4640 = vpop.f32.mrb[0].mxu0
      %v4641 = vadd.f32 0.0, %v4640
      %v4642 = vpop.f32.mrb[0].mxu0
      %4643 = vmatprep.mubr.bf16.mxu0 %v3894
      %4644 = vmatmul.mubr.bf16.gmra.mrb[0].mxu0 %v3893
      %v4645 = vpop.f32.mrb[0].mxu0
      %v4646 = vadd.f32 0.0, %v4645
      %v4647 = vpop.f32.mrb[0].mxu0
      %v4648 = vpop.f32.mrb[0].mxu0
      %v4649 = vadd.f32 0.0, %v4648
      %v4650 = vpop.f32.mrb[0].mxu0
      %4651 = vmatprep.mubr.bf16.mxu0 %v3903
      %4652 = vmatmul.mubr.bf16.gmra.mrb[0].mxu0 %v3902
      %v4653 = vpop.f32.mrb[0].mxu0
      %v4654 = vadd.f32 0.0, %v4653
      %v4655 = vpop.f32.mrb[0].mxu0
      %v4656 = vpop.f32.mrb[0].mxu0
      %v4657 = vadd.f32 0.0, %v4656
      %v4658 = vpop.f32.mrb[0].mxu0
      %4659 = vmatprep.mubr.bf16.mxu0 %v3912
      %4660 = vmatmul.mubr.bf16.gmra.mrb[0].mxu0 %v3911
      %v4661 = vpop.f32.mrb[0].mxu0
      %v4662 = vadd.f32 0.0, %v4661
      %v4663 = vpop.f32.mrb[0].mxu0
      %v4664 = vpop.f32.mrb[0].mxu0
      %v4665 = vadd.f32 0.0, %v4664
      %v4666 = vpop.f32.mrb[0].mxu0
      %4667 = vmatprep.mubr.bf16.mxu0 %v3921
      %4668 = vmatmul.mubr.bf16.gmra.mrb[0].mxu0 %v3920
      %v4669 = vpop.f32.mrb[0].mxu0
      %v4670 = vadd.f32 0.0, %v4669
      %v4671 = vpop.f32.mrb[0].mxu0
      %v4672 = vpop.f32.mrb[0].mxu0
      %v4673 = vadd.f32 0.0, %v4672
      %v4674 = vpop.f32.mrb[0].mxu0
      %4675 = vmatprep.mubr.bf16.mxu0 %v3930
      %4676 = vmatmul.mubr.bf16.gmra.mrb[0].mxu0 %v3929
      %v4677 = vpop.f32.mrb[0].mxu0
      %v4678 = vadd.f32 0.0, %v4677
      %v4679 = vpop.f32.mrb[0].mxu0
      %v4680 = vpop.f32.mrb[0].mxu0
      %v4681 = vadd.f32 0.0, %v4680
      %v4682 = vpop.f32.mrb[0].mxu0
      %4683 = vmatprep.mubr.bf16.mxu0 %v3939
      %4684 = vmatmul.mubr.bf16.gmra.mrb[0].mxu0 %v3938
      %v4685 = vpop.f32.mrb[0].mxu0
      %v4686 = vadd.f32 0.0, %v4685
      %v4687 = vpop.f32.mrb[0].mxu0
      %v4688 = vpop.f32.mrb[0].mxu0
      %v4689 = vadd.f32 0.0, %v4688
      %v4690 = vpop.f32.mrb[0].mxu0
      %4691 = vmatprep.mubr.bf16.mxu0 %v3948
      %4692 = vmatmul.mubr.bf16.gmra.mrb[0].mxu0 %v3947
      %v4693 = vpop.f32.mrb[0].mxu0
      %v4694 = vadd.f32 0.0, %v4693
      %v4695 = vpop.f32.mrb[0].mxu0
      %v4696 = vpop.f32.mrb[0].mxu0
      %v4697 = vadd.f32 0.0, %v4696
      %v4698 = vpop.f32.mrb[0].mxu0
      %4699 = vmatprep.mubr.bf16.mxu0 %v3957
      %4700 = vmatmul.mubr.bf16.gmra.mrb[0].mxu0 %v3956
      %v4701 = vpop.f32.mrb[0].mxu0
      %v4702 = vadd.f32 0.0, %v4701
      %v4703 = vpop.f32.mrb[0].mxu0
      %v4704 = vpop.f32.mrb[0].mxu0
      %v4705 = vadd.f32 0.0, %v4704
      %v4706 = vpop.f32.mrb[0].mxu0
      %4707 = vmatprep.mubr.bf16.mxu0 %v3966
      %4708 = vmatmul.mubr.bf16.gmra.mrb[0].mxu0 %v3965
      %v4709 = vpop.f32.mrb[0].mxu0
      %v4710 = vadd.f32 0.0, %v4709
      %v4711 = vpop.f32.mrb[0].mxu0
      %v4712 = vpop.f32.mrb[0].mxu0
      %v4713 = vadd.f32 0.0, %v4712
      %v4714 = vpop.f32.mrb[0].mxu0
      %4715 = vmatprep.mubr.bf16.mxu0 %v3975
      %4716 = vmatmul.mubr.bf16.gmra.mrb[0].mxu0 %v3974
      %v4717 = vpop.f32.mrb[0].mxu0
      %v4718 = vadd.f32 0.0, %v4717
      %v4719 = vpop.f32.mrb[0].mxu0
      %v4720 = vpop.f32.mrb[0].mxu0
      %v4721 = vadd.f32 0.0, %v4720
      %v4722 = vpop.f32.mrb[0].mxu0
      %4723 = vmatprep.mubr.bf16.mxu0 %v3984
      %4724 = vmatmul.mubr.bf16.gmra.mrb[0].mxu0 %v3983
      %v4725 = vpop.f32.mrb[0].mxu0
      %v4726 = vadd.f32 0.0, %v4725
      %v4727 = vpop.f32.mrb[0].mxu0
      %v4728 = vpop.f32.mrb[0].mxu0
      %v4729 = vadd.f32 0.0, %v4728
      %v4730 = vpop.f32.mrb[0].mxu0
      %4731 = vmatprep.mubr.bf16.mxu0 %v3993
      %4732 = vmatmul.mubr.bf16.gmra.mrb[0].mxu0 %v3992
      %v4733 = vpop.f32.mrb[0].mxu0
      %v4734 = vadd.f32 0.0, %v4733
      %v4735 = vpop.f32.mrb[0].mxu0
      %v4736 = vpop.f32.mrb[0].mxu0
      %v4737 = vadd.f32 0.0, %v4736
      %v4738 = vpop.f32.mrb[0].mxu0
      %4739 = vmatprep.mubr.bf16.mxu0 %v4002
      %4740 = vmatmul.mubr.bf16.gmra.mrb[0].mxu0 %v4001
      %v4741 = vpop.f32.mrb[0].mxu0
      %v4742 = vadd.f32 0.0, %v4741
      %v4743 = vpop.f32.mrb[0].mxu0
      %v4744 = vpop.f32.mrb[0].mxu0
      %v4745 = vadd.f32 0.0, %v4744
      %v4746 = vpop.f32.mrb[0].mxu0
      %4747 = vmatprep.mubr.bf16.mxu0 %v4011
      %4748 = vmatmul.mubr.bf16.gmra.mrb[0].mxu0 %v4010
      %v4749 = vpop.f32.mrb[0].mxu0
      %v4750 = vadd.f32 0.0, %v4749
      %v4751 = vpop.f32.mrb[0].mxu0
      %v4752 = vpop.f32.mrb[0].mxu0
      %v4753 = vadd.f32 0.0, %v4752
      %v4754 = vpop.f32.mrb[0].mxu0
      %4755 = vdwg.mxu0
      %4756 = vmatprep.subr.bf16.mxu0 0
      %4757 = vmatpush1.bf16.msra.mxu0 %v4467
      %4758 = vmatprep.subr.bf16.mxu0 0
      %4759 = vmatpush1.bf16.msra.mxu0 %v4468
      %4760 = vmatprep.subr.bf16.mxu0 0
      %4761 = vmatpush1.bf16.msra.mxu0 %v4469
      %4762 = vmatprep.subr.bf16.mxu0 0
      %4763 = vmatpush1.bf16.msra.mxu0 %v4470
      %4764 = vmatprep.subr.bf16.mxu0 0
      %4765 = vmatpush1.bf16.msra.mxu0 %v4471
      %4766 = vmatprep.subr.bf16.mxu0 0
      %4767 = vmatpush1.bf16.msra.mxu0 %v4472
      %4768 = vmatprep.subr.bf16.mxu0 0
      %4769 = vmatpush1.bf16.msra.mxu0 %v4473
      %4770 = vmatprep.subr.bf16.mxu0 0
      %4771 = vmatpush1.bf16.msra.mxu0 %v4474
      %4772 = vmatprep.subr.bf16.mxu0 0
      %4773 = vmatpush1.bf16.msra.mxu0 %v4475
      %4774 = vmatprep.subr.bf16.mxu0 0
      %4775 = vmatpush1.bf16.msra.mxu0 %v4476
      %4776 = vmatprep.subr.bf16.mxu0 0
      %4777 = vmatpush1.bf16.msra.mxu0 %v4477
      %4778 = vmatprep.subr.bf16.mxu0 0
      %4779 = vmatpush1.bf16.msra.mxu0 %v4478
      %4780 = vmatprep.subr.bf16.mxu0 0
      %4781 = vmatpush1.bf16.msra.mxu0 %v4479
      %4782 = vmatprep.subr.bf16.mxu0 0
      %4783 = vmatpush1.bf16.msra.mxu0 %v4480
      %4784 = vmatprep.subr.bf16.mxu0 0
      %4785 = vmatpush1.bf16.msra.mxu0 %v4481
      %4786 = vmatprep.subr.bf16.mxu0 0
      %4787 = vmatpush1.bf16.msra.mxu0 %v4482
      %4788 = vmatprep.mubr.bf16.mxu0 %v3878
      %4789 = vmatmul.mubr.bf16.gmra.mrb[0].mxu0 %v3877
      %v4790 = vpop.f32.mrb[0].mxu0
      %v4791 = vadd.f32 %v4630, %v4790
      %v4792 = vpop.f32.mrb[0].mxu0
      %v4793 = vpop.f32.mrb[0].mxu0
      %v4794 = vadd.f32 %v4633, %v4793
      %v4795 = vpop.f32.mrb[0].mxu0
      %4796 = vmatprep.mubr.bf16.mxu0 %v3887
      %4797 = vmatmul.mubr.bf16.gmra.mrb[0].mxu0 %v3886
      %v4798 = vpop.f32.mrb[0].mxu0
      %v4799 = vadd.f32 %v4638, %v4798
      %v4800 = vpop.f32.mrb[0].mxu0
      %v4801 = vpop.f32.mrb[0].mxu0
      %v4802 = vadd.f32 %v4641, %v4801
      %v4803 = vpop.f32.mrb[0].mxu0
      %4804 = vmatprep.mubr.bf16.mxu0 %v3896
      %4805 = vmatmul.mubr.bf16.gmra.mrb[0].mxu0 %v3895
      %v4806 = vpop.f32.mrb[0].mxu0
      %v4807 = vadd.f32 %v4646, %v4806
      %v4808 = vpop.f32.mrb[0].mxu0
      %v4809 = vpop.f32.mrb[0].mxu0
      %v4810 = vadd.f32 %v4649, %v4809
      %v4811 = vpop.f32.mrb[0].mxu0
      %4812 = vmatprep.mubr.bf16.mxu0 %v3905
      %4813 = vmatmul.mubr.bf16.gmra.mrb[0].mxu0 %v3904
      %v4814 = vpop.f32.mrb[0].mxu0
      %v4815 = vadd.f32 %v4654, %v4814
      %v4816 = vpop.f32.mrb[0].mxu0
      %v4817 = vpop.f32.mrb[0].mxu0
      %v4818 = vadd.f32 %v4657, %v4817
      %v4819 = vpop.f32.mrb[0].mxu0
      %4820 = vmatprep.mubr.bf16.mxu0 %v3914
      %4821 = vmatmul.mubr.bf16.gmra.mrb[0].mxu0 %v3913
      %v4822 = vpop.f32.mrb[0].mxu0
      %v4823 = vadd.f32 %v4662, %v4822
      %v4824 = vpop.f32.mrb[0].mxu0
      %v4825 = vpop.f32.mrb[0].mxu0
      %v4826 = vadd.f32 %v4665, %v4825
      %v4827 = vpop.f32.mrb[0].mxu0
      %4828 = vmatprep.mubr.bf16.mxu0 %v3923
      %4829 = vmatmul.mubr.bf16.gmra.mrb[0].mxu0 %v3922
      %v4830 = vpop.f32.mrb[0].mxu0
      %v4831 = vadd.f32 %v4670, %v4830
      %v4832 = vpop.f32.mrb[0].mxu0
      %v4833 = vpop.f32.mrb[0].mxu0
      %v4834 = vadd.f32 %v4673, %v4833
      %v4835 = vpop.f32.mrb[0].mxu0
      %4836 = vmatprep.mubr.bf16.mxu0 %v3932
      %4837 = vmatmul.mubr.bf16.gmra.mrb[0].mxu0 %v3931
      %v4838 = vpop.f32.mrb[0].mxu0
      %v4839 = vadd.f32 %v4678, %v4838
      %v4840 = vpop.f32.mrb[0].mxu0
      %v4841 = vpop.f32.mrb[0].mxu0
      %v4842 = vadd.f32 %v4681, %v4841
      %v4843 = vpop.f32.mrb[0].mxu0
      %4844 = vmatprep.mubr.bf16.mxu0 %v3941
      %4845 = vmatmul.mubr.bf16.gmra.mrb[0].mxu0 %v3940
      %v4846 = vpop.f32.mrb[0].mxu0
      %v4847 = vadd.f32 %v4686, %v4846
      %v4848 = vpop.f32.mrb[0].mxu0
      %v4849 = vpop.f32.mrb[0].mxu0
      %v4850 = vadd.f32 %v4689, %v4849
      %v4851 = vpop.f32.mrb[0].mxu0
      %4852 = vmatprep.mubr.bf16.mxu0 %v3950
      %4853 = vmatmul.mubr.bf16.gmra.mrb[0].mxu0 %v3949
      %v4854 = vpop.f32.mrb[0].mxu0
      %v4855 = vadd.f32 %v4694, %v4854
      %v4856 = vpop.f32.mrb[0].mxu0
      %v4857 = vpop.f32.mrb[0].mxu0
      %v4858 = vadd.f32 %v4697, %v4857
      %v4859 = vpop.f32.mrb[0].mxu0
      %4860 = vmatprep.mubr.bf16.mxu0 %v3959
      %4861 = vmatmul.mubr.bf16.gmra.mrb[0].mxu0 %v3958
      %v4862 = vpop.f32.mrb[0].mxu0
      %v4863 = vadd.f32 %v4702, %v4862
      %v4864 = vpop.f32.mrb[0].mxu0
      %v4865 = vpop.f32.mrb[0].mxu0
      %v4866 = vadd.f32 %v4705, %v4865
      %v4867 = vpop.f32.mrb[0].mxu0
      %4868 = vmatprep.mubr.bf16.mxu0 %v3968
      %4869 = vmatmul.mubr.bf16.gmra.mrb[0].mxu0 %v3967
      %v4870 = vpop.f32.mrb[0].mxu0
      %v4871 = vadd.f32 %v4710, %v4870
      %v4872 = vpop.f32.mrb[0].mxu0
      %v4873 = vpop.f32.mrb[0].mxu0
      %v4874 = vadd.f32 %v4713, %v4873
      %v4875 = vpop.f32.mrb[0].mxu0
      %4876 = vmatprep.mubr.bf16.mxu0 %v3977
      %4877 = vmatmul.mubr.bf16.gmra.mrb[0].mxu0 %v3976
      %v4878 = vpop.f32.mrb[0].mxu0
      %v4879 = vadd.f32 %v4718, %v4878
      %v4880 = vpop.f32.mrb[0].mxu0
      %v4881 = vpop.f32.mrb[0].mxu0
      %v4882 = vadd.f32 %v4721, %v4881
      %v4883 = vpop.f32.mrb[0].mxu0
      %4884 = vmatprep.mubr.bf16.mxu0 %v3986
      %4885 = vmatmul.mubr.bf16.gmra.mrb[0].mxu0 %v3985
      %v4886 = vpop.f32.mrb[0].mxu0
      %v4887 = vadd.f32 %v4726, %v4886
      %v4888 = vpop.f32.mrb[0].mxu0
      %v4889 = vpop.f32.mrb[0].mxu0
      %v4890 = vadd.f32 %v4729, %v4889
      %v4891 = vpop.f32.mrb[0].mxu0
      %4892 = vmatprep.mubr.bf16.mxu0 %v3995
      %4893 = vmatmul.mubr.bf16.gmra.mrb[0].mxu0 %v3994
      %v4894 = vpop.f32.mrb[0].mxu0
      %v4895 = vadd.f32 %v4734, %v4894
      %v4896 = vpop.f32.mrb[0].mxu0
      %v4897 = vpop.f32.mrb[0].mxu0
      %v4898 = vadd.f32 %v4737, %v4897
      %v4899 = vpop.f32.mrb[0].mxu0
      %4900 = vmatprep.mubr.bf16.mxu0 %v4004
      %4901 = vmatmul.mubr.bf16.gmra.mrb[0].mxu0 %v4003
      %v4902 = vpop.f32.mrb[0].mxu0
      %v4903 = vadd.f32 %v4742, %v4902
      %v4904 = vpop.f32.mrb[0].mxu0
      %v4905 = vpop.f32.mrb[0].mxu0
      %v4906 = vadd.f32 %v4745, %v4905
      %v4907 = vpop.f32.mrb[0].mxu0
      %4908 = vmatprep.mubr.bf16.mxu0 %v4013
      %4909 = vmatmul.mubr.bf16.gmra.mrb[0].mxu0 %v4012
      %v4910 = vpop.f32.mrb[0].mxu0
      %v4911 = vadd.f32 %v4750, %v4910
      %v4912 = vpop.f32.mrb[0].mxu0
      %v4913 = vpop.f32.mrb[0].mxu0
      %v4914 = vadd.f32 %v4753, %v4913
      %v4915 = vpop.f32.mrb[0].mxu0
      %4916 = vdwg.mxu0
      %4917 = vmatprep.subr.bf16.mxu0 0
      %4918 = vmatpush1.bf16.msra.mxu0 %v4483
      %4919 = vmatprep.subr.bf16.mxu0 0
      %4920 = vmatpush1.bf16.msra.mxu0 %v4484
      %4921 = vmatprep.subr.bf16.mxu0 0
      %4922 = vmatpush1.bf16.msra.mxu0 %v4485
      %4923 = vmatprep.subr.bf16.mxu0 0
      %4924 = vmatpush1.bf16.msra.mxu0 %v4486
      %4925 = vmatprep.subr.bf16.mxu0 0
      %4926 = vmatpush1.bf16.msra.mxu0 %v4487
      %4927 = vmatprep.subr.bf16.mxu0 0
      %4928 = vmatpush1.bf16.msra.mxu0 %v4488
      %4929 = vmatprep.subr.bf16.mxu0 0
      %4930 = vmatpush1.bf16.msra.mxu0 %v4489
      %4931 = vmatprep.subr.bf16.mxu0 0
      %4932 = vmatpush1.bf16.msra.mxu0 %v4490
      %4933 = vmatprep.subr.bf16.mxu0 0
      %4934 = vmatpush1.bf16.msra.mxu0 %v4491
      %4935 = vmatprep.subr.bf16.mxu0 0
      %4936 = vmatpush1.bf16.msra.mxu0 %v4492
      %4937 = vmatprep.subr.bf16.mxu0 0
      %4938 = vmatpush1.bf16.msra.mxu0 %v4493
      %4939 = vmatprep.subr.bf16.mxu0 0
      %4940 = vmatpush1.bf16.msra.mxu0 %v4494
      %4941 = vmatprep.subr.bf16.mxu0 0
      %4942 = vmatpush1.bf16.msra.mxu0 %v4495
      %4943 = vmatprep.subr.bf16.mxu0 0
      %4944 = vmatpush1.bf16.msra.mxu0 %v4496
      %4945 = vmatprep.subr.bf16.mxu0 0
      %4946 = vmatpush1.bf16.msra.mxu0 %v4497
      %4947 = vmatprep.subr.bf16.mxu0 0
      %4948 = vmatpush1.bf16.msra.mxu0 %v4498
      %4949 = vmatprep.mubr.bf16.mxu0 %v3880
      %4950 = vmatmul.mubr.bf16.gmra.mrb[0].mxu0 %v3879
      %v4951 = vpop.f32.mrb[0].mxu0
      %v4952 = vadd.f32 %v4791, %v4951
      %v4953 = vpop.f32.mrb[0].mxu0
      %v4954 = vpop.f32.mrb[0].mxu0
      %v4955 = vadd.f32 %v4794, %v4954
      %v4956 = vpop.f32.mrb[0].mxu0
      %4957 = vmatprep.mubr.bf16.mxu0 %v3889
      %4958 = vmatmul.mubr.bf16.gmra.mrb[0].mxu0 %v3888
      %v4959 = vpop.f32.mrb[0].mxu0
      %v4960 = vadd.f32 %v4799, %v4959
      %v4961 = vpop.f32.mrb[0].mxu0
      %v4962 = vpop.f32.mrb[0].mxu0
      %v4963 = vadd.f32 %v4802, %v4962
      %v4964 = vpop.f32.mrb[0].mxu0
      %4965 = vmatprep.mubr.bf16.mxu0 %v3898
      %4966 = vmatmul.mubr.bf16.gmra.mrb[0].mxu0 %v3897
      %v4967 = vpop.f32.mrb[0].mxu0
      %v4968 = vadd.f32 %v4807, %v4967
      %v4969 = vpop.f32.mrb[0].mxu0
      %v4970 = vpop.f32.mrb[0].mxu0
      %v4971 = vadd.f32 %v4810, %v4970
      %v4972 = vpop.f32.mrb[0].mxu0
      %4973 = vmatprep.mubr.bf16.mxu0 %v3907
      %4974 = vmatmul.mubr.bf16.gmra.mrb[0].mxu0 %v3906
      %v4975 = vpop.f32.mrb[0].mxu0
      %v4976 = vadd.f32 %v4815, %v4975
      %v4977 = vpop.f32.mrb[0].mxu0
      %v4978 = vpop.f32.mrb[0].mxu0
      %v4979 = vadd.f32 %v4818, %v4978
      %v4980 = vpop.f32.mrb[0].mxu0
      %4981 = vmatprep.mubr.bf16.mxu0 %v3916
      %4982 = vmatmul.mubr.bf16.gmra.mrb[0].mxu0 %v3915
      %v4983 = vpop.f32.mrb[0].mxu0
      %v4984 = vadd.f32 %v4823, %v4983
      %v4985 = vpop.f32.mrb[0].mxu0
      %v4986 = vpop.f32.mrb[0].mxu0
      %v4987 = vadd.f32 %v4826, %v4986
      %v4988 = vpop.f32.mrb[0].mxu0
      %4989 = vmatprep.mubr.bf16.mxu0 %v3925
      %4990 = vmatmul.mubr.bf16.gmra.mrb[0].mxu0 %v3924
      %v4991 = vpop.f32.mrb[0].mxu0
      %v4992 = vadd.f32 %v4831, %v4991
      %v4993 = vpop.f32.mrb[0].mxu0
      %v4994 = vpop.f32.mrb[0].mxu0
      %v4995 = vadd.f32 %v4834, %v4994
      %v4996 = vpop.f32.mrb[0].mxu0
      %4997 = vmatprep.mubr.bf16.mxu0 %v3934
      %4998 = vmatmul.mubr.bf16.gmra.mrb[0].mxu0 %v3933
      %v4999 = vpop.f32.mrb[0].mxu0
      %v5000 = vadd.f32 %v4839, %v4999
      %v5001 = vpop.f32.mrb[0].mxu0
      %v5002 = vpop.f32.mrb[0].mxu0
      %v5003 = vadd.f32 %v4842, %v5002
      %v5004 = vpop.f32.mrb[0].mxu0
      %5005 = vmatprep.mubr.bf16.mxu0 %v3943
      %5006 = vmatmul.mubr.bf16.gmra.mrb[0].mxu0 %v3942
      %v5007 = vpop.f32.mrb[0].mxu0
      %v5008 = vadd.f32 %v4847, %v5007
      %v5009 = vpop.f32.mrb[0].mxu0
      %v5010 = vpop.f32.mrb[0].mxu0
      %v5011 = vadd.f32 %v4850, %v5010
      %v5012 = vpop.f32.mrb[0].mxu0
      %5013 = vmatprep.mubr.bf16.mxu0 %v3952
      %5014 = vmatmul.mubr.bf16.gmra.mrb[0].mxu0 %v3951
      %v5015 = vpop.f32.mrb[0].mxu0
      %v5016 = vadd.f32 %v4855, %v5015
      %v5017 = vpop.f32.mrb[0].mxu0
      %v5018 = vpop.f32.mrb[0].mxu0
      %v5019 = vadd.f32 %v4858, %v5018
      %v5020 = vpop.f32.mrb[0].mxu0
      %5021 = vmatprep.mubr.bf16.mxu0 %v3961
      %5022 = vmatmul.mubr.bf16.gmra.mrb[0].mxu0 %v3960
      %v5023 = vpop.f32.mrb[0].mxu0
      %v5024 = vadd.f32 %v4863, %v5023
      %v5025 = vpop.f32.mrb[0].mxu0
      %v5026 = vpop.f32.mrb[0].mxu0
      %v5027 = vadd.f32 %v4866, %v5026
      %v5028 = vpop.f32.mrb[0].mxu0
      %5029 = vmatprep.mubr.bf16.mxu0 %v3970
      %5030 = vmatmul.mubr.bf16.gmra.mrb[0].mxu0 %v3969
      %v5031 = vpop.f32.mrb[0].mxu0
      %v5032 = vadd.f32 %v4871, %v5031
      %v5033 = vpop.f32.mrb[0].mxu0
      %v5034 = vpop.f32.mrb[0].mxu0
      %v5035 = vadd.f32 %v4874, %v5034
      %v5036 = vpop.f32.mrb[0].mxu0
      %5037 = vmatprep.mubr.bf16.mxu0 %v3979
      %5038 = vmatmul.mubr.bf16.gmra.mrb[0].mxu0 %v3978
      %v5039 = vpop.f32.mrb[0].mxu0
      %v5040 = vadd.f32 %v4879, %v5039
      %v5041 = vpop.f32.mrb[0].mxu0
      %v5042 = vpop.f32.mrb[0].mxu0
      %v5043 = vadd.f32 %v4882, %v5042
      %v5044 = vpop.f32.mrb[0].mxu0
      %5045 = vmatprep.mubr.bf16.mxu0 %v3988
      %5046 = vmatmul.mubr.bf16.gmra.mrb[0].mxu0 %v3987
      %v5047 = vpop.f32.mrb[0].mxu0
      %v5048 = vadd.f32 %v4887, %v5047
      %v5049 = vpop.f32.mrb[0].mxu0
      %v5050 = vpop.f32.mrb[0].mxu0
      %v5051 = vadd.f32 %v4890, %v5050
      %v5052 = vpop.f32.mrb[0].mxu0
      %5053 = vmatprep.mubr.bf16.mxu0 %v3997
      %5054 = vmatmul.mubr.bf16.gmra.mrb[0].mxu0 %v3996
      %v5055 = vpop.f32.mrb[0].mxu0
      %v5056 = vadd.f32 %v4895, %v5055
      %v5057 = vpop.f32.mrb[0].mxu0
      %v5058 = vpop.f32.mrb[0].mxu0
      %v5059 = vadd.f32 %v4898, %v5058
      %v5060 = vpop.f32.mrb[0].mxu0
      %5061 = vmatprep.mubr.bf16.mxu0 %v4006
      %5062 = vmatmul.mubr.bf16.gmra.mrb[0].mxu0 %v4005
      %v5063 = vpop.f32.mrb[0].mxu0
      %v5064 = vadd.f32 %v4903, %v5063
      %v5065 = vpop.f32.mrb[0].mxu0
      %v5066 = vpop.f32.mrb[0].mxu0
      %v5067 = vadd.f32 %v4906, %v5066
      %v5068 = vpop.f32.mrb[0].mxu0
      %5069 = vmatprep.mubr.bf16.mxu0 %v4015
      %5070 = vmatmul.mubr.bf16.gmra.mrb[0].mxu0 %v4014
      %v5071 = vpop.f32.mrb[0].mxu0
      %v5072 = vadd.f32 %v4911, %v5071
      %v5073 = vpop.f32.mrb[0].mxu0
      %v5074 = vpop.f32.mrb[0].mxu0
      %v5075 = vadd.f32 %v4914, %v5074
      %v5076 = vpop.f32.mrb[0].mxu0
      %5077 = vdwg.mxu0
      %5078 = vmatprep.subr.bf16.mxu0 0
      %5079 = vmatpush1.bf16.msra.mxu0 %v4499
      %5080 = vmatprep.subr.bf16.mxu0 0
      %5081 = vmatpush1.bf16.msra.mxu0 %v4500
      %5082 = vmatprep.subr.bf16.mxu0 0
      %5083 = vmatpush1.bf16.msra.mxu0 %v4501
      %5084 = vmatprep.subr.bf16.mxu0 0
      %5085 = vmatpush1.bf16.msra.mxu0 %v4502
      %5086 = vmatprep.subr.bf16.mxu0 0
      %5087 = vmatpush1.bf16.msra.mxu0 %v4503
      %5088 = vmatprep.subr.bf16.mxu0 0
      %5089 = vmatpush1.bf16.msra.mxu0 %v4504
      %5090 = vmatprep.subr.bf16.mxu0 0
      %5091 = vmatpush1.bf16.msra.mxu0 %v4505
      %5092 = vmatprep.subr.bf16.mxu0 0
      %5093 = vmatpush1.bf16.msra.mxu0 %v4506
      %5094 = vmatprep.subr.bf16.mxu0 0
      %5095 = vmatpush1.bf16.msra.mxu0 %v4507
      %5096 = vmatprep.subr.bf16.mxu0 0
      %5097 = vmatpush1.bf16.msra.mxu0 %v4508
      %5098 = vmatprep.subr.bf16.mxu0 0
      %5099 = vmatpush1.bf16.msra.mxu0 %v4509
      %5100 = vmatprep.subr.bf16.mxu0 0
      %5101 = vmatpush1.bf16.msra.mxu0 %v4510
      %5102 = vmatprep.subr.bf16.mxu0 0
      %5103 = vmatpush1.bf16.msra.mxu0 %v4511
      %5104 = vmatprep.subr.bf16.mxu0 0
      %5105 = vmatpush1.bf16.msra.mxu0 %v4512
      %5106 = vmatprep.subr.bf16.mxu0 0
      %5107 = vmatpush1.bf16.msra.mxu0 %v4513
      %5108 = vmatprep.subr.bf16.mxu0 0
      %5109 = vmatpush1.bf16.msra.mxu0 %v4514
      %5110 = vmatprep.mubr.bf16.mxu0 %v3882
      %5111 = vmatmul.mubr.bf16.gmra.mrb[0].mxu0 %v3881
      %v5112 = vpop.f32.mrb[0].mxu0
      %v5113 = vadd.f32 %v4952, %v5112
      %v5114 = vpop.f32.mrb[0].mxu0
      %v5115 = vpop.f32.mrb[0].mxu0
      %v5116 = vadd.f32 %v4955, %v5115
      %v5117 = vpop.f32.mrb[0].mxu0
      %5118 = vmatprep.mubr.bf16.mxu0 %v3891
      %5119 = vmatmul.mubr.bf16.gmra.mrb[0].mxu0 %v3890
      %v5120 = vpop.f32.mrb[0].mxu0
      %v5121 = vadd.f32 %v4960, %v5120
      %v5122 = vpop.f32.mrb[0].mxu0
      %v5123 = vpop.f32.mrb[0].mxu0
      %v5124 = vadd.f32 %v4963, %v5123
      %v5125 = vpop.f32.mrb[0].mxu0
      %5126 = vmatprep.mubr.bf16.mxu0 %v3900
      %5127 = vmatmul.mubr.bf16.gmra.mrb[0].mxu0 %v3899
      %v5128 = vpop.f32.mrb[0].mxu0
      %v5129 = vadd.f32 %v4968, %v5128
      %v5130 = vpop.f32.mrb[0].mxu0
      %v5131 = vpop.f32.mrb[0].mxu0
      %v5132 = vadd.f32 %v4971, %v5131
      %v5133 = vpop.f32.mrb[0].mxu0
      %5134 = vmatprep.mubr.bf16.mxu0 %v3909
      %5135 = vmatmul.mubr.bf16.gmra.mrb[0].mxu0 %v3908
      %v5136 = vpop.f32.mrb[0].mxu0
      %v5137 = vadd.f32 %v4976, %v5136
      %v5138 = vpop.f32.mrb[0].mxu0
      %v5139 = vpop.f32.mrb[0].mxu0
      %v5140 = vadd.f32 %v4979, %v5139
      %v5141 = vpop.f32.mrb[0].mxu0
      %5142 = vmatprep.mubr.bf16.mxu0 %v3918
      %5143 = vmatmul.mubr.bf16.gmra.mrb[0].mxu0 %v3917
      %v5144 = vpop.f32.mrb[0].mxu0
      %v5145 = vadd.f32 %v4984, %v5144
      %v5146 = vpop.f32.mrb[0].mxu0
      %v5147 = vpop.f32.mrb[0].mxu0
      %v5148 = vadd.f32 %v4987, %v5147
      %v5149 = vpop.f32.mrb[0].mxu0
      %5150 = vmatprep.mubr.bf16.mxu0 %v3927
      %5151 = vmatmul.mubr.bf16.gmra.mrb[0].mxu0 %v3926
      %v5152 = vpop.f32.mrb[0].mxu0
      %v5153 = vadd.f32 %v4992, %v5152
      %v5154 = vpop.f32.mrb[0].mxu0
      %v5155 = vpop.f32.mrb[0].mxu0
      %v5156 = vadd.f32 %v4995, %v5155
      %v5157 = vpop.f32.mrb[0].mxu0
      %5158 = vmatprep.mubr.bf16.mxu0 %v3936
      %5159 = vmatmul.mubr.bf16.gmra.mrb[0].mxu0 %v3935
      %v5160 = vpop.f32.mrb[0].mxu0
      %v5161 = vadd.f32 %v5000, %v5160
      %v5162 = vpop.f32.mrb[0].mxu0
      %v5163 = vpop.f32.mrb[0].mxu0
      %v5164 = vadd.f32 %v5003, %v5163
      %v5165 = vpop.f32.mrb[0].mxu0
      %5166 = vmatprep.mubr.bf16.mxu0 %v3945
      %5167 = vmatmul.mubr.bf16.gmra.mrb[0].mxu0 %v3944
      %v5168 = vpop.f32.mrb[0].mxu0
      %v5169 = vadd.f32 %v5008, %v5168
      %v5170 = vpop.f32.mrb[0].mxu0
      %v5171 = vpop.f32.mrb[0].mxu0
      %v5172 = vadd.f32 %v5011, %v5171
      %v5173 = vpop.f32.mrb[0].mxu0
      %5174 = vmatprep.mubr.bf16.mxu0 %v3954
      %5175 = vmatmul.mubr.bf16.gmra.mrb[0].mxu0 %v3953
      %v5176 = vpop.f32.mrb[0].mxu0
      %v5177 = vadd.f32 %v5016, %v5176
      %v5178 = vpop.f32.mrb[0].mxu0
      %v5179 = vpop.f32.mrb[0].mxu0
      %v5180 = vadd.f32 %v5019, %v5179
      %v5181 = vpop.f32.mrb[0].mxu0
      %5182 = vmatprep.mubr.bf16.mxu0 %v3963
      %5183 = vmatmul.mubr.bf16.gmra.mrb[0].mxu0 %v3962
      %v5184 = vpop.f32.mrb[0].mxu0
      %v5185 = vadd.f32 %v5024, %v5184
      %v5186 = vpop.f32.mrb[0].mxu0
      %v5187 = vpop.f32.mrb[0].mxu0
      %v5188 = vadd.f32 %v5027, %v5187
      %v5189 = vpop.f32.mrb[0].mxu0
      %5190 = vmatprep.mubr.bf16.mxu0 %v3972
      %5191 = vmatmul.mubr.bf16.gmra.mrb[0].mxu0 %v3971
      %v5192 = vpop.f32.mrb[0].mxu0
      %v5193 = vadd.f32 %v5032, %v5192
      %v5194 = vpop.f32.mrb[0].mxu0
      %v5195 = vpop.f32.mrb[0].mxu0
      %v5196 = vadd.f32 %v5035, %v5195
      %v5197 = vpop.f32.mrb[0].mxu0
      %5198 = vmatprep.mubr.bf16.mxu0 %v3981
      %5199 = vmatmul.mubr.bf16.gmra.mrb[0].mxu0 %v3980
      %v5200 = vpop.f32.mrb[0].mxu0
      %v5201 = vadd.f32 %v5040, %v5200
      %v5202 = vpop.f32.mrb[0].mxu0
      %v5203 = vpop.f32.mrb[0].mxu0
      %v5204 = vadd.f32 %v5043, %v5203
      %v5205 = vpop.f32.mrb[0].mxu0
      %5206 = vmatprep.mubr.bf16.mxu0 %v3990
      %5207 = vmatmul.mubr.bf16.gmra.mrb[0].mxu0 %v3989
      %v5208 = vpop.f32.mrb[0].mxu0
      %v5209 = vadd.f32 %v5048, %v5208
      %v5210 = vpop.f32.mrb[0].mxu0
      %v5211 = vpop.f32.mrb[0].mxu0
      %v5212 = vadd.f32 %v5051, %v5211
      %v5213 = vpop.f32.mrb[0].mxu0
      %5214 = vmatprep.mubr.bf16.mxu0 %v3999
      %5215 = vmatmul.mubr.bf16.gmra.mrb[0].mxu0 %v3998
      %v5216 = vpop.f32.mrb[0].mxu0
      %v5217 = vadd.f32 %v5056, %v5216
      %v5218 = vpop.f32.mrb[0].mxu0
      %v5219 = vpop.f32.mrb[0].mxu0
      %v5220 = vadd.f32 %v5059, %v5219
      %v5221 = vpop.f32.mrb[0].mxu0
      %5222 = vmatprep.mubr.bf16.mxu0 %v4008
      %5223 = vmatmul.mubr.bf16.gmra.mrb[0].mxu0 %v4007
      %v5224 = vpop.f32.mrb[0].mxu0
      %v5225 = vadd.f32 %v5064, %v5224
      %v5226 = vpop.f32.mrb[0].mxu0
      %v5227 = vpop.f32.mrb[0].mxu0
      %v5228 = vadd.f32 %v5067, %v5227
      %v5229 = vpop.f32.mrb[0].mxu0
      %5230 = vmatprep.mubr.bf16.mxu0 %v4017
      %5231 = vmatmul.mubr.bf16.gmra.mrb[0].mxu0 %v4016
      %v5232 = vpop.f32.mrb[0].mxu0
      %v5233 = vadd.f32 %v5072, %v5232
      %v5234 = vpop.f32.mrb[0].mxu0
      %v5235 = vpop.f32.mrb[0].mxu0
      %v5236 = vadd.f32 %v5075, %v5235
      %v5237 = vpop.f32.mrb[0].mxu0
      %5238 = vdwg.mxu0
      %5239 = vmatprep.subr.bf16.mxu0 0
      %5240 = vmatpush1.bf16.msra.mxu0 %v4515
      %5241 = vmatprep.subr.bf16.mxu0 0
      %5242 = vmatpush1.bf16.msra.mxu0 %v4516
      %5243 = vmatprep.subr.bf16.mxu0 0
      %5244 = vmatpush1.bf16.msra.mxu0 %v4517
      %5245 = vmatprep.subr.bf16.mxu0 0
      %5246 = vmatpush1.bf16.msra.mxu0 %v4518
      %5247 = vmatprep.subr.bf16.mxu0 0
      %5248 = vmatpush1.bf16.msra.mxu0 %v4519
      %5249 = vmatprep.subr.bf16.mxu0 0
      %5250 = vmatpush1.bf16.msra.mxu0 %v4520
      %5251 = vmatprep.subr.bf16.mxu0 0
      %5252 = vmatpush1.bf16.msra.mxu0 %v4521
      %5253 = vmatprep.subr.bf16.mxu0 0
      %5254 = vmatpush1.bf16.msra.mxu0 %v4522
      %5255 = vmatprep.subr.bf16.mxu0 0
      %5256 = vmatpush1.bf16.msra.mxu0 0
      %5257 = vmatprep.subr.bf16.mxu0 0
      %5258 = vmatpush1.bf16.msra.mxu0 0
      %5259 = vmatprep.subr.bf16.mxu0 0
      %5260 = vmatpush1.bf16.msra.mxu0 0
      %5261 = vmatprep.subr.bf16.mxu0 0
      %5262 = vmatpush1.bf16.msra.mxu0 0
      %5263 = vmatprep.subr.bf16.mxu0 0
      %5264 = vmatpush1.bf16.msra.mxu0 0
      %5265 = vmatprep.subr.bf16.mxu0 0
      %5266 = vmatpush1.bf16.msra.mxu0 0
      %5267 = vmatprep.subr.bf16.mxu0 0
      %5268 = vmatpush1.bf16.msra.mxu0 0
      %5269 = vmatprep.subr.bf16.mxu0 0
      %5270 = vmatpush1.bf16.msra.mxu0 0
      %5271 = vmatprep.mubr.bf16.mxu0 0
      %5272 = vmatmul.mubr.bf16.gmra.mrb[0].mxu0 %v3883
      %v5273 = vpop.f32.mrb[0].mxu0
      %v5274 = vadd.f32 %v5113, %v5273
      %v5275 = vpop.f32.mrb[0].mxu0
      %v5276 = vpop.f32.mrb[0].mxu0
      %v5277 = vadd.f32 %v5116, %v5276
      %v5278 = vpop.f32.mrb[0].mxu0
      %5279 = vmatprep.mubr.bf16.mxu0 0
      %5280 = vmatmul.mubr.bf16.gmra.mrb[0].mxu0 %v3892
      %v5281 = vpop.f32.mrb[0].mxu0
      %v5282 = vadd.f32 %v5121, %v5281
      %v5283 = vpop.f32.mrb[0].mxu0
      %v5284 = vpop.f32.mrb[0].mxu0
      %v5285 = vadd.f32 %v5124, %v5284
      %v5286 = vpop.f32.mrb[0].mxu0
      %5287 = vmatprep.mubr.bf16.mxu0 0
      %5288 = vmatmul.mubr.bf16.gmra.mrb[0].mxu0 %v3901
      %v5289 = vpop.f32.mrb[0].mxu0
      %v5290 = vadd.f32 %v5129, %v5289
      %v5291 = vpop.f32.mrb[0].mxu0
      %v5292 = vpop.f32.mrb[0].mxu0
      %v5293 = vadd.f32 %v5132, %v5292
      %v5294 = vpop.f32.mrb[0].mxu0
      %5295 = vmatprep.mubr.bf16.mxu0 0
      %5296 = vmatmul.mubr.bf16.gmra.mrb[0].mxu0 %v3910
      %v5297 = vpop.f32.mrb[0].mxu0
      %v5298 = vadd.f32 %v5137, %v5297
      %v5299 = vpop.f32.mrb[0].mxu0
      %v5300 = vpop.f32.mrb[0].mxu0
      %v5301 = vadd.f32 %v5140, %v5300
      %v5302 = vpop.f32.mrb[0].mxu0
      %5303 = vmatprep.mubr.bf16.mxu0 0
      %5304 = vmatmul.mubr.bf16.gmra.mrb[0].mxu0 %v3919
      %v5305 = vpop.f32.mrb[0].mxu0
      %v5306 = vadd.f32 %v5145, %v5305
      %v5307 = vpop.f32.mrb[0].mxu0
      %v5308 = vpop.f32.mrb[0].mxu0
      %v5309 = vadd.f32 %v5148, %v5308
      %v5310 = vpop.f32.mrb[0].mxu0
      %5311 = vmatprep.mubr.bf16.mxu0 0
      %5312 = vmatmul.mubr.bf16.gmra.mrb[0].mxu0 %v3928
      %v5313 = vpop.f32.mrb[0].mxu0
      %v5314 = vadd.f32 %v5153, %v5313
      %v5315 = vpop.f32.mrb[0].mxu0
      %v5316 = vpop.f32.mrb[0].mxu0
      %v5317 = vadd.f32 %v5156, %v5316
      %v5318 = vpop.f32.mrb[0].mxu0
      %5319 = vmatprep.mubr.bf16.mxu0 0
      %5320 = vmatmul.mubr.bf16.gmra.mrb[0].mxu0 %v3937
      %v5321 = vpop.f32.mrb[0].mxu0
      %v5322 = vadd.f32 %v5161, %v5321
      %v5323 = vpop.f32.mrb[0].mxu0
      %v5324 = vpop.f32.mrb[0].mxu0
      %v5325 = vadd.f32 %v5164, %v5324
      %v5326 = vpop.f32.mrb[0].mxu0
      %5327 = vmatprep.mubr.bf16.mxu0 0
      %5328 = vmatmul.mubr.bf16.gmra.mrb[0].mxu0 %v3946
      %v5329 = vpop.f32.mrb[0].mxu0
      %v5330 = vadd.f32 %v5169, %v5329
      %v5331 = vpop.f32.mrb[0].mxu0
      %v5332 = vpop.f32.mrb[0].mxu0
      %v5333 = vadd.f32 %v5172, %v5332
      %v5334 = vpop.f32.mrb[0].mxu0
      %5335 = vmatprep.mubr.bf16.mxu0 0
      %5336 = vmatmul.mubr.bf16.gmra.mrb[0].mxu0 %v3955
      %v5337 = vpop.f32.mrb[0].mxu0
      %v5338 = vadd.f32 %v5177, %v5337
      %v5339 = vpop.f32.mrb[0].mxu0
      %v5340 = vpop.f32.mrb[0].mxu0
      %v5341 = vadd.f32 %v5180, %v5340
      %v5342 = vpop.f32.mrb[0].mxu0
      %5343 = vmatprep.mubr.bf16.mxu0 0
      %5344 = vmatmul.mubr.bf16.gmra.mrb[0].mxu0 %v3964
      %v5345 = vpop.f32.mrb[0].mxu0
      %v5346 = vadd.f32 %v5185, %v5345
      %v5347 = vpop.f32.mrb[0].mxu0
      %v5348 = vpop.f32.mrb[0].mxu0
      %v5349 = vadd.f32 %v5188, %v5348
      %v5350 = vpop.f32.mrb[0].mxu0
      %5351 = vmatprep.mubr.bf16.mxu0 0
      %5352 = vmatmul.mubr.bf16.gmra.mrb[0].mxu0 %v3973
      %v5353 = vpop.f32.mrb[0].mxu0
      %v5354 = vadd.f32 %v5193, %v5353
      %v5355 = vpop.f32.mrb[0].mxu0
      %v5356 = vpop.f32.mrb[0].mxu0
      %v5357 = vadd.f32 %v5196, %v5356
      %v5358 = vpop.f32.mrb[0].mxu0
      %5359 = vmatprep.mubr.bf16.mxu0 0
      %5360 = vmatmul.mubr.bf16.gmra.mrb[0].mxu0 %v3982
      %v5361 = vpop.f32.mrb[0].mxu0
      %v5362 = vadd.f32 %v5201, %v5361
      %v5363 = vpop.f32.mrb[0].mxu0
      %v5364 = vpop.f32.mrb[0].mxu0
      %v5365 = vadd.f32 %v5204, %v5364
      %v5366 = vpop.f32.mrb[0].mxu0
      %5367 = vmatprep.mubr.bf16.mxu0 0
      %5368 = vmatmul.mubr.bf16.gmra.mrb[0].mxu0 %v3991
      %v5369 = vpop.f32.mrb[0].mxu0
      %v5370 = vadd.f32 %v5209, %v5369
      %v5371 = vpop.f32.mrb[0].mxu0
      %v5372 = vpop.f32.mrb[0].mxu0
      %v5373 = vadd.f32 %v5212, %v5372
      %v5374 = vpop.f32.mrb[0].mxu0
      %5375 = vmatprep.mubr.bf16.mxu0 0
      %5376 = vmatmul.mubr.bf16.gmra.mrb[0].mxu0 %v4000
      %v5377 = vpop.f32.mrb[0].mxu0
      %v5378 = vadd.f32 %v5217, %v5377
      %v5379 = vpop.f32.mrb[0].mxu0
      %v5380 = vpop.f32.mrb[0].mxu0
      %v5381 = vadd.f32 %v5220, %v5380
      %v5382 = vpop.f32.mrb[0].mxu0
      %5383 = vmatprep.mubr.bf16.mxu0 0
      %5384 = vmatmul.mubr.bf16.gmra.mrb[0].mxu0 %v4009
      %v5385 = vpop.f32.mrb[0].mxu0
      %v5386 = vadd.f32 %v5225, %v5385
      %v5387 = vpop.f32.mrb[0].mxu0
      %v5388 = vpop.f32.mrb[0].mxu0
      %v5389 = vadd.f32 %v5228, %v5388
      %v5390 = vpop.f32.mrb[0].mxu0
      %5391 = vmatprep.mubr.bf16.mxu0 0
      %5392 = vmatmul.mubr.bf16.gmra.mrb[0].mxu0 %v4018
      %v5393 = vpop.f32.mrb[0].mxu0
      %v5394 = vadd.f32 %v5233, %v5393
      %v5395 = vpop.f32.mrb[0].mxu0
      %v5396 = vpop.f32.mrb[0].mxu0
      %v5397 = vadd.f32 %v5236, %v5396
      %v5398 = vpop.f32.mrb[0].mxu0
      %5399 = vdwg.mxu0
      %v5400 = vpack.c.bf16 %v5277, %v5274
      %v5401 = vpack.c.bf16 %v5285, %v5282
      %v5402 = vpack.c.bf16 %v5293, %v5290
      %v5403 = vpack.c.bf16 %v5301, %v5298
      %v5404 = vpack.c.bf16 %v5309, %v5306
      %v5405 = vpack.c.bf16 %v5317, %v5314
      %v5406 = vpack.c.bf16 %v5325, %v5322
      %v5407 = vpack.c.bf16 %v5333, %v5330
      %v5408 = vpack.c.bf16 %v5341, %v5338
      %v5409 = vpack.c.bf16 %v5349, %v5346
      %v5410 = vpack.c.bf16 %v5357, %v5354
      %v5411 = vpack.c.bf16 %v5365, %v5362
      %v5412 = vpack.c.bf16 %v5373, %v5370
      %v5413 = vpack.c.bf16 %v5381, %v5378
      %v5414 = vpack.c.bf16 %v5389, %v5386
      %v5415 = vpack.c.bf16 %v5397, %v5394
      %v5432 = vunpack.c.l.b16 %v5400
      %v5433 = vunpack.c.h.b16 %v5400
      %v5434 = vunpack.c.l.b16 %v5401
      %v5435 = vunpack.c.h.b16 %v5401
      %v5436 = vunpack.c.l.b16 %v5402
      %v5437 = vunpack.c.h.b16 %v5402
      %v5438 = vunpack.c.l.b16 %v5403
      %v5439 = vunpack.c.h.b16 %v5403
      %v5440 = vunpack.c.l.b16 %v5404
      %v5441 = vunpack.c.h.b16 %v5404
      %v5442 = vunpack.c.l.b16 %v5405
      %v5443 = vunpack.c.h.b16 %v5405
      %v5444 = vunpack.c.l.b16 %v5406
      %v5445 = vunpack.c.h.b16 %v5406
      %v5446 = vunpack.c.l.b16 %v5407
      %v5447 = vunpack.c.h.b16 %v5407
      %v5448 = vunpack.c.l.b16 %v5408
      %v5449 = vunpack.c.h.b16 %v5408
      %v5450 = vunpack.c.l.b16 %v5409
      %v5451 = vunpack.c.h.b16 %v5409
      %v5452 = vunpack.c.l.b16 %v5410
      %v5453 = vunpack.c.h.b16 %v5410
      %v5454 = vunpack.c.l.b16 %v5411
      %v5455 = vunpack.c.h.b16 %v5411
      %v5456 = vunpack.c.l.b16 %v5412
      %v5457 = vunpack.c.h.b16 %v5412
      %v5458 = vunpack.c.l.b16 %v5413
      %v5459 = vunpack.c.h.b16 %v5413
      %v5460 = vunpack.c.l.b16 %v5414
      %v5461 = vunpack.c.h.b16 %v5414
      %v5462 = vunpack.c.l.b16 %v5415
      %v5463 = vunpack.c.h.b16 %v5415
      %v5464 = vpack.c.b16 %v5432, %v5432
      %v5465 = vpack.c.b16 %v5433, %v5433
      %v5466 = vpack.c.b16 %v5434, %v5434
      %v5467 = vpack.c.b16 %v5435, %v5435
      %v5468 = vpack.c.b16 %v5436, %v5436
      %v5469 = vpack.c.b16 %v5437, %v5437
      %v5470 = vpack.c.b16 %v5438, %v5438
      %v5471 = vpack.c.b16 %v5439, %v5439
      %v5472 = vpack.c.b16 %v5440, %v5440
      %v5473 = vpack.c.b16 %v5441, %v5441
      %v5474 = vpack.c.b16 %v5442, %v5442
      %v5475 = vpack.c.b16 %v5443, %v5443
      %v5476 = vpack.c.b16 %v5444, %v5444
      %v5477 = vpack.c.b16 %v5445, %v5445
      %v5478 = vpack.c.b16 %v5446, %v5446
      %v5479 = vpack.c.b16 %v5447, %v5447
      %v5480 = vpack.c.b16 %v5448, %v5448
      %v5481 = vpack.c.b16 %v5449, %v5449
      %v5482 = vpack.c.b16 %v5450, %v5450
      %v5483 = vpack.c.b16 %v5451, %v5451
      %v5484 = vpack.c.b16 %v5452, %v5452
      %v5485 = vpack.c.b16 %v5453, %v5453
      %v5486 = vpack.c.b16 %v5454, %v5454
      %v5487 = vpack.c.b16 %v5455, %v5455
      %v5488 = vpack.c.b16 %v5456, %v5456
      %v5489 = vpack.c.b16 %v5457, %v5457
      %v5490 = vpack.c.b16 %v5458, %v5458
      %v5491 = vpack.c.b16 %v5459, %v5459
      %v5492 = vpack.c.b16 %v5460, %v5460
      %v5493 = vpack.c.b16 %v5461, %v5461
      %v5494 = vpack.c.b16 %v5462, %v5462
      %v5495 = vpack.c.b16 %v5463, %v5463
      %5528 = vst [vmem:[%s262] sm:$0xf] %v5464
      %5529 = vst [vmem:[%s262 + $0x4] sm:$0xf] %v5465
      %5530 = vst [vmem:[%s262 + $0x8] sm:$0xf] %v5466
      %5531 = vst [vmem:[%s262 + $0xc] sm:$0xf] %v5467
      %5532 = vst [vmem:[%s262 + $0x10] sm:$0xf] %v5468
      %5533 = vst [vmem:[%s262 + $0x14] sm:$0xf] %v5469
      %5534 = vst [vmem:[%s262 + $0x18] sm:$0xf] %v5470
      %5535 = vst [vmem:[%s262 + $0x1c] sm:$0xf] %v5471
      %5536 = vst [vmem:[%s262 + $0x20] sm:$0xf] %v5472
      %5537 = vst [vmem:[%s262 + $0x24] sm:$0xf] %v5473
      %5538 = vst [vmem:[%s262 + $0x28] sm:$0xf] %v5474
      %5539 = vst [vmem:[%s262 + $0x2c] sm:$0xf] %v5475
      %5540 = vst [vmem:[%s262 + $0x30] sm:$0xf] %v5476
      %5541 = vst [vmem:[%s262 + $0x34] sm:$0xf] %v5477
      %5542 = vst [vmem:[%s262 + $0x38] sm:$0xf] %v5478
      %5543 = vst [vmem:[%s262 + $0x3c] sm:$0xf] %v5479
      %5544 = vst [vmem:[%s262 + $0x40] sm:$0xf] %v5480
      %5545 = vst [vmem:[%s262 + $0x44] sm:$0xf] %v5481
      %5546 = vst [vmem:[%s262 + $0x48] sm:$0xf] %v5482
      %5547 = vst [vmem:[%s262 + $0x4c] sm:$0xf] %v5483
      %5548 = vst [vmem:[%s262 + $0x50] sm:$0xf] %v5484
      %5549 = vst [vmem:[%s262 + $0x54] sm:$0xf] %v5485
      %5550 = vst [vmem:[%s262 + $0x58] sm:$0xf] %v5486
      %5551 = vst [vmem:[%s262 + $0x5c] sm:$0xf] %v5487
      %5552 = vst [vmem:[%s262 + $0x60] sm:$0xf] %v5488
      %5553 = vst [vmem:[%s262 + $0x64] sm:$0xf] %v5489
      %5554 = vst [vmem:[%s262 + $0x68] sm:$0xf] %v5490
      %5555 = vst [vmem:[%s262 + $0x6c] sm:$0xf] %v5491
      %5556 = vst [vmem:[%s262 + $0x70] sm:$0xf] %v5492
      %5557 = vst [vmem:[%s262 + $0x74] sm:$0xf] %v5493
      %5558 = vst [vmem:[%s262 + $0x78] sm:$0xf] %v5494
      %5559 = vst [vmem:[%s262 + $0x7c] sm:$0xf] %v5495
      %v5560 = vadd.f32 %v5274, %v5277
      %v5561 = vadd.f32 %v5560, %v5282
      %v5562 = vadd.f32 %v5561, %v5285
      %v5563 = vadd.f32 %v5562, %v5290
      %v5564 = vadd.f32 %v5563, %v5293
      %v5565 = vadd.f32 %v5564, %v5298
      %v5566 = vadd.f32 %v5565, %v5301
      %v5567 = vadd.f32 %v5566, %v5306
      %v5568 = vadd.f32 %v5567, %v5309
      %v5569 = vadd.f32 %v5568, %v5314
      %v5570 = vadd.f32 %v5569, %v5317
      %v5571 = vadd.f32 %v5570, %v5322
      %v5572 = vadd.f32 %v5571, %v5325
      %v5573 = vadd.f32 %v5572, %v5330
      %v5574 = vadd.f32 %v5573, %v5333
      %v5575 = vadd.f32 %v5574, %v5338
      %v5576 = vadd.f32 %v5575, %v5341
      %v5577 = vadd.f32 %v5576, %v5346
      %v5578 = vadd.f32 %v5577, %v5349
      %v5579 = vadd.f32 %v5578, %v5354
      %v5580 = vadd.f32 %v5579, %v5357
      %v5581 = vadd.f32 %v5580, %v5362
      %v5582 = vadd.f32 %v5581, %v5365
      %v5583 = vadd.f32 %v5582, %v5370
      %v5584 = vadd.f32 %v5583, %v5373
      %v5585 = vadd.f32 %v5584, %v5378
      %v5586 = vadd.f32 %v5585, %v5381
      %v5587 = vadd.f32 %v5586, %v5386
      %v5588 = vadd.f32 %v5587, %v5389
      %v5589 = vadd.f32 %v5588, %v5394
      %v5590 = vadd.f32 %v5589, %v5397
      %v5591 = vrot.slane %v5590, 4
      %v5592 = vadd.f32 %v5590, %v5591
      %v5593 = vrot.slane %v5592, 2
      %v5594 = vadd.f32 %v5592, %v5593
      %v5595 = vrot.slane %v5594, 1
      %v5596 = vadd.f32 %v5594, %v5595
      %5597 = vst [vmem:[%s266] sm:$0x1] %v5596
      %v5598 = vmul.f32 %v5274, %v5274
      %v5599 = vmul.f32 %v5277, %v5277
      %v5600 = vmul.f32 %v5282, %v5282
      %v5601 = vmul.f32 %v5285, %v5285
      %v5602 = vmul.f32 %v5290, %v5290
      %v5603 = vmul.f32 %v5293, %v5293
      %v5604 = vmul.f32 %v5298, %v5298
      %v5605 = vmul.f32 %v5301, %v5301
      %v5606 = vmul.f32 %v5306, %v5306
      %v5607 = vmul.f32 %v5309, %v5309
      %v5608 = vmul.f32 %v5314, %v5314
      %v5609 = vmul.f32 %v5317, %v5317
      %v5610 = vmul.f32 %v5322, %v5322
      %v5611 = vmul.f32 %v5325, %v5325
      %v5612 = vmul.f32 %v5330, %v5330
      %v5613 = vmul.f32 %v5333, %v5333
      %v5614 = vmul.f32 %v5338, %v5338
      %v5615 = vmul.f32 %v5341, %v5341
      %v5616 = vmul.f32 %v5346, %v5346
      %v5617 = vmul.f32 %v5349, %v5349
      %v5618 = vmul.f32 %v5354, %v5354
      %v5619 = vmul.f32 %v5357, %v5357
      %v5620 = vmul.f32 %v5362, %v5362
      %v5621 = vmul.f32 %v5365, %v5365
      %v5622 = vmul.f32 %v5370, %v5370
      %v5623 = vmul.f32 %v5373, %v5373
      %v5624 = vmul.f32 %v5378, %v5378
      %v5625 = vmul.f32 %v5381, %v5381
      %v5626 = vmul.f32 %v5386, %v5386
      %v5627 = vmul.f32 %v5389, %v5389
      %v5628 = vmul.f32 %v5394, %v5394
      %v5629 = vmul.f32 %v5397, %v5397
      %v5630 = vadd.f32 %v5598, %v5599
      %v5631 = vadd.f32 %v5630, %v5600
      %v5632 = vadd.f32 %v5631, %v5601
      %v5633 = vadd.f32 %v5632, %v5602
      %v5634 = vadd.f32 %v5633, %v5603
      %v5635 = vadd.f32 %v5634, %v5604
      %v5636 = vadd.f32 %v5635, %v5605
      %v5637 = vadd.f32 %v5636, %v5606
      %v5638 = vadd.f32 %v5637, %v5607
      %v5639 = vadd.f32 %v5638, %v5608
      %v5640 = vadd.f32 %v5639, %v5609
      %v5641 = vadd.f32 %v5640, %v5610
      %v5642 = vadd.f32 %v5641, %v5611
      %v5643 = vadd.f32 %v5642, %v5612
      %v5644 = vadd.f32 %v5643, %v5613
      %v5645 = vadd.f32 %v5644, %v5614
      %v5646 = vadd.f32 %v5645, %v5615
      %v5647 = vadd.f32 %v5646, %v5616
      %v5648 = vadd.f32 %v5647, %v5617
      %v5649 = vadd.f32 %v5648, %v5618
      %v5650 = vadd.f32 %v5649, %v5619
      %v5651 = vadd.f32 %v5650, %v5620
      %v5652 = vadd.f32 %v5651, %v5621
      %v5653 = vadd.f32 %v5652, %v5622
      %v5654 = vadd.f32 %v5653, %v5623
      %v5655 = vadd.f32 %v5654, %v5624
      %v5656 = vadd.f32 %v5655, %v5625
      %v5657 = vadd.f32 %v5656, %v5626
      %v5658 = vadd.f32 %v5657, %v5627
      %v5659 = vadd.f32 %v5658, %v5628
      %v5660 = vadd.f32 %v5659, %v5629
      %v5661 = vrot.slane %v5660, 4
      %v5662 = vadd.f32 %v5660, %v5661
      %v5663 = vrot.slane %v5662, 2
      %v5664 = vadd.f32 %v5662, %v5663
      %v5665 = vrot.slane %v5664, 1
      %v5666 = vadd.f32 %v5664, %v5665
      %5667 = vst [vmem:[%s269] sm:$0x1] %v5666
      %s5668 = smul.u32 32, %s18
      %p5669 = scmp.lt.s32.totalorder %s5668, 127
      %s5670 = scalar_select %p5669, %s5668, 127
      %s5671 = smul.addr %s5670, 4
      %s5672 = scalar_lea.vmem %s4, %s5671
      %p5673 = scmp.lt.s32.totalorder %s18, 3
      %s5674 = scalar_select %p5673, %s18, 3
      %s5675 = scalar_lea.vmem %s5, %s5674
      %p5676 = scmp.lt.s32.totalorder %s18, 3
      %s5677 = scalar_select %p5676, %s18, 3
      %s5678 = scalar_lea.vmem %s6, %s5677
      // Predicated region
      $region37: #{bottleneck_forward.5} parent=35 // pred_check
        %p5679 = pneg %p125
      $region38: #{bottleneck_forward.5} parent=35 // pred_check_branch
        %5681 = sbr.rel (%p5679) target = $region40
      $region39: #{bottleneck_forward.5} parent=35 // pred_region
        %s5682 = smul.u32 32, %s18
      $region40: #{bottleneck_forward.5} parent=35 // pred_fallthru
        _
      // Predicated region
      $region41: #{bottleneck_forward.5} parent=35 // pred_check
        %p5683 = pneg %p151
      $region42: #{bottleneck_forward.5} parent=35 // pred_check_branch
        %5685 = sbr.rel (%p5683) target = $region44
      $region43: #{bottleneck_forward.5} parent=35 // pred_region
        _
      $region44: #{bottleneck_forward.5} parent=35 // pred_fallthru
        _
      // Predicated region
      $region45: #{bottleneck_forward.5} parent=35 // pred_check
        %p5686 = pneg %p177
      $region46: #{bottleneck_forward.5} parent=35 // pred_check_branch
        %5688 = sbr.rel (%p5686) target = $region48
      $region47: #{bottleneck_forward.5} parent=35 // pred_region
        _
      $region48: #{bottleneck_forward.5} parent=35 // pred_fallthru
        _
    $region36: #{bottleneck_forward.5} parent=5 // pred_fallthru
      _
    %p5689 = scmp.le.s32.totalorder 2, %s13
    // Predicated region
    $region49: #{bottleneck_forward.5} parent=5 // pred_check
      %p5690 = pneg %p5689
    $region50: #{bottleneck_forward.5} parent=5 // pred_check_branch
      %5692 = sbr.rel (%p5690) target = $region52
    $region51: #{bottleneck_forward.5} parent=5 // pred_region
      %s5693 = ssub.s32 %s13, 2
      // Predicated region
      $region53: #{bottleneck_forward.5} parent=51 // pred_check
        %p5694 = pneg %p131
      $region54: #{bottleneck_forward.5} parent=51 // pred_check_branch
        %5696 = sbr.rel (%p5694) target = $region56
      $region55: #{bottleneck_forward.5} parent=51 // pred_region
        %s5697 = smul.u32 32, %s19
        %p5698 = scmp.lt.s32.totalorder %s5697, 127
        %s5699 = scalar_select %p5698, %s5697, 127
        %s5700 = smul.addr %s5699, 4
        %s5701 = scalar_lea.vmem %s4, %s5700
      $region56: #{bottleneck_forward.5} parent=51 // pred_fallthru
        _
      // Predicated region
      $region57: #{bottleneck_forward.5} parent=51 // pred_check
        %p5702 = pneg %p157
      $region58: #{bottleneck_forward.5} parent=51 // pred_check_branch
        %5704 = sbr.rel (%p5702) target = $region60
      $region59: #{bottleneck_forward.5} parent=51 // pred_region
        %p5705 = scmp.lt.s32.totalorder %s19, 3
        %s5706 = scalar_select %p5705, %s19, 3
        %s5707 = scalar_lea.vmem %s5, %s5706
      $region60: #{bottleneck_forward.5} parent=51 // pred_fallthru
        _
      // Predicated region
      $region61: #{bottleneck_forward.5} parent=51 // pred_check
        %p5708 = pneg %p183
      $region62: #{bottleneck_forward.5} parent=51 // pred_check_branch
        %5710 = sbr.rel (%p5708) target = $region64
      $region63: #{bottleneck_forward.5} parent=51 // pred_region
        %p5711 = scmp.lt.s32.totalorder %s19, 3
        %s5712 = scalar_select %p5711, %s19, 3
        %s5713 = scalar_lea.vmem %s6, %s5712
      $region64: #{bottleneck_forward.5} parent=51 // pred_fallthru
        _
    $region52: #{bottleneck_forward.5} parent=5 // pred_fallthru
      _
  $region6: #{bottleneck_forward.5} parent=0 // loop_footer
    %s17 = sadd.s32 1, %s13
  $region7: #{bottleneck_forward.5} parent=0 // loop_footer_branch
    %12 = sbr.rel target = $region3
  $region8: #{bottleneck_forward.5} parent=0 // loop_exit
    _

</llo_original>
